<compile_context>
chip_gen: v7x
topology: tpu7x:2x2x1
jax: 0.10.0
libtpu: 0.0.40
codegen_flags: <defaults>
</compile_context>

<pallas_src>
import numpy as np

import jax
import jax.numpy as jnp
from jax.experimental import pallas as pl
from jax.experimental.pallas import tpu as pltpu


# -----------------------------------------------------------------------------
# Static layout constants.
# -----------------------------------------------------------------------------
NSLAB = 6                    # row-shift slabs (s = dy + kh, dy in 0..1, kh in 0..4)
KIN = NSLAB * 32             # conv-matmul contraction depth (192)
NPW = 16                     # padded pooled width (valid pooled cols: 0..13)
N1 = NPW * 32                # conv/pool output lanes per pooled row (512 = 4*128)
NPH = 14                     # pooled rows per sample (exactly 14 -- no pad rows)
HID = 128                    # Linear-1 output, padded 100 -> 128 (lane dense)
NCLS = 128                   # Linear-2 output, padded 10 -> 128 (lane dense)
TILE_B_MAX = 64              # max samples per grid step
COMPUTE_DTYPE = jnp.bfloat16  # MXU operand dtype (accumulation stays f32)


def _round_up(n, m):
    return ((n + m - 1) // m) * m


# -----------------------------------------------------------------------------
# Fused kernel: banded conv + 2x2 maxpool + bias + ReLU + MLP + log_softmax.
# -----------------------------------------------------------------------------
def _make_fused_kernel(tile_b):
    def kernel(xs_ref, wq_ref, cb_ref, w1_ref, b1_ref, w2_ref, b2_ref, o_ref):
        # xs_ref: (1, NPH*tile_b, 192) bf16; row ph*tile_b + b holds
        #         xpad[b, 2*ph + s, :] for s = 0..5 concatenated along lanes.
        # wq_ref: (2, 2, 192, 512) bf16 band matrices, one per pooling quadrant:
        #         wq[dy,dx][s*32+wp, pw*32+c] = conv_w[c,0,s-dy, wp-(2*pw+dx)].
        # cb_ref: (1, 512) f32 conv bias tiled over pooled-w.
        # w1_ref: (14, 512, 128) bf16 Linear-1 (flatten perm folded, hidden padded).
        # b1_ref: (1, 128) f32.   w2_ref: (128, 128) bf16.
        # b2_ref: (1, 128) f32 (cols >= 10 hold -1e30 so log_softmax ignores them).
        # o_ref : (tile_b, 128) f32 log-probabilities (cols >= 10 are padding).
        x = xs_ref[0]                                           # (R, 192) bf16

        # Convolution as 4 banded MXU matmuls (K = 192); 2x2 max-pool is a
        # plain element-wise max over the 4 quadrants.
        pooled = None
        for dy in range(2):
            for dx in range(2):
                p = jnp.dot(x, wq_ref[dy, dx],
                            preferred_element_type=jnp.float32)
                pooled = p if pooled is None else jnp.maximum(pooled, p)

        # Bias once after the max (max(a+b, c+b) == max(a,c)+b), then ReLU.
        act = jnp.maximum(pooled + cb_ref[...], 0.0).astype(COMPUTE_DTYPE)

        # Linear-1 accumulated over the 14 pooled rows (K = 512 each, f32 acc).
        acc = None
        for ph in range(NPH):
            a_ph = act[ph * tile_b:(ph + 1) * tile_b, :]        # (tile_b, 512)
            part = jnp.dot(a_ph, w1_ref[ph],
                           preferred_element_type=jnp.float32)
            acc = part if acc is None else acc + part
        z1 = acc + b1_ref[...]                                  # (tile_b, 128)

        # Sigmoid (exp on the EUP).  Padded hidden units: sigmoid(0)=0.5 times
        # zero w2 rows -> no contribution.
        e = jnp.exp(-jnp.clip(z1, -60.0, 60.0))
        h = pl.reciprocal(1.0 + e, approx=True)

        z2 = jnp.dot(h.astype(COMPUTE_DTYPE), w2_ref[...],
                     preferred_element_type=jnp.float32) + b2_ref[...]

        # log_softmax over 128 lanes; padded logits are ~-1e30 -> exp == 0.
        m = jnp.max(z2, axis=-1, keepdims=True)
        lse = m + jnp.log(jnp.sum(jnp.exp(z2 - m), axis=-1, keepdims=True))
        o_ref[...] = z2 - lse

    return kernel


def convnn_forward(x_nchw, prep):
    wq, cb, w1e, b1p, w2p, b2p = prep
    B = x_nchw.shape[0]
    tile_b = min(TILE_B_MAX, _round_up(B, 16))
    BP = _round_up(B, tile_b)
    G = BP // tile_b
    R = NPH * tile_b

    xs = _make_input_slabs(x_nchw, BP, tile_b)                  # (G, R, 192) bf16

    out = pl.pallas_call(
        _make_fused_kernel(tile_b),
        out_shape=jax.ShapeDtypeStruct((BP, NCLS), jnp.float32),
        grid_spec=pltpu.PrefetchScalarGridSpec(
            num_scalar_prefetch=0,
            grid=(G,),
            in_specs=[
                pl.BlockSpec((1, R, KIN), lambda i: (i, 0, 0)),
                pl.BlockSpec((2, 2, KIN, N1), lambda i: (0, 0, 0, 0)),
                pl.BlockSpec((1, N1), lambda i: (0, 0)),
                pl.BlockSpec((NPH, N1, HID), lambda i: (0, 0, 0)),
                pl.BlockSpec((1, HID), lambda i: (0, 0)),
                pl.BlockSpec((HID, NCLS), lambda i: (0, 0)),
                pl.BlockSpec((1, NCLS), lambda i: (0, 0)),
            ],
            out_specs=pl.BlockSpec((tile_b, NCLS), lambda i: (i, 0)),
        ),
        compiler_params=pltpu.CompilerParams(
            dimension_semantics=("parallel",),
            # tile_b=64 need: ~6 MiB double-buffered blocks (incl. resident
            # weights) + <~10 MiB f32/bf16 temporaries -> 32 MiB gives ~2x
            # margin and stays well under v7x's 64 MiB physical VMEM.
            vmem_limit_bytes=32 * 1024 * 1024),
    )(xs, wq, cb, w1e, b1p, w2p, b2p)

    return out[:B, :10]


# -----------------------------------------------------------------------------
# One-time parameter preparation (band matrices, folded / padded MLP weights).
# -----------------------------------------------------------------------------
def prepare_params(params):
    conv_w, conv_b, w1, b1, w2, b2 = params

    # Banded conv weights, one (192, 512) matrix per pooling quadrant (dy,dx):
    #   wq[dy,dx][s*32+wp, pw*32+c] = conv_w[c,0,kh,kw]
    # with kh = s - dy, kw = wp - (2*pw + dx) when both lie in 0..4, else 0.
    Wnp = np.asarray(conv_w)[:, 0]                          # (c=32, kh=5, kw=5)
    wq = np.zeros((2, 2, NSLAB, 32, NPW, 32), np.float32)   # (dy,dx,s,wp,pw,c)
    for dy in range(2):
        for dx in range(2):
            for s in range(NSLAB):
                kh = s - dy
                if not (0 <= kh <= 4):
                    continue
                for pw in range(14):
                    for kw in range(5):
                        wp = 2 * pw + dx + kw
                        wq[dy, dx, s, wp, pw, :] = Wnp[:, kh, kw]
    wq = jnp.asarray(wq.reshape(2, 2, KIN, N1), dtype=COMPUTE_DTYPE)

    # Conv bias broadcast over pooled-w positions: cb[0, pw*32+c] = conv_b[c].
    cb = jnp.tile(conv_b, NPW).reshape(1, N1).astype(jnp.float32)

    # Fold the torch .view(-1, 32*14*14) (C,H,W) flatten, the pooled-w padding
    # selection and the 100->128 hidden padding into w1:
    #   w1e[ph, pw*32+c, j] = w1[j, c*196 + ph*14 + pw]  (0 for pw>=14, j>=100)
    w1_r = w1.reshape(100, 32, 14, 14)                      # (j, c, ph, pw)
    w1_g = jnp.transpose(w1_r, (2, 3, 1, 0))                # (ph, pw, c, j)
    w1e = jnp.zeros((NPH, NPW, 32, HID), jnp.float32)
    w1e = w1e.at[:, :14, :, :100].set(w1_g)
    w1e = w1e.reshape(NPH, N1, HID).astype(COMPUTE_DTYPE)

    b1p = jnp.zeros((1, HID), jnp.float32).at[0, :100].set(b1)

    # Linear-2 padded to (128, 128); padded classes get -1e30 bias so they
    # contribute exp(-inf)=0 to the log-sum-exp.
    w2p = jnp.zeros((HID, NCLS), jnp.float32).at[:100, :10].set(w2.T)
    w2p = w2p.astype(COMPUTE_DTYPE)
    b2p = jnp.full((1, NCLS), -1e30, jnp.float32).at[0, :10].set(b2)

    return (wq, cb, w1e, b1p, w2p, b2p)


# -----------------------------------------------------------------------------
# JAX glue: build the K-concatenated row-shift slabs in (ph, batch) row order.
# -----------------------------------------------------------------------------
def _make_input_slabs(x_nchw, BP, tile_b):
    """[B,1,28,28] -> (G, NPH*tile_b, 192) bf16.

    Per batch-tile g, row ph*tile_b + b holds [xpad[b, 2*ph+s, :] for s=0..5]
    concatenated along the lane axis (192 = 6 slabs x 32 padded columns).
    """
    B = x_nchw.shape[0]
    x = x_nchw[:, 0].astype(jnp.float32)                    # (B, 28, 28)
    x = jnp.pad(x, ((0, BP - B), (2, 2), (2, 2)))           # (BP, 32, 32)
    slabs = [x[:, s:s + 28:2, :] for s in range(NSLAB)]     # each (BP, 14, 32)
    xc = jnp.stack(slabs, axis=2)                           # (BP, 14, 6, 32)
    xc = xc.reshape(BP, NPH, KIN)                           # lane = s*32 + wp
    G = BP // tile_b
    xc = xc.reshape(G, tile_b, NPH, KIN)
    xc = jnp.transpose(xc, (0, 2, 1, 3))                    # (G, ph, b, K)
    xc = xc.reshape(G, NPH * tile_b, KIN)
    return xc.astype(COMPUTE_DTYPE)


# -----------------------------------------------------------------------------
# Pure-JAX reference (sanity check of the Pallas path).
# -----------------------------------------------------------------------------
def convnn_reference(x_nchw, params):
    conv_w, conv_b, w1, b1, w2, b2 = params
    y = jax.lax.conv_general_dilated(
        x_nchw, conv_w, window_strides=(1, 1), padding=((2, 2), (2, 2)),
        dimension_numbers=("NCHW", "OIHW", "NCHW"))
    y = y + conv_b.reshape(1, 32, 1, 1)
    y = jax.lax.reduce_window(y, -jnp.inf, jax.lax.max,
                              (1, 1, 2, 2), (1, 1, 2, 2), "VALID")
    y = jnp.maximum(y, 0.0)
    y = y.reshape(y.shape[0], 32 * 14 * 14)
    h = jax.nn.sigmoid(y @ w1.T + b1)
    logits = h @ w2.T + b2
    return jax.nn.log_softmax(logits, axis=1)


def init_params(key):
    k = jax.random.split(key, 6)
    conv_w = 0.1 * jax.random.normal(k[0], (32, 1, 5, 5), jnp.float32)
    conv_b = 0.1 * jax.random.normal(k[1], (32,), jnp.float32)
    w1 = (1.0 / jnp.sqrt(32.0 * 14 * 14)) * jax.random.normal(
        k[2], (100, 32 * 14 * 14), jnp.float32)
    b1 = 0.1 * jax.random.normal(k[3], (100,), jnp.float32)
    w2 = (1.0 / jnp.sqrt(100.0)) * jax.random.normal(k[4], (10, 100), jnp.float32)
    b2 = 0.1 * jax.random.normal(k[5], (10,), jnp.float32)
    return (conv_w, conv_b, w1, b1, w2, b2)


if __name__ == "__main__":
    key = jax.random.PRNGKey(0)
    kx, kp = jax.random.split(key)
    # MNIST-like input: batch=2, 1 channel, 28x28 (fixed by the 32*14*14 Linear).
    x = jax.random.normal(kx, (2, 1, 28, 28), jnp.float32)
    params = init_params(kp)
    prep = prepare_params(params)

    out = jax.jit(convnn_forward)(x, prep)
    out = jax.block_until_ready(out)
    assert out.shape == (2, 10), out.shape

    ref = jax.jit(convnn_reference)(x, params)
    ref = jax.block_until_ready(ref)
    err = float(jnp.max(jnp.abs(out - ref)))
    # Loose tolerance: matmul operands are bf16 (f32 accumulation) + approx rcp.
    assert err < 1e-1, f"Pallas output mismatch vs reference: max abs err {err}"

    print("KERNEL_OK")
</pallas_src>

<mosaic_0001>
module attributes {stable_mosaic.version = 11 : i64} {
  func.func @kernel(%arg0: i32, %arg1: memref<1x224x192xbf16, #tpu.memory_space<vmem>>, %arg2: memref<2x2x192x512xbf16, #tpu.memory_space<vmem>>, %arg3: memref<1x512xf32, #tpu.memory_space<vmem>>, %arg4: memref<14x512x128xbf16, #tpu.memory_space<vmem>>, %arg5: memref<1x128xf32, #tpu.memory_space<vmem>>, %arg6: memref<128x128xbf16, #tpu.memory_space<vmem>>, %arg7: memref<1x128xf32, #tpu.memory_space<vmem>>, %arg8: memref<16x128xf32, #tpu.memory_space<vmem>>) attributes {dimension_semantics = [#tpu.dimension_semantics<parallel>], iteration_bounds = array<i64: 1>, scalar_prefetch = 0 : i64, scratch_operands = 0 : i64, tpu.core_type = #tpu.core_type<tc>, window_params = [{transform_indices = @transform_0, window_bounds = array<i64: 1, 224, 192>}, {pipeline_mode = #tpu.pipeline_mode<synchronous>, transform_indices = @transform_1, window_bounds = array<i64: 2, 2, 192, 512>}, {pipeline_mode = #tpu.pipeline_mode<synchronous>, transform_indices = @transform_2, window_bounds = array<i64: 1, 512>}, {pipeline_mode = #tpu.pipeline_mode<synchronous>, transform_indices = @transform_3, window_bounds = array<i64: 14, 512, 128>}, {pipeline_mode = #tpu.pipeline_mode<synchronous>, transform_indices = @transform_4, window_bounds = array<i64: 1, 128>}, {pipeline_mode = #tpu.pipeline_mode<synchronous>, transform_indices = @transform_5, window_bounds = array<i64: 128, 128>}, {pipeline_mode = #tpu.pipeline_mode<synchronous>, transform_indices = @transform_6, window_bounds = array<i64: 1, 128>}, {transform_indices = @transform_7, window_bounds = array<i64: 16, 128>}]} {
    %c0 = arith.constant 0 : index
    %c0_0 = arith.constant 0 : index
    %c0_1 = arith.constant 0 : index
    %0 = vector.load %arg1[%c0, %c0_0, %c0_1] : memref<1x224x192xbf16, #tpu.memory_space<vmem>>, vector<1x224x192xbf16>
    %1 = vector.shape_cast %0 : vector<1x224x192xbf16> to vector<224x192xbf16>
    %c0_2 = arith.constant 0 : index
    %c0_3 = arith.constant 0 : index
    %c0_4 = arith.constant 0 : index
    %c0_5 = arith.constant 0 : index
    %2 = vector.load %arg2[%c0_2, %c0_3, %c0_4, %c0_5] : memref<2x2x192x512xbf16, #tpu.memory_space<vmem>>, vector<1x1x192x512xbf16>
    %3 = vector.shape_cast %2 : vector<1x1x192x512xbf16> to vector<192x512xbf16>
    %cst = arith.constant dense<0.000000e+00> : vector<224x512xf32>
    %4 = tpu.matmul %1, %3, %cst {dimension_numbers = #tpu.dot_dimension_numbers<[1], [0], [0], [1], [0, 0, 1, 1], [], []>} : vector<224x192xbf16>, vector<192x512xbf16>, vector<224x512xf32> -> vector<224x512xf32>
    %c0_6 = arith.constant 0 : index
    %c1 = arith.constant 1 : index
    %c0_7 = arith.constant 0 : index
    %c0_8 = arith.constant 0 : index
    %5 = vector.load %arg2[%c0_6, %c1, %c0_7, %c0_8] : memref<2x2x192x512xbf16, #tpu.memory_space<vmem>>, vector<1x1x192x512xbf16>
    %6 = vector.shape_cast %5 : vector<1x1x192x512xbf16> to vector<192x512xbf16>
    %cst_9 = arith.constant dense<0.000000e+00> : vector<224x512xf32>
    %7 = tpu.matmul %1, %6, %cst_9 {dimension_numbers = #tpu.dot_dimension_numbers<[1], [0], [0], [1], [0, 0, 1, 1], [], []>} : vector<224x192xbf16>, vector<192x512xbf16>, vector<224x512xf32> -> vector<224x512xf32>
    %8 = arith.maximumf %4, %7 : vector<224x512xf32>
    %c1_10 = arith.constant 1 : index
    %c0_11 = arith.constant 0 : index
    %c0_12 = arith.constant 0 : index
    %c0_13 = arith.constant 0 : index
    %9 = vector.load %arg2[%c1_10, %c0_11, %c0_12, %c0_13] : memref<2x2x192x512xbf16, #tpu.memory_space<vmem>>, vector<1x1x192x512xbf16>
    %10 = vector.shape_cast %9 : vector<1x1x192x512xbf16> to vector<192x512xbf16>
    %cst_14 = arith.constant dense<0.000000e+00> : vector<224x512xf32>
    %11 = tpu.matmul %1, %10, %cst_14 {dimension_numbers = #tpu.dot_dimension_numbers<[1], [0], [0], [1], [0, 0, 1, 1], [], []>} : vector<224x192xbf16>, vector<192x512xbf16>, vector<224x512xf32> -> vector<224x512xf32>
    %12 = arith.maximumf %8, %11 : vector<224x512xf32>
    %c1_15 = arith.constant 1 : index
    %c1_16 = arith.constant 1 : index
    %c0_17 = arith.constant 0 : index
    %c0_18 = arith.constant 0 : index
    %13 = vector.load %arg2[%c1_15, %c1_16, %c0_17, %c0_18] : memref<2x2x192x512xbf16, #tpu.memory_space<vmem>>, vector<1x1x192x512xbf16>
    %14 = vector.shape_cast %13 : vector<1x1x192x512xbf16> to vector<192x512xbf16>
    %cst_19 = arith.constant dense<0.000000e+00> : vector<224x512xf32>
    %15 = tpu.matmul %1, %14, %cst_19 {dimension_numbers = #tpu.dot_dimension_numbers<[1], [0], [0], [1], [0, 0, 1, 1], [], []>} : vector<224x192xbf16>, vector<192x512xbf16>, vector<224x512xf32> -> vector<224x512xf32>
    %16 = arith.maximumf %12, %15 : vector<224x512xf32>
    %c0_20 = arith.constant 0 : index
    %c0_21 = arith.constant 0 : index
    %17 = vector.load %arg3[%c0_20, %c0_21] : memref<1x512xf32, #tpu.memory_space<vmem>>, vector<1x512xf32>
    %18 = vector.broadcast %17 : vector<1x512xf32> to vector<224x512xf32>
    %19 = arith.addf %16, %18 : vector<224x512xf32>
    %cst_22 = arith.constant 0.000000e+00 : f32
    %20 = vector.broadcast %cst_22 : f32 to vector<224x512xf32>
    %21 = arith.maximumf %19, %20 : vector<224x512xf32>
    %22 = arith.truncf %21 : vector<224x512xf32> to vector<224x512xbf16>
    %23 = vector.extract_strided_slice %22 {offsets = [0, 0], sizes = [16, 512], strides = [1, 1]} : vector<224x512xbf16> to vector<16x512xbf16>
    %c0_23 = arith.constant 0 : index
    %c0_24 = arith.constant 0 : index
    %c0_25 = arith.constant 0 : index
    %24 = vector.load %arg4[%c0_23, %c0_24, %c0_25] : memref<14x512x128xbf16, #tpu.memory_space<vmem>>, vector<1x512x128xbf16>
    %25 = vector.shape_cast %24 : vector<1x512x128xbf16> to vector<512x128xbf16>
    %cst_26 = arith.constant dense<0.000000e+00> : vector<16x128xf32>
    %26 = tpu.matmul %23, %25, %cst_26 {dimension_numbers = #tpu.dot_dimension_numbers<[1], [0], [0], [1], [0, 0, 1, 1], [], []>} : vector<16x512xbf16>, vector<512x128xbf16>, vector<16x128xf32> -> vector<16x128xf32>
    %27 = vector.extract_strided_slice %22 {offsets = [16, 0], sizes = [16, 512], strides = [1, 1]} : vector<224x512xbf16> to vector<16x512xbf16>
    %c1_27 = arith.constant 1 : index
    %c0_28 = arith.constant 0 : index
    %c0_29 = arith.constant 0 : index
    %28 = vector.load %arg4[%c1_27, %c0_28, %c0_29] : memref<14x512x128xbf16, #tpu.memory_space<vmem>>, vector<1x512x128xbf16>
    %29 = vector.shape_cast %28 : vector<1x512x128xbf16> to vector<512x128xbf16>
    %cst_30 = arith.constant dense<0.000000e+00> : vector<16x128xf32>
    %30 = tpu.matmul %27, %29, %cst_30 {dimension_numbers = #tpu.dot_dimension_numbers<[1], [0], [0], [1], [0, 0, 1, 1], [], []>} : vector<16x512xbf16>, vector<512x128xbf16>, vector<16x128xf32> -> vector<16x128xf32>
    %31 = arith.addf %26, %30 : vector<16x128xf32>
    %32 = vector.extract_strided_slice %22 {offsets = [32, 0], sizes = [16, 512], strides = [1, 1]} : vector<224x512xbf16> to vector<16x512xbf16>
    %c2 = arith.constant 2 : index
    %c0_31 = arith.constant 0 : index
    %c0_32 = arith.constant 0 : index
    %33 = vector.load %arg4[%c2, %c0_31, %c0_32] : memref<14x512x128xbf16, #tpu.memory_space<vmem>>, vector<1x512x128xbf16>
    %34 = vector.shape_cast %33 : vector<1x512x128xbf16> to vector<512x128xbf16>
    %cst_33 = arith.constant dense<0.000000e+00> : vector<16x128xf32>
    %35 = tpu.matmul %32, %34, %cst_33 {dimension_numbers = #tpu.dot_dimension_numbers<[1], [0], [0], [1], [0, 0, 1, 1], [], []>} : vector<16x512xbf16>, vector<512x128xbf16>, vector<16x128xf32> -> vector<16x128xf32>
    %36 = arith.addf %31, %35 : vector<16x128xf32>
    %37 = vector.extract_strided_slice %22 {offsets = [48, 0], sizes = [16, 512], strides = [1, 1]} : vector<224x512xbf16> to vector<16x512xbf16>
    %c3 = arith.constant 3 : index
    %c0_34 = arith.constant 0 : index
    %c0_35 = arith.constant 0 : index
    %38 = vector.load %arg4[%c3, %c0_34, %c0_35] : memref<14x512x128xbf16, #tpu.memory_space<vmem>>, vector<1x512x128xbf16>
    %39 = vector.shape_cast %38 : vector<1x512x128xbf16> to vector<512x128xbf16>
    %cst_36 = arith.constant dense<0.000000e+00> : vector<16x128xf32>
    %40 = tpu.matmul %37, %39, %cst_36 {dimension_numbers = #tpu.dot_dimension_numbers<[1], [0], [0], [1], [0, 0, 1, 1], [], []>} : vector<16x512xbf16>, vector<512x128xbf16>, vector<16x128xf32> -> vector<16x128xf32>
    %41 = arith.addf %36, %40 : vector<16x128xf32>
    %42 = vector.extract_strided_slice %22 {offsets = [64, 0], sizes = [16, 512], strides = [1, 1]} : vector<224x512xbf16> to vector<16x512xbf16>
    %c4 = arith.constant 4 : index
    %c0_37 = arith.constant 0 : index
    %c0_38 = arith.constant 0 : index
    %43 = vector.load %arg4[%c4, %c0_37, %c0_38] : memref<14x512x128xbf16, #tpu.memory_space<vmem>>, vector<1x512x128xbf16>
    %44 = vector.shape_cast %43 : vector<1x512x128xbf16> to vector<512x128xbf16>
    %cst_39 = arith.constant dense<0.000000e+00> : vector<16x128xf32>
    %45 = tpu.matmul %42, %44, %cst_39 {dimension_numbers = #tpu.dot_dimension_numbers<[1], [0], [0], [1], [0, 0, 1, 1], [], []>} : vector<16x512xbf16>, vector<512x128xbf16>, vector<16x128xf32> -> vector<16x128xf32>
    %46 = arith.addf %41, %45 : vector<16x128xf32>
    %47 = vector.extract_strided_slice %22 {offsets = [80, 0], sizes = [16, 512], strides = [1, 1]} : vector<224x512xbf16> to vector<16x512xbf16>
    %c5 = arith.constant 5 : index
    %c0_40 = arith.constant 0 : index
    %c0_41 = arith.constant 0 : index
    %48 = vector.load %arg4[%c5, %c0_40, %c0_41] : memref<14x512x128xbf16, #tpu.memory_space<vmem>>, vector<1x512x128xbf16>
    %49 = vector.shape_cast %48 : vector<1x512x128xbf16> to vector<512x128xbf16>
    %cst_42 = arith.constant dense<0.000000e+00> : vector<16x128xf32>
    %50 = tpu.matmul %47, %49, %cst_42 {dimension_numbers = #tpu.dot_dimension_numbers<[1], [0], [0], [1], [0, 0, 1, 1], [], []>} : vector<16x512xbf16>, vector<512x128xbf16>, vector<16x128xf32> -> vector<16x128xf32>
    %51 = arith.addf %46, %50 : vector<16x128xf32>
    %52 = vector.extract_strided_slice %22 {offsets = [96, 0], sizes = [16, 512], strides = [1, 1]} : vector<224x512xbf16> to vector<16x512xbf16>
    %c6 = arith.constant 6 : index
    %c0_43 = arith.constant 0 : index
    %c0_44 = arith.constant 0 : index
    %53 = vector.load %arg4[%c6, %c0_43, %c0_44] : memref<14x512x128xbf16, #tpu.memory_space<vmem>>, vector<1x512x128xbf16>
    %54 = vector.shape_cast %53 : vector<1x512x128xbf16> to vector<512x128xbf16>
    %cst_45 = arith.constant dense<0.000000e+00> : vector<16x128xf32>
    %55 = tpu.matmul %52, %54, %cst_45 {dimension_numbers = #tpu.dot_dimension_numbers<[1], [0], [0], [1], [0, 0, 1, 1], [], []>} : vector<16x512xbf16>, vector<512x128xbf16>, vector<16x128xf32> -> vector<16x128xf32>
    %56 = arith.addf %51, %55 : vector<16x128xf32>
    %57 = vector.extract_strided_slice %22 {offsets = [112, 0], sizes = [16, 512], strides = [1, 1]} : vector<224x512xbf16> to vector<16x512xbf16>
    %c7 = arith.constant 7 : index
    %c0_46 = arith.constant 0 : index
    %c0_47 = arith.constant 0 : index
    %58 = vector.load %arg4[%c7, %c0_46, %c0_47] : memref<14x512x128xbf16, #tpu.memory_space<vmem>>, vector<1x512x128xbf16>
    %59 = vector.shape_cast %58 : vector<1x512x128xbf16> to vector<512x128xbf16>
    %cst_48 = arith.constant dense<0.000000e+00> : vector<16x128xf32>
    %60 = tpu.matmul %57, %59, %cst_48 {dimension_numbers = #tpu.dot_dimension_numbers<[1], [0], [0], [1], [0, 0, 1, 1], [], []>} : vector<16x512xbf16>, vector<512x128xbf16>, vector<16x128xf32> -> vector<16x128xf32>
    %61 = arith.addf %56, %60 : vector<16x128xf32>
    %62 = vector.extract_strided_slice %22 {offsets = [128, 0], sizes = [16, 512], strides = [1, 1]} : vector<224x512xbf16> to vector<16x512xbf16>
    %c8 = arith.constant 8 : index
    %c0_49 = arith.constant 0 : index
    %c0_50 = arith.constant 0 : index
    %63 = vector.load %arg4[%c8, %c0_49, %c0_50] : memref<14x512x128xbf16, #tpu.memory_space<vmem>>, vector<1x512x128xbf16>
    %64 = vector.shape_cast %63 : vector<1x512x128xbf16> to vector<512x128xbf16>
    %cst_51 = arith.constant dense<0.000000e+00> : vector<16x128xf32>
    %65 = tpu.matmul %62, %64, %cst_51 {dimension_numbers = #tpu.dot_dimension_numbers<[1], [0], [0], [1], [0, 0, 1, 1], [], []>} : vector<16x512xbf16>, vector<512x128xbf16>, vector<16x128xf32> -> vector<16x128xf32>
    %66 = arith.addf %61, %65 : vector<16x128xf32>
    %67 = vector.extract_strided_slice %22 {offsets = [144, 0], sizes = [16, 512], strides = [1, 1]} : vector<224x512xbf16> to vector<16x512xbf16>
    %c9 = arith.constant 9 : index
    %c0_52 = arith.constant 0 : index
    %c0_53 = arith.constant 0 : index
    %68 = vector.load %arg4[%c9, %c0_52, %c0_53] : memref<14x512x128xbf16, #tpu.memory_space<vmem>>, vector<1x512x128xbf16>
    %69 = vector.shape_cast %68 : vector<1x512x128xbf16> to vector<512x128xbf16>
    %cst_54 = arith.constant dense<0.000000e+00> : vector<16x128xf32>
    %70 = tpu.matmul %67, %69, %cst_54 {dimension_numbers = #tpu.dot_dimension_numbers<[1], [0], [0], [1], [0, 0, 1, 1], [], []>} : vector<16x512xbf16>, vector<512x128xbf16>, vector<16x128xf32> -> vector<16x128xf32>
    %71 = arith.addf %66, %70 : vector<16x128xf32>
    %72 = vector.extract_strided_slice %22 {offsets = [160, 0], sizes = [16, 512], strides = [1, 1]} : vector<224x512xbf16> to vector<16x512xbf16>
    %c10 = arith.constant 10 : index
    %c0_55 = arith.constant 0 : index
    %c0_56 = arith.constant 0 : index
    %73 = vector.load %arg4[%c10, %c0_55, %c0_56] : memref<14x512x128xbf16, #tpu.memory_space<vmem>>, vector<1x512x128xbf16>
    %74 = vector.shape_cast %73 : vector<1x512x128xbf16> to vector<512x128xbf16>
    %cst_57 = arith.constant dense<0.000000e+00> : vector<16x128xf32>
    %75 = tpu.matmul %72, %74, %cst_57 {dimension_numbers = #tpu.dot_dimension_numbers<[1], [0], [0], [1], [0, 0, 1, 1], [], []>} : vector<16x512xbf16>, vector<512x128xbf16>, vector<16x128xf32> -> vector<16x128xf32>
    %76 = arith.addf %71, %75 : vector<16x128xf32>
    %77 = vector.extract_strided_slice %22 {offsets = [176, 0], sizes = [16, 512], strides = [1, 1]} : vector<224x512xbf16> to vector<16x512xbf16>
    %c11 = arith.constant 11 : index
    %c0_58 = arith.constant 0 : index
    %c0_59 = arith.constant 0 : index
    %78 = vector.load %arg4[%c11, %c0_58, %c0_59] : memref<14x512x128xbf16, #tpu.memory_space<vmem>>, vector<1x512x128xbf16>
    %79 = vector.shape_cast %78 : vector<1x512x128xbf16> to vector<512x128xbf16>
    %cst_60 = arith.constant dense<0.000000e+00> : vector<16x128xf32>
    %80 = tpu.matmul %77, %79, %cst_60 {dimension_numbers = #tpu.dot_dimension_numbers<[1], [0], [0], [1], [0, 0, 1, 1], [], []>} : vector<16x512xbf16>, vector<512x128xbf16>, vector<16x128xf32> -> vector<16x128xf32>
    %81 = arith.addf %76, %80 : vector<16x128xf32>
    %82 = vector.extract_strided_slice %22 {offsets = [192, 0], sizes = [16, 512], strides = [1, 1]} : vector<224x512xbf16> to vector<16x512xbf16>
    %c12 = arith.constant 12 : index
    %c0_61 = arith.constant 0 : index
    %c0_62 = arith.constant 0 : index
    %83 = vector.load %arg4[%c12, %c0_61, %c0_62] : memref<14x512x128xbf16, #tpu.memory_space<vmem>>, vector<1x512x128xbf16>
    %84 = vector.shape_cast %83 : vector<1x512x128xbf16> to vector<512x128xbf16>
    %cst_63 = arith.constant dense<0.000000e+00> : vector<16x128xf32>
    %85 = tpu.matmul %82, %84, %cst_63 {dimension_numbers = #tpu.dot_dimension_numbers<[1], [0], [0], [1], [0, 0, 1, 1], [], []>} : vector<16x512xbf16>, vector<512x128xbf16>, vector<16x128xf32> -> vector<16x128xf32>
    %86 = arith.addf %81, %85 : vector<16x128xf32>
    %87 = vector.extract_strided_slice %22 {offsets = [208, 0], sizes = [16, 512], strides = [1, 1]} : vector<224x512xbf16> to vector<16x512xbf16>
    %c13 = arith.constant 13 : index
    %c0_64 = arith.constant 0 : index
    %c0_65 = arith.constant 0 : index
    %88 = vector.load %arg4[%c13, %c0_64, %c0_65] : memref<14x512x128xbf16, #tpu.memory_space<vmem>>, vector<1x512x128xbf16>
    %89 = vector.shape_cast %88 : vector<1x512x128xbf16> to vector<512x128xbf16>
    %cst_66 = arith.constant dense<0.000000e+00> : vector<16x128xf32>
    %90 = tpu.matmul %87, %89, %cst_66 {dimension_numbers = #tpu.dot_dimension_numbers<[1], [0], [0], [1], [0, 0, 1, 1], [], []>} : vector<16x512xbf16>, vector<512x128xbf16>, vector<16x128xf32> -> vector<16x128xf32>
    %91 = arith.addf %86, %90 : vector<16x128xf32>
    %c0_67 = arith.constant 0 : index
    %c0_68 = arith.constant 0 : index
    %92 = vector.load %arg5[%c0_67, %c0_68] : memref<1x128xf32, #tpu.memory_space<vmem>>, vector<1x128xf32>
    %93 = vector.broadcast %92 : vector<1x128xf32> to vector<16x128xf32>
    %94 = arith.addf %91, %93 : vector<16x128xf32>
    %cst_69 = arith.constant -6.000000e+01 : f32
    %cst_70 = arith.constant 6.000000e+01 : f32
    %95 = vector.broadcast %cst_69 : f32 to vector<16x128xf32>
    %96 = arith.maximumf %95, %94 : vector<16x128xf32>
    %97 = vector.broadcast %cst_70 : f32 to vector<16x128xf32>
    %98 = arith.minimumf %97, %96 : vector<16x128xf32>
    %cst_71 = arith.constant 0.000000e+00 : f32
    %99 = vector.broadcast %cst_71 : f32 to vector<16x128xf32>
    %100 = arith.subf %99, %98 : vector<16x128xf32>
    %101 = math.exp %100 : vector<16x128xf32>
    %cst_72 = arith.constant 1.000000e+00 : f32
    %102 = vector.broadcast %cst_72 : f32 to vector<16x128xf32>
    %103 = arith.addf %102, %101 : vector<16x128xf32>
    %104 = tpu.reciprocal %103 {approx = true} : vector<16x128xf32> -> vector<16x128xf32>
    %105 = arith.truncf %104 : vector<16x128xf32> to vector<16x128xbf16>
    %c0_73 = arith.constant 0 : index
    %c0_74 = arith.constant 0 : index
    %106 = vector.load %arg6[%c0_73, %c0_74] : memref<128x128xbf16, #tpu.memory_space<vmem>>, vector<128x128xbf16>
    %cst_75 = arith.constant dense<0.000000e+00> : vector<16x128xf32>
    %107 = tpu.matmul %105, %106, %cst_75 {dimension_numbers = #tpu.dot_dimension_numbers<[1], [0], [0], [1], [0, 0, 1, 1], [], []>} : vector<16x128xbf16>, vector<128x128xbf16>, vector<16x128xf32> -> vector<16x128xf32>
    %c0_76 = arith.constant 0 : index
    %c0_77 = arith.constant 0 : index
    %108 = vector.load %arg7[%c0_76, %c0_77] : memref<1x128xf32, #tpu.memory_space<vmem>>, vector<1x128xf32>
    %109 = vector.broadcast %108 : vector<1x128xf32> to vector<16x128xf32>
    %110 = arith.addf %107, %109 : vector<16x128xf32>
    %cst_78 = arith.constant dense<0xFF800000> : vector<16xf32>
    %111 = vector.multi_reduction <maximumf>, %110, %cst_78 [1] : vector<16x128xf32> to vector<16xf32>
    %112 = vector.shape_cast %111 : vector<16xf32> to vector<16x1xf32>
    %113 = vector.broadcast %112 : vector<16x1xf32> to vector<16x128xf32>
    %114 = arith.subf %110, %113 : vector<16x128xf32>
    %115 = math.exp %114 : vector<16x128xf32>
    %cst_79 = arith.constant dense<0.000000e+00> : vector<16xf32>
    %116 = vector.multi_reduction <add>, %115, %cst_79 [1] : vector<16x128xf32> to vector<16xf32>
    %117 = vector.shape_cast %116 : vector<16xf32> to vector<16x1xf32>
    %118 = math.log %117 : vector<16x1xf32>
    %119 = arith.addf %112, %118 : vector<16x1xf32>
    %120 = vector.broadcast %119 : vector<16x1xf32> to vector<16x128xf32>
    %121 = arith.subf %110, %120 : vector<16x128xf32>
    %c0_80 = arith.constant 0 : index
    %c0_81 = arith.constant 0 : index
    %122 = vector.load %arg8[%c0_80, %c0_81] : memref<16x128xf32, #tpu.memory_space<vmem>>, vector<16x128xf32>
    tpu.vector_store %arg8[%c0_80, %c0_81], %121 {strides = array<i32>} : memref<16x128xf32, #tpu.memory_space<vmem>>, vector<16x128xf32>,
    return
  }
  func.func @transform_0(%arg0: i32) -> (i32, i32, i32) {
    %c0_i32 = arith.constant 0 : i32
    %c0_i32_0 = arith.constant 0 : i32
    %c0_i32_1 = arith.constant 0 : i32
    return %arg0, %c0_i32, %c0_i32_0 : i32, i32, i32
  }
  func.func @transform_1(%arg0: i32) -> (i32, i32, i32, i32) {
    %c0_i32 = arith.constant 0 : i32
    %c0_i32_0 = arith.constant 0 : i32
    %c0_i32_1 = arith.constant 0 : i32
    %c0_i32_2 = arith.constant 0 : i32
    %c0_i32_3 = arith.constant 0 : i32
    return %c0_i32, %c0_i32_0, %c0_i32_1, %c0_i32_2 : i32, i32, i32, i32
  }
  func.func @transform_2(%arg0: i32) -> (i32, i32) {
    %c0_i32 = arith.constant 0 : i32
    %c0_i32_0 = arith.constant 0 : i32
    %c0_i32_1 = arith.constant 0 : i32
    return %c0_i32, %c0_i32_0 : i32, i32
  }
  func.func @transform_3(%arg0: i32) -> (i32, i32, i32) {
    %c0_i32 = arith.constant 0 : i32
    %c0_i32_0 = arith.constant 0 : i32
    %c0_i32_1 = arith.constant 0 : i32
    %c0_i32_2 = arith.constant 0 : i32
    return %c0_i32, %c0_i32_0, %c0_i32_1 : i32, i32, i32
  }
  func.func @transform_4(%arg0: i32) -> (i32, i32) {
    %c0_i32 = arith.constant 0 : i32
    %c0_i32_0 = arith.constant 0 : i32
    %c0_i32_1 = arith.constant 0 : i32
    return %c0_i32, %c0_i32_0 : i32, i32
  }
  func.func @transform_5(%arg0: i32) -> (i32, i32) {
    %c0_i32 = arith.constant 0 : i32
    %c0_i32_0 = arith.constant 0 : i32
    %c0_i32_1 = arith.constant 0 : i32
    return %c0_i32, %c0_i32_0 : i32, i32
  }
  func.func @transform_6(%arg0: i32) -> (i32, i32) {
    %c0_i32 = arith.constant 0 : i32
    %c0_i32_0 = arith.constant 0 : i32
    %c0_i32_1 = arith.constant 0 : i32
    return %c0_i32, %c0_i32_0 : i32, i32
  }
  func.func @transform_7(%arg0: i32) -> (i32, i32) {
    %c0_i32 = arith.constant 0 : i32
    %c0_i32_0 = arith.constant 0 : i32
    return %arg0, %c0_i32 : i32, i32
  }
}

</mosaic_0001>

<llo_original>
// kernel: convnn_forward.1
$region0: #{convnn_forward.1}
  #allocation0 [shape = 'u32[]', space=smem, size = 0x4, offset = 0x4, fixed_abs, tag = 'smem constant byte address 0x4 - core index']
  #allocation1 [shape = 'u32[144,128]{1,0:T(1,128)}', space=vmem, size = 0x12000, scoped, tag = 'internal scratch']
  %s0 = inlined_call_operand.vmem [shape: bf16[1,224,192], index: 0, kind: input, shape index: {}]
  %s1 = inlined_call_operand.hbm [shape: bf16[2,2,192,512], index: 1, kind: input, shape index: {}]
  %s2 = inlined_call_operand.vmem [shape: f32[1,512], index: 2, kind: input, shape index: {}]
  %s3 = inlined_call_operand.vmem [shape: bf16[14,512,128], index: 3, kind: input, shape index: {}]
  %s4 = inlined_call_operand.vmem [shape: f32[1,128], index: 4, kind: input, shape index: {}]
  %s5 = inlined_call_operand.vmem [shape: bf16[128,128], index: 5, kind: input, shape index: {}]
  %s6 = inlined_call_operand.vmem [shape: f32[1,128], index: 6, kind: input, shape index: {}]
  %s7 = inlined_call_operand.vmem [shape: f32[16,128], index: 7, kind: output, shape index: {}]
  %s8 = sld [smem:[#allocation0]]
  $region42: #{convnn_forward.1} parent=0
    _
  %s10 = ssub.s32 1, %s8
  %s11 = scalar_select 0, %s10, %s8
  $region1: #{convnn_forward.1} parent=0
    #allocation2 [shape = 'u8[786432]{0}', space=vmem, size = 0xc0000, scoped, tag = 'input window, operand 1, single buffered']
    #allocation3 [shape = 's32[1]{0}', space=sflag, size = 0x4, scoped, tag = 'scoped memory for convnn_forward.1']
    %12 = vsyncpa [#allocation3], 0
    // Predicated region
    $region2: #{convnn_forward.1} parent=1 // pred_check
      _
    $region3: #{convnn_forward.1} parent=1 // pred_check_branch
      %14 = sbr.rel (0) target = $region5
    $region4: #{convnn_forward.1} parent=1 // pred_region
      _
    $region5: #{convnn_forward.1} parent=1 // pred_fallthru
      _
    // Predicated region
    $region6: #{convnn_forward.1} parent=1 // pred_check
      _
    $region7: #{convnn_forward.1} parent=1 // pred_check_branch
      %16 = sbr.rel (0) target = $region9
    $region8: #{convnn_forward.1} parent=1 // pred_region
      %s18 = ssub.s32 24576, 24576
      %19 = vsyncadd [#allocation3], %s18
      %s20 = sshll.u32 [#allocation2], 4
      %s21 = int_to_ptr.vmem [resolvable:$true] %s20
      %26 = dma.hbm_to_vmem [thread:$0]  %s1, 24576, %s21, [#allocation3], 256, 256, 16
    $region9: #{convnn_forward.1} parent=1 // pred_fallthru
      _
    // Predicated region
    $region10: #{convnn_forward.1} parent=1 // pred_check
      _
    $region11: #{convnn_forward.1} parent=1 // pred_check_branch
      %28 = sbr.rel (0) target = $region13
    $region12: #{convnn_forward.1} parent=1 // pred_region
      _
    $region13: #{convnn_forward.1} parent=1 // pred_fallthru
      _
    // Predicated region
    $region14: #{convnn_forward.1} parent=1 // pred_check
      _
    $region15: #{convnn_forward.1} parent=1 // pred_check_branch
      %30 = sbr.rel (0) target = $region17
    $region16: #{convnn_forward.1} parent=1 // pred_region
      _
    $region17: #{convnn_forward.1} parent=1 // pred_fallthru
      _
    // Predicated region
    $region18: #{convnn_forward.1} parent=1 // pred_check
      _
    $region19: #{convnn_forward.1} parent=1 // pred_check_branch
      %32 = sbr.rel (0) target = $region21
    $region20: #{convnn_forward.1} parent=1 // pred_region
      _
    $region21: #{convnn_forward.1} parent=1 // pred_fallthru
      _
    // Predicated region
    $region22: #{convnn_forward.1} parent=1 // pred_check
      _
    $region23: #{convnn_forward.1} parent=1 // pred_check_branch
      %34 = sbr.rel (0) target = $region25
    $region24: #{convnn_forward.1} parent=1 // pred_region
      _
    $region25: #{convnn_forward.1} parent=1 // pred_fallthru
      _
    // Predicated region
    $region26: #{convnn_forward.1} parent=1 // pred_check
      _
    $region27: #{convnn_forward.1} parent=1 // pred_check_branch
      %36 = sbr.rel (0) target = $region29
    $region28: #{convnn_forward.1} parent=1 // pred_region
      _
    $region29: #{convnn_forward.1} parent=1 // pred_fallthru
      _
    // Predicated region
    $region30: #{convnn_forward.1} parent=1 // pred_check
      _
    $region31: #{convnn_forward.1} parent=1 // pred_check_branch
      %38 = sbr.rel (0) target = $region33
    $region32: #{convnn_forward.1} parent=1 // pred_region
      %39 = dma.done [#allocation3], 24576
    $region33: #{convnn_forward.1} parent=1 // pred_fallthru
      _
    %v41 = vld [vmem:[%s0] sm:$0xff]
    %v42 = vld [vmem:[%s0 + $0x8] sm:$0xff]
    %v43 = vld [vmem:[%s0 + $0x10] sm:$0xff]
    %v44 = vld [vmem:[%s0 + $0x18] sm:$0xff]
    %v45 = vld [vmem:[%s0 + $0x20] sm:$0xff]
    %v46 = vld [vmem:[%s0 + $0x28] sm:$0xff]
    %v47 = vld [vmem:[%s0 + $0x30] sm:$0xff]
    %v48 = vld [vmem:[%s0 + $0x38] sm:$0xff]
    %v49 = vld [vmem:[%s0 + $0x40] sm:$0xff]
    %v50 = vld [vmem:[%s0 + $0x48] sm:$0xff]
    %v51 = vld [vmem:[%s0 + $0x50] sm:$0xff]
    %v52 = vld [vmem:[%s0 + $0x58] sm:$0xff]
    %v53 = vld [vmem:[%s0 + $0x60] sm:$0xff]
    %v54 = vld [vmem:[%s0 + $0x68] sm:$0xff]
    %v55 = vld [vmem:[%s0 + $0x70] sm:$0xff]
    %v56 = vld [vmem:[%s0 + $0x78] sm:$0xff]
    %v57 = vld [vmem:[%s0 + $0x80] sm:$0xff]
    %v58 = vld [vmem:[%s0 + $0x88] sm:$0xff]
    %v59 = vld [vmem:[%s0 + $0x90] sm:$0xff]
    %v60 = vld [vmem:[%s0 + $0x98] sm:$0xff]
    %v61 = vld [vmem:[%s0 + $0xa0] sm:$0xff]
    %v62 = vld [vmem:[%s0 + $0xa8] sm:$0xff]
    %v63 = vld [vmem:[%s0 + $0xb0] sm:$0xff]
    %v64 = vld [vmem:[%s0 + $0xb8] sm:$0xff]
    %v65 = vld [vmem:[%s0 + $0xc0] sm:$0xff]
    %v66 = vld [vmem:[%s0 + $0xc8] sm:$0xff]
    %v67 = vld [vmem:[%s0 + $0xd0] sm:$0xff]
    %v68 = vld [vmem:[%s0 + $0xd8] sm:$0xff]
    %v69 = vld [vmem:[#allocation2] sm:$0xff]
    %v70 = vld [vmem:[#allocation2 + $0x8] sm:$0xff]
    %v71 = vld [vmem:[#allocation2 + $0x10] sm:$0xff]
    %v72 = vld [vmem:[#allocation2 + $0x18] sm:$0xff]
    %v73 = vld [vmem:[#allocation2 + $0x20] sm:$0xff]
    %v74 = vld [vmem:[#allocation2 + $0x28] sm:$0xff]
    %v75 = vld [vmem:[#allocation2 + $0x30] sm:$0xff]
    %v76 = vld [vmem:[#allocation2 + $0x38] sm:$0xff]
    %v77 = vld [vmem:[#allocation2 + $0x40] sm:$0xff]
    %v78 = vld [vmem:[#allocation2 + $0x48] sm:$0xff]
    %v79 = vld [vmem:[#allocation2 + $0x50] sm:$0xff]
    %v80 = vld [vmem:[#allocation2 + $0x58] sm:$0xff]
    %v81 = vld [vmem:[#allocation2 + $0x60] sm:$0xff]
    %v82 = vld [vmem:[#allocation2 + $0x68] sm:$0xff]
    %v83 = vld [vmem:[#allocation2 + $0x70] sm:$0xff]
    %v84 = vld [vmem:[#allocation2 + $0x78] sm:$0xff]
    %v85 = vld [vmem:[#allocation2 + $0x80] sm:$0xff]
    %v86 = vld [vmem:[#allocation2 + $0x88] sm:$0xff]
    %v87 = vld [vmem:[#allocation2 + $0x90] sm:$0xff]
    %v88 = vld [vmem:[#allocation2 + $0x98] sm:$0xff]
    %v89 = vld [vmem:[#allocation2 + $0xa0] sm:$0xff]
    %v90 = vld [vmem:[#allocation2 + $0xa8] sm:$0xff]
    %v91 = vld [vmem:[#allocation2 + $0xb0] sm:$0xff]
    %v92 = vld [vmem:[#allocation2 + $0xb8] sm:$0xff]
    %v93 = vld [vmem:[#allocation2 + $0xc0] sm:$0xff]
    %v94 = vld [vmem:[#allocation2 + $0xc8] sm:$0xff]
    %v95 = vld [vmem:[#allocation2 + $0xd0] sm:$0xff]
    %v96 = vld [vmem:[#allocation2 + $0xd8] sm:$0xff]
    %v97 = vld [vmem:[#allocation2 + $0xe0] sm:$0xff]
    %v98 = vld [vmem:[#allocation2 + $0xe8] sm:$0xff]
    %v99 = vld [vmem:[#allocation2 + $0xf0] sm:$0xff]
    %v100 = vld [vmem:[#allocation2 + $0xf8] sm:$0xff]
    %v101 = vld [vmem:[#allocation2 + $0x100] sm:$0xff]
    %v102 = vld [vmem:[#allocation2 + $0x108] sm:$0xff]
    %v103 = vld [vmem:[#allocation2 + $0x110] sm:$0xff]
    %v104 = vld [vmem:[#allocation2 + $0x118] sm:$0xff]
    %v105 = vld [vmem:[#allocation2 + $0x120] sm:$0xff]
    %v106 = vld [vmem:[#allocation2 + $0x128] sm:$0xff]
    %v107 = vld [vmem:[#allocation2 + $0x130] sm:$0xff]
    %v108 = vld [vmem:[#allocation2 + $0x138] sm:$0xff]
    %v109 = vld [vmem:[#allocation2 + $0x140] sm:$0xff]
    %v110 = vld [vmem:[#allocation2 + $0x148] sm:$0xff]
    %v111 = vld [vmem:[#allocation2 + $0x150] sm:$0xff]
    %v112 = vld [vmem:[#allocation2 + $0x158] sm:$0xff]
    %v113 = vld [vmem:[#allocation2 + $0x160] sm:$0xff]
    %v114 = vld [vmem:[#allocation2 + $0x168] sm:$0xff]
    %v115 = vld [vmem:[#allocation2 + $0x170] sm:$0xff]
    %v116 = vld [vmem:[#allocation2 + $0x178] sm:$0xff]
    %v145 = vunpack.c.l.b16 %v41
    %v146 = vunpack.c.h.b16 %v41
    %v147 = vunpack.c.l.b16 %v42
    %v148 = vunpack.c.h.b16 %v42
    %v149 = vunpack.c.l.b16 %v43
    %v150 = vunpack.c.h.b16 %v43
    %v151 = vunpack.c.l.b16 %v44
    %v152 = vunpack.c.h.b16 %v44
    %v153 = vunpack.c.l.b16 %v45
    %v154 = vunpack.c.h.b16 %v45
    %v155 = vunpack.c.l.b16 %v46
    %v156 = vunpack.c.h.b16 %v46
    %v157 = vunpack.c.l.b16 %v47
    %v158 = vunpack.c.h.b16 %v47
    %v159 = vunpack.c.l.b16 %v48
    %v160 = vunpack.c.h.b16 %v48
    %v161 = vunpack.c.l.b16 %v49
    %v162 = vunpack.c.h.b16 %v49
    %v163 = vunpack.c.l.b16 %v50
    %v164 = vunpack.c.h.b16 %v50
    %v165 = vunpack.c.l.b16 %v51
    %v166 = vunpack.c.h.b16 %v51
    %v167 = vunpack.c.l.b16 %v52
    %v168 = vunpack.c.h.b16 %v52
    %v169 = vunpack.c.l.b16 %v53
    %v170 = vunpack.c.h.b16 %v53
    %v171 = vunpack.c.l.b16 %v54
    %v172 = vunpack.c.h.b16 %v54
    %v173 = vunpack.c.l.b16 %v55
    %v174 = vunpack.c.h.b16 %v55
    %v175 = vunpack.c.l.b16 %v56
    %v176 = vunpack.c.h.b16 %v56
    %v177 = vunpack.c.l.b16 %v57
    %v178 = vunpack.c.h.b16 %v57
    %v179 = vunpack.c.l.b16 %v58
    %v180 = vunpack.c.h.b16 %v58
    %v181 = vunpack.c.l.b16 %v59
    %v182 = vunpack.c.h.b16 %v59
    %v183 = vunpack.c.l.b16 %v60
    %v184 = vunpack.c.h.b16 %v60
    %v185 = vunpack.c.l.b16 %v61
    %v186 = vunpack.c.h.b16 %v61
    %v187 = vunpack.c.l.b16 %v62
    %v188 = vunpack.c.h.b16 %v62
    %v189 = vunpack.c.l.b16 %v63
    %v190 = vunpack.c.h.b16 %v63
    %v191 = vunpack.c.l.b16 %v64
    %v192 = vunpack.c.h.b16 %v64
    %v193 = vunpack.c.l.b16 %v65
    %v194 = vunpack.c.h.b16 %v65
    %v195 = vunpack.c.l.b16 %v66
    %v196 = vunpack.c.h.b16 %v66
    %v197 = vunpack.c.l.b16 %v67
    %v198 = vunpack.c.h.b16 %v67
    %v199 = vunpack.c.l.b16 %v68
    %v200 = vunpack.c.h.b16 %v68
    %v201 = vpack.c.b16 %v147, %v145
    %v202 = vpack.c.b16 %v148, %v146
    %v203 = vpack.c.b16 %v151, %v149
    %v204 = vpack.c.b16 %v152, %v150
    %v205 = vpack.c.b16 %v155, %v153
    %v206 = vpack.c.b16 %v156, %v154
    %v207 = vpack.c.b16 %v159, %v157
    %v208 = vpack.c.b16 %v160, %v158
    %v209 = vpack.c.b16 %v163, %v161
    %v210 = vpack.c.b16 %v164, %v162
    %v211 = vpack.c.b16 %v167, %v165
    %v212 = vpack.c.b16 %v168, %v166
    %v213 = vpack.c.b16 %v171, %v169
    %v214 = vpack.c.b16 %v172, %v170
    %v215 = vpack.c.b16 %v175, %v173
    %v216 = vpack.c.b16 %v176, %v174
    %v217 = vpack.c.b16 %v179, %v177
    %v218 = vpack.c.b16 %v180, %v178
    %v219 = vpack.c.b16 %v183, %v181
    %v220 = vpack.c.b16 %v184, %v182
    %v221 = vpack.c.b16 %v187, %v185
    %v222 = vpack.c.b16 %v188, %v186
    %v223 = vpack.c.b16 %v191, %v189
    %v224 = vpack.c.b16 %v192, %v190
    %v225 = vpack.c.b16 %v195, %v193
    %v226 = vpack.c.b16 %v196, %v194
    %v227 = vpack.c.b16 %v199, %v197
    %v228 = vpack.c.b16 %v200, %v198
    %v291 = vunpack.c.l.b16 %v69
    %v292 = vunpack.c.h.b16 %v69
    %v293 = vunpack.c.l.b16 %v70
    %v294 = vunpack.c.h.b16 %v70
    %v295 = vunpack.c.l.b16 %v71
    %v296 = vunpack.c.h.b16 %v71
    %v297 = vunpack.c.l.b16 %v72
    %v298 = vunpack.c.h.b16 %v72
    %v299 = vunpack.c.l.b16 %v73
    %v300 = vunpack.c.h.b16 %v73
    %v301 = vunpack.c.l.b16 %v74
    %v302 = vunpack.c.h.b16 %v74
    %v303 = vunpack.c.l.b16 %v75
    %v304 = vunpack.c.h.b16 %v75
    %v305 = vunpack.c.l.b16 %v76
    %v306 = vunpack.c.h.b16 %v76
    %v307 = vunpack.c.l.b16 %v77
    %v308 = vunpack.c.h.b16 %v77
    %v309 = vunpack.c.l.b16 %v78
    %v310 = vunpack.c.h.b16 %v78
    %v311 = vunpack.c.l.b16 %v79
    %v312 = vunpack.c.h.b16 %v79
    %v313 = vunpack.c.l.b16 %v80
    %v314 = vunpack.c.h.b16 %v80
    %v315 = vunpack.c.l.b16 %v81
    %v316 = vunpack.c.h.b16 %v81
    %v317 = vunpack.c.l.b16 %v82
    %v318 = vunpack.c.h.b16 %v82
    %v319 = vunpack.c.l.b16 %v83
    %v320 = vunpack.c.h.b16 %v83
    %v321 = vunpack.c.l.b16 %v84
    %v322 = vunpack.c.h.b16 %v84
    %v323 = vunpack.c.l.b16 %v85
    %v324 = vunpack.c.h.b16 %v85
    %v325 = vunpack.c.l.b16 %v86
    %v326 = vunpack.c.h.b16 %v86
    %v327 = vunpack.c.l.b16 %v87
    %v328 = vunpack.c.h.b16 %v87
    %v329 = vunpack.c.l.b16 %v88
    %v330 = vunpack.c.h.b16 %v88
    %v331 = vunpack.c.l.b16 %v89
    %v332 = vunpack.c.h.b16 %v89
    %v333 = vunpack.c.l.b16 %v90
    %v334 = vunpack.c.h.b16 %v90
    %v335 = vunpack.c.l.b16 %v91
    %v336 = vunpack.c.h.b16 %v91
    %v337 = vunpack.c.l.b16 %v92
    %v338 = vunpack.c.h.b16 %v92
    %v339 = vunpack.c.l.b16 %v93
    %v340 = vunpack.c.h.b16 %v93
    %v341 = vunpack.c.l.b16 %v94
    %v342 = vunpack.c.h.b16 %v94
    %v343 = vunpack.c.l.b16 %v95
    %v344 = vunpack.c.h.b16 %v95
    %v345 = vunpack.c.l.b16 %v96
    %v346 = vunpack.c.h.b16 %v96
    %v347 = vunpack.c.l.b16 %v97
    %v348 = vunpack.c.h.b16 %v97
    %v349 = vunpack.c.l.b16 %v98
    %v350 = vunpack.c.h.b16 %v98
    %v351 = vunpack.c.l.b16 %v99
    %v352 = vunpack.c.h.b16 %v99
    %v353 = vunpack.c.l.b16 %v100
    %v354 = vunpack.c.h.b16 %v100
    %v355 = vunpack.c.l.b16 %v101
    %v356 = vunpack.c.h.b16 %v101
    %v357 = vunpack.c.l.b16 %v102
    %v358 = vunpack.c.h.b16 %v102
    %v359 = vunpack.c.l.b16 %v103
    %v360 = vunpack.c.h.b16 %v103
    %v361 = vunpack.c.l.b16 %v104
    %v362 = vunpack.c.h.b16 %v104
    %v363 = vunpack.c.l.b16 %v105
    %v364 = vunpack.c.h.b16 %v105
    %v365 = vunpack.c.l.b16 %v106
    %v366 = vunpack.c.h.b16 %v106
    %v367 = vunpack.c.l.b16 %v107
    %v368 = vunpack.c.h.b16 %v107
    %v369 = vunpack.c.l.b16 %v108
    %v370 = vunpack.c.h.b16 %v108
    %v371 = vunpack.c.l.b16 %v109
    %v372 = vunpack.c.h.b16 %v109
    %v373 = vunpack.c.l.b16 %v110
    %v374 = vunpack.c.h.b16 %v110
    %v375 = vunpack.c.l.b16 %v111
    %v376 = vunpack.c.h.b16 %v111
    %v377 = vunpack.c.l.b16 %v112
    %v378 = vunpack.c.h.b16 %v112
    %v379 = vunpack.c.l.b16 %v113
    %v380 = vunpack.c.h.b16 %v113
    %v381 = vunpack.c.l.b16 %v114
    %v382 = vunpack.c.h.b16 %v114
    %v383 = vunpack.c.l.b16 %v115
    %v384 = vunpack.c.h.b16 %v115
    %v385 = vunpack.c.l.b16 %v116
    %v386 = vunpack.c.h.b16 %v116
    %v387 = vpack.c.b16 %v295, %v291
    %v388 = vpack.c.b16 %v296, %v292
    %v389 = vpack.c.b16 %v297, %v293
    %v390 = vpack.c.b16 %v298, %v294
    %v391 = vpack.c.b16 %v303, %v299
    %v392 = vpack.c.b16 %v304, %v300
    %v393 = vpack.c.b16 %v305, %v301
    %v394 = vpack.c.b16 %v306, %v302
    %v395 = vpack.c.b16 %v311, %v307
    %v396 = vpack.c.b16 %v312, %v308
    %v397 = vpack.c.b16 %v313, %v309
    %v398 = vpack.c.b16 %v314, %v310
    %v399 = vpack.c.b16 %v319, %v315
    %v400 = vpack.c.b16 %v320, %v316
    %v401 = vpack.c.b16 %v321, %v317
    %v402 = vpack.c.b16 %v322, %v318
    %v403 = vpack.c.b16 %v327, %v323
    %v404 = vpack.c.b16 %v328, %v324
    %v405 = vpack.c.b16 %v329, %v325
    %v406 = vpack.c.b16 %v330, %v326
    %v407 = vpack.c.b16 %v335, %v331
    %v408 = vpack.c.b16 %v336, %v332
    %v409 = vpack.c.b16 %v337, %v333
    %v410 = vpack.c.b16 %v338, %v334
    %v411 = vpack.c.b16 %v343, %v339
    %v412 = vpack.c.b16 %v344, %v340
    %v413 = vpack.c.b16 %v345, %v341
    %v414 = vpack.c.b16 %v346, %v342
    %v415 = vpack.c.b16 %v351, %v347
    %v416 = vpack.c.b16 %v352, %v348
    %v417 = vpack.c.b16 %v353, %v349
    %v418 = vpack.c.b16 %v354, %v350
    %v419 = vpack.c.b16 %v359, %v355
    %v420 = vpack.c.b16 %v360, %v356
    %v421 = vpack.c.b16 %v361, %v357
    %v422 = vpack.c.b16 %v362, %v358
    %v423 = vpack.c.b16 %v367, %v363
    %v424 = vpack.c.b16 %v368, %v364
    %v425 = vpack.c.b16 %v369, %v365
    %v426 = vpack.c.b16 %v370, %v366
    %v427 = vpack.c.b16 %v375, %v371
    %v428 = vpack.c.b16 %v376, %v372
    %v429 = vpack.c.b16 %v377, %v373
    %v430 = vpack.c.b16 %v378, %v374
    %v431 = vpack.c.b16 %v383, %v379
    %v432 = vpack.c.b16 %v384, %v380
    %v433 = vpack.c.b16 %v385, %v381
    %v434 = vpack.c.b16 %v386, %v382
    %vm483 = vcmask 523264
    %v485 = vsel %vm483, %v202, 0
    %v488 = vsel %vm483, %v204, 0
    %v491 = vsel %vm483, %v206, 0
    %v494 = vsel %vm483, %v208, 0
    %v497 = vsel %vm483, %v210, 0
    %v500 = vsel %vm483, %v212, 0
    %v503 = vsel %vm483, %v214, 0
    %v506 = vsel %vm483, %v216, 0
    %v509 = vsel %vm483, %v218, 0
    %v512 = vsel %vm483, %v220, 0
    %v515 = vsel %vm483, %v222, 0
    %v518 = vsel %vm483, %v224, 0
    %v521 = vsel %vm483, %v226, 0
    %v524 = vsel %vm483, %v228, 0
    %526 = vmatprep.subr.bf16.mxu0 %v388
    %527 = vmatpush1.bf16.msra.mxu0 %v387
    %528 = vmatprep.subr.bf16.mxu0 %v392
    %529 = vmatpush1.bf16.msra.mxu0 %v391
    %530 = vmatprep.subr.bf16.mxu0 %v396
    %531 = vmatpush1.bf16.msra.mxu0 %v395
    %532 = vmatprep.subr.bf16.mxu0 %v400
    %533 = vmatpush1.bf16.msra.mxu0 %v399
    %534 = vmatprep.subr.bf16.mxu0 %v404
    %535 = vmatpush1.bf16.msra.mxu0 %v403
    %536 = vmatprep.subr.bf16.mxu0 %v408
    %537 = vmatpush1.bf16.msra.mxu0 %v407
    %538 = vmatprep.subr.bf16.mxu0 %v412
    %539 = vmatpush1.bf16.msra.mxu0 %v411
    %540 = vmatprep.subr.bf16.mxu0 %v416
    %541 = vmatpush1.bf16.msra.mxu0 %v415
    %542 = vmatprep.subr.bf16.mxu0 %v420
    %543 = vmatpush1.bf16.msra.mxu0 %v419
    %544 = vmatprep.subr.bf16.mxu0 %v424
    %545 = vmatpush1.bf16.msra.mxu0 %v423
    %546 = vmatprep.subr.bf16.mxu0 %v428
    %547 = vmatpush1.bf16.msra.mxu0 %v427
    %548 = vmatprep.subr.bf16.mxu0 %v432
    %549 = vmatpush1.bf16.msra.mxu0 %v431
    %550 = vmatprep.subr.bf16.mxu0 0
    %551 = vmatpush1.bf16.msra.mxu0 0
    %552 = vmatprep.subr.bf16.mxu0 0
    %553 = vmatpush1.bf16.msra.mxu0 0
    %554 = vmatprep.subr.bf16.mxu0 0
    %555 = vmatpush1.bf16.msra.mxu0 0
    %556 = vmatprep.subr.bf16.mxu0 0
    %557 = vmatpush1.bf16.msra.mxu0 0
    %558 = vmatprep.mubr.bf16.mxu0 %v485
    %559 = vmatmul.mubr.bf16.gmra.mrb[0].mxu0 %v201
    %v560 = vpop.f32.mrb[0].mxu0
    %v561 = vadd.f32 0.0, %v560
    %v562 = vpop.f32.mrb[0].mxu0
    %v563 = vadd.f32 0.0, %v562
    %v564 = vpop.f32.mrb[0].mxu0
    %v565 = vadd.f32 0.0, %v564
    %v566 = vpop.f32.mrb[0].mxu0
    %v567 = vadd.f32 0.0, %v566
    %568 = vmatprep.mubr.bf16.mxu0 %v488
    %569 = vmatmul.mubr.bf16.gmra.mrb[0].mxu0 %v203
    %v570 = vpop.f32.mrb[0].mxu0
    %v571 = vadd.f32 0.0, %v570
    %v572 = vpop.f32.mrb[0].mxu0
    %v573 = vadd.f32 0.0, %v572
    %v574 = vpop.f32.mrb[0].mxu0
    %v575 = vadd.f32 0.0, %v574
    %v576 = vpop.f32.mrb[0].mxu0
    %v577 = vadd.f32 0.0, %v576
    %578 = vmatprep.mubr.bf16.mxu0 %v491
    %579 = vmatmul.mubr.bf16.gmra.mrb[0].mxu0 %v205
    %v580 = vpop.f32.mrb[0].mxu0
    %v581 = vadd.f32 0.0, %v580
    %v582 = vpop.f32.mrb[0].mxu0
    %v583 = vadd.f32 0.0, %v582
    %v584 = vpop.f32.mrb[0].mxu0
    %v585 = vadd.f32 0.0, %v584
    %v586 = vpop.f32.mrb[0].mxu0
    %v587 = vadd.f32 0.0, %v586
    %588 = vmatprep.mubr.bf16.mxu0 %v494
    %589 = vmatmul.mubr.bf16.gmra.mrb[0].mxu0 %v207
    %v590 = vpop.f32.mrb[0].mxu0
    %v591 = vadd.f32 0.0, %v590
    %v592 = vpop.f32.mrb[0].mxu0
    %v593 = vadd.f32 0.0, %v592
    %v594 = vpop.f32.mrb[0].mxu0
    %v595 = vadd.f32 0.0, %v594
    %v596 = vpop.f32.mrb[0].mxu0
    %v597 = vadd.f32 0.0, %v596
    %598 = vmatprep.mubr.bf16.mxu0 %v497
    %599 = vmatmul.mubr.bf16.gmra.mrb[0].mxu0 %v209
    %v600 = vpop.f32.mrb[0].mxu0
    %v601 = vadd.f32 0.0, %v600
    %v602 = vpop.f32.mrb[0].mxu0
    %v603 = vadd.f32 0.0, %v602
    %v604 = vpop.f32.mrb[0].mxu0
    %v605 = vadd.f32 0.0, %v604
    %v606 = vpop.f32.mrb[0].mxu0
    %v607 = vadd.f32 0.0, %v606
    %608 = vmatprep.mubr.bf16.mxu0 %v500
    %609 = vmatmul.mubr.bf16.gmra.mrb[0].mxu0 %v211
    %v610 = vpop.f32.mrb[0].mxu0
    %v611 = vadd.f32 0.0, %v610
    %v612 = vpop.f32.mrb[0].mxu0
    %v613 = vadd.f32 0.0, %v612
    %v614 = vpop.f32.mrb[0].mxu0
    %v615 = vadd.f32 0.0, %v614
    %v616 = vpop.f32.mrb[0].mxu0
    %v617 = vadd.f32 0.0, %v616
    %618 = vmatprep.mubr.bf16.mxu0 %v503
    %619 = vmatmul.mubr.bf16.gmra.mrb[0].mxu0 %v213
    %v620 = vpop.f32.mrb[0].mxu0
    %v621 = vadd.f32 0.0, %v620
    %v622 = vpop.f32.mrb[0].mxu0
    %v623 = vadd.f32 0.0, %v622
    %v624 = vpop.f32.mrb[0].mxu0
    %v625 = vadd.f32 0.0, %v624
    %v626 = vpop.f32.mrb[0].mxu0
    %v627 = vadd.f32 0.0, %v626
    %628 = vmatprep.mubr.bf16.mxu0 %v506
    %629 = vmatmul.mubr.bf16.gmra.mrb[0].mxu0 %v215
    %v630 = vpop.f32.mrb[0].mxu0
    %v631 = vadd.f32 0.0, %v630
    %v632 = vpop.f32.mrb[0].mxu0
    %v633 = vadd.f32 0.0, %v632
    %v634 = vpop.f32.mrb[0].mxu0
    %v635 = vadd.f32 0.0, %v634
    %v636 = vpop.f32.mrb[0].mxu0
    %v637 = vadd.f32 0.0, %v636
    %638 = vmatprep.mubr.bf16.mxu0 %v509
    %639 = vmatmul.mubr.bf16.gmra.mrb[0].mxu0 %v217
    %v640 = vpop.f32.mrb[0].mxu0
    %v641 = vadd.f32 0.0, %v640
    %v642 = vpop.f32.mrb[0].mxu0
    %v643 = vadd.f32 0.0, %v642
    %v644 = vpop.f32.mrb[0].mxu0
    %v645 = vadd.f32 0.0, %v644
    %v646 = vpop.f32.mrb[0].mxu0
    %v647 = vadd.f32 0.0, %v646
    %648 = vmatprep.mubr.bf16.mxu0 %v512
    %649 = vmatmul.mubr.bf16.gmra.mrb[0].mxu0 %v219
    %v650 = vpop.f32.mrb[0].mxu0
    %v651 = vadd.f32 0.0, %v650
    %v652 = vpop.f32.mrb[0].mxu0
    %v653 = vadd.f32 0.0, %v652
    %v654 = vpop.f32.mrb[0].mxu0
    %v655 = vadd.f32 0.0, %v654
    %v656 = vpop.f32.mrb[0].mxu0
    %v657 = vadd.f32 0.0, %v656
    %658 = vmatprep.mubr.bf16.mxu0 %v515
    %659 = vmatmul.mubr.bf16.gmra.mrb[0].mxu0 %v221
    %v660 = vpop.f32.mrb[0].mxu0
    %v661 = vadd.f32 0.0, %v660
    %v662 = vpop.f32.mrb[0].mxu0
    %v663 = vadd.f32 0.0, %v662
    %v664 = vpop.f32.mrb[0].mxu0
    %v665 = vadd.f32 0.0, %v664
    %v666 = vpop.f32.mrb[0].mxu0
    %v667 = vadd.f32 0.0, %v666
    %668 = vmatprep.mubr.bf16.mxu0 %v518
    %669 = vmatmul.mubr.bf16.gmra.mrb[0].mxu0 %v223
    %v670 = vpop.f32.mrb[0].mxu0
    %v671 = vadd.f32 0.0, %v670
    %v672 = vpop.f32.mrb[0].mxu0
    %v673 = vadd.f32 0.0, %v672
    %v674 = vpop.f32.mrb[0].mxu0
    %v675 = vadd.f32 0.0, %v674
    %v676 = vpop.f32.mrb[0].mxu0
    %v677 = vadd.f32 0.0, %v676
    %678 = vmatprep.mubr.bf16.mxu0 %v521
    %679 = vmatmul.mubr.bf16.gmra.mrb[0].mxu0 %v225
    %v680 = vpop.f32.mrb[0].mxu0
    %v681 = vadd.f32 0.0, %v680
    %v682 = vpop.f32.mrb[0].mxu0
    %v683 = vadd.f32 0.0, %v682
    %v684 = vpop.f32.mrb[0].mxu0
    %v685 = vadd.f32 0.0, %v684
    %v686 = vpop.f32.mrb[0].mxu0
    %v687 = vadd.f32 0.0, %v686
    %688 = vmatprep.mubr.bf16.mxu0 %v524
    %689 = vmatmul.mubr.bf16.gmra.mrb[0].mxu0 %v227
    %v690 = vpop.f32.mrb[0].mxu0
    %v691 = vadd.f32 0.0, %v690
    %v692 = vpop.f32.mrb[0].mxu0
    %v693 = vadd.f32 0.0, %v692
    %v694 = vpop.f32.mrb[0].mxu0
    %v695 = vadd.f32 0.0, %v694
    %v696 = vpop.f32.mrb[0].mxu0
    %v697 = vadd.f32 0.0, %v696
    %698 = vdwg.mxu0
    %699 = vmatprep.subr.bf16.mxu0 %v390
    %700 = vmatpush1.bf16.msra.mxu0 %v389
    %701 = vmatprep.subr.bf16.mxu0 %v394
    %702 = vmatpush1.bf16.msra.mxu0 %v393
    %703 = vmatprep.subr.bf16.mxu0 %v398
    %704 = vmatpush1.bf16.msra.mxu0 %v397
    %705 = vmatprep.subr.bf16.mxu0 %v402
    %706 = vmatpush1.bf16.msra.mxu0 %v401
    %707 = vmatprep.subr.bf16.mxu0 %v406
    %708 = vmatpush1.bf16.msra.mxu0 %v405
    %709 = vmatprep.subr.bf16.mxu0 %v410
    %710 = vmatpush1.bf16.msra.mxu0 %v409
    %711 = vmatprep.subr.bf16.mxu0 %v414
    %712 = vmatpush1.bf16.msra.mxu0 %v413
    %713 = vmatprep.subr.bf16.mxu0 %v418
    %714 = vmatpush1.bf16.msra.mxu0 %v417
    %715 = vmatprep.subr.bf16.mxu0 %v422
    %716 = vmatpush1.bf16.msra.mxu0 %v421
    %717 = vmatprep.subr.bf16.mxu0 %v426
    %718 = vmatpush1.bf16.msra.mxu0 %v425
    %719 = vmatprep.subr.bf16.mxu0 %v430
    %720 = vmatpush1.bf16.msra.mxu0 %v429
    %721 = vmatprep.subr.bf16.mxu0 %v434
    %722 = vmatpush1.bf16.msra.mxu0 %v433
    %723 = vmatprep.subr.bf16.mxu0 0
    %724 = vmatpush1.bf16.msra.mxu0 0
    %725 = vmatprep.subr.bf16.mxu0 0
    %726 = vmatpush1.bf16.msra.mxu0 0
    %727 = vmatprep.subr.bf16.mxu0 0
    %728 = vmatpush1.bf16.msra.mxu0 0
    %729 = vmatprep.subr.bf16.mxu0 0
    %730 = vmatpush1.bf16.msra.mxu0 0
    %731 = vmatprep.mubr.bf16.mxu0 %v485
    %732 = vmatmul.mubr.bf16.gmra.mrb[0].mxu0 %v201
    %v733 = vpop.f32.mrb[0].mxu0
    %v734 = vadd.f32 0.0, %v733
    %v735 = vpop.f32.mrb[0].mxu0
    %v736 = vadd.f32 0.0, %v735
    %v737 = vpop.f32.mrb[0].mxu0
    %v738 = vadd.f32 0.0, %v737
    %v739 = vpop.f32.mrb[0].mxu0
    %v740 = vadd.f32 0.0, %v739
    %741 = vmatprep.mubr.bf16.mxu0 %v488
    %742 = vmatmul.mubr.bf16.gmra.mrb[0].mxu0 %v203
    %v743 = vpop.f32.mrb[0].mxu0
    %v744 = vadd.f32 0.0, %v743
    %v745 = vpop.f32.mrb[0].mxu0
    %v746 = vadd.f32 0.0, %v745
    %v747 = vpop.f32.mrb[0].mxu0
    %v748 = vadd.f32 0.0, %v747
    %v749 = vpop.f32.mrb[0].mxu0
    %v750 = vadd.f32 0.0, %v749
    %751 = vmatprep.mubr.bf16.mxu0 %v491
    %752 = vmatmul.mubr.bf16.gmra.mrb[0].mxu0 %v205
    %v753 = vpop.f32.mrb[0].mxu0
    %v754 = vadd.f32 0.0, %v753
    %v755 = vpop.f32.mrb[0].mxu0
    %v756 = vadd.f32 0.0, %v755
    %v757 = vpop.f32.mrb[0].mxu0
    %v758 = vadd.f32 0.0, %v757
    %v759 = vpop.f32.mrb[0].mxu0
    %v760 = vadd.f32 0.0, %v759
    %761 = vmatprep.mubr.bf16.mxu0 %v494
    %762 = vmatmul.mubr.bf16.gmra.mrb[0].mxu0 %v207
    %v763 = vpop.f32.mrb[0].mxu0
    %v764 = vadd.f32 0.0, %v763
    %v765 = vpop.f32.mrb[0].mxu0
    %v766 = vadd.f32 0.0, %v765
    %v767 = vpop.f32.mrb[0].mxu0
    %v768 = vadd.f32 0.0, %v767
    %v769 = vpop.f32.mrb[0].mxu0
    %v770 = vadd.f32 0.0, %v769
    %771 = vmatprep.mubr.bf16.mxu0 %v497
    %772 = vmatmul.mubr.bf16.gmra.mrb[0].mxu0 %v209
    %v773 = vpop.f32.mrb[0].mxu0
    %v774 = vadd.f32 0.0, %v773
    %v775 = vpop.f32.mrb[0].mxu0
    %v776 = vadd.f32 0.0, %v775
    %v777 = vpop.f32.mrb[0].mxu0
    %v778 = vadd.f32 0.0, %v777
    %v779 = vpop.f32.mrb[0].mxu0
    %v780 = vadd.f32 0.0, %v779
    %781 = vmatprep.mubr.bf16.mxu0 %v500
    %782 = vmatmul.mubr.bf16.gmra.mrb[0].mxu0 %v211
    %v783 = vpop.f32.mrb[0].mxu0
    %v784 = vadd.f32 0.0, %v783
    %v785 = vpop.f32.mrb[0].mxu0
    %v786 = vadd.f32 0.0, %v785
    %v787 = vpop.f32.mrb[0].mxu0
    %v788 = vadd.f32 0.0, %v787
    %v789 = vpop.f32.mrb[0].mxu0
    %v790 = vadd.f32 0.0, %v789
    %791 = vmatprep.mubr.bf16.mxu0 %v503
    %792 = vmatmul.mubr.bf16.gmra.mrb[0].mxu0 %v213
    %v793 = vpop.f32.mrb[0].mxu0
    %v794 = vadd.f32 0.0, %v793
    %v795 = vpop.f32.mrb[0].mxu0
    %v796 = vadd.f32 0.0, %v795
    %v797 = vpop.f32.mrb[0].mxu0
    %v798 = vadd.f32 0.0, %v797
    %v799 = vpop.f32.mrb[0].mxu0
    %v800 = vadd.f32 0.0, %v799
    %801 = vmatprep.mubr.bf16.mxu0 %v506
    %802 = vmatmul.mubr.bf16.gmra.mrb[0].mxu0 %v215
    %v803 = vpop.f32.mrb[0].mxu0
    %v804 = vadd.f32 0.0, %v803
    %v805 = vpop.f32.mrb[0].mxu0
    %v806 = vadd.f32 0.0, %v805
    %v807 = vpop.f32.mrb[0].mxu0
    %v808 = vadd.f32 0.0, %v807
    %v809 = vpop.f32.mrb[0].mxu0
    %v810 = vadd.f32 0.0, %v809
    %811 = vmatprep.mubr.bf16.mxu0 %v509
    %812 = vmatmul.mubr.bf16.gmra.mrb[0].mxu0 %v217
    %v813 = vpop.f32.mrb[0].mxu0
    %v814 = vadd.f32 0.0, %v813
    %v815 = vpop.f32.mrb[0].mxu0
    %v816 = vadd.f32 0.0, %v815
    %v817 = vpop.f32.mrb[0].mxu0
    %v818 = vadd.f32 0.0, %v817
    %v819 = vpop.f32.mrb[0].mxu0
    %v820 = vadd.f32 0.0, %v819
    %821 = vmatprep.mubr.bf16.mxu0 %v512
    %822 = vmatmul.mubr.bf16.gmra.mrb[0].mxu0 %v219
    %v823 = vpop.f32.mrb[0].mxu0
    %v824 = vadd.f32 0.0, %v823
    %v825 = vpop.f32.mrb[0].mxu0
    %v826 = vadd.f32 0.0, %v825
    %v827 = vpop.f32.mrb[0].mxu0
    %v828 = vadd.f32 0.0, %v827
    %v829 = vpop.f32.mrb[0].mxu0
    %v830 = vadd.f32 0.0, %v829
    %831 = vmatprep.mubr.bf16.mxu0 %v515
    %832 = vmatmul.mubr.bf16.gmra.mrb[0].mxu0 %v221
    %v833 = vpop.f32.mrb[0].mxu0
    %v834 = vadd.f32 0.0, %v833
    %v835 = vpop.f32.mrb[0].mxu0
    %v836 = vadd.f32 0.0, %v835
    %v837 = vpop.f32.mrb[0].mxu0
    %v838 = vadd.f32 0.0, %v837
    %v839 = vpop.f32.mrb[0].mxu0
    %v840 = vadd.f32 0.0, %v839
    %841 = vmatprep.mubr.bf16.mxu0 %v518
    %842 = vmatmul.mubr.bf16.gmra.mrb[0].mxu0 %v223
    %v843 = vpop.f32.mrb[0].mxu0
    %v844 = vadd.f32 0.0, %v843
    %v845 = vpop.f32.mrb[0].mxu0
    %v846 = vadd.f32 0.0, %v845
    %v847 = vpop.f32.mrb[0].mxu0
    %v848 = vadd.f32 0.0, %v847
    %v849 = vpop.f32.mrb[0].mxu0
    %v850 = vadd.f32 0.0, %v849
    %851 = vmatprep.mubr.bf16.mxu0 %v521
    %852 = vmatmul.mubr.bf16.gmra.mrb[0].mxu0 %v225
    %v853 = vpop.f32.mrb[0].mxu0
    %v854 = vadd.f32 0.0, %v853
    %v855 = vpop.f32.mrb[0].mxu0
    %v856 = vadd.f32 0.0, %v855
    %v857 = vpop.f32.mrb[0].mxu0
    %v858 = vadd.f32 0.0, %v857
    %v859 = vpop.f32.mrb[0].mxu0
    %v860 = vadd.f32 0.0, %v859
    %861 = vmatprep.mubr.bf16.mxu0 %v524
    %862 = vmatmul.mubr.bf16.gmra.mrb[0].mxu0 %v227
    %v863 = vpop.f32.mrb[0].mxu0
    %v864 = vadd.f32 0.0, %v863
    %v865 = vpop.f32.mrb[0].mxu0
    %v866 = vadd.f32 0.0, %v865
    %v867 = vpop.f32.mrb[0].mxu0
    %v868 = vadd.f32 0.0, %v867
    %v869 = vpop.f32.mrb[0].mxu0
    %v870 = vadd.f32 0.0, %v869
    %871 = vdwg.mxu0
    %s872 = scalar_lea.vmem [#allocation2], 384
    %v873 = vld [vmem:[%s872] sm:$0xff]
    %v874 = vld [vmem:[%s872 + $0x8] sm:$0xff]
    %v875 = vld [vmem:[%s872 + $0x10] sm:$0xff]
    %v876 = vld [vmem:[%s872 + $0x18] sm:$0xff]
    %v877 = vld [vmem:[%s872 + $0x20] sm:$0xff]
    %v878 = vld [vmem:[%s872 + $0x28] sm:$0xff]
    %v879 = vld [vmem:[%s872 + $0x30] sm:$0xff]
    %v880 = vld [vmem:[%s872 + $0x38] sm:$0xff]
    %v881 = vld [vmem:[%s872 + $0x40] sm:$0xff]
    %v882 = vld [vmem:[%s872 + $0x48] sm:$0xff]
    %v883 = vld [vmem:[%s872 + $0x50] sm:$0xff]
    %v884 = vld [vmem:[%s872 + $0x58] sm:$0xff]
    %v885 = vld [vmem:[%s872 + $0x60] sm:$0xff]
    %v886 = vld [vmem:[%s872 + $0x68] sm:$0xff]
    %v887 = vld [vmem:[%s872 + $0x70] sm:$0xff]
    %v888 = vld [vmem:[%s872 + $0x78] sm:$0xff]
    %v889 = vld [vmem:[%s872 + $0x80] sm:$0xff]
    %v890 = vld [vmem:[%s872 + $0x88] sm:$0xff]
    %v891 = vld [vmem:[%s872 + $0x90] sm:$0xff]
    %v892 = vld [vmem:[%s872 + $0x98] sm:$0xff]
    %v893 = vld [vmem:[%s872 + $0xa0] sm:$0xff]
    %v894 = vld [vmem:[%s872 + $0xa8] sm:$0xff]
    %v895 = vld [vmem:[%s872 + $0xb0] sm:$0xff]
    %v896 = vld [vmem:[%s872 + $0xb8] sm:$0xff]
    %v897 = vld [vmem:[%s872 + $0xc0] sm:$0xff]
    %v898 = vld [vmem:[%s872 + $0xc8] sm:$0xff]
    %v899 = vld [vmem:[%s872 + $0xd0] sm:$0xff]
    %v900 = vld [vmem:[%s872 + $0xd8] sm:$0xff]
    %v901 = vld [vmem:[%s872 + $0xe0] sm:$0xff]
    %v902 = vld [vmem:[%s872 + $0xe8] sm:$0xff]
    %v903 = vld [vmem:[%s872 + $0xf0] sm:$0xff]
    %v904 = vld [vmem:[%s872 + $0xf8] sm:$0xff]
    %v905 = vld [vmem:[%s872 + $0x100] sm:$0xff]
    %v906 = vld [vmem:[%s872 + $0x108] sm:$0xff]
    %v907 = vld [vmem:[%s872 + $0x110] sm:$0xff]
    %v908 = vld [vmem:[%s872 + $0x118] sm:$0xff]
    %v909 = vld [vmem:[%s872 + $0x120] sm:$0xff]
    %v910 = vld [vmem:[%s872 + $0x128] sm:$0xff]
    %v911 = vld [vmem:[%s872 + $0x130] sm:$0xff]
    %v912 = vld [vmem:[%s872 + $0x138] sm:$0xff]
    %v913 = vld [vmem:[%s872 + $0x140] sm:$0xff]
    %v914 = vld [vmem:[%s872 + $0x148] sm:$0xff]
    %v915 = vld [vmem:[%s872 + $0x150] sm:$0xff]
    %v916 = vld [vmem:[%s872 + $0x158] sm:$0xff]
    %v917 = vld [vmem:[%s872 + $0x160] sm:$0xff]
    %v918 = vld [vmem:[%s872 + $0x168] sm:$0xff]
    %v919 = vld [vmem:[%s872 + $0x170] sm:$0xff]
    %v920 = vld [vmem:[%s872 + $0x178] sm:$0xff]
    %v969 = vunpack.c.l.b16 %v873
    %v970 = vunpack.c.h.b16 %v873
    %v971 = vunpack.c.l.b16 %v874
    %v972 = vunpack.c.h.b16 %v874
    %v973 = vunpack.c.l.b16 %v875
    %v974 = vunpack.c.h.b16 %v875
    %v975 = vunpack.c.l.b16 %v876
    %v976 = vunpack.c.h.b16 %v876
    %v977 = vunpack.c.l.b16 %v877
    %v978 = vunpack.c.h.b16 %v877
    %v979 = vunpack.c.l.b16 %v878
    %v980 = vunpack.c.h.b16 %v878
    %v981 = vunpack.c.l.b16 %v879
    %v982 = vunpack.c.h.b16 %v879
    %v983 = vunpack.c.l.b16 %v880
    %v984 = vunpack.c.h.b16 %v880
    %v985 = vunpack.c.l.b16 %v881
    %v986 = vunpack.c.h.b16 %v881
    %v987 = vunpack.c.l.b16 %v882
    %v988 = vunpack.c.h.b16 %v882
    %v989 = vunpack.c.l.b16 %v883
    %v990 = vunpack.c.h.b16 %v883
    %v991 = vunpack.c.l.b16 %v884
    %v992 = vunpack.c.h.b16 %v884
    %v993 = vunpack.c.l.b16 %v885
    %v994 = vunpack.c.h.b16 %v885
    %v995 = vunpack.c.l.b16 %v886
    %v996 = vunpack.c.h.b16 %v886
    %v997 = vunpack.c.l.b16 %v887
    %v998 = vunpack.c.h.b16 %v887
    %v999 = vunpack.c.l.b16 %v888
    %v1000 = vunpack.c.h.b16 %v888
    %v1001 = vunpack.c.l.b16 %v889
    %v1002 = vunpack.c.h.b16 %v889
    %v1003 = vunpack.c.l.b16 %v890
    %v1004 = vunpack.c.h.b16 %v890
    %v1005 = vunpack.c.l.b16 %v891
    %v1006 = vunpack.c.h.b16 %v891
    %v1007 = vunpack.c.l.b16 %v892
    %v1008 = vunpack.c.h.b16 %v892
    %v1009 = vunpack.c.l.b16 %v893
    %v1010 = vunpack.c.h.b16 %v893
    %v1011 = vunpack.c.l.b16 %v894
    %v1012 = vunpack.c.h.b16 %v894
    %v1013 = vunpack.c.l.b16 %v895
    %v1014 = vunpack.c.h.b16 %v895
    %v1015 = vunpack.c.l.b16 %v896
    %v1016 = vunpack.c.h.b16 %v896
    %v1017 = vunpack.c.l.b16 %v897
    %v1018 = vunpack.c.h.b16 %v897
    %v1019 = vunpack.c.l.b16 %v898
    %v1020 = vunpack.c.h.b16 %v898
    %v1021 = vunpack.c.l.b16 %v899
    %v1022 = vunpack.c.h.b16 %v899
    %v1023 = vunpack.c.l.b16 %v900
    %v1024 = vunpack.c.h.b16 %v900
    %v1025 = vunpack.c.l.b16 %v901
    %v1026 = vunpack.c.h.b16 %v901
    %v1027 = vunpack.c.l.b16 %v902
    %v1028 = vunpack.c.h.b16 %v902
    %v1029 = vunpack.c.l.b16 %v903
    %v1030 = vunpack.c.h.b16 %v903
    %v1031 = vunpack.c.l.b16 %v904
    %v1032 = vunpack.c.h.b16 %v904
    %v1033 = vunpack.c.l.b16 %v905
    %v1034 = vunpack.c.h.b16 %v905
    %v1035 = vunpack.c.l.b16 %v906
    %v1036 = vunpack.c.h.b16 %v906
    %v1037 = vunpack.c.l.b16 %v907
    %v1038 = vunpack.c.h.b16 %v907
    %v1039 = vunpack.c.l.b16 %v908
    %v1040 = vunpack.c.h.b16 %v908
    %v1041 = vunpack.c.l.b16 %v909
    %v1042 = vunpack.c.h.b16 %v909
    %v1043 = vunpack.c.l.b16 %v910
    %v1044 = vunpack.c.h.b16 %v910
    %v1045 = vunpack.c.l.b16 %v911
    %v1046 = vunpack.c.h.b16 %v911
    %v1047 = vunpack.c.l.b16 %v912
    %v1048 = vunpack.c.h.b16 %v912
    %v1049 = vunpack.c.l.b16 %v913
    %v1050 = vunpack.c.h.b16 %v913
    %v1051 = vunpack.c.l.b16 %v914
    %v1052 = vunpack.c.h.b16 %v914
    %v1053 = vunpack.c.l.b16 %v915
    %v1054 = vunpack.c.h.b16 %v915
    %v1055 = vunpack.c.l.b16 %v916
    %v1056 = vunpack.c.h.b16 %v916
    %v1057 = vunpack.c.l.b16 %v917
    %v1058 = vunpack.c.h.b16 %v917
    %v1059 = vunpack.c.l.b16 %v918
    %v1060 = vunpack.c.h.b16 %v918
    %v1061 = vunpack.c.l.b16 %v919
    %v1062 = vunpack.c.h.b16 %v919
    %v1063 = vunpack.c.l.b16 %v920
    %v1064 = vunpack.c.h.b16 %v920
    %v1065 = vpack.c.b16 %v973, %v969
    %v1066 = vpack.c.b16 %v974, %v970
    %v1067 = vpack.c.b16 %v975, %v971
    %v1068 = vpack.c.b16 %v976, %v972
    %v1069 = vpack.c.b16 %v981, %v977
    %v1070 = vpack.c.b16 %v982, %v978
    %v1071 = vpack.c.b16 %v983, %v979
    %v1072 = vpack.c.b16 %v984, %v980
    %v1073 = vpack.c.b16 %v989, %v985
    %v1074 = vpack.c.b16 %v990, %v986
    %v1075 = vpack.c.b16 %v991, %v987
    %v1076 = vpack.c.b16 %v992, %v988
    %v1077 = vpack.c.b16 %v997, %v993
    %v1078 = vpack.c.b16 %v998, %v994
    %v1079 = vpack.c.b16 %v999, %v995
    %v1080 = vpack.c.b16 %v1000, %v996
    %v1081 = vpack.c.b16 %v1005, %v1001
    %v1082 = vpack.c.b16 %v1006, %v1002
    %v1083 = vpack.c.b16 %v1007, %v1003
    %v1084 = vpack.c.b16 %v1008, %v1004
    %v1085 = vpack.c.b16 %v1013, %v1009
    %v1086 = vpack.c.b16 %v1014, %v1010
    %v1087 = vpack.c.b16 %v1015, %v1011
    %v1088 = vpack.c.b16 %v1016, %v1012
    %v1089 = vpack.c.b16 %v1021, %v1017
    %v1090 = vpack.c.b16 %v1022, %v1018
    %v1091 = vpack.c.b16 %v1023, %v1019
    %v1092 = vpack.c.b16 %v1024, %v1020
    %v1093 = vpack.c.b16 %v1029, %v1025
    %v1094 = vpack.c.b16 %v1030, %v1026
    %v1095 = vpack.c.b16 %v1031, %v1027
    %v1096 = vpack.c.b16 %v1032, %v1028
    %v1097 = vpack.c.b16 %v1037, %v1033
    %v1098 = vpack.c.b16 %v1038, %v1034
    %v1099 = vpack.c.b16 %v1039, %v1035
    %v1100 = vpack.c.b16 %v1040, %v1036
    %v1101 = vpack.c.b16 %v1045, %v1041
    %v1102 = vpack.c.b16 %v1046, %v1042
    %v1103 = vpack.c.b16 %v1047, %v1043
    %v1104 = vpack.c.b16 %v1048, %v1044
    %v1105 = vpack.c.b16 %v1053, %v1049
    %v1106 = vpack.c.b16 %v1054, %v1050
    %v1107 = vpack.c.b16 %v1055, %v1051
    %v1108 = vpack.c.b16 %v1056, %v1052
    %v1109 = vpack.c.b16 %v1061, %v1057
    %v1110 = vpack.c.b16 %v1062, %v1058
    %v1111 = vpack.c.b16 %v1063, %v1059
    %v1112 = vpack.c.b16 %v1064, %v1060
    %1161 = vmatprep.subr.bf16.mxu0 %v1066
    %1162 = vmatpush1.bf16.msra.mxu0 %v1065
    %1163 = vmatprep.subr.bf16.mxu0 %v1070
    %1164 = vmatpush1.bf16.msra.mxu0 %v1069
    %1165 = vmatprep.subr.bf16.mxu0 %v1074
    %1166 = vmatpush1.bf16.msra.mxu0 %v1073
    %1167 = vmatprep.subr.bf16.mxu0 %v1078
    %1168 = vmatpush1.bf16.msra.mxu0 %v1077
    %1169 = vmatprep.subr.bf16.mxu0 %v1082
    %1170 = vmatpush1.bf16.msra.mxu0 %v1081
    %1171 = vmatprep.subr.bf16.mxu0 %v1086
    %1172 = vmatpush1.bf16.msra.mxu0 %v1085
    %1173 = vmatprep.subr.bf16.mxu0 %v1090
    %1174 = vmatpush1.bf16.msra.mxu0 %v1089
    %1175 = vmatprep.subr.bf16.mxu0 %v1094
    %1176 = vmatpush1.bf16.msra.mxu0 %v1093
    %1177 = vmatprep.subr.bf16.mxu0 %v1098
    %1178 = vmatpush1.bf16.msra.mxu0 %v1097
    %1179 = vmatprep.subr.bf16.mxu0 %v1102
    %1180 = vmatpush1.bf16.msra.mxu0 %v1101
    %1181 = vmatprep.subr.bf16.mxu0 %v1106
    %1182 = vmatpush1.bf16.msra.mxu0 %v1105
    %1183 = vmatprep.subr.bf16.mxu0 %v1110
    %1184 = vmatpush1.bf16.msra.mxu0 %v1109
    %1185 = vmatprep.subr.bf16.mxu0 0
    %1186 = vmatpush1.bf16.msra.mxu0 0
    %1187 = vmatprep.subr.bf16.mxu0 0
    %1188 = vmatpush1.bf16.msra.mxu0 0
    %1189 = vmatprep.subr.bf16.mxu0 0
    %1190 = vmatpush1.bf16.msra.mxu0 0
    %1191 = vmatprep.subr.bf16.mxu0 0
    %1192 = vmatpush1.bf16.msra.mxu0 0
    %1193 = vmatprep.mubr.bf16.mxu0 %v485
    %1194 = vmatmul.mubr.bf16.gmra.mrb[0].mxu0 %v201
    %v1195 = vpop.f32.mrb[0].mxu0
    %v1196 = vadd.f32 0.0, %v1195
    %v1197 = vpop.f32.mrb[0].mxu0
    %v1198 = vadd.f32 0.0, %v1197
    %v1199 = vpop.f32.mrb[0].mxu0
    %v1200 = vadd.f32 0.0, %v1199
    %v1201 = vpop.f32.mrb[0].mxu0
    %v1202 = vadd.f32 0.0, %v1201
    %1203 = vmatprep.mubr.bf16.mxu0 %v488
    %1204 = vmatmul.mubr.bf16.gmra.mrb[0].mxu0 %v203
    %v1205 = vpop.f32.mrb[0].mxu0
    %v1206 = vadd.f32 0.0, %v1205
    %v1207 = vpop.f32.mrb[0].mxu0
    %v1208 = vadd.f32 0.0, %v1207
    %v1209 = vpop.f32.mrb[0].mxu0
    %v1210 = vadd.f32 0.0, %v1209
    %v1211 = vpop.f32.mrb[0].mxu0
    %v1212 = vadd.f32 0.0, %v1211
    %1213 = vmatprep.mubr.bf16.mxu0 %v491
    %1214 = vmatmul.mubr.bf16.gmra.mrb[0].mxu0 %v205
    %v1215 = vpop.f32.mrb[0].mxu0
    %v1216 = vadd.f32 0.0, %v1215
    %v1217 = vpop.f32.mrb[0].mxu0
    %v1218 = vadd.f32 0.0, %v1217
    %v1219 = vpop.f32.mrb[0].mxu0
    %v1220 = vadd.f32 0.0, %v1219
    %v1221 = vpop.f32.mrb[0].mxu0
    %v1222 = vadd.f32 0.0, %v1221
    %1223 = vmatprep.mubr.bf16.mxu0 %v494
    %1224 = vmatmul.mubr.bf16.gmra.mrb[0].mxu0 %v207
    %v1225 = vpop.f32.mrb[0].mxu0
    %v1226 = vadd.f32 0.0, %v1225
    %v1227 = vpop.f32.mrb[0].mxu0
    %v1228 = vadd.f32 0.0, %v1227
    %v1229 = vpop.f32.mrb[0].mxu0
    %v1230 = vadd.f32 0.0, %v1229
    %v1231 = vpop.f32.mrb[0].mxu0
    %v1232 = vadd.f32 0.0, %v1231
    %1233 = vmatprep.mubr.bf16.mxu0 %v497
    %1234 = vmatmul.mubr.bf16.gmra.mrb[0].mxu0 %v209
    %v1235 = vpop.f32.mrb[0].mxu0
    %v1236 = vadd.f32 0.0, %v1235
    %v1237 = vpop.f32.mrb[0].mxu0
    %v1238 = vadd.f32 0.0, %v1237
    %v1239 = vpop.f32.mrb[0].mxu0
    %v1240 = vadd.f32 0.0, %v1239
    %v1241 = vpop.f32.mrb[0].mxu0
    %v1242 = vadd.f32 0.0, %v1241
    %1243 = vmatprep.mubr.bf16.mxu0 %v500
    %1244 = vmatmul.mubr.bf16.gmra.mrb[0].mxu0 %v211
    %v1245 = vpop.f32.mrb[0].mxu0
    %v1246 = vadd.f32 0.0, %v1245
    %v1247 = vpop.f32.mrb[0].mxu0
    %v1248 = vadd.f32 0.0, %v1247
    %v1249 = vpop.f32.mrb[0].mxu0
    %v1250 = vadd.f32 0.0, %v1249
    %v1251 = vpop.f32.mrb[0].mxu0
    %v1252 = vadd.f32 0.0, %v1251
    %1253 = vmatprep.mubr.bf16.mxu0 %v503
    %1254 = vmatmul.mubr.bf16.gmra.mrb[0].mxu0 %v213
    %v1255 = vpop.f32.mrb[0].mxu0
    %v1256 = vadd.f32 0.0, %v1255
    %v1257 = vpop.f32.mrb[0].mxu0
    %v1258 = vadd.f32 0.0, %v1257
    %v1259 = vpop.f32.mrb[0].mxu0
    %v1260 = vadd.f32 0.0, %v1259
    %v1261 = vpop.f32.mrb[0].mxu0
    %v1262 = vadd.f32 0.0, %v1261
    %1263 = vmatprep.mubr.bf16.mxu0 %v506
    %1264 = vmatmul.mubr.bf16.gmra.mrb[0].mxu0 %v215
    %v1265 = vpop.f32.mrb[0].mxu0
    %v1266 = vadd.f32 0.0, %v1265
    %v1267 = vpop.f32.mrb[0].mxu0
    %v1268 = vadd.f32 0.0, %v1267
    %v1269 = vpop.f32.mrb[0].mxu0
    %v1270 = vadd.f32 0.0, %v1269
    %v1271 = vpop.f32.mrb[0].mxu0
    %v1272 = vadd.f32 0.0, %v1271
    %1273 = vmatprep.mubr.bf16.mxu0 %v509
    %1274 = vmatmul.mubr.bf16.gmra.mrb[0].mxu0 %v217
    %v1275 = vpop.f32.mrb[0].mxu0
    %v1276 = vadd.f32 0.0, %v1275
    %v1277 = vpop.f32.mrb[0].mxu0
    %v1278 = vadd.f32 0.0, %v1277
    %v1279 = vpop.f32.mrb[0].mxu0
    %v1280 = vadd.f32 0.0, %v1279
    %v1281 = vpop.f32.mrb[0].mxu0
    %v1282 = vadd.f32 0.0, %v1281
    %1283 = vmatprep.mubr.bf16.mxu0 %v512
    %1284 = vmatmul.mubr.bf16.gmra.mrb[0].mxu0 %v219
    %v1285 = vpop.f32.mrb[0].mxu0
    %v1286 = vadd.f32 0.0, %v1285
    %v1287 = vpop.f32.mrb[0].mxu0
    %v1288 = vadd.f32 0.0, %v1287
    %v1289 = vpop.f32.mrb[0].mxu0
    %v1290 = vadd.f32 0.0, %v1289
    %v1291 = vpop.f32.mrb[0].mxu0
    %v1292 = vadd.f32 0.0, %v1291
    %1293 = vmatprep.mubr.bf16.mxu0 %v515
    %1294 = vmatmul.mubr.bf16.gmra.mrb[0].mxu0 %v221
    %v1295 = vpop.f32.mrb[0].mxu0
    %v1296 = vadd.f32 0.0, %v1295
    %v1297 = vpop.f32.mrb[0].mxu0
    %v1298 = vadd.f32 0.0, %v1297
    %v1299 = vpop.f32.mrb[0].mxu0
    %v1300 = vadd.f32 0.0, %v1299
    %v1301 = vpop.f32.mrb[0].mxu0
    %v1302 = vadd.f32 0.0, %v1301
    %1303 = vmatprep.mubr.bf16.mxu0 %v518
    %1304 = vmatmul.mubr.bf16.gmra.mrb[0].mxu0 %v223
    %v1305 = vpop.f32.mrb[0].mxu0
    %v1306 = vadd.f32 0.0, %v1305
    %v1307 = vpop.f32.mrb[0].mxu0
    %v1308 = vadd.f32 0.0, %v1307
    %v1309 = vpop.f32.mrb[0].mxu0
    %v1310 = vadd.f32 0.0, %v1309
    %v1311 = vpop.f32.mrb[0].mxu0
    %v1312 = vadd.f32 0.0, %v1311
    %1313 = vmatprep.mubr.bf16.mxu0 %v521
    %1314 = vmatmul.mubr.bf16.gmra.mrb[0].mxu0 %v225
    %v1315 = vpop.f32.mrb[0].mxu0
    %v1316 = vadd.f32 0.0, %v1315
    %v1317 = vpop.f32.mrb[0].mxu0
    %v1318 = vadd.f32 0.0, %v1317
    %v1319 = vpop.f32.mrb[0].mxu0
    %v1320 = vadd.f32 0.0, %v1319
    %v1321 = vpop.f32.mrb[0].mxu0
    %v1322 = vadd.f32 0.0, %v1321
    %1323 = vmatprep.mubr.bf16.mxu0 %v524
    %1324 = vmatmul.mubr.bf16.gmra.mrb[0].mxu0 %v227
    %v1325 = vpop.f32.mrb[0].mxu0
    %v1326 = vadd.f32 0.0, %v1325
    %v1327 = vpop.f32.mrb[0].mxu0
    %v1328 = vadd.f32 0.0, %v1327
    %v1329 = vpop.f32.mrb[0].mxu0
    %v1330 = vadd.f32 0.0, %v1329
    %v1331 = vpop.f32.mrb[0].mxu0
    %v1332 = vadd.f32 0.0, %v1331
    %1333 = vdwg.mxu0
    %1334 = vmatprep.subr.bf16.mxu0 %v1068
    %1335 = vmatpush1.bf16.msra.mxu0 %v1067
    %1336 = vmatprep.subr.bf16.mxu0 %v1072
    %1337 = vmatpush1.bf16.msra.mxu0 %v1071
    %1338 = vmatprep.subr.bf16.mxu0 %v1076
    %1339 = vmatpush1.bf16.msra.mxu0 %v1075
    %1340 = vmatprep.subr.bf16.mxu0 %v1080
    %1341 = vmatpush1.bf16.msra.mxu0 %v1079
    %1342 = vmatprep.subr.bf16.mxu0 %v1084
    %1343 = vmatpush1.bf16.msra.mxu0 %v1083
    %1344 = vmatprep.subr.bf16.mxu0 %v1088
    %1345 = vmatpush1.bf16.msra.mxu0 %v1087
    %1346 = vmatprep.subr.bf16.mxu0 %v1092
    %1347 = vmatpush1.bf16.msra.mxu0 %v1091
    %1348 = vmatprep.subr.bf16.mxu0 %v1096
    %1349 = vmatpush1.bf16.msra.mxu0 %v1095
    %1350 = vmatprep.subr.bf16.mxu0 %v1100
    %1351 = vmatpush1.bf16.msra.mxu0 %v1099
    %1352 = vmatprep.subr.bf16.mxu0 %v1104
    %1353 = vmatpush1.bf16.msra.mxu0 %v1103
    %1354 = vmatprep.subr.bf16.mxu0 %v1108
    %1355 = vmatpush1.bf16.msra.mxu0 %v1107
    %1356 = vmatprep.subr.bf16.mxu0 %v1112
    %1357 = vmatpush1.bf16.msra.mxu0 %v1111
    %1358 = vmatprep.subr.bf16.mxu0 0
    %1359 = vmatpush1.bf16.msra.mxu0 0
    %1360 = vmatprep.subr.bf16.mxu0 0
    %1361 = vmatpush1.bf16.msra.mxu0 0
    %1362 = vmatprep.subr.bf16.mxu0 0
    %1363 = vmatpush1.bf16.msra.mxu0 0
    %1364 = vmatprep.subr.bf16.mxu0 0
    %1365 = vmatpush1.bf16.msra.mxu0 0
    %1366 = vmatprep.mubr.bf16.mxu0 %v485
    %1367 = vmatmul.mubr.bf16.gmra.mrb[0].mxu0 %v201
    %v1368 = vpop.f32.mrb[0].mxu0
    %v1369 = vadd.f32 0.0, %v1368
    %v1370 = vpop.f32.mrb[0].mxu0
    %v1371 = vadd.f32 0.0, %v1370
    %v1372 = vpop.f32.mrb[0].mxu0
    %v1373 = vadd.f32 0.0, %v1372
    %v1374 = vpop.f32.mrb[0].mxu0
    %v1375 = vadd.f32 0.0, %v1374
    %1376 = vmatprep.mubr.bf16.mxu0 %v488
    %1377 = vmatmul.mubr.bf16.gmra.mrb[0].mxu0 %v203
    %v1378 = vpop.f32.mrb[0].mxu0
    %v1379 = vadd.f32 0.0, %v1378
    %v1380 = vpop.f32.mrb[0].mxu0
    %v1381 = vadd.f32 0.0, %v1380
    %v1382 = vpop.f32.mrb[0].mxu0
    %v1383 = vadd.f32 0.0, %v1382
    %v1384 = vpop.f32.mrb[0].mxu0
    %v1385 = vadd.f32 0.0, %v1384
    %1386 = vmatprep.mubr.bf16.mxu0 %v491
    %1387 = vmatmul.mubr.bf16.gmra.mrb[0].mxu0 %v205
    %v1388 = vpop.f32.mrb[0].mxu0
    %v1389 = vadd.f32 0.0, %v1388
    %v1390 = vpop.f32.mrb[0].mxu0
    %v1391 = vadd.f32 0.0, %v1390
    %v1392 = vpop.f32.mrb[0].mxu0
    %v1393 = vadd.f32 0.0, %v1392
    %v1394 = vpop.f32.mrb[0].mxu0
    %v1395 = vadd.f32 0.0, %v1394
    %1396 = vmatprep.mubr.bf16.mxu0 %v494
    %1397 = vmatmul.mubr.bf16.gmra.mrb[0].mxu0 %v207
    %v1398 = vpop.f32.mrb[0].mxu0
    %v1399 = vadd.f32 0.0, %v1398
    %v1400 = vpop.f32.mrb[0].mxu0
    %v1401 = vadd.f32 0.0, %v1400
    %v1402 = vpop.f32.mrb[0].mxu0
    %v1403 = vadd.f32 0.0, %v1402
    %v1404 = vpop.f32.mrb[0].mxu0
    %v1405 = vadd.f32 0.0, %v1404
    %1406 = vmatprep.mubr.bf16.mxu0 %v497
    %1407 = vmatmul.mubr.bf16.gmra.mrb[0].mxu0 %v209
    %v1408 = vpop.f32.mrb[0].mxu0
    %v1409 = vadd.f32 0.0, %v1408
    %v1410 = vpop.f32.mrb[0].mxu0
    %v1411 = vadd.f32 0.0, %v1410
    %v1412 = vpop.f32.mrb[0].mxu0
    %v1413 = vadd.f32 0.0, %v1412
    %v1414 = vpop.f32.mrb[0].mxu0
    %v1415 = vadd.f32 0.0, %v1414
    %1416 = vmatprep.mubr.bf16.mxu0 %v500
    %1417 = vmatmul.mubr.bf16.gmra.mrb[0].mxu0 %v211
    %v1418 = vpop.f32.mrb[0].mxu0
    %v1419 = vadd.f32 0.0, %v1418
    %v1420 = vpop.f32.mrb[0].mxu0
    %v1421 = vadd.f32 0.0, %v1420
    %v1422 = vpop.f32.mrb[0].mxu0
    %v1423 = vadd.f32 0.0, %v1422
    %v1424 = vpop.f32.mrb[0].mxu0
    %v1425 = vadd.f32 0.0, %v1424
    %1426 = vmatprep.mubr.bf16.mxu0 %v503
    %1427 = vmatmul.mubr.bf16.gmra.mrb[0].mxu0 %v213
    %v1428 = vpop.f32.mrb[0].mxu0
    %v1429 = vadd.f32 0.0, %v1428
    %v1430 = vpop.f32.mrb[0].mxu0
    %v1431 = vadd.f32 0.0, %v1430
    %v1432 = vpop.f32.mrb[0].mxu0
    %v1433 = vadd.f32 0.0, %v1432
    %v1434 = vpop.f32.mrb[0].mxu0
    %v1435 = vadd.f32 0.0, %v1434
    %1436 = vmatprep.mubr.bf16.mxu0 %v506
    %1437 = vmatmul.mubr.bf16.gmra.mrb[0].mxu0 %v215
    %v1438 = vpop.f32.mrb[0].mxu0
    %v1439 = vadd.f32 0.0, %v1438
    %v1440 = vpop.f32.mrb[0].mxu0
    %v1441 = vadd.f32 0.0, %v1440
    %v1442 = vpop.f32.mrb[0].mxu0
    %v1443 = vadd.f32 0.0, %v1442
    %v1444 = vpop.f32.mrb[0].mxu0
    %v1445 = vadd.f32 0.0, %v1444
    %1446 = vmatprep.mubr.bf16.mxu0 %v509
    %1447 = vmatmul.mubr.bf16.gmra.mrb[0].mxu0 %v217
    %v1448 = vpop.f32.mrb[0].mxu0
    %v1449 = vadd.f32 0.0, %v1448
    %v1450 = vpop.f32.mrb[0].mxu0
    %v1451 = vadd.f32 0.0, %v1450
    %v1452 = vpop.f32.mrb[0].mxu0
    %v1453 = vadd.f32 0.0, %v1452
    %v1454 = vpop.f32.mrb[0].mxu0
    %v1455 = vadd.f32 0.0, %v1454
    %1456 = vmatprep.mubr.bf16.mxu0 %v512
    %1457 = vmatmul.mubr.bf16.gmra.mrb[0].mxu0 %v219
    %v1458 = vpop.f32.mrb[0].mxu0
    %v1459 = vadd.f32 0.0, %v1458
    %v1460 = vpop.f32.mrb[0].mxu0
    %v1461 = vadd.f32 0.0, %v1460
    %v1462 = vpop.f32.mrb[0].mxu0
    %v1463 = vadd.f32 0.0, %v1462
    %v1464 = vpop.f32.mrb[0].mxu0
    %v1465 = vadd.f32 0.0, %v1464
    %1466 = vmatprep.mubr.bf16.mxu0 %v515
    %1467 = vmatmul.mubr.bf16.gmra.mrb[0].mxu0 %v221
    %v1468 = vpop.f32.mrb[0].mxu0
    %v1469 = vadd.f32 0.0, %v1468
    %v1470 = vpop.f32.mrb[0].mxu0
    %v1471 = vadd.f32 0.0, %v1470
    %v1472 = vpop.f32.mrb[0].mxu0
    %v1473 = vadd.f32 0.0, %v1472
    %v1474 = vpop.f32.mrb[0].mxu0
    %v1475 = vadd.f32 0.0, %v1474
    %1476 = vmatprep.mubr.bf16.mxu0 %v518
    %1477 = vmatmul.mubr.bf16.gmra.mrb[0].mxu0 %v223
    %v1478 = vpop.f32.mrb[0].mxu0
    %v1479 = vadd.f32 0.0, %v1478
    %v1480 = vpop.f32.mrb[0].mxu0
    %v1481 = vadd.f32 0.0, %v1480
    %v1482 = vpop.f32.mrb[0].mxu0
    %v1483 = vadd.f32 0.0, %v1482
    %v1484 = vpop.f32.mrb[0].mxu0
    %v1485 = vadd.f32 0.0, %v1484
    %1486 = vmatprep.mubr.bf16.mxu0 %v521
    %1487 = vmatmul.mubr.bf16.gmra.mrb[0].mxu0 %v225
    %v1488 = vpop.f32.mrb[0].mxu0
    %v1489 = vadd.f32 0.0, %v1488
    %v1490 = vpop.f32.mrb[0].mxu0
    %v1491 = vadd.f32 0.0, %v1490
    %v1492 = vpop.f32.mrb[0].mxu0
    %v1493 = vadd.f32 0.0, %v1492
    %v1494 = vpop.f32.mrb[0].mxu0
    %v1495 = vadd.f32 0.0, %v1494
    %1496 = vmatprep.mubr.bf16.mxu0 %v524
    %1497 = vmatmul.mubr.bf16.gmra.mrb[0].mxu0 %v227
    %v1498 = vpop.f32.mrb[0].mxu0
    %v1499 = vadd.f32 0.0, %v1498
    %v1500 = vpop.f32.mrb[0].mxu0
    %v1501 = vadd.f32 0.0, %v1500
    %v1502 = vpop.f32.mrb[0].mxu0
    %v1503 = vadd.f32 0.0, %v1502
    %v1504 = vpop.f32.mrb[0].mxu0
    %v1505 = vadd.f32 0.0, %v1504
    %1506 = vdwg.mxu0
    %v1507 = vmax.f32 %v561, %v1196
    %v1508 = vmax.f32 %v563, %v1198
    %v1509 = vmax.f32 %v734, %v1369
    %v1510 = vmax.f32 %v736, %v1371
    %v1511 = vmax.f32 %v565, %v1200
    %v1512 = vmax.f32 %v567, %v1202
    %v1513 = vmax.f32 %v738, %v1373
    %v1514 = vmax.f32 %v740, %v1375
    %v1515 = vmax.f32 %v571, %v1206
    %v1516 = vmax.f32 %v573, %v1208
    %v1517 = vmax.f32 %v744, %v1379
    %v1518 = vmax.f32 %v746, %v1381
    %v1519 = vmax.f32 %v575, %v1210
    %v1520 = vmax.f32 %v577, %v1212
    %v1521 = vmax.f32 %v748, %v1383
    %v1522 = vmax.f32 %v750, %v1385
    %v1523 = vmax.f32 %v581, %v1216
    %v1524 = vmax.f32 %v583, %v1218
    %v1525 = vmax.f32 %v754, %v1389
    %v1526 = vmax.f32 %v756, %v1391
    %v1527 = vmax.f32 %v585, %v1220
    %v1528 = vmax.f32 %v587, %v1222
    %v1529 = vmax.f32 %v758, %v1393
    %v1530 = vmax.f32 %v760, %v1395
    %v1531 = vmax.f32 %v591, %v1226
    %v1532 = vmax.f32 %v593, %v1228
    %v1533 = vmax.f32 %v764, %v1399
    %v1534 = vmax.f32 %v766, %v1401
    %v1535 = vmax.f32 %v595, %v1230
    %v1536 = vmax.f32 %v597, %v1232
    %v1537 = vmax.f32 %v768, %v1403
    %v1538 = vmax.f32 %v770, %v1405
    %v1539 = vmax.f32 %v601, %v1236
    %v1540 = vmax.f32 %v603, %v1238
    %v1541 = vmax.f32 %v774, %v1409
    %v1542 = vmax.f32 %v776, %v1411
    %v1543 = vmax.f32 %v605, %v1240
    %v1544 = vmax.f32 %v607, %v1242
    %v1545 = vmax.f32 %v778, %v1413
    %v1546 = vmax.f32 %v780, %v1415
    %v1547 = vmax.f32 %v611, %v1246
    %v1548 = vmax.f32 %v613, %v1248
    %v1549 = vmax.f32 %v784, %v1419
    %v1550 = vmax.f32 %v786, %v1421
    %v1551 = vmax.f32 %v615, %v1250
    %v1552 = vmax.f32 %v617, %v1252
    %v1553 = vmax.f32 %v788, %v1423
    %v1554 = vmax.f32 %v790, %v1425
    %v1555 = vmax.f32 %v621, %v1256
    %v1556 = vmax.f32 %v623, %v1258
    %v1557 = vmax.f32 %v794, %v1429
    %v1558 = vmax.f32 %v796, %v1431
    %v1559 = vmax.f32 %v625, %v1260
    %v1560 = vmax.f32 %v627, %v1262
    %v1561 = vmax.f32 %v798, %v1433
    %v1562 = vmax.f32 %v800, %v1435
    %v1563 = vmax.f32 %v631, %v1266
    %v1564 = vmax.f32 %v633, %v1268
    %v1565 = vmax.f32 %v804, %v1439
    %v1566 = vmax.f32 %v806, %v1441
    %v1567 = vmax.f32 %v635, %v1270
    %v1568 = vmax.f32 %v637, %v1272
    %v1569 = vmax.f32 %v808, %v1443
    %v1570 = vmax.f32 %v810, %v1445
    %v1571 = vmax.f32 %v641, %v1276
    %v1572 = vmax.f32 %v643, %v1278
    %v1573 = vmax.f32 %v814, %v1449
    %v1574 = vmax.f32 %v816, %v1451
    %v1575 = vmax.f32 %v645, %v1280
    %v1576 = vmax.f32 %v647, %v1282
    %v1577 = vmax.f32 %v818, %v1453
    %v1578 = vmax.f32 %v820, %v1455
    %v1579 = vmax.f32 %v651, %v1286
    %v1580 = vmax.f32 %v653, %v1288
    %v1581 = vmax.f32 %v824, %v1459
    %v1582 = vmax.f32 %v826, %v1461
    %v1583 = vmax.f32 %v655, %v1290
    %v1584 = vmax.f32 %v657, %v1292
    %v1585 = vmax.f32 %v828, %v1463
    %v1586 = vmax.f32 %v830, %v1465
    %v1587 = vmax.f32 %v661, %v1296
    %v1588 = vmax.f32 %v663, %v1298
    %v1589 = vmax.f32 %v834, %v1469
    %v1590 = vmax.f32 %v836, %v1471
    %v1591 = vmax.f32 %v665, %v1300
    %v1592 = vmax.f32 %v667, %v1302
    %v1593 = vmax.f32 %v838, %v1473
    %v1594 = vmax.f32 %v840, %v1475
    %v1595 = vmax.f32 %v671, %v1306
    %v1596 = vmax.f32 %v673, %v1308
    %v1597 = vmax.f32 %v844, %v1479
    %v1598 = vmax.f32 %v846, %v1481
    %v1599 = vmax.f32 %v675, %v1310
    %v1600 = vmax.f32 %v677, %v1312
    %v1601 = vmax.f32 %v848, %v1483
    %v1602 = vmax.f32 %v850, %v1485
    %v1603 = vmax.f32 %v681, %v1316
    %v1604 = vmax.f32 %v683, %v1318
    %v1605 = vmax.f32 %v854, %v1489
    %v1606 = vmax.f32 %v856, %v1491
    %v1607 = vmax.f32 %v685, %v1320
    %v1608 = vmax.f32 %v687, %v1322
    %v1609 = vmax.f32 %v858, %v1493
    %v1610 = vmax.f32 %v860, %v1495
    %v1611 = vmax.f32 %v691, %v1326
    %v1612 = vmax.f32 %v693, %v1328
    %v1613 = vmax.f32 %v864, %v1499
    %v1614 = vmax.f32 %v866, %v1501
    %v1615 = vmax.f32 %v695, %v1330
    %v1616 = vmax.f32 %v697, %v1332
    %v1617 = vmax.f32 %v868, %v1503
    %v1618 = vmax.f32 %v870, %v1505
    %s1619 = scalar_lea.vmem [#allocation2], 768
    %v1620 = vld [vmem:[%s1619] sm:$0xff]
    %v1621 = vld [vmem:[%s1619 + $0x8] sm:$0xff]
    %v1622 = vld [vmem:[%s1619 + $0x10] sm:$0xff]
    %v1623 = vld [vmem:[%s1619 + $0x18] sm:$0xff]
    %v1624 = vld [vmem:[%s1619 + $0x20] sm:$0xff]
    %v1625 = vld [vmem:[%s1619 + $0x28] sm:$0xff]
    %v1626 = vld [vmem:[%s1619 + $0x30] sm:$0xff]
    %v1627 = vld [vmem:[%s1619 + $0x38] sm:$0xff]
    %v1628 = vld [vmem:[%s1619 + $0x40] sm:$0xff]
    %v1629 = vld [vmem:[%s1619 + $0x48] sm:$0xff]
    %v1630 = vld [vmem:[%s1619 + $0x50] sm:$0xff]
    %v1631 = vld [vmem:[%s1619 + $0x58] sm:$0xff]
    %v1632 = vld [vmem:[%s1619 + $0x60] sm:$0xff]
    %v1633 = vld [vmem:[%s1619 + $0x68] sm:$0xff]
    %v1634 = vld [vmem:[%s1619 + $0x70] sm:$0xff]
    %v1635 = vld [vmem:[%s1619 + $0x78] sm:$0xff]
    %v1636 = vld [vmem:[%s1619 + $0x80] sm:$0xff]
    %v1637 = vld [vmem:[%s1619 + $0x88] sm:$0xff]
    %v1638 = vld [vmem:[%s1619 + $0x90] sm:$0xff]
    %v1639 = vld [vmem:[%s1619 + $0x98] sm:$0xff]
    %v1640 = vld [vmem:[%s1619 + $0xa0] sm:$0xff]
    %v1641 = vld [vmem:[%s1619 + $0xa8] sm:$0xff]
    %v1642 = vld [vmem:[%s1619 + $0xb0] sm:$0xff]
    %v1643 = vld [vmem:[%s1619 + $0xb8] sm:$0xff]
    %v1644 = vld [vmem:[%s1619 + $0xc0] sm:$0xff]
    %v1645 = vld [vmem:[%s1619 + $0xc8] sm:$0xff]
    %v1646 = vld [vmem:[%s1619 + $0xd0] sm:$0xff]
    %v1647 = vld [vmem:[%s1619 + $0xd8] sm:$0xff]
    %v1648 = vld [vmem:[%s1619 + $0xe0] sm:$0xff]
    %v1649 = vld [vmem:[%s1619 + $0xe8] sm:$0xff]
    %v1650 = vld [vmem:[%s1619 + $0xf0] sm:$0xff]
    %v1651 = vld [vmem:[%s1619 + $0xf8] sm:$0xff]
    %v1652 = vld [vmem:[%s1619 + $0x100] sm:$0xff]
    %v1653 = vld [vmem:[%s1619 + $0x108] sm:$0xff]
    %v1654 = vld [vmem:[%s1619 + $0x110] sm:$0xff]
    %v1655 = vld [vmem:[%s1619 + $0x118] sm:$0xff]
    %v1656 = vld [vmem:[%s1619 + $0x120] sm:$0xff]
    %v1657 = vld [vmem:[%s1619 + $0x128] sm:$0xff]
    %v1658 = vld [vmem:[%s1619 + $0x130] sm:$0xff]
    %v1659 = vld [vmem:[%s1619 + $0x138] sm:$0xff]
    %v1660 = vld [vmem:[%s1619 + $0x140] sm:$0xff]
    %v1661 = vld [vmem:[%s1619 + $0x148] sm:$0xff]
    %v1662 = vld [vmem:[%s1619 + $0x150] sm:$0xff]
    %v1663 = vld [vmem:[%s1619 + $0x158] sm:$0xff]
    %v1664 = vld [vmem:[%s1619 + $0x160] sm:$0xff]
    %v1665 = vld [vmem:[%s1619 + $0x168] sm:$0xff]
    %v1666 = vld [vmem:[%s1619 + $0x170] sm:$0xff]
    %v1667 = vld [vmem:[%s1619 + $0x178] sm:$0xff]
    %v1716 = vunpack.c.l.b16 %v1620
    %v1717 = vunpack.c.h.b16 %v1620
    %v1718 = vunpack.c.l.b16 %v1621
    %v1719 = vunpack.c.h.b16 %v1621
    %v1720 = vunpack.c.l.b16 %v1622
    %v1721 = vunpack.c.h.b16 %v1622
    %v1722 = vunpack.c.l.b16 %v1623
    %v1723 = vunpack.c.h.b16 %v1623
    %v1724 = vunpack.c.l.b16 %v1624
    %v1725 = vunpack.c.h.b16 %v1624
    %v1726 = vunpack.c.l.b16 %v1625
    %v1727 = vunpack.c.h.b16 %v1625
    %v1728 = vunpack.c.l.b16 %v1626
    %v1729 = vunpack.c.h.b16 %v1626
    %v1730 = vunpack.c.l.b16 %v1627
    %v1731 = vunpack.c.h.b16 %v1627
    %v1732 = vunpack.c.l.b16 %v1628
    %v1733 = vunpack.c.h.b16 %v1628
    %v1734 = vunpack.c.l.b16 %v1629
    %v1735 = vunpack.c.h.b16 %v1629
    %v1736 = vunpack.c.l.b16 %v1630
    %v1737 = vunpack.c.h.b16 %v1630
    %v1738 = vunpack.c.l.b16 %v1631
    %v1739 = vunpack.c.h.b16 %v1631
    %v1740 = vunpack.c.l.b16 %v1632
    %v1741 = vunpack.c.h.b16 %v1632
    %v1742 = vunpack.c.l.b16 %v1633
    %v1743 = vunpack.c.h.b16 %v1633
    %v1744 = vunpack.c.l.b16 %v1634
    %v1745 = vunpack.c.h.b16 %v1634
    %v1746 = vunpack.c.l.b16 %v1635
    %v1747 = vunpack.c.h.b16 %v1635
    %v1748 = vunpack.c.l.b16 %v1636
    %v1749 = vunpack.c.h.b16 %v1636
    %v1750 = vunpack.c.l.b16 %v1637
    %v1751 = vunpack.c.h.b16 %v1637
    %v1752 = vunpack.c.l.b16 %v1638
    %v1753 = vunpack.c.h.b16 %v1638
    %v1754 = vunpack.c.l.b16 %v1639
    %v1755 = vunpack.c.h.b16 %v1639
    %v1756 = vunpack.c.l.b16 %v1640
    %v1757 = vunpack.c.h.b16 %v1640
    %v1758 = vunpack.c.l.b16 %v1641
    %v1759 = vunpack.c.h.b16 %v1641
    %v1760 = vunpack.c.l.b16 %v1642
    %v1761 = vunpack.c.h.b16 %v1642
    %v1762 = vunpack.c.l.b16 %v1643
    %v1763 = vunpack.c.h.b16 %v1643
    %v1764 = vunpack.c.l.b16 %v1644
    %v1765 = vunpack.c.h.b16 %v1644
    %v1766 = vunpack.c.l.b16 %v1645
    %v1767 = vunpack.c.h.b16 %v1645
    %v1768 = vunpack.c.l.b16 %v1646
    %v1769 = vunpack.c.h.b16 %v1646
    %v1770 = vunpack.c.l.b16 %v1647
    %v1771 = vunpack.c.h.b16 %v1647
    %v1772 = vunpack.c.l.b16 %v1648
    %v1773 = vunpack.c.h.b16 %v1648
    %v1774 = vunpack.c.l.b16 %v1649
    %v1775 = vunpack.c.h.b16 %v1649
    %v1776 = vunpack.c.l.b16 %v1650
    %v1777 = vunpack.c.h.b16 %v1650
    %v1778 = vunpack.c.l.b16 %v1651
    %v1779 = vunpack.c.h.b16 %v1651
    %v1780 = vunpack.c.l.b16 %v1652
    %v1781 = vunpack.c.h.b16 %v1652
    %v1782 = vunpack.c.l.b16 %v1653
    %v1783 = vunpack.c.h.b16 %v1653
    %v1784 = vunpack.c.l.b16 %v1654
    %v1785 = vunpack.c.h.b16 %v1654
    %v1786 = vunpack.c.l.b16 %v1655
    %v1787 = vunpack.c.h.b16 %v1655
    %v1788 = vunpack.c.l.b16 %v1656
    %v1789 = vunpack.c.h.b16 %v1656
    %v1790 = vunpack.c.l.b16 %v1657
    %v1791 = vunpack.c.h.b16 %v1657
    %v1792 = vunpack.c.l.b16 %v1658
    %v1793 = vunpack.c.h.b16 %v1658
    %v1794 = vunpack.c.l.b16 %v1659
    %v1795 = vunpack.c.h.b16 %v1659
    %v1796 = vunpack.c.l.b16 %v1660
    %v1797 = vunpack.c.h.b16 %v1660
    %v1798 = vunpack.c.l.b16 %v1661
    %v1799 = vunpack.c.h.b16 %v1661
    %v1800 = vunpack.c.l.b16 %v1662
    %v1801 = vunpack.c.h.b16 %v1662
    %v1802 = vunpack.c.l.b16 %v1663
    %v1803 = vunpack.c.h.b16 %v1663
    %v1804 = vunpack.c.l.b16 %v1664
    %v1805 = vunpack.c.h.b16 %v1664
    %v1806 = vunpack.c.l.b16 %v1665
    %v1807 = vunpack.c.h.b16 %v1665
    %v1808 = vunpack.c.l.b16 %v1666
    %v1809 = vunpack.c.h.b16 %v1666
    %v1810 = vunpack.c.l.b16 %v1667
    %v1811 = vunpack.c.h.b16 %v1667
    %v1812 = vpack.c.b16 %v1720, %v1716
    %v1813 = vpack.c.b16 %v1721, %v1717
    %v1814 = vpack.c.b16 %v1722, %v1718
    %v1815 = vpack.c.b16 %v1723, %v1719
    %v1816 = vpack.c.b16 %v1728, %v1724
    %v1817 = vpack.c.b16 %v1729, %v1725
    %v1818 = vpack.c.b16 %v1730, %v1726
    %v1819 = vpack.c.b16 %v1731, %v1727
    %v1820 = vpack.c.b16 %v1736, %v1732
    %v1821 = vpack.c.b16 %v1737, %v1733
    %v1822 = vpack.c.b16 %v1738, %v1734
    %v1823 = vpack.c.b16 %v1739, %v1735
    %v1824 = vpack.c.b16 %v1744, %v1740
    %v1825 = vpack.c.b16 %v1745, %v1741
    %v1826 = vpack.c.b16 %v1746, %v1742
    %v1827 = vpack.c.b16 %v1747, %v1743
    %v1828 = vpack.c.b16 %v1752, %v1748
    %v1829 = vpack.c.b16 %v1753, %v1749
    %v1830 = vpack.c.b16 %v1754, %v1750
    %v1831 = vpack.c.b16 %v1755, %v1751
    %v1832 = vpack.c.b16 %v1760, %v1756
    %v1833 = vpack.c.b16 %v1761, %v1757
    %v1834 = vpack.c.b16 %v1762, %v1758
    %v1835 = vpack.c.b16 %v1763, %v1759
    %v1836 = vpack.c.b16 %v1768, %v1764
    %v1837 = vpack.c.b16 %v1769, %v1765
    %v1838 = vpack.c.b16 %v1770, %v1766
    %v1839 = vpack.c.b16 %v1771, %v1767
    %v1840 = vpack.c.b16 %v1776, %v1772
    %v1841 = vpack.c.b16 %v1777, %v1773
    %v1842 = vpack.c.b16 %v1778, %v1774
    %v1843 = vpack.c.b16 %v1779, %v1775
    %v1844 = vpack.c.b16 %v1784, %v1780
    %v1845 = vpack.c.b16 %v1785, %v1781
    %v1846 = vpack.c.b16 %v1786, %v1782
    %v1847 = vpack.c.b16 %v1787, %v1783
    %v1848 = vpack.c.b16 %v1792, %v1788
    %v1849 = vpack.c.b16 %v1793, %v1789
    %v1850 = vpack.c.b16 %v1794, %v1790
    %v1851 = vpack.c.b16 %v1795, %v1791
    %v1852 = vpack.c.b16 %v1800, %v1796
    %v1853 = vpack.c.b16 %v1801, %v1797
    %v1854 = vpack.c.b16 %v1802, %v1798
    %v1855 = vpack.c.b16 %v1803, %v1799
    %v1856 = vpack.c.b16 %v1808, %v1804
    %v1857 = vpack.c.b16 %v1809, %v1805
    %v1858 = vpack.c.b16 %v1810, %v1806
    %v1859 = vpack.c.b16 %v1811, %v1807
    %1908 = vmatprep.subr.bf16.mxu0 %v1813
    %1909 = vmatpush1.bf16.msra.mxu0 %v1812
    %1910 = vmatprep.subr.bf16.mxu0 %v1817
    %1911 = vmatpush1.bf16.msra.mxu0 %v1816
    %1912 = vmatprep.subr.bf16.mxu0 %v1821
    %1913 = vmatpush1.bf16.msra.mxu0 %v1820
    %1914 = vmatprep.subr.bf16.mxu0 %v1825
    %1915 = vmatpush1.bf16.msra.mxu0 %v1824
    %1916 = vmatprep.subr.bf16.mxu0 %v1829
    %1917 = vmatpush1.bf16.msra.mxu0 %v1828
    %1918 = vmatprep.subr.bf16.mxu0 %v1833
    %1919 = vmatpush1.bf16.msra.mxu0 %v1832
    %1920 = vmatprep.subr.bf16.mxu0 %v1837
    %1921 = vmatpush1.bf16.msra.mxu0 %v1836
    %1922 = vmatprep.subr.bf16.mxu0 %v1841
    %1923 = vmatpush1.bf16.msra.mxu0 %v1840
    %1924 = vmatprep.subr.bf16.mxu0 %v1845
    %1925 = vmatpush1.bf16.msra.mxu0 %v1844
    %1926 = vmatprep.subr.bf16.mxu0 %v1849
    %1927 = vmatpush1.bf16.msra.mxu0 %v1848
    %1928 = vmatprep.subr.bf16.mxu0 %v1853
    %1929 = vmatpush1.bf16.msra.mxu0 %v1852
    %1930 = vmatprep.subr.bf16.mxu0 %v1857
    %1931 = vmatpush1.bf16.msra.mxu0 %v1856
    %1932 = vmatprep.subr.bf16.mxu0 0
    %1933 = vmatpush1.bf16.msra.mxu0 0
    %1934 = vmatprep.subr.bf16.mxu0 0
    %1935 = vmatpush1.bf16.msra.mxu0 0
    %1936 = vmatprep.subr.bf16.mxu0 0
    %1937 = vmatpush1.bf16.msra.mxu0 0
    %1938 = vmatprep.subr.bf16.mxu0 0
    %1939 = vmatpush1.bf16.msra.mxu0 0
    %1940 = vmatprep.mubr.bf16.mxu0 %v485
    %1941 = vmatmul.mubr.bf16.gmra.mrb[0].mxu0 %v201
    %v1942 = vpop.f32.mrb[0].mxu0
    %v1943 = vadd.f32 0.0, %v1942
    %v1944 = vpop.f32.mrb[0].mxu0
    %v1945 = vadd.f32 0.0, %v1944
    %v1946 = vpop.f32.mrb[0].mxu0
    %v1947 = vadd.f32 0.0, %v1946
    %v1948 = vpop.f32.mrb[0].mxu0
    %v1949 = vadd.f32 0.0, %v1948
    %1950 = vmatprep.mubr.bf16.mxu0 %v488
    %1951 = vmatmul.mubr.bf16.gmra.mrb[0].mxu0 %v203
    %v1952 = vpop.f32.mrb[0].mxu0
    %v1953 = vadd.f32 0.0, %v1952
    %v1954 = vpop.f32.mrb[0].mxu0
    %v1955 = vadd.f32 0.0, %v1954
    %v1956 = vpop.f32.mrb[0].mxu0
    %v1957 = vadd.f32 0.0, %v1956
    %v1958 = vpop.f32.mrb[0].mxu0
    %v1959 = vadd.f32 0.0, %v1958
    %1960 = vmatprep.mubr.bf16.mxu0 %v491
    %1961 = vmatmul.mubr.bf16.gmra.mrb[0].mxu0 %v205
    %v1962 = vpop.f32.mrb[0].mxu0
    %v1963 = vadd.f32 0.0, %v1962
    %v1964 = vpop.f32.mrb[0].mxu0
    %v1965 = vadd.f32 0.0, %v1964
    %v1966 = vpop.f32.mrb[0].mxu0
    %v1967 = vadd.f32 0.0, %v1966
    %v1968 = vpop.f32.mrb[0].mxu0
    %v1969 = vadd.f32 0.0, %v1968
    %1970 = vmatprep.mubr.bf16.mxu0 %v494
    %1971 = vmatmul.mubr.bf16.gmra.mrb[0].mxu0 %v207
    %v1972 = vpop.f32.mrb[0].mxu0
    %v1973 = vadd.f32 0.0, %v1972
    %v1974 = vpop.f32.mrb[0].mxu0
    %v1975 = vadd.f32 0.0, %v1974
    %v1976 = vpop.f32.mrb[0].mxu0
    %v1977 = vadd.f32 0.0, %v1976
    %v1978 = vpop.f32.mrb[0].mxu0
    %v1979 = vadd.f32 0.0, %v1978
    %1980 = vmatprep.mubr.bf16.mxu0 %v497
    %1981 = vmatmul.mubr.bf16.gmra.mrb[0].mxu0 %v209
    %v1982 = vpop.f32.mrb[0].mxu0
    %v1983 = vadd.f32 0.0, %v1982
    %v1984 = vpop.f32.mrb[0].mxu0
    %v1985 = vadd.f32 0.0, %v1984
    %v1986 = vpop.f32.mrb[0].mxu0
    %v1987 = vadd.f32 0.0, %v1986
    %v1988 = vpop.f32.mrb[0].mxu0
    %v1989 = vadd.f32 0.0, %v1988
    %1990 = vmatprep.mubr.bf16.mxu0 %v500
    %1991 = vmatmul.mubr.bf16.gmra.mrb[0].mxu0 %v211
    %v1992 = vpop.f32.mrb[0].mxu0
    %v1993 = vadd.f32 0.0, %v1992
    %v1994 = vpop.f32.mrb[0].mxu0
    %v1995 = vadd.f32 0.0, %v1994
    %v1996 = vpop.f32.mrb[0].mxu0
    %v1997 = vadd.f32 0.0, %v1996
    %v1998 = vpop.f32.mrb[0].mxu0
    %v1999 = vadd.f32 0.0, %v1998
    %2000 = vmatprep.mubr.bf16.mxu0 %v503
    %2001 = vmatmul.mubr.bf16.gmra.mrb[0].mxu0 %v213
    %v2002 = vpop.f32.mrb[0].mxu0
    %v2003 = vadd.f32 0.0, %v2002
    %v2004 = vpop.f32.mrb[0].mxu0
    %v2005 = vadd.f32 0.0, %v2004
    %v2006 = vpop.f32.mrb[0].mxu0
    %v2007 = vadd.f32 0.0, %v2006
    %v2008 = vpop.f32.mrb[0].mxu0
    %v2009 = vadd.f32 0.0, %v2008
    %2010 = vmatprep.mubr.bf16.mxu0 %v506
    %2011 = vmatmul.mubr.bf16.gmra.mrb[0].mxu0 %v215
    %v2012 = vpop.f32.mrb[0].mxu0
    %v2013 = vadd.f32 0.0, %v2012
    %v2014 = vpop.f32.mrb[0].mxu0
    %v2015 = vadd.f32 0.0, %v2014
    %v2016 = vpop.f32.mrb[0].mxu0
    %v2017 = vadd.f32 0.0, %v2016
    %v2018 = vpop.f32.mrb[0].mxu0
    %v2019 = vadd.f32 0.0, %v2018
    %2020 = vmatprep.mubr.bf16.mxu0 %v509
    %2021 = vmatmul.mubr.bf16.gmra.mrb[0].mxu0 %v217
    %v2022 = vpop.f32.mrb[0].mxu0
    %v2023 = vadd.f32 0.0, %v2022
    %v2024 = vpop.f32.mrb[0].mxu0
    %v2025 = vadd.f32 0.0, %v2024
    %v2026 = vpop.f32.mrb[0].mxu0
    %v2027 = vadd.f32 0.0, %v2026
    %v2028 = vpop.f32.mrb[0].mxu0
    %v2029 = vadd.f32 0.0, %v2028
    %2030 = vmatprep.mubr.bf16.mxu0 %v512
    %2031 = vmatmul.mubr.bf16.gmra.mrb[0].mxu0 %v219
    %v2032 = vpop.f32.mrb[0].mxu0
    %v2033 = vadd.f32 0.0, %v2032
    %v2034 = vpop.f32.mrb[0].mxu0
    %v2035 = vadd.f32 0.0, %v2034
    %v2036 = vpop.f32.mrb[0].mxu0
    %v2037 = vadd.f32 0.0, %v2036
    %v2038 = vpop.f32.mrb[0].mxu0
    %v2039 = vadd.f32 0.0, %v2038
    %2040 = vmatprep.mubr.bf16.mxu0 %v515
    %2041 = vmatmul.mubr.bf16.gmra.mrb[0].mxu0 %v221
    %v2042 = vpop.f32.mrb[0].mxu0
    %v2043 = vadd.f32 0.0, %v2042
    %v2044 = vpop.f32.mrb[0].mxu0
    %v2045 = vadd.f32 0.0, %v2044
    %v2046 = vpop.f32.mrb[0].mxu0
    %v2047 = vadd.f32 0.0, %v2046
    %v2048 = vpop.f32.mrb[0].mxu0
    %v2049 = vadd.f32 0.0, %v2048
    %2050 = vmatprep.mubr.bf16.mxu0 %v518
    %2051 = vmatmul.mubr.bf16.gmra.mrb[0].mxu0 %v223
    %v2052 = vpop.f32.mrb[0].mxu0
    %v2053 = vadd.f32 0.0, %v2052
    %v2054 = vpop.f32.mrb[0].mxu0
    %v2055 = vadd.f32 0.0, %v2054
    %v2056 = vpop.f32.mrb[0].mxu0
    %v2057 = vadd.f32 0.0, %v2056
    %v2058 = vpop.f32.mrb[0].mxu0
    %v2059 = vadd.f32 0.0, %v2058
    %2060 = vmatprep.mubr.bf16.mxu0 %v521
    %2061 = vmatmul.mubr.bf16.gmra.mrb[0].mxu0 %v225
    %v2062 = vpop.f32.mrb[0].mxu0
    %v2063 = vadd.f32 0.0, %v2062
    %v2064 = vpop.f32.mrb[0].mxu0
    %v2065 = vadd.f32 0.0, %v2064
    %v2066 = vpop.f32.mrb[0].mxu0
    %v2067 = vadd.f32 0.0, %v2066
    %v2068 = vpop.f32.mrb[0].mxu0
    %v2069 = vadd.f32 0.0, %v2068
    %2070 = vmatprep.mubr.bf16.mxu0 %v524
    %2071 = vmatmul.mubr.bf16.gmra.mrb[0].mxu0 %v227
    %v2072 = vpop.f32.mrb[0].mxu0
    %v2073 = vadd.f32 0.0, %v2072
    %v2074 = vpop.f32.mrb[0].mxu0
    %v2075 = vadd.f32 0.0, %v2074
    %v2076 = vpop.f32.mrb[0].mxu0
    %v2077 = vadd.f32 0.0, %v2076
    %v2078 = vpop.f32.mrb[0].mxu0
    %v2079 = vadd.f32 0.0, %v2078
    %2080 = vdwg.mxu0
    %2081 = vmatprep.subr.bf16.mxu0 %v1815
    %2082 = vmatpush1.bf16.msra.mxu0 %v1814
    %2083 = vmatprep.subr.bf16.mxu0 %v1819
    %2084 = vmatpush1.bf16.msra.mxu0 %v1818
    %2085 = vmatprep.subr.bf16.mxu0 %v1823
    %2086 = vmatpush1.bf16.msra.mxu0 %v1822
    %2087 = vmatprep.subr.bf16.mxu0 %v1827
    %2088 = vmatpush1.bf16.msra.mxu0 %v1826
    %2089 = vmatprep.subr.bf16.mxu0 %v1831
    %2090 = vmatpush1.bf16.msra.mxu0 %v1830
    %2091 = vmatprep.subr.bf16.mxu0 %v1835
    %2092 = vmatpush1.bf16.msra.mxu0 %v1834
    %2093 = vmatprep.subr.bf16.mxu0 %v1839
    %2094 = vmatpush1.bf16.msra.mxu0 %v1838
    %2095 = vmatprep.subr.bf16.mxu0 %v1843
    %2096 = vmatpush1.bf16.msra.mxu0 %v1842
    %2097 = vmatprep.subr.bf16.mxu0 %v1847
    %2098 = vmatpush1.bf16.msra.mxu0 %v1846
    %2099 = vmatprep.subr.bf16.mxu0 %v1851
    %2100 = vmatpush1.bf16.msra.mxu0 %v1850
    %2101 = vmatprep.subr.bf16.mxu0 %v1855
    %2102 = vmatpush1.bf16.msra.mxu0 %v1854
    %2103 = vmatprep.subr.bf16.mxu0 %v1859
    %2104 = vmatpush1.bf16.msra.mxu0 %v1858
    %2105 = vmatprep.subr.bf16.mxu0 0
    %2106 = vmatpush1.bf16.msra.mxu0 0
    %2107 = vmatprep.subr.bf16.mxu0 0
    %2108 = vmatpush1.bf16.msra.mxu0 0
    %2109 = vmatprep.subr.bf16.mxu0 0
    %2110 = vmatpush1.bf16.msra.mxu0 0
    %2111 = vmatprep.subr.bf16.mxu0 0
    %2112 = vmatpush1.bf16.msra.mxu0 0
    %2113 = vmatprep.mubr.bf16.mxu0 %v485
    %2114 = vmatmul.mubr.bf16.gmra.mrb[0].mxu0 %v201
    %v2115 = vpop.f32.mrb[0].mxu0
    %v2116 = vadd.f32 0.0, %v2115
    %v2117 = vpop.f32.mrb[0].mxu0
    %v2118 = vadd.f32 0.0, %v2117
    %v2119 = vpop.f32.mrb[0].mxu0
    %v2120 = vadd.f32 0.0, %v2119
    %v2121 = vpop.f32.mrb[0].mxu0
    %v2122 = vadd.f32 0.0, %v2121
    %2123 = vmatprep.mubr.bf16.mxu0 %v488
    %2124 = vmatmul.mubr.bf16.gmra.mrb[0].mxu0 %v203
    %v2125 = vpop.f32.mrb[0].mxu0
    %v2126 = vadd.f32 0.0, %v2125
    %v2127 = vpop.f32.mrb[0].mxu0
    %v2128 = vadd.f32 0.0, %v2127
    %v2129 = vpop.f32.mrb[0].mxu0
    %v2130 = vadd.f32 0.0, %v2129
    %v2131 = vpop.f32.mrb[0].mxu0
    %v2132 = vadd.f32 0.0, %v2131
    %2133 = vmatprep.mubr.bf16.mxu0 %v491
    %2134 = vmatmul.mubr.bf16.gmra.mrb[0].mxu0 %v205
    %v2135 = vpop.f32.mrb[0].mxu0
    %v2136 = vadd.f32 0.0, %v2135
    %v2137 = vpop.f32.mrb[0].mxu0
    %v2138 = vadd.f32 0.0, %v2137
    %v2139 = vpop.f32.mrb[0].mxu0
    %v2140 = vadd.f32 0.0, %v2139
    %v2141 = vpop.f32.mrb[0].mxu0
    %v2142 = vadd.f32 0.0, %v2141
    %2143 = vmatprep.mubr.bf16.mxu0 %v494
    %2144 = vmatmul.mubr.bf16.gmra.mrb[0].mxu0 %v207
    %v2145 = vpop.f32.mrb[0].mxu0
    %v2146 = vadd.f32 0.0, %v2145
    %v2147 = vpop.f32.mrb[0].mxu0
    %v2148 = vadd.f32 0.0, %v2147
    %v2149 = vpop.f32.mrb[0].mxu0
    %v2150 = vadd.f32 0.0, %v2149
    %v2151 = vpop.f32.mrb[0].mxu0
    %v2152 = vadd.f32 0.0, %v2151
    %2153 = vmatprep.mubr.bf16.mxu0 %v497
    %2154 = vmatmul.mubr.bf16.gmra.mrb[0].mxu0 %v209
    %v2155 = vpop.f32.mrb[0].mxu0
    %v2156 = vadd.f32 0.0, %v2155
    %v2157 = vpop.f32.mrb[0].mxu0
    %v2158 = vadd.f32 0.0, %v2157
    %v2159 = vpop.f32.mrb[0].mxu0
    %v2160 = vadd.f32 0.0, %v2159
    %v2161 = vpop.f32.mrb[0].mxu0
    %v2162 = vadd.f32 0.0, %v2161
    %2163 = vmatprep.mubr.bf16.mxu0 %v500
    %2164 = vmatmul.mubr.bf16.gmra.mrb[0].mxu0 %v211
    %v2165 = vpop.f32.mrb[0].mxu0
    %v2166 = vadd.f32 0.0, %v2165
    %v2167 = vpop.f32.mrb[0].mxu0
    %v2168 = vadd.f32 0.0, %v2167
    %v2169 = vpop.f32.mrb[0].mxu0
    %v2170 = vadd.f32 0.0, %v2169
    %v2171 = vpop.f32.mrb[0].mxu0
    %v2172 = vadd.f32 0.0, %v2171
    %2173 = vmatprep.mubr.bf16.mxu0 %v503
    %2174 = vmatmul.mubr.bf16.gmra.mrb[0].mxu0 %v213
    %v2175 = vpop.f32.mrb[0].mxu0
    %v2176 = vadd.f32 0.0, %v2175
    %v2177 = vpop.f32.mrb[0].mxu0
    %v2178 = vadd.f32 0.0, %v2177
    %v2179 = vpop.f32.mrb[0].mxu0
    %v2180 = vadd.f32 0.0, %v2179
    %v2181 = vpop.f32.mrb[0].mxu0
    %v2182 = vadd.f32 0.0, %v2181
    %2183 = vmatprep.mubr.bf16.mxu0 %v506
    %2184 = vmatmul.mubr.bf16.gmra.mrb[0].mxu0 %v215
    %v2185 = vpop.f32.mrb[0].mxu0
    %v2186 = vadd.f32 0.0, %v2185
    %v2187 = vpop.f32.mrb[0].mxu0
    %v2188 = vadd.f32 0.0, %v2187
    %v2189 = vpop.f32.mrb[0].mxu0
    %v2190 = vadd.f32 0.0, %v2189
    %v2191 = vpop.f32.mrb[0].mxu0
    %v2192 = vadd.f32 0.0, %v2191
    %2193 = vmatprep.mubr.bf16.mxu0 %v509
    %2194 = vmatmul.mubr.bf16.gmra.mrb[0].mxu0 %v217
    %v2195 = vpop.f32.mrb[0].mxu0
    %v2196 = vadd.f32 0.0, %v2195
    %v2197 = vpop.f32.mrb[0].mxu0
    %v2198 = vadd.f32 0.0, %v2197
    %v2199 = vpop.f32.mrb[0].mxu0
    %v2200 = vadd.f32 0.0, %v2199
    %v2201 = vpop.f32.mrb[0].mxu0
    %v2202 = vadd.f32 0.0, %v2201
    %2203 = vmatprep.mubr.bf16.mxu0 %v512
    %2204 = vmatmul.mubr.bf16.gmra.mrb[0].mxu0 %v219
    %v2205 = vpop.f32.mrb[0].mxu0
    %v2206 = vadd.f32 0.0, %v2205
    %v2207 = vpop.f32.mrb[0].mxu0
    %v2208 = vadd.f32 0.0, %v2207
    %v2209 = vpop.f32.mrb[0].mxu0
    %v2210 = vadd.f32 0.0, %v2209
    %v2211 = vpop.f32.mrb[0].mxu0
    %v2212 = vadd.f32 0.0, %v2211
    %2213 = vmatprep.mubr.bf16.mxu0 %v515
    %2214 = vmatmul.mubr.bf16.gmra.mrb[0].mxu0 %v221
    %v2215 = vpop.f32.mrb[0].mxu0
    %v2216 = vadd.f32 0.0, %v2215
    %v2217 = vpop.f32.mrb[0].mxu0
    %v2218 = vadd.f32 0.0, %v2217
    %v2219 = vpop.f32.mrb[0].mxu0
    %v2220 = vadd.f32 0.0, %v2219
    %v2221 = vpop.f32.mrb[0].mxu0
    %v2222 = vadd.f32 0.0, %v2221
    %2223 = vmatprep.mubr.bf16.mxu0 %v518
    %2224 = vmatmul.mubr.bf16.gmra.mrb[0].mxu0 %v223
    %v2225 = vpop.f32.mrb[0].mxu0
    %v2226 = vadd.f32 0.0, %v2225
    %v2227 = vpop.f32.mrb[0].mxu0
    %v2228 = vadd.f32 0.0, %v2227
    %v2229 = vpop.f32.mrb[0].mxu0
    %v2230 = vadd.f32 0.0, %v2229
    %v2231 = vpop.f32.mrb[0].mxu0
    %v2232 = vadd.f32 0.0, %v2231
    %2233 = vmatprep.mubr.bf16.mxu0 %v521
    %2234 = vmatmul.mubr.bf16.gmra.mrb[0].mxu0 %v225
    %v2235 = vpop.f32.mrb[0].mxu0
    %v2236 = vadd.f32 0.0, %v2235
    %v2237 = vpop.f32.mrb[0].mxu0
    %v2238 = vadd.f32 0.0, %v2237
    %v2239 = vpop.f32.mrb[0].mxu0
    %v2240 = vadd.f32 0.0, %v2239
    %v2241 = vpop.f32.mrb[0].mxu0
    %v2242 = vadd.f32 0.0, %v2241
    %2243 = vmatprep.mubr.bf16.mxu0 %v524
    %2244 = vmatmul.mubr.bf16.gmra.mrb[0].mxu0 %v227
    %v2245 = vpop.f32.mrb[0].mxu0
    %v2246 = vadd.f32 0.0, %v2245
    %v2247 = vpop.f32.mrb[0].mxu0
    %v2248 = vadd.f32 0.0, %v2247
    %v2249 = vpop.f32.mrb[0].mxu0
    %v2250 = vadd.f32 0.0, %v2249
    %v2251 = vpop.f32.mrb[0].mxu0
    %v2252 = vadd.f32 0.0, %v2251
    %2253 = vdwg.mxu0
    %v2254 = vmax.f32 %v1507, %v1943
    %v2255 = vmax.f32 %v1508, %v1945
    %v2256 = vmax.f32 %v1509, %v2116
    %v2257 = vmax.f32 %v1510, %v2118
    %v2258 = vmax.f32 %v1511, %v1947
    %v2259 = vmax.f32 %v1512, %v1949
    %v2260 = vmax.f32 %v1513, %v2120
    %v2261 = vmax.f32 %v1514, %v2122
    %v2262 = vmax.f32 %v1515, %v1953
    %v2263 = vmax.f32 %v1516, %v1955
    %v2264 = vmax.f32 %v1517, %v2126
    %v2265 = vmax.f32 %v1518, %v2128
    %v2266 = vmax.f32 %v1519, %v1957
    %v2267 = vmax.f32 %v1520, %v1959
    %v2268 = vmax.f32 %v1521, %v2130
    %v2269 = vmax.f32 %v1522, %v2132
    %v2270 = vmax.f32 %v1523, %v1963
    %v2271 = vmax.f32 %v1524, %v1965
    %v2272 = vmax.f32 %v1525, %v2136
    %v2273 = vmax.f32 %v1526, %v2138
    %v2274 = vmax.f32 %v1527, %v1967
    %v2275 = vmax.f32 %v1528, %v1969
    %v2276 = vmax.f32 %v1529, %v2140
    %v2277 = vmax.f32 %v1530, %v2142
    %v2278 = vmax.f32 %v1531, %v1973
    %v2279 = vmax.f32 %v1532, %v1975
    %v2280 = vmax.f32 %v1533, %v2146
    %v2281 = vmax.f32 %v1534, %v2148
    %v2282 = vmax.f32 %v1535, %v1977
    %v2283 = vmax.f32 %v1536, %v1979
    %v2284 = vmax.f32 %v1537, %v2150
    %v2285 = vmax.f32 %v1538, %v2152
    %v2286 = vmax.f32 %v1539, %v1983
    %v2287 = vmax.f32 %v1540, %v1985
    %v2288 = vmax.f32 %v1541, %v2156
    %v2289 = vmax.f32 %v1542, %v2158
    %v2290 = vmax.f32 %v1543, %v1987
    %v2291 = vmax.f32 %v1544, %v1989
    %v2292 = vmax.f32 %v1545, %v2160
    %v2293 = vmax.f32 %v1546, %v2162
    %v2294 = vmax.f32 %v1547, %v1993
    %v2295 = vmax.f32 %v1548, %v1995
    %v2296 = vmax.f32 %v1549, %v2166
    %v2297 = vmax.f32 %v1550, %v2168
    %v2298 = vmax.f32 %v1551, %v1997
    %v2299 = vmax.f32 %v1552, %v1999
    %v2300 = vmax.f32 %v1553, %v2170
    %v2301 = vmax.f32 %v1554, %v2172
    %v2302 = vmax.f32 %v1555, %v2003
    %v2303 = vmax.f32 %v1556, %v2005
    %v2304 = vmax.f32 %v1557, %v2176
    %v2305 = vmax.f32 %v1558, %v2178
    %v2306 = vmax.f32 %v1559, %v2007
    %v2307 = vmax.f32 %v1560, %v2009
    %v2308 = vmax.f32 %v1561, %v2180
    %v2309 = vmax.f32 %v1562, %v2182
    %v2310 = vmax.f32 %v1563, %v2013
    %v2311 = vmax.f32 %v1564, %v2015
    %v2312 = vmax.f32 %v1565, %v2186
    %v2313 = vmax.f32 %v1566, %v2188
    %v2314 = vmax.f32 %v1567, %v2017
    %v2315 = vmax.f32 %v1568, %v2019
    %v2316 = vmax.f32 %v1569, %v2190
    %v2317 = vmax.f32 %v1570, %v2192
    %v2318 = vmax.f32 %v1571, %v2023
    %v2319 = vmax.f32 %v1572, %v2025
    %v2320 = vmax.f32 %v1573, %v2196
    %v2321 = vmax.f32 %v1574, %v2198
    %v2322 = vmax.f32 %v1575, %v2027
    %v2323 = vmax.f32 %v1576, %v2029
    %v2324 = vmax.f32 %v1577, %v2200
    %v2325 = vmax.f32 %v1578, %v2202
    %v2326 = vmax.f32 %v1579, %v2033
    %v2327 = vmax.f32 %v1580, %v2035
    %v2328 = vmax.f32 %v1581, %v2206
    %v2329 = vmax.f32 %v1582, %v2208
    %v2330 = vmax.f32 %v1583, %v2037
    %v2331 = vmax.f32 %v1584, %v2039
    %v2332 = vmax.f32 %v1585, %v2210
    %v2333 = vmax.f32 %v1586, %v2212
    %v2334 = vmax.f32 %v1587, %v2043
    %v2335 = vmax.f32 %v1588, %v2045
    %v2336 = vmax.f32 %v1589, %v2216
    %v2337 = vmax.f32 %v1590, %v2218
    %v2338 = vmax.f32 %v1591, %v2047
    %v2339 = vmax.f32 %v1592, %v2049
    %v2340 = vmax.f32 %v1593, %v2220
    %v2341 = vmax.f32 %v1594, %v2222
    %v2342 = vmax.f32 %v1595, %v2053
    %v2343 = vmax.f32 %v1596, %v2055
    %v2344 = vmax.f32 %v1597, %v2226
    %v2345 = vmax.f32 %v1598, %v2228
    %v2346 = vmax.f32 %v1599, %v2057
    %v2347 = vmax.f32 %v1600, %v2059
    %v2348 = vmax.f32 %v1601, %v2230
    %v2349 = vmax.f32 %v1602, %v2232
    %v2350 = vmax.f32 %v1603, %v2063
    %v2351 = vmax.f32 %v1604, %v2065
    %v2352 = vmax.f32 %v1605, %v2236
    %v2353 = vmax.f32 %v1606, %v2238
    %v2354 = vmax.f32 %v1607, %v2067
    %v2355 = vmax.f32 %v1608, %v2069
    %v2356 = vmax.f32 %v1609, %v2240
    %v2357 = vmax.f32 %v1610, %v2242
    %v2358 = vmax.f32 %v1611, %v2073
    %v2359 = vmax.f32 %v1612, %v2075
    %v2360 = vmax.f32 %v1613, %v2246
    %v2361 = vmax.f32 %v1614, %v2248
    %v2362 = vmax.f32 %v1615, %v2077
    %v2363 = vmax.f32 %v1616, %v2079
    %v2364 = vmax.f32 %v1617, %v2250
    %v2365 = vmax.f32 %v1618, %v2252
    %s2366 = scalar_lea.vmem [#allocation2], 1152
    %v2367 = vld [vmem:[%s2366] sm:$0xff]
    %v2368 = vld [vmem:[%s2366 + $0x8] sm:$0xff]
    %v2369 = vld [vmem:[%s2366 + $0x10] sm:$0xff]
    %v2370 = vld [vmem:[%s2366 + $0x18] sm:$0xff]
    %v2371 = vld [vmem:[%s2366 + $0x20] sm:$0xff]
    %v2372 = vld [vmem:[%s2366 + $0x28] sm:$0xff]
    %v2373 = vld [vmem:[%s2366 + $0x30] sm:$0xff]
    %v2374 = vld [vmem:[%s2366 + $0x38] sm:$0xff]
    %v2375 = vld [vmem:[%s2366 + $0x40] sm:$0xff]
    %v2376 = vld [vmem:[%s2366 + $0x48] sm:$0xff]
    %v2377 = vld [vmem:[%s2366 + $0x50] sm:$0xff]
    %v2378 = vld [vmem:[%s2366 + $0x58] sm:$0xff]
    %v2379 = vld [vmem:[%s2366 + $0x60] sm:$0xff]
    %v2380 = vld [vmem:[%s2366 + $0x68] sm:$0xff]
    %v2381 = vld [vmem:[%s2366 + $0x70] sm:$0xff]
    %v2382 = vld [vmem:[%s2366 + $0x78] sm:$0xff]
    %v2383 = vld [vmem:[%s2366 + $0x80] sm:$0xff]
    %v2384 = vld [vmem:[%s2366 + $0x88] sm:$0xff]
    %v2385 = vld [vmem:[%s2366 + $0x90] sm:$0xff]
    %v2386 = vld [vmem:[%s2366 + $0x98] sm:$0xff]
    %v2387 = vld [vmem:[%s2366 + $0xa0] sm:$0xff]
    %v2388 = vld [vmem:[%s2366 + $0xa8] sm:$0xff]
    %v2389 = vld [vmem:[%s2366 + $0xb0] sm:$0xff]
    %v2390 = vld [vmem:[%s2366 + $0xb8] sm:$0xff]
    %v2391 = vld [vmem:[%s2366 + $0xc0] sm:$0xff]
    %v2392 = vld [vmem:[%s2366 + $0xc8] sm:$0xff]
    %v2393 = vld [vmem:[%s2366 + $0xd0] sm:$0xff]
    %v2394 = vld [vmem:[%s2366 + $0xd8] sm:$0xff]
    %v2395 = vld [vmem:[%s2366 + $0xe0] sm:$0xff]
    %v2396 = vld [vmem:[%s2366 + $0xe8] sm:$0xff]
    %v2397 = vld [vmem:[%s2366 + $0xf0] sm:$0xff]
    %v2398 = vld [vmem:[%s2366 + $0xf8] sm:$0xff]
    %v2399 = vld [vmem:[%s2366 + $0x100] sm:$0xff]
    %v2400 = vld [vmem:[%s2366 + $0x108] sm:$0xff]
    %v2401 = vld [vmem:[%s2366 + $0x110] sm:$0xff]
    %v2402 = vld [vmem:[%s2366 + $0x118] sm:$0xff]
    %v2403 = vld [vmem:[%s2366 + $0x120] sm:$0xff]
    %v2404 = vld [vmem:[%s2366 + $0x128] sm:$0xff]
    %v2405 = vld [vmem:[%s2366 + $0x130] sm:$0xff]
    %v2406 = vld [vmem:[%s2366 + $0x138] sm:$0xff]
    %v2407 = vld [vmem:[%s2366 + $0x140] sm:$0xff]
    %v2408 = vld [vmem:[%s2366 + $0x148] sm:$0xff]
    %v2409 = vld [vmem:[%s2366 + $0x150] sm:$0xff]
    %v2410 = vld [vmem:[%s2366 + $0x158] sm:$0xff]
    %v2411 = vld [vmem:[%s2366 + $0x160] sm:$0xff]
    %v2412 = vld [vmem:[%s2366 + $0x168] sm:$0xff]
    %v2413 = vld [vmem:[%s2366 + $0x170] sm:$0xff]
    %v2414 = vld [vmem:[%s2366 + $0x178] sm:$0xff]
    %v2463 = vunpack.c.l.b16 %v2367
    %v2464 = vunpack.c.h.b16 %v2367
    %v2465 = vunpack.c.l.b16 %v2368
    %v2466 = vunpack.c.h.b16 %v2368
    %v2467 = vunpack.c.l.b16 %v2369
    %v2468 = vunpack.c.h.b16 %v2369
    %v2469 = vunpack.c.l.b16 %v2370
    %v2470 = vunpack.c.h.b16 %v2370
    %v2471 = vunpack.c.l.b16 %v2371
    %v2472 = vunpack.c.h.b16 %v2371
    %v2473 = vunpack.c.l.b16 %v2372
    %v2474 = vunpack.c.h.b16 %v2372
    %v2475 = vunpack.c.l.b16 %v2373
    %v2476 = vunpack.c.h.b16 %v2373
    %v2477 = vunpack.c.l.b16 %v2374
    %v2478 = vunpack.c.h.b16 %v2374
    %v2479 = vunpack.c.l.b16 %v2375
    %v2480 = vunpack.c.h.b16 %v2375
    %v2481 = vunpack.c.l.b16 %v2376
    %v2482 = vunpack.c.h.b16 %v2376
    %v2483 = vunpack.c.l.b16 %v2377
    %v2484 = vunpack.c.h.b16 %v2377
    %v2485 = vunpack.c.l.b16 %v2378
    %v2486 = vunpack.c.h.b16 %v2378
    %v2487 = vunpack.c.l.b16 %v2379
    %v2488 = vunpack.c.h.b16 %v2379
    %v2489 = vunpack.c.l.b16 %v2380
    %v2490 = vunpack.c.h.b16 %v2380
    %v2491 = vunpack.c.l.b16 %v2381
    %v2492 = vunpack.c.h.b16 %v2381
    %v2493 = vunpack.c.l.b16 %v2382
    %v2494 = vunpack.c.h.b16 %v2382
    %v2495 = vunpack.c.l.b16 %v2383
    %v2496 = vunpack.c.h.b16 %v2383
    %v2497 = vunpack.c.l.b16 %v2384
    %v2498 = vunpack.c.h.b16 %v2384
    %v2499 = vunpack.c.l.b16 %v2385
    %v2500 = vunpack.c.h.b16 %v2385
    %v2501 = vunpack.c.l.b16 %v2386
    %v2502 = vunpack.c.h.b16 %v2386
    %v2503 = vunpack.c.l.b16 %v2387
    %v2504 = vunpack.c.h.b16 %v2387
    %v2505 = vunpack.c.l.b16 %v2388
    %v2506 = vunpack.c.h.b16 %v2388
    %v2507 = vunpack.c.l.b16 %v2389
    %v2508 = vunpack.c.h.b16 %v2389
    %v2509 = vunpack.c.l.b16 %v2390
    %v2510 = vunpack.c.h.b16 %v2390
    %v2511 = vunpack.c.l.b16 %v2391
    %v2512 = vunpack.c.h.b16 %v2391
    %v2513 = vunpack.c.l.b16 %v2392
    %v2514 = vunpack.c.h.b16 %v2392
    %v2515 = vunpack.c.l.b16 %v2393
    %v2516 = vunpack.c.h.b16 %v2393
    %v2517 = vunpack.c.l.b16 %v2394
    %v2518 = vunpack.c.h.b16 %v2394
    %v2519 = vunpack.c.l.b16 %v2395
    %v2520 = vunpack.c.h.b16 %v2395
    %v2521 = vunpack.c.l.b16 %v2396
    %v2522 = vunpack.c.h.b16 %v2396
    %v2523 = vunpack.c.l.b16 %v2397
    %v2524 = vunpack.c.h.b16 %v2397
    %v2525 = vunpack.c.l.b16 %v2398
    %v2526 = vunpack.c.h.b16 %v2398
    %v2527 = vunpack.c.l.b16 %v2399
    %v2528 = vunpack.c.h.b16 %v2399
    %v2529 = vunpack.c.l.b16 %v2400
    %v2530 = vunpack.c.h.b16 %v2400
    %v2531 = vunpack.c.l.b16 %v2401
    %v2532 = vunpack.c.h.b16 %v2401
    %v2533 = vunpack.c.l.b16 %v2402
    %v2534 = vunpack.c.h.b16 %v2402
    %v2535 = vunpack.c.l.b16 %v2403
    %v2536 = vunpack.c.h.b16 %v2403
    %v2537 = vunpack.c.l.b16 %v2404
    %v2538 = vunpack.c.h.b16 %v2404
    %v2539 = vunpack.c.l.b16 %v2405
    %v2540 = vunpack.c.h.b16 %v2405
    %v2541 = vunpack.c.l.b16 %v2406
    %v2542 = vunpack.c.h.b16 %v2406
    %v2543 = vunpack.c.l.b16 %v2407
    %v2544 = vunpack.c.h.b16 %v2407
    %v2545 = vunpack.c.l.b16 %v2408
    %v2546 = vunpack.c.h.b16 %v2408
    %v2547 = vunpack.c.l.b16 %v2409
    %v2548 = vunpack.c.h.b16 %v2409
    %v2549 = vunpack.c.l.b16 %v2410
    %v2550 = vunpack.c.h.b16 %v2410
    %v2551 = vunpack.c.l.b16 %v2411
    %v2552 = vunpack.c.h.b16 %v2411
    %v2553 = vunpack.c.l.b16 %v2412
    %v2554 = vunpack.c.h.b16 %v2412
    %v2555 = vunpack.c.l.b16 %v2413
    %v2556 = vunpack.c.h.b16 %v2413
    %v2557 = vunpack.c.l.b16 %v2414
    %v2558 = vunpack.c.h.b16 %v2414
    %v2559 = vpack.c.b16 %v2467, %v2463
    %v2560 = vpack.c.b16 %v2468, %v2464
    %v2561 = vpack.c.b16 %v2469, %v2465
    %v2562 = vpack.c.b16 %v2470, %v2466
    %v2563 = vpack.c.b16 %v2475, %v2471
    %v2564 = vpack.c.b16 %v2476, %v2472
    %v2565 = vpack.c.b16 %v2477, %v2473
    %v2566 = vpack.c.b16 %v2478, %v2474
    %v2567 = vpack.c.b16 %v2483, %v2479
    %v2568 = vpack.c.b16 %v2484, %v2480
    %v2569 = vpack.c.b16 %v2485, %v2481
    %v2570 = vpack.c.b16 %v2486, %v2482
    %v2571 = vpack.c.b16 %v2491, %v2487
    %v2572 = vpack.c.b16 %v2492, %v2488
    %v2573 = vpack.c.b16 %v2493, %v2489
    %v2574 = vpack.c.b16 %v2494, %v2490
    %v2575 = vpack.c.b16 %v2499, %v2495
    %v2576 = vpack.c.b16 %v2500, %v2496
    %v2577 = vpack.c.b16 %v2501, %v2497
    %v2578 = vpack.c.b16 %v2502, %v2498
    %v2579 = vpack.c.b16 %v2507, %v2503
    %v2580 = vpack.c.b16 %v2508, %v2504
    %v2581 = vpack.c.b16 %v2509, %v2505
    %v2582 = vpack.c.b16 %v2510, %v2506
    %v2583 = vpack.c.b16 %v2515, %v2511
    %v2584 = vpack.c.b16 %v2516, %v2512
    %v2585 = vpack.c.b16 %v2517, %v2513
    %v2586 = vpack.c.b16 %v2518, %v2514
    %v2587 = vpack.c.b16 %v2523, %v2519
    %v2588 = vpack.c.b16 %v2524, %v2520
    %v2589 = vpack.c.b16 %v2525, %v2521
    %v2590 = vpack.c.b16 %v2526, %v2522
    %v2591 = vpack.c.b16 %v2531, %v2527
    %v2592 = vpack.c.b16 %v2532, %v2528
    %v2593 = vpack.c.b16 %v2533, %v2529
    %v2594 = vpack.c.b16 %v2534, %v2530
    %v2595 = vpack.c.b16 %v2539, %v2535
    %v2596 = vpack.c.b16 %v2540, %v2536
    %v2597 = vpack.c.b16 %v2541, %v2537
    %v2598 = vpack.c.b16 %v2542, %v2538
    %v2599 = vpack.c.b16 %v2547, %v2543
    %v2600 = vpack.c.b16 %v2548, %v2544
    %v2601 = vpack.c.b16 %v2549, %v2545
    %v2602 = vpack.c.b16 %v2550, %v2546
    %v2603 = vpack.c.b16 %v2555, %v2551
    %v2604 = vpack.c.b16 %v2556, %v2552
    %v2605 = vpack.c.b16 %v2557, %v2553
    %v2606 = vpack.c.b16 %v2558, %v2554
    %2655 = vmatprep.subr.bf16.mxu0 %v2560
    %2656 = vmatpush1.bf16.msra.mxu0 %v2559
    %2657 = vmatprep.subr.bf16.mxu0 %v2564
    %2658 = vmatpush1.bf16.msra.mxu0 %v2563
    %2659 = vmatprep.subr.bf16.mxu0 %v2568
    %2660 = vmatpush1.bf16.msra.mxu0 %v2567
    %2661 = vmatprep.subr.bf16.mxu0 %v2572
    %2662 = vmatpush1.bf16.msra.mxu0 %v2571
    %2663 = vmatprep.subr.bf16.mxu0 %v2576
    %2664 = vmatpush1.bf16.msra.mxu0 %v2575
    %2665 = vmatprep.subr.bf16.mxu0 %v2580
    %2666 = vmatpush1.bf16.msra.mxu0 %v2579
    %2667 = vmatprep.subr.bf16.mxu0 %v2584
    %2668 = vmatpush1.bf16.msra.mxu0 %v2583
    %2669 = vmatprep.subr.bf16.mxu0 %v2588
    %2670 = vmatpush1.bf16.msra.mxu0 %v2587
    %2671 = vmatprep.subr.bf16.mxu0 %v2592
    %2672 = vmatpush1.bf16.msra.mxu0 %v2591
    %2673 = vmatprep.subr.bf16.mxu0 %v2596
    %2674 = vmatpush1.bf16.msra.mxu0 %v2595
    %2675 = vmatprep.subr.bf16.mxu0 %v2600
    %2676 = vmatpush1.bf16.msra.mxu0 %v2599
    %2677 = vmatprep.subr.bf16.mxu0 %v2604
    %2678 = vmatpush1.bf16.msra.mxu0 %v2603
    %2679 = vmatprep.subr.bf16.mxu0 0
    %2680 = vmatpush1.bf16.msra.mxu0 0
    %2681 = vmatprep.subr.bf16.mxu0 0
    %2682 = vmatpush1.bf16.msra.mxu0 0
    %2683 = vmatprep.subr.bf16.mxu0 0
    %2684 = vmatpush1.bf16.msra.mxu0 0
    %2685 = vmatprep.subr.bf16.mxu0 0
    %2686 = vmatpush1.bf16.msra.mxu0 0
    %2687 = vmatprep.mubr.bf16.mxu0 %v485
    %2688 = vmatmul.mubr.bf16.gmra.mrb[0].mxu0 %v201
    %v2689 = vpop.f32.mrb[0].mxu0
    %v2690 = vadd.f32 0.0, %v2689
    %v2691 = vpop.f32.mrb[0].mxu0
    %v2692 = vadd.f32 0.0, %v2691
    %v2693 = vpop.f32.mrb[0].mxu0
    %v2694 = vadd.f32 0.0, %v2693
    %v2695 = vpop.f32.mrb[0].mxu0
    %v2696 = vadd.f32 0.0, %v2695
    %2697 = vmatprep.mubr.bf16.mxu0 %v488
    %2698 = vmatmul.mubr.bf16.gmra.mrb[0].mxu0 %v203
    %v2699 = vpop.f32.mrb[0].mxu0
    %v2700 = vadd.f32 0.0, %v2699
    %v2701 = vpop.f32.mrb[0].mxu0
    %v2702 = vadd.f32 0.0, %v2701
    %v2703 = vpop.f32.mrb[0].mxu0
    %v2704 = vadd.f32 0.0, %v2703
    %v2705 = vpop.f32.mrb[0].mxu0
    %v2706 = vadd.f32 0.0, %v2705
    %2707 = vmatprep.mubr.bf16.mxu0 %v491
    %2708 = vmatmul.mubr.bf16.gmra.mrb[0].mxu0 %v205
    %v2709 = vpop.f32.mrb[0].mxu0
    %v2710 = vadd.f32 0.0, %v2709
    %v2711 = vpop.f32.mrb[0].mxu0
    %v2712 = vadd.f32 0.0, %v2711
    %v2713 = vpop.f32.mrb[0].mxu0
    %v2714 = vadd.f32 0.0, %v2713
    %v2715 = vpop.f32.mrb[0].mxu0
    %v2716 = vadd.f32 0.0, %v2715
    %2717 = vmatprep.mubr.bf16.mxu0 %v494
    %2718 = vmatmul.mubr.bf16.gmra.mrb[0].mxu0 %v207
    %v2719 = vpop.f32.mrb[0].mxu0
    %v2720 = vadd.f32 0.0, %v2719
    %v2721 = vpop.f32.mrb[0].mxu0
    %v2722 = vadd.f32 0.0, %v2721
    %v2723 = vpop.f32.mrb[0].mxu0
    %v2724 = vadd.f32 0.0, %v2723
    %v2725 = vpop.f32.mrb[0].mxu0
    %v2726 = vadd.f32 0.0, %v2725
    %2727 = vmatprep.mubr.bf16.mxu0 %v497
    %2728 = vmatmul.mubr.bf16.gmra.mrb[0].mxu0 %v209
    %v2729 = vpop.f32.mrb[0].mxu0
    %v2730 = vadd.f32 0.0, %v2729
    %v2731 = vpop.f32.mrb[0].mxu0
    %v2732 = vadd.f32 0.0, %v2731
    %v2733 = vpop.f32.mrb[0].mxu0
    %v2734 = vadd.f32 0.0, %v2733
    %v2735 = vpop.f32.mrb[0].mxu0
    %v2736 = vadd.f32 0.0, %v2735
    %2737 = vmatprep.mubr.bf16.mxu0 %v500
    %2738 = vmatmul.mubr.bf16.gmra.mrb[0].mxu0 %v211
    %v2739 = vpop.f32.mrb[0].mxu0
    %v2740 = vadd.f32 0.0, %v2739
    %v2741 = vpop.f32.mrb[0].mxu0
    %v2742 = vadd.f32 0.0, %v2741
    %v2743 = vpop.f32.mrb[0].mxu0
    %v2744 = vadd.f32 0.0, %v2743
    %v2745 = vpop.f32.mrb[0].mxu0
    %v2746 = vadd.f32 0.0, %v2745
    %2747 = vmatprep.mubr.bf16.mxu0 %v503
    %2748 = vmatmul.mubr.bf16.gmra.mrb[0].mxu0 %v213
    %v2749 = vpop.f32.mrb[0].mxu0
    %v2750 = vadd.f32 0.0, %v2749
    %v2751 = vpop.f32.mrb[0].mxu0
    %v2752 = vadd.f32 0.0, %v2751
    %v2753 = vpop.f32.mrb[0].mxu0
    %v2754 = vadd.f32 0.0, %v2753
    %v2755 = vpop.f32.mrb[0].mxu0
    %v2756 = vadd.f32 0.0, %v2755
    %2757 = vmatprep.mubr.bf16.mxu0 %v506
    %2758 = vmatmul.mubr.bf16.gmra.mrb[0].mxu0 %v215
    %v2759 = vpop.f32.mrb[0].mxu0
    %v2760 = vadd.f32 0.0, %v2759
    %v2761 = vpop.f32.mrb[0].mxu0
    %v2762 = vadd.f32 0.0, %v2761
    %v2763 = vpop.f32.mrb[0].mxu0
    %v2764 = vadd.f32 0.0, %v2763
    %v2765 = vpop.f32.mrb[0].mxu0
    %v2766 = vadd.f32 0.0, %v2765
    %2767 = vmatprep.mubr.bf16.mxu0 %v509
    %2768 = vmatmul.mubr.bf16.gmra.mrb[0].mxu0 %v217
    %v2769 = vpop.f32.mrb[0].mxu0
    %v2770 = vadd.f32 0.0, %v2769
    %v2771 = vpop.f32.mrb[0].mxu0
    %v2772 = vadd.f32 0.0, %v2771
    %v2773 = vpop.f32.mrb[0].mxu0
    %v2774 = vadd.f32 0.0, %v2773
    %v2775 = vpop.f32.mrb[0].mxu0
    %v2776 = vadd.f32 0.0, %v2775
    %2777 = vmatprep.mubr.bf16.mxu0 %v512
    %2778 = vmatmul.mubr.bf16.gmra.mrb[0].mxu0 %v219
    %v2779 = vpop.f32.mrb[0].mxu0
    %v2780 = vadd.f32 0.0, %v2779
    %v2781 = vpop.f32.mrb[0].mxu0
    %v2782 = vadd.f32 0.0, %v2781
    %v2783 = vpop.f32.mrb[0].mxu0
    %v2784 = vadd.f32 0.0, %v2783
    %v2785 = vpop.f32.mrb[0].mxu0
    %v2786 = vadd.f32 0.0, %v2785
    %2787 = vmatprep.mubr.bf16.mxu0 %v515
    %2788 = vmatmul.mubr.bf16.gmra.mrb[0].mxu0 %v221
    %v2789 = vpop.f32.mrb[0].mxu0
    %v2790 = vadd.f32 0.0, %v2789
    %v2791 = vpop.f32.mrb[0].mxu0
    %v2792 = vadd.f32 0.0, %v2791
    %v2793 = vpop.f32.mrb[0].mxu0
    %v2794 = vadd.f32 0.0, %v2793
    %v2795 = vpop.f32.mrb[0].mxu0
    %v2796 = vadd.f32 0.0, %v2795
    %2797 = vmatprep.mubr.bf16.mxu0 %v518
    %2798 = vmatmul.mubr.bf16.gmra.mrb[0].mxu0 %v223
    %v2799 = vpop.f32.mrb[0].mxu0
    %v2800 = vadd.f32 0.0, %v2799
    %v2801 = vpop.f32.mrb[0].mxu0
    %v2802 = vadd.f32 0.0, %v2801
    %v2803 = vpop.f32.mrb[0].mxu0
    %v2804 = vadd.f32 0.0, %v2803
    %v2805 = vpop.f32.mrb[0].mxu0
    %v2806 = vadd.f32 0.0, %v2805
    %2807 = vmatprep.mubr.bf16.mxu0 %v521
    %2808 = vmatmul.mubr.bf16.gmra.mrb[0].mxu0 %v225
    %v2809 = vpop.f32.mrb[0].mxu0
    %v2810 = vadd.f32 0.0, %v2809
    %v2811 = vpop.f32.mrb[0].mxu0
    %v2812 = vadd.f32 0.0, %v2811
    %v2813 = vpop.f32.mrb[0].mxu0
    %v2814 = vadd.f32 0.0, %v2813
    %v2815 = vpop.f32.mrb[0].mxu0
    %v2816 = vadd.f32 0.0, %v2815
    %2817 = vmatprep.mubr.bf16.mxu0 %v524
    %2818 = vmatmul.mubr.bf16.gmra.mrb[0].mxu0 %v227
    %v2819 = vpop.f32.mrb[0].mxu0
    %v2820 = vadd.f32 0.0, %v2819
    %v2821 = vpop.f32.mrb[0].mxu0
    %v2822 = vadd.f32 0.0, %v2821
    %v2823 = vpop.f32.mrb[0].mxu0
    %v2824 = vadd.f32 0.0, %v2823
    %v2825 = vpop.f32.mrb[0].mxu0
    %v2826 = vadd.f32 0.0, %v2825
    %2827 = vdwg.mxu0
    %2828 = vmatprep.subr.bf16.mxu0 %v2562
    %2829 = vmatpush1.bf16.msra.mxu0 %v2561
    %2830 = vmatprep.subr.bf16.mxu0 %v2566
    %2831 = vmatpush1.bf16.msra.mxu0 %v2565
    %2832 = vmatprep.subr.bf16.mxu0 %v2570
    %2833 = vmatpush1.bf16.msra.mxu0 %v2569
    %2834 = vmatprep.subr.bf16.mxu0 %v2574
    %2835 = vmatpush1.bf16.msra.mxu0 %v2573
    %2836 = vmatprep.subr.bf16.mxu0 %v2578
    %2837 = vmatpush1.bf16.msra.mxu0 %v2577
    %2838 = vmatprep.subr.bf16.mxu0 %v2582
    %2839 = vmatpush1.bf16.msra.mxu0 %v2581
    %2840 = vmatprep.subr.bf16.mxu0 %v2586
    %2841 = vmatpush1.bf16.msra.mxu0 %v2585
    %2842 = vmatprep.subr.bf16.mxu0 %v2590
    %2843 = vmatpush1.bf16.msra.mxu0 %v2589
    %2844 = vmatprep.subr.bf16.mxu0 %v2594
    %2845 = vmatpush1.bf16.msra.mxu0 %v2593
    %2846 = vmatprep.subr.bf16.mxu0 %v2598
    %2847 = vmatpush1.bf16.msra.mxu0 %v2597
    %2848 = vmatprep.subr.bf16.mxu0 %v2602
    %2849 = vmatpush1.bf16.msra.mxu0 %v2601
    %2850 = vmatprep.subr.bf16.mxu0 %v2606
    %2851 = vmatpush1.bf16.msra.mxu0 %v2605
    %2852 = vmatprep.subr.bf16.mxu0 0
    %2853 = vmatpush1.bf16.msra.mxu0 0
    %2854 = vmatprep.subr.bf16.mxu0 0
    %2855 = vmatpush1.bf16.msra.mxu0 0
    %2856 = vmatprep.subr.bf16.mxu0 0
    %2857 = vmatpush1.bf16.msra.mxu0 0
    %2858 = vmatprep.subr.bf16.mxu0 0
    %2859 = vmatpush1.bf16.msra.mxu0 0
    %2860 = vmatprep.mubr.bf16.mxu0 %v485
    %2861 = vmatmul.mubr.bf16.gmra.mrb[0].mxu0 %v201
    %v2862 = vpop.f32.mrb[0].mxu0
    %v2863 = vadd.f32 0.0, %v2862
    %v2864 = vpop.f32.mrb[0].mxu0
    %v2865 = vadd.f32 0.0, %v2864
    %v2866 = vpop.f32.mrb[0].mxu0
    %v2867 = vadd.f32 0.0, %v2866
    %v2868 = vpop.f32.mrb[0].mxu0
    %v2869 = vadd.f32 0.0, %v2868
    %2870 = vmatprep.mubr.bf16.mxu0 %v488
    %2871 = vmatmul.mubr.bf16.gmra.mrb[0].mxu0 %v203
    %v2872 = vpop.f32.mrb[0].mxu0
    %v2873 = vadd.f32 0.0, %v2872
    %v2874 = vpop.f32.mrb[0].mxu0
    %v2875 = vadd.f32 0.0, %v2874
    %v2876 = vpop.f32.mrb[0].mxu0
    %v2877 = vadd.f32 0.0, %v2876
    %v2878 = vpop.f32.mrb[0].mxu0
    %v2879 = vadd.f32 0.0, %v2878
    %2880 = vmatprep.mubr.bf16.mxu0 %v491
    %2881 = vmatmul.mubr.bf16.gmra.mrb[0].mxu0 %v205
    %v2882 = vpop.f32.mrb[0].mxu0
    %v2883 = vadd.f32 0.0, %v2882
    %v2884 = vpop.f32.mrb[0].mxu0
    %v2885 = vadd.f32 0.0, %v2884
    %v2886 = vpop.f32.mrb[0].mxu0
    %v2887 = vadd.f32 0.0, %v2886
    %v2888 = vpop.f32.mrb[0].mxu0
    %v2889 = vadd.f32 0.0, %v2888
    %2890 = vmatprep.mubr.bf16.mxu0 %v494
    %2891 = vmatmul.mubr.bf16.gmra.mrb[0].mxu0 %v207
    %v2892 = vpop.f32.mrb[0].mxu0
    %v2893 = vadd.f32 0.0, %v2892
    %v2894 = vpop.f32.mrb[0].mxu0
    %v2895 = vadd.f32 0.0, %v2894
    %v2896 = vpop.f32.mrb[0].mxu0
    %v2897 = vadd.f32 0.0, %v2896
    %v2898 = vpop.f32.mrb[0].mxu0
    %v2899 = vadd.f32 0.0, %v2898
    %2900 = vmatprep.mubr.bf16.mxu0 %v497
    %2901 = vmatmul.mubr.bf16.gmra.mrb[0].mxu0 %v209
    %v2902 = vpop.f32.mrb[0].mxu0
    %v2903 = vadd.f32 0.0, %v2902
    %v2904 = vpop.f32.mrb[0].mxu0
    %v2905 = vadd.f32 0.0, %v2904
    %v2906 = vpop.f32.mrb[0].mxu0
    %v2907 = vadd.f32 0.0, %v2906
    %v2908 = vpop.f32.mrb[0].mxu0
    %v2909 = vadd.f32 0.0, %v2908
    %2910 = vmatprep.mubr.bf16.mxu0 %v500
    %2911 = vmatmul.mubr.bf16.gmra.mrb[0].mxu0 %v211
    %v2912 = vpop.f32.mrb[0].mxu0
    %v2913 = vadd.f32 0.0, %v2912
    %v2914 = vpop.f32.mrb[0].mxu0
    %v2915 = vadd.f32 0.0, %v2914
    %v2916 = vpop.f32.mrb[0].mxu0
    %v2917 = vadd.f32 0.0, %v2916
    %v2918 = vpop.f32.mrb[0].mxu0
    %v2919 = vadd.f32 0.0, %v2918
    %2920 = vmatprep.mubr.bf16.mxu0 %v503
    %2921 = vmatmul.mubr.bf16.gmra.mrb[0].mxu0 %v213
    %v2922 = vpop.f32.mrb[0].mxu0
    %v2923 = vadd.f32 0.0, %v2922
    %v2924 = vpop.f32.mrb[0].mxu0
    %v2925 = vadd.f32 0.0, %v2924
    %v2926 = vpop.f32.mrb[0].mxu0
    %v2927 = vadd.f32 0.0, %v2926
    %v2928 = vpop.f32.mrb[0].mxu0
    %v2929 = vadd.f32 0.0, %v2928
    %2930 = vmatprep.mubr.bf16.mxu0 %v506
    %2931 = vmatmul.mubr.bf16.gmra.mrb[0].mxu0 %v215
    %v2932 = vpop.f32.mrb[0].mxu0
    %v2933 = vadd.f32 0.0, %v2932
    %v2934 = vpop.f32.mrb[0].mxu0
    %v2935 = vadd.f32 0.0, %v2934
    %v2936 = vpop.f32.mrb[0].mxu0
    %v2937 = vadd.f32 0.0, %v2936
    %v2938 = vpop.f32.mrb[0].mxu0
    %v2939 = vadd.f32 0.0, %v2938
    %2940 = vmatprep.mubr.bf16.mxu0 %v509
    %2941 = vmatmul.mubr.bf16.gmra.mrb[0].mxu0 %v217
    %v2942 = vpop.f32.mrb[0].mxu0
    %v2943 = vadd.f32 0.0, %v2942
    %v2944 = vpop.f32.mrb[0].mxu0
    %v2945 = vadd.f32 0.0, %v2944
    %v2946 = vpop.f32.mrb[0].mxu0
    %v2947 = vadd.f32 0.0, %v2946
    %v2948 = vpop.f32.mrb[0].mxu0
    %v2949 = vadd.f32 0.0, %v2948
    %2950 = vmatprep.mubr.bf16.mxu0 %v512
    %2951 = vmatmul.mubr.bf16.gmra.mrb[0].mxu0 %v219
    %v2952 = vpop.f32.mrb[0].mxu0
    %v2953 = vadd.f32 0.0, %v2952
    %v2954 = vpop.f32.mrb[0].mxu0
    %v2955 = vadd.f32 0.0, %v2954
    %v2956 = vpop.f32.mrb[0].mxu0
    %v2957 = vadd.f32 0.0, %v2956
    %v2958 = vpop.f32.mrb[0].mxu0
    %v2959 = vadd.f32 0.0, %v2958
    %2960 = vmatprep.mubr.bf16.mxu0 %v515
    %2961 = vmatmul.mubr.bf16.gmra.mrb[0].mxu0 %v221
    %v2962 = vpop.f32.mrb[0].mxu0
    %v2963 = vadd.f32 0.0, %v2962
    %v2964 = vpop.f32.mrb[0].mxu0
    %v2965 = vadd.f32 0.0, %v2964
    %v2966 = vpop.f32.mrb[0].mxu0
    %v2967 = vadd.f32 0.0, %v2966
    %v2968 = vpop.f32.mrb[0].mxu0
    %v2969 = vadd.f32 0.0, %v2968
    %2970 = vmatprep.mubr.bf16.mxu0 %v518
    %2971 = vmatmul.mubr.bf16.gmra.mrb[0].mxu0 %v223
    %v2972 = vpop.f32.mrb[0].mxu0
    %v2973 = vadd.f32 0.0, %v2972
    %v2974 = vpop.f32.mrb[0].mxu0
    %v2975 = vadd.f32 0.0, %v2974
    %v2976 = vpop.f32.mrb[0].mxu0
    %v2977 = vadd.f32 0.0, %v2976
    %v2978 = vpop.f32.mrb[0].mxu0
    %v2979 = vadd.f32 0.0, %v2978
    %2980 = vmatprep.mubr.bf16.mxu0 %v521
    %2981 = vmatmul.mubr.bf16.gmra.mrb[0].mxu0 %v225
    %v2982 = vpop.f32.mrb[0].mxu0
    %v2983 = vadd.f32 0.0, %v2982
    %v2984 = vpop.f32.mrb[0].mxu0
    %v2985 = vadd.f32 0.0, %v2984
    %v2986 = vpop.f32.mrb[0].mxu0
    %v2987 = vadd.f32 0.0, %v2986
    %v2988 = vpop.f32.mrb[0].mxu0
    %v2989 = vadd.f32 0.0, %v2988
    %2990 = vmatprep.mubr.bf16.mxu0 %v524
    %2991 = vmatmul.mubr.bf16.gmra.mrb[0].mxu0 %v227
    %v2992 = vpop.f32.mrb[0].mxu0
    %v2993 = vadd.f32 0.0, %v2992
    %v2994 = vpop.f32.mrb[0].mxu0
    %v2995 = vadd.f32 0.0, %v2994
    %v2996 = vpop.f32.mrb[0].mxu0
    %v2997 = vadd.f32 0.0, %v2996
    %v2998 = vpop.f32.mrb[0].mxu0
    %v2999 = vadd.f32 0.0, %v2998
    %3000 = vdwg.mxu0
    %v3001 = vmax.f32 %v2254, %v2690
    %v3002 = vmax.f32 %v2255, %v2692
    %v3003 = vmax.f32 %v2256, %v2863
    %v3004 = vmax.f32 %v2257, %v2865
    %v3005 = vmax.f32 %v2258, %v2694
    %v3006 = vmax.f32 %v2259, %v2696
    %v3007 = vmax.f32 %v2260, %v2867
    %v3008 = vmax.f32 %v2261, %v2869
    %v3009 = vmax.f32 %v2262, %v2700
    %v3010 = vmax.f32 %v2263, %v2702
    %v3011 = vmax.f32 %v2264, %v2873
    %v3012 = vmax.f32 %v2265, %v2875
    %v3013 = vmax.f32 %v2266, %v2704
    %v3014 = vmax.f32 %v2267, %v2706
    %v3015 = vmax.f32 %v2268, %v2877
    %v3016 = vmax.f32 %v2269, %v2879
    %v3017 = vmax.f32 %v2270, %v2710
    %v3018 = vmax.f32 %v2271, %v2712
    %v3019 = vmax.f32 %v2272, %v2883
    %v3020 = vmax.f32 %v2273, %v2885
    %v3021 = vmax.f32 %v2274, %v2714
    %v3022 = vmax.f32 %v2275, %v2716
    %v3023 = vmax.f32 %v2276, %v2887
    %v3024 = vmax.f32 %v2277, %v2889
    %v3025 = vmax.f32 %v2278, %v2720
    %v3026 = vmax.f32 %v2279, %v2722
    %v3027 = vmax.f32 %v2280, %v2893
    %v3028 = vmax.f32 %v2281, %v2895
    %v3029 = vmax.f32 %v2282, %v2724
    %v3030 = vmax.f32 %v2283, %v2726
    %v3031 = vmax.f32 %v2284, %v2897
    %v3032 = vmax.f32 %v2285, %v2899
    %v3033 = vmax.f32 %v2286, %v2730
    %v3034 = vmax.f32 %v2287, %v2732
    %v3035 = vmax.f32 %v2288, %v2903
    %v3036 = vmax.f32 %v2289, %v2905
    %v3037 = vmax.f32 %v2290, %v2734
    %v3038 = vmax.f32 %v2291, %v2736
    %v3039 = vmax.f32 %v2292, %v2907
    %v3040 = vmax.f32 %v2293, %v2909
    %v3041 = vmax.f32 %v2294, %v2740
    %v3042 = vmax.f32 %v2295, %v2742
    %v3043 = vmax.f32 %v2296, %v2913
    %v3044 = vmax.f32 %v2297, %v2915
    %v3045 = vmax.f32 %v2298, %v2744
    %v3046 = vmax.f32 %v2299, %v2746
    %v3047 = vmax.f32 %v2300, %v2917
    %v3048 = vmax.f32 %v2301, %v2919
    %v3049 = vmax.f32 %v2302, %v2750
    %v3050 = vmax.f32 %v2303, %v2752
    %v3051 = vmax.f32 %v2304, %v2923
    %v3052 = vmax.f32 %v2305, %v2925
    %v3053 = vmax.f32 %v2306, %v2754
    %v3054 = vmax.f32 %v2307, %v2756
    %v3055 = vmax.f32 %v2308, %v2927
    %v3056 = vmax.f32 %v2309, %v2929
    %v3057 = vmax.f32 %v2310, %v2760
    %v3058 = vmax.f32 %v2311, %v2762
    %v3059 = vmax.f32 %v2312, %v2933
    %v3060 = vmax.f32 %v2313, %v2935
    %v3061 = vmax.f32 %v2314, %v2764
    %v3062 = vmax.f32 %v2315, %v2766
    %v3063 = vmax.f32 %v2316, %v2937
    %v3064 = vmax.f32 %v2317, %v2939
    %v3065 = vmax.f32 %v2318, %v2770
    %v3066 = vmax.f32 %v2319, %v2772
    %v3067 = vmax.f32 %v2320, %v2943
    %v3068 = vmax.f32 %v2321, %v2945
    %v3069 = vmax.f32 %v2322, %v2774
    %v3070 = vmax.f32 %v2323, %v2776
    %v3071 = vmax.f32 %v2324, %v2947
    %v3072 = vmax.f32 %v2325, %v2949
    %v3073 = vmax.f32 %v2326, %v2780
    %v3074 = vmax.f32 %v2327, %v2782
    %v3075 = vmax.f32 %v2328, %v2953
    %v3076 = vmax.f32 %v2329, %v2955
    %v3077 = vmax.f32 %v2330, %v2784
    %v3078 = vmax.f32 %v2331, %v2786
    %v3079 = vmax.f32 %v2332, %v2957
    %v3080 = vmax.f32 %v2333, %v2959
    %v3081 = vmax.f32 %v2334, %v2790
    %v3082 = vmax.f32 %v2335, %v2792
    %v3083 = vmax.f32 %v2336, %v2963
    %v3084 = vmax.f32 %v2337, %v2965
    %v3085 = vmax.f32 %v2338, %v2794
    %v3086 = vmax.f32 %v2339, %v2796
    %v3087 = vmax.f32 %v2340, %v2967
    %v3088 = vmax.f32 %v2341, %v2969
    %v3089 = vmax.f32 %v2342, %v2800
    %v3090 = vmax.f32 %v2343, %v2802
    %v3091 = vmax.f32 %v2344, %v2973
    %v3092 = vmax.f32 %v2345, %v2975
    %v3093 = vmax.f32 %v2346, %v2804
    %v3094 = vmax.f32 %v2347, %v2806
    %v3095 = vmax.f32 %v2348, %v2977
    %v3096 = vmax.f32 %v2349, %v2979
    %v3097 = vmax.f32 %v2350, %v2810
    %v3098 = vmax.f32 %v2351, %v2812
    %v3099 = vmax.f32 %v2352, %v2983
    %v3100 = vmax.f32 %v2353, %v2985
    %v3101 = vmax.f32 %v2354, %v2814
    %v3102 = vmax.f32 %v2355, %v2816
    %v3103 = vmax.f32 %v2356, %v2987
    %v3104 = vmax.f32 %v2357, %v2989
    %v3105 = vmax.f32 %v2358, %v2820
    %v3106 = vmax.f32 %v2359, %v2822
    %v3107 = vmax.f32 %v2360, %v2993
    %v3108 = vmax.f32 %v2361, %v2995
    %v3109 = vmax.f32 %v2362, %v2824
    %v3110 = vmax.f32 %v2363, %v2826
    %v3111 = vmax.f32 %v2364, %v2997
    %v3112 = vmax.f32 %v2365, %v2999
    %v3113 = vld [vmem:[%s2] sm:$0xf]
    %v3115 = vlaneseq
    %v3116 = vshrl.u32 %v3115, 7
    %v3117 = vsub.s32 0, %v3116
    %v3118 = vrot.slane %v3113, %v3117
    %v3119 = vlaneseq
    %v3120 = vshrl.u32 %v3119, 7
    %v3121 = vsub.s32 1, %v3120
    %v3122 = vrot.slane %v3113, %v3121
    %v3123 = vlaneseq
    %v3124 = vshrl.u32 %v3123, 7
    %v3125 = vsub.s32 2, %v3124
    %v3126 = vrot.slane %v3113, %v3125
    %v3127 = vlaneseq
    %v3128 = vshrl.u32 %v3127, 7
    %v3129 = vsub.s32 3, %v3128
    %v3130 = vrot.slane %v3113, %v3129
    %v3135 = vadd.f32 %v3001, %v3118
    %v3136 = vadd.f32 %v3002, %v3122
    %v3137 = vadd.f32 %v3003, %v3126
    %v3138 = vadd.f32 %v3004, %v3130
    %v3139 = vadd.f32 %v3005, %v3118
    %v3140 = vadd.f32 %v3006, %v3122
    %v3141 = vadd.f32 %v3007, %v3126
    %v3142 = vadd.f32 %v3008, %v3130
    %v3143 = vadd.f32 %v3009, %v3118
    %v3144 = vadd.f32 %v3010, %v3122
    %v3145 = vadd.f32 %v3011, %v3126
    %v3146 = vadd.f32 %v3012, %v3130
    %v3147 = vadd.f32 %v3013, %v3118
    %v3148 = vadd.f32 %v3014, %v3122
    %v3149 = vadd.f32 %v3015, %v3126
    %v3150 = vadd.f32 %v3016, %v3130
    %v3151 = vadd.f32 %v3017, %v3118
    %v3152 = vadd.f32 %v3018, %v3122
    %v3153 = vadd.f32 %v3019, %v3126
    %v3154 = vadd.f32 %v3020, %v3130
    %v3155 = vadd.f32 %v3021, %v3118
    %v3156 = vadd.f32 %v3022, %v3122
    %v3157 = vadd.f32 %v3023, %v3126
    %v3158 = vadd.f32 %v3024, %v3130
    %v3159 = vadd.f32 %v3025, %v3118
    %v3160 = vadd.f32 %v3026, %v3122
    %v3161 = vadd.f32 %v3027, %v3126
    %v3162 = vadd.f32 %v3028, %v3130
    %v3163 = vadd.f32 %v3029, %v3118
    %v3164 = vadd.f32 %v3030, %v3122
    %v3165 = vadd.f32 %v3031, %v3126
    %v3166 = vadd.f32 %v3032, %v3130
    %v3167 = vadd.f32 %v3033, %v3118
    %v3168 = vadd.f32 %v3034, %v3122
    %v3169 = vadd.f32 %v3035, %v3126
    %v3170 = vadd.f32 %v3036, %v3130
    %v3171 = vadd.f32 %v3037, %v3118
    %v3172 = vadd.f32 %v3038, %v3122
    %v3173 = vadd.f32 %v3039, %v3126
    %v3174 = vadd.f32 %v3040, %v3130
    %v3175 = vadd.f32 %v3041, %v3118
    %v3176 = vadd.f32 %v3042, %v3122
    %v3177 = vadd.f32 %v3043, %v3126
    %v3178 = vadd.f32 %v3044, %v3130
    %v3179 = vadd.f32 %v3045, %v3118
    %v3180 = vadd.f32 %v3046, %v3122
    %v3181 = vadd.f32 %v3047, %v3126
    %v3182 = vadd.f32 %v3048, %v3130
    %v3183 = vadd.f32 %v3049, %v3118
    %v3184 = vadd.f32 %v3050, %v3122
    %v3185 = vadd.f32 %v3051, %v3126
    %v3186 = vadd.f32 %v3052, %v3130
    %v3187 = vadd.f32 %v3053, %v3118
    %v3188 = vadd.f32 %v3054, %v3122
    %v3189 = vadd.f32 %v3055, %v3126
    %v3190 = vadd.f32 %v3056, %v3130
    %v3191 = vadd.f32 %v3057, %v3118
    %v3192 = vadd.f32 %v3058, %v3122
    %v3193 = vadd.f32 %v3059, %v3126
    %v3194 = vadd.f32 %v3060, %v3130
    %v3195 = vadd.f32 %v3061, %v3118
    %v3196 = vadd.f32 %v3062, %v3122
    %v3197 = vadd.f32 %v3063, %v3126
    %v3198 = vadd.f32 %v3064, %v3130
    %v3199 = vadd.f32 %v3065, %v3118
    %v3200 = vadd.f32 %v3066, %v3122
    %v3201 = vadd.f32 %v3067, %v3126
    %v3202 = vadd.f32 %v3068, %v3130
    %v3203 = vadd.f32 %v3069, %v3118
    %v3204 = vadd.f32 %v3070, %v3122
    %v3205 = vadd.f32 %v3071, %v3126
    %v3206 = vadd.f32 %v3072, %v3130
    %v3207 = vadd.f32 %v3073, %v3118
    %v3208 = vadd.f32 %v3074, %v3122
    %v3209 = vadd.f32 %v3075, %v3126
    %v3210 = vadd.f32 %v3076, %v3130
    %v3211 = vadd.f32 %v3077, %v3118
    %v3212 = vadd.f32 %v3078, %v3122
    %v3213 = vadd.f32 %v3079, %v3126
    %v3214 = vadd.f32 %v3080, %v3130
    %v3215 = vadd.f32 %v3081, %v3118
    %v3216 = vadd.f32 %v3082, %v3122
    %v3217 = vadd.f32 %v3083, %v3126
    %v3218 = vadd.f32 %v3084, %v3130
    %v3219 = vadd.f32 %v3085, %v3118
    %v3220 = vadd.f32 %v3086, %v3122
    %v3221 = vadd.f32 %v3087, %v3126
    %v3222 = vadd.f32 %v3088, %v3130
    %v3223 = vadd.f32 %v3089, %v3118
    %v3224 = vadd.f32 %v3090, %v3122
    %v3225 = vadd.f32 %v3091, %v3126
    %v3226 = vadd.f32 %v3092, %v3130
    %v3227 = vadd.f32 %v3093, %v3118
    %v3228 = vadd.f32 %v3094, %v3122
    %v3229 = vadd.f32 %v3095, %v3126
    %v3230 = vadd.f32 %v3096, %v3130
    %v3231 = vadd.f32 %v3097, %v3118
    %v3232 = vadd.f32 %v3098, %v3122
    %v3233 = vadd.f32 %v3099, %v3126
    %v3234 = vadd.f32 %v3100, %v3130
    %v3235 = vadd.f32 %v3101, %v3118
    %v3236 = vadd.f32 %v3102, %v3122
    %v3237 = vadd.f32 %v3103, %v3126
    %v3238 = vadd.f32 %v3104, %v3130
    %v3239 = vadd.f32 %v3105, %v3118
    %v3240 = vadd.f32 %v3106, %v3122
    %v3241 = vadd.f32 %v3107, %v3126
    %v3242 = vadd.f32 %v3108, %v3130
    %v3243 = vadd.f32 %v3109, %v3118
    %v3244 = vadd.f32 %v3110, %v3122
    %v3245 = vadd.f32 %v3111, %v3126
    %v3246 = vadd.f32 %v3112, %v3130
    %v3247 = vmax.f32 %v3135, 0.0
    %v3248 = vmax.f32 %v3136, 0.0
    %v3249 = vmax.f32 %v3137, 0.0
    %v3250 = vmax.f32 %v3138, 0.0
    %v3251 = vmax.f32 %v3139, 0.0
    %v3252 = vmax.f32 %v3140, 0.0
    %v3253 = vmax.f32 %v3141, 0.0
    %v3254 = vmax.f32 %v3142, 0.0
    %v3255 = vmax.f32 %v3143, 0.0
    %v3256 = vmax.f32 %v3144, 0.0
    %v3257 = vmax.f32 %v3145, 0.0
    %v3258 = vmax.f32 %v3146, 0.0
    %v3259 = vmax.f32 %v3147, 0.0
    %v3260 = vmax.f32 %v3148, 0.0
    %v3261 = vmax.f32 %v3149, 0.0
    %v3262 = vmax.f32 %v3150, 0.0
    %v3263 = vmax.f32 %v3151, 0.0
    %v3264 = vmax.f32 %v3152, 0.0
    %v3265 = vmax.f32 %v3153, 0.0
    %v3266 = vmax.f32 %v3154, 0.0
    %v3267 = vmax.f32 %v3155, 0.0
    %v3268 = vmax.f32 %v3156, 0.0
    %v3269 = vmax.f32 %v3157, 0.0
    %v3270 = vmax.f32 %v3158, 0.0
    %v3271 = vmax.f32 %v3159, 0.0
    %v3272 = vmax.f32 %v3160, 0.0
    %v3273 = vmax.f32 %v3161, 0.0
    %v3274 = vmax.f32 %v3162, 0.0
    %v3275 = vmax.f32 %v3163, 0.0
    %v3276 = vmax.f32 %v3164, 0.0
    %v3277 = vmax.f32 %v3165, 0.0
    %v3278 = vmax.f32 %v3166, 0.0
    %v3279 = vmax.f32 %v3167, 0.0
    %v3280 = vmax.f32 %v3168, 0.0
    %v3281 = vmax.f32 %v3169, 0.0
    %v3282 = vmax.f32 %v3170, 0.0
    %v3283 = vmax.f32 %v3171, 0.0
    %v3284 = vmax.f32 %v3172, 0.0
    %v3285 = vmax.f32 %v3173, 0.0
    %v3286 = vmax.f32 %v3174, 0.0
    %v3287 = vmax.f32 %v3175, 0.0
    %v3288 = vmax.f32 %v3176, 0.0
    %v3289 = vmax.f32 %v3177, 0.0
    %v3290 = vmax.f32 %v3178, 0.0
    %v3291 = vmax.f32 %v3179, 0.0
    %v3292 = vmax.f32 %v3180, 0.0
    %v3293 = vmax.f32 %v3181, 0.0
    %v3294 = vmax.f32 %v3182, 0.0
    %v3295 = vmax.f32 %v3183, 0.0
    %v3296 = vmax.f32 %v3184, 0.0
    %v3297 = vmax.f32 %v3185, 0.0
    %v3298 = vmax.f32 %v3186, 0.0
    %v3299 = vmax.f32 %v3187, 0.0
    %v3300 = vmax.f32 %v3188, 0.0
    %v3301 = vmax.f32 %v3189, 0.0
    %v3302 = vmax.f32 %v3190, 0.0
    %v3303 = vmax.f32 %v3191, 0.0
    %v3304 = vmax.f32 %v3192, 0.0
    %v3305 = vmax.f32 %v3193, 0.0
    %v3306 = vmax.f32 %v3194, 0.0
    %v3307 = vmax.f32 %v3195, 0.0
    %v3308 = vmax.f32 %v3196, 0.0
    %v3309 = vmax.f32 %v3197, 0.0
    %v3310 = vmax.f32 %v3198, 0.0
    %v3311 = vmax.f32 %v3199, 0.0
    %v3312 = vmax.f32 %v3200, 0.0
    %v3313 = vmax.f32 %v3201, 0.0
    %v3314 = vmax.f32 %v3202, 0.0
    %v3315 = vmax.f32 %v3203, 0.0
    %v3316 = vmax.f32 %v3204, 0.0
    %v3317 = vmax.f32 %v3205, 0.0
    %v3318 = vmax.f32 %v3206, 0.0
    %v3319 = vmax.f32 %v3207, 0.0
    %v3320 = vmax.f32 %v3208, 0.0
    %v3321 = vmax.f32 %v3209, 0.0
    %v3322 = vmax.f32 %v3210, 0.0
    %v3323 = vmax.f32 %v3211, 0.0
    %v3324 = vmax.f32 %v3212, 0.0
    %v3325 = vmax.f32 %v3213, 0.0
    %v3326 = vmax.f32 %v3214, 0.0
    %v3327 = vmax.f32 %v3215, 0.0
    %v3328 = vmax.f32 %v3216, 0.0
    %v3329 = vmax.f32 %v3217, 0.0
    %v3330 = vmax.f32 %v3218, 0.0
    %v3331 = vmax.f32 %v3219, 0.0
    %v3332 = vmax.f32 %v3220, 0.0
    %v3333 = vmax.f32 %v3221, 0.0
    %v3334 = vmax.f32 %v3222, 0.0
    %v3335 = vmax.f32 %v3223, 0.0
    %v3336 = vmax.f32 %v3224, 0.0
    %v3337 = vmax.f32 %v3225, 0.0
    %v3338 = vmax.f32 %v3226, 0.0
    %v3339 = vmax.f32 %v3227, 0.0
    %v3340 = vmax.f32 %v3228, 0.0
    %v3341 = vmax.f32 %v3229, 0.0
    %v3342 = vmax.f32 %v3230, 0.0
    %v3343 = vmax.f32 %v3231, 0.0
    %v3344 = vmax.f32 %v3232, 0.0
    %v3345 = vmax.f32 %v3233, 0.0
    %v3346 = vmax.f32 %v3234, 0.0
    %v3347 = vmax.f32 %v3235, 0.0
    %v3348 = vmax.f32 %v3236, 0.0
    %v3349 = vmax.f32 %v3237, 0.0
    %v3350 = vmax.f32 %v3238, 0.0
    %v3351 = vmax.f32 %v3239, 0.0
    %v3352 = vmax.f32 %v3240, 0.0
    %v3353 = vmax.f32 %v3241, 0.0
    %v3354 = vmax.f32 %v3242, 0.0
    %v3355 = vmax.f32 %v3243, 0.0
    %v3356 = vmax.f32 %v3244, 0.0
    %v3357 = vmax.f32 %v3245, 0.0
    %v3358 = vmax.f32 %v3246, 0.0
    %v3359 = vpack.c.bf16 %v3251, %v3247
    %v3360 = vpack.c.bf16 %v3252, %v3248
    %v3361 = vpack.c.bf16 %v3253, %v3249
    %v3362 = vpack.c.bf16 %v3254, %v3250
    %v3363 = vpack.c.bf16 %v3259, %v3255
    %v3364 = vpack.c.bf16 %v3260, %v3256
    %v3365 = vpack.c.bf16 %v3261, %v3257
    %v3366 = vpack.c.bf16 %v3262, %v3258
    %v3367 = vpack.c.bf16 %v3267, %v3263
    %v3368 = vpack.c.bf16 %v3268, %v3264
    %v3369 = vpack.c.bf16 %v3269, %v3265
    %v3370 = vpack.c.bf16 %v3270, %v3266
    %v3371 = vpack.c.bf16 %v3275, %v3271
    %v3372 = vpack.c.bf16 %v3276, %v3272
    %v3373 = vpack.c.bf16 %v3277, %v3273
    %v3374 = vpack.c.bf16 %v3278, %v3274
    %v3375 = vpack.c.bf16 %v3283, %v3279
    %v3376 = vpack.c.bf16 %v3284, %v3280
    %v3377 = vpack.c.bf16 %v3285, %v3281
    %v3378 = vpack.c.bf16 %v3286, %v3282
    %v3379 = vpack.c.bf16 %v3291, %v3287
    %v3380 = vpack.c.bf16 %v3292, %v3288
    %v3381 = vpack.c.bf16 %v3293, %v3289
    %v3382 = vpack.c.bf16 %v3294, %v3290
    %v3383 = vpack.c.bf16 %v3299, %v3295
    %v3384 = vpack.c.bf16 %v3300, %v3296
    %v3385 = vpack.c.bf16 %v3301, %v3297
    %v3386 = vpack.c.bf16 %v3302, %v3298
    %v3387 = vpack.c.bf16 %v3307, %v3303
    %v3388 = vpack.c.bf16 %v3308, %v3304
    %v3389 = vpack.c.bf16 %v3309, %v3305
    %v3390 = vpack.c.bf16 %v3310, %v3306
    %v3391 = vpack.c.bf16 %v3315, %v3311
    %v3392 = vpack.c.bf16 %v3316, %v3312
    %v3393 = vpack.c.bf16 %v3317, %v3313
    %v3394 = vpack.c.bf16 %v3318, %v3314
    %v3395 = vpack.c.bf16 %v3323, %v3319
    %v3396 = vpack.c.bf16 %v3324, %v3320
    %v3397 = vpack.c.bf16 %v3325, %v3321
    %v3398 = vpack.c.bf16 %v3326, %v3322
    %v3399 = vpack.c.bf16 %v3331, %v3327
    %v3400 = vpack.c.bf16 %v3332, %v3328
    %v3401 = vpack.c.bf16 %v3333, %v3329
    %v3402 = vpack.c.bf16 %v3334, %v3330
    %v3403 = vpack.c.bf16 %v3339, %v3335
    %v3404 = vpack.c.bf16 %v3340, %v3336
    %v3405 = vpack.c.bf16 %v3341, %v3337
    %v3406 = vpack.c.bf16 %v3342, %v3338
    %v3407 = vpack.c.bf16 %v3347, %v3343
    %v3408 = vpack.c.bf16 %v3348, %v3344
    %v3409 = vpack.c.bf16 %v3349, %v3345
    %v3410 = vpack.c.bf16 %v3350, %v3346
    %v3411 = vpack.c.bf16 %v3355, %v3351
    %v3412 = vpack.c.bf16 %v3356, %v3352
    %v3413 = vpack.c.bf16 %v3357, %v3353
    %v3414 = vpack.c.bf16 %v3358, %v3354
    %v3415 = vld [vmem:[%s3] sm:$0xf]
    %v3416 = vld [vmem:[%s3 + $0x4] sm:$0xf]
    %v3417 = vld [vmem:[%s3 + $0x8] sm:$0xf]
    %v3418 = vld [vmem:[%s3 + $0xc] sm:$0xf]
    %v3419 = vld [vmem:[%s3 + $0x10] sm:$0xf]
    %v3420 = vld [vmem:[%s3 + $0x14] sm:$0xf]
    %v3421 = vld [vmem:[%s3 + $0x18] sm:$0xf]
    %v3422 = vld [vmem:[%s3 + $0x1c] sm:$0xf]
    %v3423 = vld [vmem:[%s3 + $0x20] sm:$0xf]
    %v3424 = vld [vmem:[%s3 + $0x24] sm:$0xf]
    %v3425 = vld [vmem:[%s3 + $0x28] sm:$0xf]
    %v3426 = vld [vmem:[%s3 + $0x2c] sm:$0xf]
    %v3427 = vld [vmem:[%s3 + $0x30] sm:$0xf]
    %v3428 = vld [vmem:[%s3 + $0x34] sm:$0xf]
    %v3429 = vld [vmem:[%s3 + $0x38] sm:$0xf]
    %v3430 = vld [vmem:[%s3 + $0x3c] sm:$0xf]
    %v3431 = vld [vmem:[%s3 + $0x40] sm:$0xf]
    %v3432 = vld [vmem:[%s3 + $0x44] sm:$0xf]
    %v3433 = vld [vmem:[%s3 + $0x48] sm:$0xf]
    %v3434 = vld [vmem:[%s3 + $0x4c] sm:$0xf]
    %v3435 = vld [vmem:[%s3 + $0x50] sm:$0xf]
    %v3436 = vld [vmem:[%s3 + $0x54] sm:$0xf]
    %v3437 = vld [vmem:[%s3 + $0x58] sm:$0xf]
    %v3438 = vld [vmem:[%s3 + $0x5c] sm:$0xf]
    %v3439 = vld [vmem:[%s3 + $0x60] sm:$0xf]
    %v3440 = vld [vmem:[%s3 + $0x64] sm:$0xf]
    %v3441 = vld [vmem:[%s3 + $0x68] sm:$0xf]
    %v3442 = vld [vmem:[%s3 + $0x6c] sm:$0xf]
    %v3443 = vld [vmem:[%s3 + $0x70] sm:$0xf]
    %v3444 = vld [vmem:[%s3 + $0x74] sm:$0xf]
    %v3445 = vld [vmem:[%s3 + $0x78] sm:$0xf]
    %v3446 = vld [vmem:[%s3 + $0x7c] sm:$0xf]
    %v3447 = vld [vmem:[%s3 + $0x80] sm:$0xf]
    %v3448 = vld [vmem:[%s3 + $0x84] sm:$0xf]
    %v3449 = vld [vmem:[%s3 + $0x88] sm:$0xf]
    %v3450 = vld [vmem:[%s3 + $0x8c] sm:$0xf]
    %v3451 = vld [vmem:[%s3 + $0x90] sm:$0xf]
    %v3452 = vld [vmem:[%s3 + $0x94] sm:$0xf]
    %v3453 = vld [vmem:[%s3 + $0x98] sm:$0xf]
    %v3454 = vld [vmem:[%s3 + $0x9c] sm:$0xf]
    %v3455 = vld [vmem:[%s3 + $0xa0] sm:$0xf]
    %v3456 = vld [vmem:[%s3 + $0xa4] sm:$0xf]
    %v3457 = vld [vmem:[%s3 + $0xa8] sm:$0xf]
    %v3458 = vld [vmem:[%s3 + $0xac] sm:$0xf]
    %v3459 = vld [vmem:[%s3 + $0xb0] sm:$0xf]
    %v3460 = vld [vmem:[%s3 + $0xb4] sm:$0xf]
    %v3461 = vld [vmem:[%s3 + $0xb8] sm:$0xf]
    %v3462 = vld [vmem:[%s3 + $0xbc] sm:$0xf]
    %v3463 = vld [vmem:[%s3 + $0xc0] sm:$0xf]
    %v3464 = vld [vmem:[%s3 + $0xc4] sm:$0xf]
    %v3465 = vld [vmem:[%s3 + $0xc8] sm:$0xf]
    %v3466 = vld [vmem:[%s3 + $0xcc] sm:$0xf]
    %v3467 = vld [vmem:[%s3 + $0xd0] sm:$0xf]
    %v3468 = vld [vmem:[%s3 + $0xd4] sm:$0xf]
    %v3469 = vld [vmem:[%s3 + $0xd8] sm:$0xf]
    %v3470 = vld [vmem:[%s3 + $0xdc] sm:$0xf]
    %v3471 = vld [vmem:[%s3 + $0xe0] sm:$0xf]
    %v3472 = vld [vmem:[%s3 + $0xe4] sm:$0xf]
    %v3473 = vld [vmem:[%s3 + $0xe8] sm:$0xf]
    %v3474 = vld [vmem:[%s3 + $0xec] sm:$0xf]
    %v3475 = vld [vmem:[%s3 + $0xf0] sm:$0xf]
    %v3476 = vld [vmem:[%s3 + $0xf4] sm:$0xf]
    %v3477 = vld [vmem:[%s3 + $0xf8] sm:$0xf]
    %v3478 = vld [vmem:[%s3 + $0xfc] sm:$0xf]
    %s3479 = scalar_lea.vmem %s3, 256
    %v3480 = vld [vmem:[%s3479] sm:$0xf]
    %v3481 = vld [vmem:[%s3479 + $0x4] sm:$0xf]
    %v3482 = vld [vmem:[%s3479 + $0x8] sm:$0xf]
    %v3483 = vld [vmem:[%s3479 + $0xc] sm:$0xf]
    %v3484 = vld [vmem:[%s3479 + $0x10] sm:$0xf]
    %v3485 = vld [vmem:[%s3479 + $0x14] sm:$0xf]
    %v3486 = vld [vmem:[%s3479 + $0x18] sm:$0xf]
    %v3487 = vld [vmem:[%s3479 + $0x1c] sm:$0xf]
    %v3488 = vld [vmem:[%s3479 + $0x20] sm:$0xf]
    %v3489 = vld [vmem:[%s3479 + $0x24] sm:$0xf]
    %v3490 = vld [vmem:[%s3479 + $0x28] sm:$0xf]
    %v3491 = vld [vmem:[%s3479 + $0x2c] sm:$0xf]
    %v3492 = vld [vmem:[%s3479 + $0x30] sm:$0xf]
    %v3493 = vld [vmem:[%s3479 + $0x34] sm:$0xf]
    %v3494 = vld [vmem:[%s3479 + $0x38] sm:$0xf]
    %v3495 = vld [vmem:[%s3479 + $0x3c] sm:$0xf]
    %v3496 = vld [vmem:[%s3479 + $0x40] sm:$0xf]
    %v3497 = vld [vmem:[%s3479 + $0x44] sm:$0xf]
    %v3498 = vld [vmem:[%s3479 + $0x48] sm:$0xf]
    %v3499 = vld [vmem:[%s3479 + $0x4c] sm:$0xf]
    %v3500 = vld [vmem:[%s3479 + $0x50] sm:$0xf]
    %v3501 = vld [vmem:[%s3479 + $0x54] sm:$0xf]
    %v3502 = vld [vmem:[%s3479 + $0x58] sm:$0xf]
    %v3503 = vld [vmem:[%s3479 + $0x5c] sm:$0xf]
    %v3504 = vld [vmem:[%s3479 + $0x60] sm:$0xf]
    %v3505 = vld [vmem:[%s3479 + $0x64] sm:$0xf]
    %v3506 = vld [vmem:[%s3479 + $0x68] sm:$0xf]
    %v3507 = vld [vmem:[%s3479 + $0x6c] sm:$0xf]
    %v3508 = vld [vmem:[%s3479 + $0x70] sm:$0xf]
    %v3509 = vld [vmem:[%s3479 + $0x74] sm:$0xf]
    %v3510 = vld [vmem:[%s3479 + $0x78] sm:$0xf]
    %v3511 = vld [vmem:[%s3479 + $0x7c] sm:$0xf]
    %v3512 = vld [vmem:[%s3479 + $0x80] sm:$0xf]
    %v3513 = vld [vmem:[%s3479 + $0x84] sm:$0xf]
    %v3514 = vld [vmem:[%s3479 + $0x88] sm:$0xf]
    %v3515 = vld [vmem:[%s3479 + $0x8c] sm:$0xf]
    %v3516 = vld [vmem:[%s3479 + $0x90] sm:$0xf]
    %v3517 = vld [vmem:[%s3479 + $0x94] sm:$0xf]
    %v3518 = vld [vmem:[%s3479 + $0x98] sm:$0xf]
    %v3519 = vld [vmem:[%s3479 + $0x9c] sm:$0xf]
    %v3520 = vld [vmem:[%s3479 + $0xa0] sm:$0xf]
    %v3521 = vld [vmem:[%s3479 + $0xa4] sm:$0xf]
    %v3522 = vld [vmem:[%s3479 + $0xa8] sm:$0xf]
    %v3523 = vld [vmem:[%s3479 + $0xac] sm:$0xf]
    %v3524 = vld [vmem:[%s3479 + $0xb0] sm:$0xf]
    %v3525 = vld [vmem:[%s3479 + $0xb4] sm:$0xf]
    %v3526 = vld [vmem:[%s3479 + $0xb8] sm:$0xf]
    %v3527 = vld [vmem:[%s3479 + $0xbc] sm:$0xf]
    %v3528 = vld [vmem:[%s3479 + $0xc0] sm:$0xf]
    %v3529 = vld [vmem:[%s3479 + $0xc4] sm:$0xf]
    %v3530 = vld [vmem:[%s3479 + $0xc8] sm:$0xf]
    %v3531 = vld [vmem:[%s3479 + $0xcc] sm:$0xf]
    %v3532 = vld [vmem:[%s3479 + $0xd0] sm:$0xf]
    %v3533 = vld [vmem:[%s3479 + $0xd4] sm:$0xf]
    %v3534 = vld [vmem:[%s3479 + $0xd8] sm:$0xf]
    %v3535 = vld [vmem:[%s3479 + $0xdc] sm:$0xf]
    %v3536 = vld [vmem:[%s3479 + $0xe0] sm:$0xf]
    %v3537 = vld [vmem:[%s3479 + $0xe4] sm:$0xf]
    %v3538 = vld [vmem:[%s3479 + $0xe8] sm:$0xf]
    %v3539 = vld [vmem:[%s3479 + $0xec] sm:$0xf]
    %v3540 = vld [vmem:[%s3479 + $0xf0] sm:$0xf]
    %v3541 = vld [vmem:[%s3479 + $0xf4] sm:$0xf]
    %v3542 = vld [vmem:[%s3479 + $0xf8] sm:$0xf]
    %v3543 = vld [vmem:[%s3479 + $0xfc] sm:$0xf]
    %v3608 = vunpack.c.l.b16 %v3480
    %v3609 = vunpack.c.l.b16 %v3481
    %v3610 = vunpack.c.l.b16 %v3482
    %v3611 = vunpack.c.l.b16 %v3483
    %v3612 = vunpack.c.l.b16 %v3484
    %v3613 = vunpack.c.l.b16 %v3485
    %v3614 = vunpack.c.l.b16 %v3486
    %v3615 = vunpack.c.l.b16 %v3487
    %v3616 = vunpack.c.l.b16 %v3488
    %v3617 = vunpack.c.l.b16 %v3489
    %v3618 = vunpack.c.l.b16 %v3490
    %v3619 = vunpack.c.l.b16 %v3491
    %v3620 = vunpack.c.l.b16 %v3492
    %v3621 = vunpack.c.l.b16 %v3493
    %v3622 = vunpack.c.l.b16 %v3494
    %v3623 = vunpack.c.l.b16 %v3495
    %v3624 = vunpack.c.l.b16 %v3496
    %v3625 = vunpack.c.l.b16 %v3497
    %v3626 = vunpack.c.l.b16 %v3498
    %v3627 = vunpack.c.l.b16 %v3499
    %v3628 = vunpack.c.l.b16 %v3500
    %v3629 = vunpack.c.l.b16 %v3501
    %v3630 = vunpack.c.l.b16 %v3502
    %v3631 = vunpack.c.l.b16 %v3503
    %v3632 = vunpack.c.l.b16 %v3504
    %v3633 = vunpack.c.l.b16 %v3505
    %v3634 = vunpack.c.l.b16 %v3506
    %v3635 = vunpack.c.l.b16 %v3507
    %v3636 = vunpack.c.l.b16 %v3508
    %v3637 = vunpack.c.l.b16 %v3509
    %v3638 = vunpack.c.l.b16 %v3510
    %v3639 = vunpack.c.l.b16 %v3511
    %v3640 = vunpack.c.l.b16 %v3512
    %v3641 = vunpack.c.l.b16 %v3513
    %v3642 = vunpack.c.l.b16 %v3514
    %v3643 = vunpack.c.l.b16 %v3515
    %v3644 = vunpack.c.l.b16 %v3516
    %v3645 = vunpack.c.l.b16 %v3517
    %v3646 = vunpack.c.l.b16 %v3518
    %v3647 = vunpack.c.l.b16 %v3519
    %v3648 = vunpack.c.l.b16 %v3520
    %v3649 = vunpack.c.l.b16 %v3521
    %v3650 = vunpack.c.l.b16 %v3522
    %v3651 = vunpack.c.l.b16 %v3523
    %v3652 = vunpack.c.l.b16 %v3524
    %v3653 = vunpack.c.l.b16 %v3525
    %v3654 = vunpack.c.l.b16 %v3526
    %v3655 = vunpack.c.l.b16 %v3527
    %v3656 = vunpack.c.l.b16 %v3528
    %v3657 = vunpack.c.l.b16 %v3529
    %v3658 = vunpack.c.l.b16 %v3530
    %v3659 = vunpack.c.l.b16 %v3531
    %v3660 = vunpack.c.l.b16 %v3532
    %v3661 = vunpack.c.l.b16 %v3533
    %v3662 = vunpack.c.l.b16 %v3534
    %v3663 = vunpack.c.l.b16 %v3535
    %v3664 = vunpack.c.l.b16 %v3536
    %v3665 = vunpack.c.l.b16 %v3537
    %v3666 = vunpack.c.l.b16 %v3538
    %v3667 = vunpack.c.l.b16 %v3539
    %v3668 = vunpack.c.l.b16 %v3540
    %v3669 = vunpack.c.l.b16 %v3541
    %v3670 = vunpack.c.l.b16 %v3542
    %v3671 = vunpack.c.l.b16 %v3543
    %v3672 = vpack.c.b16 %v3609, %v3608
    %v3673 = vpack.c.b16 %v3611, %v3610
    %v3674 = vpack.c.b16 %v3613, %v3612
    %v3675 = vpack.c.b16 %v3615, %v3614
    %v3676 = vpack.c.b16 %v3617, %v3616
    %v3677 = vpack.c.b16 %v3619, %v3618
    %v3678 = vpack.c.b16 %v3621, %v3620
    %v3679 = vpack.c.b16 %v3623, %v3622
    %v3680 = vpack.c.b16 %v3625, %v3624
    %v3681 = vpack.c.b16 %v3627, %v3626
    %v3682 = vpack.c.b16 %v3629, %v3628
    %v3683 = vpack.c.b16 %v3631, %v3630
    %v3684 = vpack.c.b16 %v3633, %v3632
    %v3685 = vpack.c.b16 %v3635, %v3634
    %v3686 = vpack.c.b16 %v3637, %v3636
    %v3687 = vpack.c.b16 %v3639, %v3638
    %v3688 = vpack.c.b16 %v3641, %v3640
    %v3689 = vpack.c.b16 %v3643, %v3642
    %v3690 = vpack.c.b16 %v3645, %v3644
    %v3691 = vpack.c.b16 %v3647, %v3646
    %v3692 = vpack.c.b16 %v3649, %v3648
    %v3693 = vpack.c.b16 %v3651, %v3650
    %v3694 = vpack.c.b16 %v3653, %v3652
    %v3695 = vpack.c.b16 %v3655, %v3654
    %v3696 = vpack.c.b16 %v3657, %v3656
    %v3697 = vpack.c.b16 %v3659, %v3658
    %v3698 = vpack.c.b16 %v3661, %v3660
    %v3699 = vpack.c.b16 %v3663, %v3662
    %v3700 = vpack.c.b16 %v3665, %v3664
    %v3701 = vpack.c.b16 %v3667, %v3666
    %v3702 = vpack.c.b16 %v3669, %v3668
    %v3703 = vpack.c.b16 %v3671, %v3670
    %3736 = vmatprep.subr.bf16.mxu0 0
    %3737 = vmatpush1.bf16.msra.mxu0 %v3672
    %3738 = vmatprep.subr.bf16.mxu0 0
    %3739 = vmatpush1.bf16.msra.mxu0 %v3673
    %3740 = vmatprep.subr.bf16.mxu0 0
    %3741 = vmatpush1.bf16.msra.mxu0 %v3674
    %3742 = vmatprep.subr.bf16.mxu0 0
    %3743 = vmatpush1.bf16.msra.mxu0 %v3675
    %3744 = vmatprep.subr.bf16.mxu0 0
    %3745 = vmatpush1.bf16.msra.mxu0 %v3676
    %3746 = vmatprep.subr.bf16.mxu0 0
    %3747 = vmatpush1.bf16.msra.mxu0 %v3677
    %3748 = vmatprep.subr.bf16.mxu0 0
    %3749 = vmatpush1.bf16.msra.mxu0 %v3678
    %3750 = vmatprep.subr.bf16.mxu0 0
    %3751 = vmatpush1.bf16.msra.mxu0 %v3679
    %3752 = vmatprep.subr.bf16.mxu0 0
    %3753 = vmatpush1.bf16.msra.mxu0 %v3680
    %3754 = vmatprep.subr.bf16.mxu0 0
    %3755 = vmatpush1.bf16.msra.mxu0 %v3681
    %3756 = vmatprep.subr.bf16.mxu0 0
    %3757 = vmatpush1.bf16.msra.mxu0 %v3682
    %3758 = vmatprep.subr.bf16.mxu0 0
    %3759 = vmatpush1.bf16.msra.mxu0 %v3683
    %3760 = vmatprep.subr.bf16.mxu0 0
    %3761 = vmatpush1.bf16.msra.mxu0 %v3684
    %3762 = vmatprep.subr.bf16.mxu0 0
    %3763 = vmatpush1.bf16.msra.mxu0 %v3685
    %3764 = vmatprep.subr.bf16.mxu0 0
    %3765 = vmatpush1.bf16.msra.mxu0 %v3686
    %3766 = vmatprep.subr.bf16.mxu0 0
    %3767 = vmatpush1.bf16.msra.mxu0 %v3687
    %3768 = vmatprep.mubr.bf16.mxu0 %v3364
    %3769 = vmatmul.mubr.bf16.gmra.mrb[0].mxu0 %v3363
    %v3770 = vpop.f32.mrb[0].mxu0
    %v3771 = vadd.f32 0.0, %v3770
    %v3772 = vpop.f32.mrb[0].mxu0
    %v3773 = vpop.f32.mrb[0].mxu0
    %v3774 = vadd.f32 0.0, %v3773
    %v3775 = vpop.f32.mrb[0].mxu0
    %3776 = vdwg.mxu0
    %3777 = vmatprep.subr.bf16.mxu0 0
    %3778 = vmatpush1.bf16.msra.mxu0 %v3688
    %3779 = vmatprep.subr.bf16.mxu0 0
    %3780 = vmatpush1.bf16.msra.mxu0 %v3689
    %3781 = vmatprep.subr.bf16.mxu0 0
    %3782 = vmatpush1.bf16.msra.mxu0 %v3690
    %3783 = vmatprep.subr.bf16.mxu0 0
    %3784 = vmatpush1.bf16.msra.mxu0 %v3691
    %3785 = vmatprep.subr.bf16.mxu0 0
    %3786 = vmatpush1.bf16.msra.mxu0 %v3692
    %3787 = vmatprep.subr.bf16.mxu0 0
    %3788 = vmatpush1.bf16.msra.mxu0 %v3693
    %3789 = vmatprep.subr.bf16.mxu0 0
    %3790 = vmatpush1.bf16.msra.mxu0 %v3694
    %3791 = vmatprep.subr.bf16.mxu0 0
    %3792 = vmatpush1.bf16.msra.mxu0 %v3695
    %3793 = vmatprep.subr.bf16.mxu0 0
    %3794 = vmatpush1.bf16.msra.mxu0 %v3696
    %3795 = vmatprep.subr.bf16.mxu0 0
    %3796 = vmatpush1.bf16.msra.mxu0 %v3697
    %3797 = vmatprep.subr.bf16.mxu0 0
    %3798 = vmatpush1.bf16.msra.mxu0 %v3698
    %3799 = vmatprep.subr.bf16.mxu0 0
    %3800 = vmatpush1.bf16.msra.mxu0 %v3699
    %3801 = vmatprep.subr.bf16.mxu0 0
    %3802 = vmatpush1.bf16.msra.mxu0 %v3700
    %3803 = vmatprep.subr.bf16.mxu0 0
    %3804 = vmatpush1.bf16.msra.mxu0 %v3701
    %3805 = vmatprep.subr.bf16.mxu0 0
    %3806 = vmatpush1.bf16.msra.mxu0 %v3702
    %3807 = vmatprep.subr.bf16.mxu0 0
    %3808 = vmatpush1.bf16.msra.mxu0 %v3703
    %3809 = vmatprep.mubr.bf16.mxu0 %v3366
    %3810 = vmatmul.mubr.bf16.gmra.mrb[0].mxu0 %v3365
    %v3811 = vpop.f32.mrb[0].mxu0
    %v3812 = vadd.f32 %v3771, %v3811
    %v3813 = vpop.f32.mrb[0].mxu0
    %v3814 = vpop.f32.mrb[0].mxu0
    %v3815 = vadd.f32 %v3774, %v3814
    %v3816 = vpop.f32.mrb[0].mxu0
    %3817 = vdwg.mxu0
    %v3882 = vunpack.c.l.b16 %v3415
    %v3883 = vunpack.c.l.b16 %v3416
    %v3884 = vunpack.c.l.b16 %v3417
    %v3885 = vunpack.c.l.b16 %v3418
    %v3886 = vunpack.c.l.b16 %v3419
    %v3887 = vunpack.c.l.b16 %v3420
    %v3888 = vunpack.c.l.b16 %v3421
    %v3889 = vunpack.c.l.b16 %v3422
    %v3890 = vunpack.c.l.b16 %v3423
    %v3891 = vunpack.c.l.b16 %v3424
    %v3892 = vunpack.c.l.b16 %v3425
    %v3893 = vunpack.c.l.b16 %v3426
    %v3894 = vunpack.c.l.b16 %v3427
    %v3895 = vunpack.c.l.b16 %v3428
    %v3896 = vunpack.c.l.b16 %v3429
    %v3897 = vunpack.c.l.b16 %v3430
    %v3898 = vunpack.c.l.b16 %v3431
    %v3899 = vunpack.c.l.b16 %v3432
    %v3900 = vunpack.c.l.b16 %v3433
    %v3901 = vunpack.c.l.b16 %v3434
    %v3902 = vunpack.c.l.b16 %v3435
    %v3903 = vunpack.c.l.b16 %v3436
    %v3904 = vunpack.c.l.b16 %v3437
    %v3905 = vunpack.c.l.b16 %v3438
    %v3906 = vunpack.c.l.b16 %v3439
    %v3907 = vunpack.c.l.b16 %v3440
    %v3908 = vunpack.c.l.b16 %v3441
    %v3909 = vunpack.c.l.b16 %v3442
    %v3910 = vunpack.c.l.b16 %v3443
    %v3911 = vunpack.c.l.b16 %v3444
    %v3912 = vunpack.c.l.b16 %v3445
    %v3913 = vunpack.c.l.b16 %v3446
    %v3914 = vunpack.c.l.b16 %v3447
    %v3915 = vunpack.c.l.b16 %v3448
    %v3916 = vunpack.c.l.b16 %v3449
    %v3917 = vunpack.c.l.b16 %v3450
    %v3918 = vunpack.c.l.b16 %v3451
    %v3919 = vunpack.c.l.b16 %v3452
    %v3920 = vunpack.c.l.b16 %v3453
    %v3921 = vunpack.c.l.b16 %v3454
    %v3922 = vunpack.c.l.b16 %v3455
    %v3923 = vunpack.c.l.b16 %v3456
    %v3924 = vunpack.c.l.b16 %v3457
    %v3925 = vunpack.c.l.b16 %v3458
    %v3926 = vunpack.c.l.b16 %v3459
    %v3927 = vunpack.c.l.b16 %v3460
    %v3928 = vunpack.c.l.b16 %v3461
    %v3929 = vunpack.c.l.b16 %v3462
    %v3930 = vunpack.c.l.b16 %v3463
    %v3931 = vunpack.c.l.b16 %v3464
    %v3932 = vunpack.c.l.b16 %v3465
    %v3933 = vunpack.c.l.b16 %v3466
    %v3934 = vunpack.c.l.b16 %v3467
    %v3935 = vunpack.c.l.b16 %v3468
    %v3936 = vunpack.c.l.b16 %v3469
    %v3937 = vunpack.c.l.b16 %v3470
    %v3938 = vunpack.c.l.b16 %v3471
    %v3939 = vunpack.c.l.b16 %v3472
    %v3940 = vunpack.c.l.b16 %v3473
    %v3941 = vunpack.c.l.b16 %v3474
    %v3942 = vunpack.c.l.b16 %v3475
    %v3943 = vunpack.c.l.b16 %v3476
    %v3944 = vunpack.c.l.b16 %v3477
    %v3945 = vunpack.c.l.b16 %v3478
    %v3946 = vpack.c.b16 %v3883, %v3882
    %v3947 = vpack.c.b16 %v3885, %v3884
    %v3948 = vpack.c.b16 %v3887, %v3886
    %v3949 = vpack.c.b16 %v3889, %v3888
    %v3950 = vpack.c.b16 %v3891, %v3890
    %v3951 = vpack.c.b16 %v3893, %v3892
    %v3952 = vpack.c.b16 %v3895, %v3894
    %v3953 = vpack.c.b16 %v3897, %v3896
    %v3954 = vpack.c.b16 %v3899, %v3898
    %v3955 = vpack.c.b16 %v3901, %v3900
    %v3956 = vpack.c.b16 %v3903, %v3902
    %v3957 = vpack.c.b16 %v3905, %v3904
    %v3958 = vpack.c.b16 %v3907, %v3906
    %v3959 = vpack.c.b16 %v3909, %v3908
    %v3960 = vpack.c.b16 %v3911, %v3910
    %v3961 = vpack.c.b16 %v3913, %v3912
    %v3962 = vpack.c.b16 %v3915, %v3914
    %v3963 = vpack.c.b16 %v3917, %v3916
    %v3964 = vpack.c.b16 %v3919, %v3918
    %v3965 = vpack.c.b16 %v3921, %v3920
    %v3966 = vpack.c.b16 %v3923, %v3922
    %v3967 = vpack.c.b16 %v3925, %v3924
    %v3968 = vpack.c.b16 %v3927, %v3926
    %v3969 = vpack.c.b16 %v3929, %v3928
    %v3970 = vpack.c.b16 %v3931, %v3930
    %v3971 = vpack.c.b16 %v3933, %v3932
    %v3972 = vpack.c.b16 %v3935, %v3934
    %v3973 = vpack.c.b16 %v3937, %v3936
    %v3974 = vpack.c.b16 %v3939, %v3938
    %v3975 = vpack.c.b16 %v3941, %v3940
    %v3976 = vpack.c.b16 %v3943, %v3942
    %v3977 = vpack.c.b16 %v3945, %v3944
    %4010 = vmatprep.subr.bf16.mxu0 0
    %4011 = vmatpush1.bf16.msra.mxu0 %v3946
    %4012 = vmatprep.subr.bf16.mxu0 0
    %4013 = vmatpush1.bf16.msra.mxu0 %v3947
    %4014 = vmatprep.subr.bf16.mxu0 0
    %4015 = vmatpush1.bf16.msra.mxu0 %v3948
    %4016 = vmatprep.subr.bf16.mxu0 0
    %4017 = vmatpush1.bf16.msra.mxu0 %v3949
    %4018 = vmatprep.subr.bf16.mxu0 0
    %4019 = vmatpush1.bf16.msra.mxu0 %v3950
    %4020 = vmatprep.subr.bf16.mxu0 0
    %4021 = vmatpush1.bf16.msra.mxu0 %v3951
    %4022 = vmatprep.subr.bf16.mxu0 0
    %4023 = vmatpush1.bf16.msra.mxu0 %v3952
    %4024 = vmatprep.subr.bf16.mxu0 0
    %4025 = vmatpush1.bf16.msra.mxu0 %v3953
    %4026 = vmatprep.subr.bf16.mxu0 0
    %4027 = vmatpush1.bf16.msra.mxu0 %v3954
    %4028 = vmatprep.subr.bf16.mxu0 0
    %4029 = vmatpush1.bf16.msra.mxu0 %v3955
    %4030 = vmatprep.subr.bf16.mxu0 0
    %4031 = vmatpush1.bf16.msra.mxu0 %v3956
    %4032 = vmatprep.subr.bf16.mxu0 0
    %4033 = vmatpush1.bf16.msra.mxu0 %v3957
    %4034 = vmatprep.subr.bf16.mxu0 0
    %4035 = vmatpush1.bf16.msra.mxu0 %v3958
    %4036 = vmatprep.subr.bf16.mxu0 0
    %4037 = vmatpush1.bf16.msra.mxu0 %v3959
    %4038 = vmatprep.subr.bf16.mxu0 0
    %4039 = vmatpush1.bf16.msra.mxu0 %v3960
    %4040 = vmatprep.subr.bf16.mxu0 0
    %4041 = vmatpush1.bf16.msra.mxu0 %v3961
    %4042 = vmatprep.mubr.bf16.mxu0 %v3360
    %4043 = vmatmul.mubr.bf16.gmra.mrb[0].mxu0 %v3359
    %v4044 = vpop.f32.mrb[0].mxu0
    %v4045 = vadd.f32 %v3812, %v4044
    %v4046 = vpop.f32.mrb[0].mxu0
    %v4047 = vpop.f32.mrb[0].mxu0
    %v4048 = vadd.f32 %v3815, %v4047
    %v4049 = vpop.f32.mrb[0].mxu0
    %4050 = vdwg.mxu0
    %4051 = vmatprep.subr.bf16.mxu0 0
    %4052 = vmatpush1.bf16.msra.mxu0 %v3962
    %4053 = vmatprep.subr.bf16.mxu0 0
    %4054 = vmatpush1.bf16.msra.mxu0 %v3963
    %4055 = vmatprep.subr.bf16.mxu0 0
    %4056 = vmatpush1.bf16.msra.mxu0 %v3964
    %4057 = vmatprep.subr.bf16.mxu0 0
    %4058 = vmatpush1.bf16.msra.mxu0 %v3965
    %4059 = vmatprep.subr.bf16.mxu0 0
    %4060 = vmatpush1.bf16.msra.mxu0 %v3966
    %4061 = vmatprep.subr.bf16.mxu0 0
    %4062 = vmatpush1.bf16.msra.mxu0 %v3967
    %4063 = vmatprep.subr.bf16.mxu0 0
    %4064 = vmatpush1.bf16.msra.mxu0 %v3968
    %4065 = vmatprep.subr.bf16.mxu0 0
    %4066 = vmatpush1.bf16.msra.mxu0 %v3969
    %4067 = vmatprep.subr.bf16.mxu0 0
    %4068 = vmatpush1.bf16.msra.mxu0 %v3970
    %4069 = vmatprep.subr.bf16.mxu0 0
    %4070 = vmatpush1.bf16.msra.mxu0 %v3971
    %4071 = vmatprep.subr.bf16.mxu0 0
    %4072 = vmatpush1.bf16.msra.mxu0 %v3972
    %4073 = vmatprep.subr.bf16.mxu0 0
    %4074 = vmatpush1.bf16.msra.mxu0 %v3973
    %4075 = vmatprep.subr.bf16.mxu0 0
    %4076 = vmatpush1.bf16.msra.mxu0 %v3974
    %4077 = vmatprep.subr.bf16.mxu0 0
    %4078 = vmatpush1.bf16.msra.mxu0 %v3975
    %4079 = vmatprep.subr.bf16.mxu0 0
    %4080 = vmatpush1.bf16.msra.mxu0 %v3976
    %4081 = vmatprep.subr.bf16.mxu0 0
    %4082 = vmatpush1.bf16.msra.mxu0 %v3977
    %4083 = vmatprep.mubr.bf16.mxu0 %v3362
    %4084 = vmatmul.mubr.bf16.gmra.mrb[0].mxu0 %v3361
    %v4085 = vpop.f32.mrb[0].mxu0
    %v4086 = vadd.f32 %v4045, %v4085
    %v4087 = vpop.f32.mrb[0].mxu0
    %v4088 = vpop.f32.mrb[0].mxu0
    %v4089 = vadd.f32 %v4048, %v4088
    %v4090 = vpop.f32.mrb[0].mxu0
    %4091 = vdwg.mxu0
    %s4092 = scalar_lea.vmem %s3, 512
    %v4093 = vld [vmem:[%s4092] sm:$0xf]
    %v4094 = vld [vmem:[%s4092 + $0x4] sm:$0xf]
    %v4095 = vld [vmem:[%s4092 + $0x8] sm:$0xf]
    %v4096 = vld [vmem:[%s4092 + $0xc] sm:$0xf]
    %v4097 = vld [vmem:[%s4092 + $0x10] sm:$0xf]
    %v4098 = vld [vmem:[%s4092 + $0x14] sm:$0xf]
    %v4099 = vld [vmem:[%s4092 + $0x18] sm:$0xf]
    %v4100 = vld [vmem:[%s4092 + $0x1c] sm:$0xf]
    %v4101 = vld [vmem:[%s4092 + $0x20] sm:$0xf]
    %v4102 = vld [vmem:[%s4092 + $0x24] sm:$0xf]
    %v4103 = vld [vmem:[%s4092 + $0x28] sm:$0xf]
    %v4104 = vld [vmem:[%s4092 + $0x2c] sm:$0xf]
    %v4105 = vld [vmem:[%s4092 + $0x30] sm:$0xf]
    %v4106 = vld [vmem:[%s4092 + $0x34] sm:$0xf]
    %v4107 = vld [vmem:[%s4092 + $0x38] sm:$0xf]
    %v4108 = vld [vmem:[%s4092 + $0x3c] sm:$0xf]
    %v4109 = vld [vmem:[%s4092 + $0x40] sm:$0xf]
    %v4110 = vld [vmem:[%s4092 + $0x44] sm:$0xf]
    %v4111 = vld [vmem:[%s4092 + $0x48] sm:$0xf]
    %v4112 = vld [vmem:[%s4092 + $0x4c] sm:$0xf]
    %v4113 = vld [vmem:[%s4092 + $0x50] sm:$0xf]
    %v4114 = vld [vmem:[%s4092 + $0x54] sm:$0xf]
    %v4115 = vld [vmem:[%s4092 + $0x58] sm:$0xf]
    %v4116 = vld [vmem:[%s4092 + $0x5c] sm:$0xf]
    %v4117 = vld [vmem:[%s4092 + $0x60] sm:$0xf]
    %v4118 = vld [vmem:[%s4092 + $0x64] sm:$0xf]
    %v4119 = vld [vmem:[%s4092 + $0x68] sm:$0xf]
    %v4120 = vld [vmem:[%s4092 + $0x6c] sm:$0xf]
    %v4121 = vld [vmem:[%s4092 + $0x70] sm:$0xf]
    %v4122 = vld [vmem:[%s4092 + $0x74] sm:$0xf]
    %v4123 = vld [vmem:[%s4092 + $0x78] sm:$0xf]
    %v4124 = vld [vmem:[%s4092 + $0x7c] sm:$0xf]
    %v4125 = vld [vmem:[%s4092 + $0x80] sm:$0xf]
    %v4126 = vld [vmem:[%s4092 + $0x84] sm:$0xf]
    %v4127 = vld [vmem:[%s4092 + $0x88] sm:$0xf]
    %v4128 = vld [vmem:[%s4092 + $0x8c] sm:$0xf]
    %v4129 = vld [vmem:[%s4092 + $0x90] sm:$0xf]
    %v4130 = vld [vmem:[%s4092 + $0x94] sm:$0xf]
    %v4131 = vld [vmem:[%s4092 + $0x98] sm:$0xf]
    %v4132 = vld [vmem:[%s4092 + $0x9c] sm:$0xf]
    %v4133 = vld [vmem:[%s4092 + $0xa0] sm:$0xf]
    %v4134 = vld [vmem:[%s4092 + $0xa4] sm:$0xf]
    %v4135 = vld [vmem:[%s4092 + $0xa8] sm:$0xf]
    %v4136 = vld [vmem:[%s4092 + $0xac] sm:$0xf]
    %v4137 = vld [vmem:[%s4092 + $0xb0] sm:$0xf]
    %v4138 = vld [vmem:[%s4092 + $0xb4] sm:$0xf]
    %v4139 = vld [vmem:[%s4092 + $0xb8] sm:$0xf]
    %v4140 = vld [vmem:[%s4092 + $0xbc] sm:$0xf]
    %v4141 = vld [vmem:[%s4092 + $0xc0] sm:$0xf]
    %v4142 = vld [vmem:[%s4092 + $0xc4] sm:$0xf]
    %v4143 = vld [vmem:[%s4092 + $0xc8] sm:$0xf]
    %v4144 = vld [vmem:[%s4092 + $0xcc] sm:$0xf]
    %v4145 = vld [vmem:[%s4092 + $0xd0] sm:$0xf]
    %v4146 = vld [vmem:[%s4092 + $0xd4] sm:$0xf]
    %v4147 = vld [vmem:[%s4092 + $0xd8] sm:$0xf]
    %v4148 = vld [vmem:[%s4092 + $0xdc] sm:$0xf]
    %v4149 = vld [vmem:[%s4092 + $0xe0] sm:$0xf]
    %v4150 = vld [vmem:[%s4092 + $0xe4] sm:$0xf]
    %v4151 = vld [vmem:[%s4092 + $0xe8] sm:$0xf]
    %v4152 = vld [vmem:[%s4092 + $0xec] sm:$0xf]
    %v4153 = vld [vmem:[%s4092 + $0xf0] sm:$0xf]
    %v4154 = vld [vmem:[%s4092 + $0xf4] sm:$0xf]
    %v4155 = vld [vmem:[%s4092 + $0xf8] sm:$0xf]
    %v4156 = vld [vmem:[%s4092 + $0xfc] sm:$0xf]
    %v4221 = vunpack.c.l.b16 %v4093
    %v4222 = vunpack.c.l.b16 %v4094
    %v4223 = vunpack.c.l.b16 %v4095
    %v4224 = vunpack.c.l.b16 %v4096
    %v4225 = vunpack.c.l.b16 %v4097
    %v4226 = vunpack.c.l.b16 %v4098
    %v4227 = vunpack.c.l.b16 %v4099
    %v4228 = vunpack.c.l.b16 %v4100
    %v4229 = vunpack.c.l.b16 %v4101
    %v4230 = vunpack.c.l.b16 %v4102
    %v4231 = vunpack.c.l.b16 %v4103
    %v4232 = vunpack.c.l.b16 %v4104
    %v4233 = vunpack.c.l.b16 %v4105
    %v4234 = vunpack.c.l.b16 %v4106
    %v4235 = vunpack.c.l.b16 %v4107
    %v4236 = vunpack.c.l.b16 %v4108
    %v4237 = vunpack.c.l.b16 %v4109
    %v4238 = vunpack.c.l.b16 %v4110
    %v4239 = vunpack.c.l.b16 %v4111
    %v4240 = vunpack.c.l.b16 %v4112
    %v4241 = vunpack.c.l.b16 %v4113
    %v4242 = vunpack.c.l.b16 %v4114
    %v4243 = vunpack.c.l.b16 %v4115
    %v4244 = vunpack.c.l.b16 %v4116
    %v4245 = vunpack.c.l.b16 %v4117
    %v4246 = vunpack.c.l.b16 %v4118
    %v4247 = vunpack.c.l.b16 %v4119
    %v4248 = vunpack.c.l.b16 %v4120
    %v4249 = vunpack.c.l.b16 %v4121
    %v4250 = vunpack.c.l.b16 %v4122
    %v4251 = vunpack.c.l.b16 %v4123
    %v4252 = vunpack.c.l.b16 %v4124
    %v4253 = vunpack.c.l.b16 %v4125
    %v4254 = vunpack.c.l.b16 %v4126
    %v4255 = vunpack.c.l.b16 %v4127
    %v4256 = vunpack.c.l.b16 %v4128
    %v4257 = vunpack.c.l.b16 %v4129
    %v4258 = vunpack.c.l.b16 %v4130
    %v4259 = vunpack.c.l.b16 %v4131
    %v4260 = vunpack.c.l.b16 %v4132
    %v4261 = vunpack.c.l.b16 %v4133
    %v4262 = vunpack.c.l.b16 %v4134
    %v4263 = vunpack.c.l.b16 %v4135
    %v4264 = vunpack.c.l.b16 %v4136
    %v4265 = vunpack.c.l.b16 %v4137
    %v4266 = vunpack.c.l.b16 %v4138
    %v4267 = vunpack.c.l.b16 %v4139
    %v4268 = vunpack.c.l.b16 %v4140
    %v4269 = vunpack.c.l.b16 %v4141
    %v4270 = vunpack.c.l.b16 %v4142
    %v4271 = vunpack.c.l.b16 %v4143
    %v4272 = vunpack.c.l.b16 %v4144
    %v4273 = vunpack.c.l.b16 %v4145
    %v4274 = vunpack.c.l.b16 %v4146
    %v4275 = vunpack.c.l.b16 %v4147
    %v4276 = vunpack.c.l.b16 %v4148
    %v4277 = vunpack.c.l.b16 %v4149
    %v4278 = vunpack.c.l.b16 %v4150
    %v4279 = vunpack.c.l.b16 %v4151
    %v4280 = vunpack.c.l.b16 %v4152
    %v4281 = vunpack.c.l.b16 %v4153
    %v4282 = vunpack.c.l.b16 %v4154
    %v4283 = vunpack.c.l.b16 %v4155
    %v4284 = vunpack.c.l.b16 %v4156
    %v4285 = vpack.c.b16 %v4222, %v4221
    %v4286 = vpack.c.b16 %v4224, %v4223
    %v4287 = vpack.c.b16 %v4226, %v4225
    %v4288 = vpack.c.b16 %v4228, %v4227
    %v4289 = vpack.c.b16 %v4230, %v4229
    %v4290 = vpack.c.b16 %v4232, %v4231
    %v4291 = vpack.c.b16 %v4234, %v4233
    %v4292 = vpack.c.b16 %v4236, %v4235
    %v4293 = vpack.c.b16 %v4238, %v4237
    %v4294 = vpack.c.b16 %v4240, %v4239
    %v4295 = vpack.c.b16 %v4242, %v4241
    %v4296 = vpack.c.b16 %v4244, %v4243
    %v4297 = vpack.c.b16 %v4246, %v4245
    %v4298 = vpack.c.b16 %v4248, %v4247
    %v4299 = vpack.c.b16 %v4250, %v4249
    %v4300 = vpack.c.b16 %v4252, %v4251
    %v4301 = vpack.c.b16 %v4254, %v4253
    %v4302 = vpack.c.b16 %v4256, %v4255
    %v4303 = vpack.c.b16 %v4258, %v4257
    %v4304 = vpack.c.b16 %v4260, %v4259
    %v4305 = vpack.c.b16 %v4262, %v4261
    %v4306 = vpack.c.b16 %v4264, %v4263
    %v4307 = vpack.c.b16 %v4266, %v4265
    %v4308 = vpack.c.b16 %v4268, %v4267
    %v4309 = vpack.c.b16 %v4270, %v4269
    %v4310 = vpack.c.b16 %v4272, %v4271
    %v4311 = vpack.c.b16 %v4274, %v4273
    %v4312 = vpack.c.b16 %v4276, %v4275
    %v4313 = vpack.c.b16 %v4278, %v4277
    %v4314 = vpack.c.b16 %v4280, %v4279
    %v4315 = vpack.c.b16 %v4282, %v4281
    %v4316 = vpack.c.b16 %v4284, %v4283
    %4349 = vmatprep.subr.bf16.mxu0 0
    %4350 = vmatpush1.bf16.msra.mxu0 %v4285
    %4351 = vmatprep.subr.bf16.mxu0 0
    %4352 = vmatpush1.bf16.msra.mxu0 %v4286
    %4353 = vmatprep.subr.bf16.mxu0 0
    %4354 = vmatpush1.bf16.msra.mxu0 %v4287
    %4355 = vmatprep.subr.bf16.mxu0 0
    %4356 = vmatpush1.bf16.msra.mxu0 %v4288
    %4357 = vmatprep.subr.bf16.mxu0 0
    %4358 = vmatpush1.bf16.msra.mxu0 %v4289
    %4359 = vmatprep.subr.bf16.mxu0 0
    %4360 = vmatpush1.bf16.msra.mxu0 %v4290
    %4361 = vmatprep.subr.bf16.mxu0 0
    %4362 = vmatpush1.bf16.msra.mxu0 %v4291
    %4363 = vmatprep.subr.bf16.mxu0 0
    %4364 = vmatpush1.bf16.msra.mxu0 %v4292
    %4365 = vmatprep.subr.bf16.mxu0 0
    %4366 = vmatpush1.bf16.msra.mxu0 %v4293
    %4367 = vmatprep.subr.bf16.mxu0 0
    %4368 = vmatpush1.bf16.msra.mxu0 %v4294
    %4369 = vmatprep.subr.bf16.mxu0 0
    %4370 = vmatpush1.bf16.msra.mxu0 %v4295
    %4371 = vmatprep.subr.bf16.mxu0 0
    %4372 = vmatpush1.bf16.msra.mxu0 %v4296
    %4373 = vmatprep.subr.bf16.mxu0 0
    %4374 = vmatpush1.bf16.msra.mxu0 %v4297
    %4375 = vmatprep.subr.bf16.mxu0 0
    %4376 = vmatpush1.bf16.msra.mxu0 %v4298
    %4377 = vmatprep.subr.bf16.mxu0 0
    %4378 = vmatpush1.bf16.msra.mxu0 %v4299
    %4379 = vmatprep.subr.bf16.mxu0 0
    %4380 = vmatpush1.bf16.msra.mxu0 %v4300
    %4381 = vmatprep.mubr.bf16.mxu0 %v3368
    %4382 = vmatmul.mubr.bf16.gmra.mrb[0].mxu0 %v3367
    %v4383 = vpop.f32.mrb[0].mxu0
    %v4384 = vadd.f32 0.0, %v4383
    %v4385 = vpop.f32.mrb[0].mxu0
    %v4386 = vpop.f32.mrb[0].mxu0
    %v4387 = vadd.f32 0.0, %v4386
    %v4388 = vpop.f32.mrb[0].mxu0
    %4389 = vdwg.mxu0
    %4390 = vmatprep.subr.bf16.mxu0 0
    %4391 = vmatpush1.bf16.msra.mxu0 %v4301
    %4392 = vmatprep.subr.bf16.mxu0 0
    %4393 = vmatpush1.bf16.msra.mxu0 %v4302
    %4394 = vmatprep.subr.bf16.mxu0 0
    %4395 = vmatpush1.bf16.msra.mxu0 %v4303
    %4396 = vmatprep.subr.bf16.mxu0 0
    %4397 = vmatpush1.bf16.msra.mxu0 %v4304
    %4398 = vmatprep.subr.bf16.mxu0 0
    %4399 = vmatpush1.bf16.msra.mxu0 %v4305
    %4400 = vmatprep.subr.bf16.mxu0 0
    %4401 = vmatpush1.bf16.msra.mxu0 %v4306
    %4402 = vmatprep.subr.bf16.mxu0 0
    %4403 = vmatpush1.bf16.msra.mxu0 %v4307
    %4404 = vmatprep.subr.bf16.mxu0 0
    %4405 = vmatpush1.bf16.msra.mxu0 %v4308
    %4406 = vmatprep.subr.bf16.mxu0 0
    %4407 = vmatpush1.bf16.msra.mxu0 %v4309
    %4408 = vmatprep.subr.bf16.mxu0 0
    %4409 = vmatpush1.bf16.msra.mxu0 %v4310
    %4410 = vmatprep.subr.bf16.mxu0 0
    %4411 = vmatpush1.bf16.msra.mxu0 %v4311
    %4412 = vmatprep.subr.bf16.mxu0 0
    %4413 = vmatpush1.bf16.msra.mxu0 %v4312
    %4414 = vmatprep.subr.bf16.mxu0 0
    %4415 = vmatpush1.bf16.msra.mxu0 %v4313
    %4416 = vmatprep.subr.bf16.mxu0 0
    %4417 = vmatpush1.bf16.msra.mxu0 %v4314
    %4418 = vmatprep.subr.bf16.mxu0 0
    %4419 = vmatpush1.bf16.msra.mxu0 %v4315
    %4420 = vmatprep.subr.bf16.mxu0 0
    %4421 = vmatpush1.bf16.msra.mxu0 %v4316
    %4422 = vmatprep.mubr.bf16.mxu0 %v3370
    %4423 = vmatmul.mubr.bf16.gmra.mrb[0].mxu0 %v3369
    %v4424 = vpop.f32.mrb[0].mxu0
    %v4425 = vadd.f32 %v4384, %v4424
    %v4426 = vpop.f32.mrb[0].mxu0
    %v4427 = vpop.f32.mrb[0].mxu0
    %v4428 = vadd.f32 %v4387, %v4427
    %v4429 = vpop.f32.mrb[0].mxu0
    %4430 = vdwg.mxu0
    %v4431 = vadd.f32 %v4086, %v4425
    %v4432 = vadd.f32 %v4089, %v4428
    %s4433 = scalar_lea.vmem %s3, 768
    %v4434 = vld [vmem:[%s4433] sm:$0xf]
    %v4435 = vld [vmem:[%s4433 + $0x4] sm:$0xf]
    %v4436 = vld [vmem:[%s4433 + $0x8] sm:$0xf]
    %v4437 = vld [vmem:[%s4433 + $0xc] sm:$0xf]
    %v4438 = vld [vmem:[%s4433 + $0x10] sm:$0xf]
    %v4439 = vld [vmem:[%s4433 + $0x14] sm:$0xf]
    %v4440 = vld [vmem:[%s4433 + $0x18] sm:$0xf]
    %v4441 = vld [vmem:[%s4433 + $0x1c] sm:$0xf]
    %v4442 = vld [vmem:[%s4433 + $0x20] sm:$0xf]
    %v4443 = vld [vmem:[%s4433 + $0x24] sm:$0xf]
    %v4444 = vld [vmem:[%s4433 + $0x28] sm:$0xf]
    %v4445 = vld [vmem:[%s4433 + $0x2c] sm:$0xf]
    %v4446 = vld [vmem:[%s4433 + $0x30] sm:$0xf]
    %v4447 = vld [vmem:[%s4433 + $0x34] sm:$0xf]
    %v4448 = vld [vmem:[%s4433 + $0x38] sm:$0xf]
    %v4449 = vld [vmem:[%s4433 + $0x3c] sm:$0xf]
    %v4450 = vld [vmem:[%s4433 + $0x40] sm:$0xf]
    %v4451 = vld [vmem:[%s4433 + $0x44] sm:$0xf]
    %v4452 = vld [vmem:[%s4433 + $0x48] sm:$0xf]
    %v4453 = vld [vmem:[%s4433 + $0x4c] sm:$0xf]
    %v4454 = vld [vmem:[%s4433 + $0x50] sm:$0xf]
    %v4455 = vld [vmem:[%s4433 + $0x54] sm:$0xf]
    %v4456 = vld [vmem:[%s4433 + $0x58] sm:$0xf]
    %v4457 = vld [vmem:[%s4433 + $0x5c] sm:$0xf]
    %v4458 = vld [vmem:[%s4433 + $0x60] sm:$0xf]
    %v4459 = vld [vmem:[%s4433 + $0x64] sm:$0xf]
    %v4460 = vld [vmem:[%s4433 + $0x68] sm:$0xf]
    %v4461 = vld [vmem:[%s4433 + $0x6c] sm:$0xf]
    %v4462 = vld [vmem:[%s4433 + $0x70] sm:$0xf]
    %v4463 = vld [vmem:[%s4433 + $0x74] sm:$0xf]
    %v4464 = vld [vmem:[%s4433 + $0x78] sm:$0xf]
    %v4465 = vld [vmem:[%s4433 + $0x7c] sm:$0xf]
    %v4466 = vld [vmem:[%s4433 + $0x80] sm:$0xf]
    %v4467 = vld [vmem:[%s4433 + $0x84] sm:$0xf]
    %v4468 = vld [vmem:[%s4433 + $0x88] sm:$0xf]
    %v4469 = vld [vmem:[%s4433 + $0x8c] sm:$0xf]
    %v4470 = vld [vmem:[%s4433 + $0x90] sm:$0xf]
    %v4471 = vld [vmem:[%s4433 + $0x94] sm:$0xf]
    %v4472 = vld [vmem:[%s4433 + $0x98] sm:$0xf]
    %v4473 = vld [vmem:[%s4433 + $0x9c] sm:$0xf]
    %v4474 = vld [vmem:[%s4433 + $0xa0] sm:$0xf]
    %v4475 = vld [vmem:[%s4433 + $0xa4] sm:$0xf]
    %v4476 = vld [vmem:[%s4433 + $0xa8] sm:$0xf]
    %v4477 = vld [vmem:[%s4433 + $0xac] sm:$0xf]
    %v4478 = vld [vmem:[%s4433 + $0xb0] sm:$0xf]
    %v4479 = vld [vmem:[%s4433 + $0xb4] sm:$0xf]
    %v4480 = vld [vmem:[%s4433 + $0xb8] sm:$0xf]
    %v4481 = vld [vmem:[%s4433 + $0xbc] sm:$0xf]
    %v4482 = vld [vmem:[%s4433 + $0xc0] sm:$0xf]
    %v4483 = vld [vmem:[%s4433 + $0xc4] sm:$0xf]
    %v4484 = vld [vmem:[%s4433 + $0xc8] sm:$0xf]
    %v4485 = vld [vmem:[%s4433 + $0xcc] sm:$0xf]
    %v4486 = vld [vmem:[%s4433 + $0xd0] sm:$0xf]
    %v4487 = vld [vmem:[%s4433 + $0xd4] sm:$0xf]
    %v4488 = vld [vmem:[%s4433 + $0xd8] sm:$0xf]
    %v4489 = vld [vmem:[%s4433 + $0xdc] sm:$0xf]
    %v4490 = vld [vmem:[%s4433 + $0xe0] sm:$0xf]
    %v4491 = vld [vmem:[%s4433 + $0xe4] sm:$0xf]
    %v4492 = vld [vmem:[%s4433 + $0xe8] sm:$0xf]
    %v4493 = vld [vmem:[%s4433 + $0xec] sm:$0xf]
    %v4494 = vld [vmem:[%s4433 + $0xf0] sm:$0xf]
    %v4495 = vld [vmem:[%s4433 + $0xf4] sm:$0xf]
    %v4496 = vld [vmem:[%s4433 + $0xf8] sm:$0xf]
    %v4497 = vld [vmem:[%s4433 + $0xfc] sm:$0xf]
    %v4562 = vunpack.c.l.b16 %v4434
    %v4563 = vunpack.c.l.b16 %v4435
    %v4564 = vunpack.c.l.b16 %v4436
    %v4565 = vunpack.c.l.b16 %v4437
    %v4566 = vunpack.c.l.b16 %v4438
    %v4567 = vunpack.c.l.b16 %v4439
    %v4568 = vunpack.c.l.b16 %v4440
    %v4569 = vunpack.c.l.b16 %v4441
    %v4570 = vunpack.c.l.b16 %v4442
    %v4571 = vunpack.c.l.b16 %v4443
    %v4572 = vunpack.c.l.b16 %v4444
    %v4573 = vunpack.c.l.b16 %v4445
    %v4574 = vunpack.c.l.b16 %v4446
    %v4575 = vunpack.c.l.b16 %v4447
    %v4576 = vunpack.c.l.b16 %v4448
    %v4577 = vunpack.c.l.b16 %v4449
    %v4578 = vunpack.c.l.b16 %v4450
    %v4579 = vunpack.c.l.b16 %v4451
    %v4580 = vunpack.c.l.b16 %v4452
    %v4581 = vunpack.c.l.b16 %v4453
    %v4582 = vunpack.c.l.b16 %v4454
    %v4583 = vunpack.c.l.b16 %v4455
    %v4584 = vunpack.c.l.b16 %v4456
    %v4585 = vunpack.c.l.b16 %v4457
    %v4586 = vunpack.c.l.b16 %v4458
    %v4587 = vunpack.c.l.b16 %v4459
    %v4588 = vunpack.c.l.b16 %v4460
    %v4589 = vunpack.c.l.b16 %v4461
    %v4590 = vunpack.c.l.b16 %v4462
    %v4591 = vunpack.c.l.b16 %v4463
    %v4592 = vunpack.c.l.b16 %v4464
    %v4593 = vunpack.c.l.b16 %v4465
    %v4594 = vunpack.c.l.b16 %v4466
    %v4595 = vunpack.c.l.b16 %v4467
    %v4596 = vunpack.c.l.b16 %v4468
    %v4597 = vunpack.c.l.b16 %v4469
    %v4598 = vunpack.c.l.b16 %v4470
    %v4599 = vunpack.c.l.b16 %v4471
    %v4600 = vunpack.c.l.b16 %v4472
    %v4601 = vunpack.c.l.b16 %v4473
    %v4602 = vunpack.c.l.b16 %v4474
    %v4603 = vunpack.c.l.b16 %v4475
    %v4604 = vunpack.c.l.b16 %v4476
    %v4605 = vunpack.c.l.b16 %v4477
    %v4606 = vunpack.c.l.b16 %v4478
    %v4607 = vunpack.c.l.b16 %v4479
    %v4608 = vunpack.c.l.b16 %v4480
    %v4609 = vunpack.c.l.b16 %v4481
    %v4610 = vunpack.c.l.b16 %v4482
    %v4611 = vunpack.c.l.b16 %v4483
    %v4612 = vunpack.c.l.b16 %v4484
    %v4613 = vunpack.c.l.b16 %v4485
    %v4614 = vunpack.c.l.b16 %v4486
    %v4615 = vunpack.c.l.b16 %v4487
    %v4616 = vunpack.c.l.b16 %v4488
    %v4617 = vunpack.c.l.b16 %v4489
    %v4618 = vunpack.c.l.b16 %v4490
    %v4619 = vunpack.c.l.b16 %v4491
    %v4620 = vunpack.c.l.b16 %v4492
    %v4621 = vunpack.c.l.b16 %v4493
    %v4622 = vunpack.c.l.b16 %v4494
    %v4623 = vunpack.c.l.b16 %v4495
    %v4624 = vunpack.c.l.b16 %v4496
    %v4625 = vunpack.c.l.b16 %v4497
    %v4626 = vpack.c.b16 %v4563, %v4562
    %v4627 = vpack.c.b16 %v4565, %v4564
    %v4628 = vpack.c.b16 %v4567, %v4566
    %v4629 = vpack.c.b16 %v4569, %v4568
    %v4630 = vpack.c.b16 %v4571, %v4570
    %v4631 = vpack.c.b16 %v4573, %v4572
    %v4632 = vpack.c.b16 %v4575, %v4574
    %v4633 = vpack.c.b16 %v4577, %v4576
    %v4634 = vpack.c.b16 %v4579, %v4578
    %v4635 = vpack.c.b16 %v4581, %v4580
    %v4636 = vpack.c.b16 %v4583, %v4582
    %v4637 = vpack.c.b16 %v4585, %v4584
    %v4638 = vpack.c.b16 %v4587, %v4586
    %v4639 = vpack.c.b16 %v4589, %v4588
    %v4640 = vpack.c.b16 %v4591, %v4590
    %v4641 = vpack.c.b16 %v4593, %v4592
    %v4642 = vpack.c.b16 %v4595, %v4594
    %v4643 = vpack.c.b16 %v4597, %v4596
    %v4644 = vpack.c.b16 %v4599, %v4598
    %v4645 = vpack.c.b16 %v4601, %v4600
    %v4646 = vpack.c.b16 %v4603, %v4602
    %v4647 = vpack.c.b16 %v4605, %v4604
    %v4648 = vpack.c.b16 %v4607, %v4606
    %v4649 = vpack.c.b16 %v4609, %v4608
    %v4650 = vpack.c.b16 %v4611, %v4610
    %v4651 = vpack.c.b16 %v4613, %v4612
    %v4652 = vpack.c.b16 %v4615, %v4614
    %v4653 = vpack.c.b16 %v4617, %v4616
    %v4654 = vpack.c.b16 %v4619, %v4618
    %v4655 = vpack.c.b16 %v4621, %v4620
    %v4656 = vpack.c.b16 %v4623, %v4622
    %v4657 = vpack.c.b16 %v4625, %v4624
    %4690 = vmatprep.subr.bf16.mxu0 0
    %4691 = vmatpush1.bf16.msra.mxu0 %v4626
    %4692 = vmatprep.subr.bf16.mxu0 0
    %4693 = vmatpush1.bf16.msra.mxu0 %v4627
    %4694 = vmatprep.subr.bf16.mxu0 0
    %4695 = vmatpush1.bf16.msra.mxu0 %v4628
    %4696 = vmatprep.subr.bf16.mxu0 0
    %4697 = vmatpush1.bf16.msra.mxu0 %v4629
    %4698 = vmatprep.subr.bf16.mxu0 0
    %4699 = vmatpush1.bf16.msra.mxu0 %v4630
    %4700 = vmatprep.subr.bf16.mxu0 0
    %4701 = vmatpush1.bf16.msra.mxu0 %v4631
    %4702 = vmatprep.subr.bf16.mxu0 0
    %4703 = vmatpush1.bf16.msra.mxu0 %v4632
    %4704 = vmatprep.subr.bf16.mxu0 0
    %4705 = vmatpush1.bf16.msra.mxu0 %v4633
    %4706 = vmatprep.subr.bf16.mxu0 0
    %4707 = vmatpush1.bf16.msra.mxu0 %v4634
    %4708 = vmatprep.subr.bf16.mxu0 0
    %4709 = vmatpush1.bf16.msra.mxu0 %v4635
    %4710 = vmatprep.subr.bf16.mxu0 0
    %4711 = vmatpush1.bf16.msra.mxu0 %v4636
    %4712 = vmatprep.subr.bf16.mxu0 0
    %4713 = vmatpush1.bf16.msra.mxu0 %v4637
    %4714 = vmatprep.subr.bf16.mxu0 0
    %4715 = vmatpush1.bf16.msra.mxu0 %v4638
    %4716 = vmatprep.subr.bf16.mxu0 0
    %4717 = vmatpush1.bf16.msra.mxu0 %v4639
    %4718 = vmatprep.subr.bf16.mxu0 0
    %4719 = vmatpush1.bf16.msra.mxu0 %v4640
    %4720 = vmatprep.subr.bf16.mxu0 0
    %4721 = vmatpush1.bf16.msra.mxu0 %v4641
    %4722 = vmatprep.mubr.bf16.mxu0 %v3372
    %4723 = vmatmul.mubr.bf16.gmra.mrb[0].mxu0 %v3371
    %v4724 = vpop.f32.mrb[0].mxu0
    %v4725 = vadd.f32 0.0, %v4724
    %v4726 = vpop.f32.mrb[0].mxu0
    %v4727 = vpop.f32.mrb[0].mxu0
    %v4728 = vadd.f32 0.0, %v4727
    %v4729 = vpop.f32.mrb[0].mxu0
    %4730 = vdwg.mxu0
    %4731 = vmatprep.subr.bf16.mxu0 0
    %4732 = vmatpush1.bf16.msra.mxu0 %v4642
    %4733 = vmatprep.subr.bf16.mxu0 0
    %4734 = vmatpush1.bf16.msra.mxu0 %v4643
    %4735 = vmatprep.subr.bf16.mxu0 0
    %4736 = vmatpush1.bf16.msra.mxu0 %v4644
    %4737 = vmatprep.subr.bf16.mxu0 0
    %4738 = vmatpush1.bf16.msra.mxu0 %v4645
    %4739 = vmatprep.subr.bf16.mxu0 0
    %4740 = vmatpush1.bf16.msra.mxu0 %v4646
    %4741 = vmatprep.subr.bf16.mxu0 0
    %4742 = vmatpush1.bf16.msra.mxu0 %v4647
    %4743 = vmatprep.subr.bf16.mxu0 0
    %4744 = vmatpush1.bf16.msra.mxu0 %v4648
    %4745 = vmatprep.subr.bf16.mxu0 0
    %4746 = vmatpush1.bf16.msra.mxu0 %v4649
    %4747 = vmatprep.subr.bf16.mxu0 0
    %4748 = vmatpush1.bf16.msra.mxu0 %v4650
    %4749 = vmatprep.subr.bf16.mxu0 0
    %4750 = vmatpush1.bf16.msra.mxu0 %v4651
    %4751 = vmatprep.subr.bf16.mxu0 0
    %4752 = vmatpush1.bf16.msra.mxu0 %v4652
    %4753 = vmatprep.subr.bf16.mxu0 0
    %4754 = vmatpush1.bf16.msra.mxu0 %v4653
    %4755 = vmatprep.subr.bf16.mxu0 0
    %4756 = vmatpush1.bf16.msra.mxu0 %v4654
    %4757 = vmatprep.subr.bf16.mxu0 0
    %4758 = vmatpush1.bf16.msra.mxu0 %v4655
    %4759 = vmatprep.subr.bf16.mxu0 0
    %4760 = vmatpush1.bf16.msra.mxu0 %v4656
    %4761 = vmatprep.subr.bf16.mxu0 0
    %4762 = vmatpush1.bf16.msra.mxu0 %v4657
    %4763 = vmatprep.mubr.bf16.mxu0 %v3374
    %4764 = vmatmul.mubr.bf16.gmra.mrb[0].mxu0 %v3373
    %v4765 = vpop.f32.mrb[0].mxu0
    %v4766 = vadd.f32 %v4725, %v4765
    %v4767 = vpop.f32.mrb[0].mxu0
    %v4768 = vpop.f32.mrb[0].mxu0
    %v4769 = vadd.f32 %v4728, %v4768
    %v4770 = vpop.f32.mrb[0].mxu0
    %4771 = vdwg.mxu0
    %v4772 = vadd.f32 %v4431, %v4766
    %v4773 = vadd.f32 %v4432, %v4769
    %s4774 = scalar_lea.vmem %s3, 1024
    %v4775 = vld [vmem:[%s4774] sm:$0xf]
    %v4776 = vld [vmem:[%s4774 + $0x4] sm:$0xf]
    %v4777 = vld [vmem:[%s4774 + $0x8] sm:$0xf]
    %v4778 = vld [vmem:[%s4774 + $0xc] sm:$0xf]
    %v4779 = vld [vmem:[%s4774 + $0x10] sm:$0xf]
    %v4780 = vld [vmem:[%s4774 + $0x14] sm:$0xf]
    %v4781 = vld [vmem:[%s4774 + $0x18] sm:$0xf]
    %v4782 = vld [vmem:[%s4774 + $0x1c] sm:$0xf]
    %v4783 = vld [vmem:[%s4774 + $0x20] sm:$0xf]
    %v4784 = vld [vmem:[%s4774 + $0x24] sm:$0xf]
    %v4785 = vld [vmem:[%s4774 + $0x28] sm:$0xf]
    %v4786 = vld [vmem:[%s4774 + $0x2c] sm:$0xf]
    %v4787 = vld [vmem:[%s4774 + $0x30] sm:$0xf]
    %v4788 = vld [vmem:[%s4774 + $0x34] sm:$0xf]
    %v4789 = vld [vmem:[%s4774 + $0x38] sm:$0xf]
    %v4790 = vld [vmem:[%s4774 + $0x3c] sm:$0xf]
    %v4791 = vld [vmem:[%s4774 + $0x40] sm:$0xf]
    %v4792 = vld [vmem:[%s4774 + $0x44] sm:$0xf]
    %v4793 = vld [vmem:[%s4774 + $0x48] sm:$0xf]
    %v4794 = vld [vmem:[%s4774 + $0x4c] sm:$0xf]
    %v4795 = vld [vmem:[%s4774 + $0x50] sm:$0xf]
    %v4796 = vld [vmem:[%s4774 + $0x54] sm:$0xf]
    %v4797 = vld [vmem:[%s4774 + $0x58] sm:$0xf]
    %v4798 = vld [vmem:[%s4774 + $0x5c] sm:$0xf]
    %v4799 = vld [vmem:[%s4774 + $0x60] sm:$0xf]
    %v4800 = vld [vmem:[%s4774 + $0x64] sm:$0xf]
    %v4801 = vld [vmem:[%s4774 + $0x68] sm:$0xf]
    %v4802 = vld [vmem:[%s4774 + $0x6c] sm:$0xf]
    %v4803 = vld [vmem:[%s4774 + $0x70] sm:$0xf]
    %v4804 = vld [vmem:[%s4774 + $0x74] sm:$0xf]
    %v4805 = vld [vmem:[%s4774 + $0x78] sm:$0xf]
    %v4806 = vld [vmem:[%s4774 + $0x7c] sm:$0xf]
    %v4807 = vld [vmem:[%s4774 + $0x80] sm:$0xf]
    %v4808 = vld [vmem:[%s4774 + $0x84] sm:$0xf]
    %v4809 = vld [vmem:[%s4774 + $0x88] sm:$0xf]
    %v4810 = vld [vmem:[%s4774 + $0x8c] sm:$0xf]
    %v4811 = vld [vmem:[%s4774 + $0x90] sm:$0xf]
    %v4812 = vld [vmem:[%s4774 + $0x94] sm:$0xf]
    %v4813 = vld [vmem:[%s4774 + $0x98] sm:$0xf]
    %v4814 = vld [vmem:[%s4774 + $0x9c] sm:$0xf]
    %v4815 = vld [vmem:[%s4774 + $0xa0] sm:$0xf]
    %v4816 = vld [vmem:[%s4774 + $0xa4] sm:$0xf]
    %v4817 = vld [vmem:[%s4774 + $0xa8] sm:$0xf]
    %v4818 = vld [vmem:[%s4774 + $0xac] sm:$0xf]
    %v4819 = vld [vmem:[%s4774 + $0xb0] sm:$0xf]
    %v4820 = vld [vmem:[%s4774 + $0xb4] sm:$0xf]
    %v4821 = vld [vmem:[%s4774 + $0xb8] sm:$0xf]
    %v4822 = vld [vmem:[%s4774 + $0xbc] sm:$0xf]
    %v4823 = vld [vmem:[%s4774 + $0xc0] sm:$0xf]
    %v4824 = vld [vmem:[%s4774 + $0xc4] sm:$0xf]
    %v4825 = vld [vmem:[%s4774 + $0xc8] sm:$0xf]
    %v4826 = vld [vmem:[%s4774 + $0xcc] sm:$0xf]
    %v4827 = vld [vmem:[%s4774 + $0xd0] sm:$0xf]
    %v4828 = vld [vmem:[%s4774 + $0xd4] sm:$0xf]
    %v4829 = vld [vmem:[%s4774 + $0xd8] sm:$0xf]
    %v4830 = vld [vmem:[%s4774 + $0xdc] sm:$0xf]
    %v4831 = vld [vmem:[%s4774 + $0xe0] sm:$0xf]
    %v4832 = vld [vmem:[%s4774 + $0xe4] sm:$0xf]
    %v4833 = vld [vmem:[%s4774 + $0xe8] sm:$0xf]
    %v4834 = vld [vmem:[%s4774 + $0xec] sm:$0xf]
    %v4835 = vld [vmem:[%s4774 + $0xf0] sm:$0xf]
    %v4836 = vld [vmem:[%s4774 + $0xf4] sm:$0xf]
    %v4837 = vld [vmem:[%s4774 + $0xf8] sm:$0xf]
    %v4838 = vld [vmem:[%s4774 + $0xfc] sm:$0xf]
    %v4903 = vunpack.c.l.b16 %v4775
    %v4904 = vunpack.c.l.b16 %v4776
    %v4905 = vunpack.c.l.b16 %v4777
    %v4906 = vunpack.c.l.b16 %v4778
    %v4907 = vunpack.c.l.b16 %v4779
    %v4908 = vunpack.c.l.b16 %v4780
    %v4909 = vunpack.c.l.b16 %v4781
    %v4910 = vunpack.c.l.b16 %v4782
    %v4911 = vunpack.c.l.b16 %v4783
    %v4912 = vunpack.c.l.b16 %v4784
    %v4913 = vunpack.c.l.b16 %v4785
    %v4914 = vunpack.c.l.b16 %v4786
    %v4915 = vunpack.c.l.b16 %v4787
    %v4916 = vunpack.c.l.b16 %v4788
    %v4917 = vunpack.c.l.b16 %v4789
    %v4918 = vunpack.c.l.b16 %v4790
    %v4919 = vunpack.c.l.b16 %v4791
    %v4920 = vunpack.c.l.b16 %v4792
    %v4921 = vunpack.c.l.b16 %v4793
    %v4922 = vunpack.c.l.b16 %v4794
    %v4923 = vunpack.c.l.b16 %v4795
    %v4924 = vunpack.c.l.b16 %v4796
    %v4925 = vunpack.c.l.b16 %v4797
    %v4926 = vunpack.c.l.b16 %v4798
    %v4927 = vunpack.c.l.b16 %v4799
    %v4928 = vunpack.c.l.b16 %v4800
    %v4929 = vunpack.c.l.b16 %v4801
    %v4930 = vunpack.c.l.b16 %v4802
    %v4931 = vunpack.c.l.b16 %v4803
    %v4932 = vunpack.c.l.b16 %v4804
    %v4933 = vunpack.c.l.b16 %v4805
    %v4934 = vunpack.c.l.b16 %v4806
    %v4935 = vunpack.c.l.b16 %v4807
    %v4936 = vunpack.c.l.b16 %v4808
    %v4937 = vunpack.c.l.b16 %v4809
    %v4938 = vunpack.c.l.b16 %v4810
    %v4939 = vunpack.c.l.b16 %v4811
    %v4940 = vunpack.c.l.b16 %v4812
    %v4941 = vunpack.c.l.b16 %v4813
    %v4942 = vunpack.c.l.b16 %v4814
    %v4943 = vunpack.c.l.b16 %v4815
    %v4944 = vunpack.c.l.b16 %v4816
    %v4945 = vunpack.c.l.b16 %v4817
    %v4946 = vunpack.c.l.b16 %v4818
    %v4947 = vunpack.c.l.b16 %v4819
    %v4948 = vunpack.c.l.b16 %v4820
    %v4949 = vunpack.c.l.b16 %v4821
    %v4950 = vunpack.c.l.b16 %v4822
    %v4951 = vunpack.c.l.b16 %v4823
    %v4952 = vunpack.c.l.b16 %v4824
    %v4953 = vunpack.c.l.b16 %v4825
    %v4954 = vunpack.c.l.b16 %v4826
    %v4955 = vunpack.c.l.b16 %v4827
    %v4956 = vunpack.c.l.b16 %v4828
    %v4957 = vunpack.c.l.b16 %v4829
    %v4958 = vunpack.c.l.b16 %v4830
    %v4959 = vunpack.c.l.b16 %v4831
    %v4960 = vunpack.c.l.b16 %v4832
    %v4961 = vunpack.c.l.b16 %v4833
    %v4962 = vunpack.c.l.b16 %v4834
    %v4963 = vunpack.c.l.b16 %v4835
    %v4964 = vunpack.c.l.b16 %v4836
    %v4965 = vunpack.c.l.b16 %v4837
    %v4966 = vunpack.c.l.b16 %v4838
    %v4967 = vpack.c.b16 %v4904, %v4903
    %v4968 = vpack.c.b16 %v4906, %v4905
    %v4969 = vpack.c.b16 %v4908, %v4907
    %v4970 = vpack.c.b16 %v4910, %v4909
    %v4971 = vpack.c.b16 %v4912, %v4911
    %v4972 = vpack.c.b16 %v4914, %v4913
    %v4973 = vpack.c.b16 %v4916, %v4915
    %v4974 = vpack.c.b16 %v4918, %v4917
    %v4975 = vpack.c.b16 %v4920, %v4919
    %v4976 = vpack.c.b16 %v4922, %v4921
    %v4977 = vpack.c.b16 %v4924, %v4923
    %v4978 = vpack.c.b16 %v4926, %v4925
    %v4979 = vpack.c.b16 %v4928, %v4927
    %v4980 = vpack.c.b16 %v4930, %v4929
    %v4981 = vpack.c.b16 %v4932, %v4931
    %v4982 = vpack.c.b16 %v4934, %v4933
    %v4983 = vpack.c.b16 %v4936, %v4935
    %v4984 = vpack.c.b16 %v4938, %v4937
    %v4985 = vpack.c.b16 %v4940, %v4939
    %v4986 = vpack.c.b16 %v4942, %v4941
    %v4987 = vpack.c.b16 %v4944, %v4943
    %v4988 = vpack.c.b16 %v4946, %v4945
    %v4989 = vpack.c.b16 %v4948, %v4947
    %v4990 = vpack.c.b16 %v4950, %v4949
    %v4991 = vpack.c.b16 %v4952, %v4951
    %v4992 = vpack.c.b16 %v4954, %v4953
    %v4993 = vpack.c.b16 %v4956, %v4955
    %v4994 = vpack.c.b16 %v4958, %v4957
    %v4995 = vpack.c.b16 %v4960, %v4959
    %v4996 = vpack.c.b16 %v4962, %v4961
    %v4997 = vpack.c.b16 %v4964, %v4963
    %v4998 = vpack.c.b16 %v4966, %v4965
    %5031 = vmatprep.subr.bf16.mxu0 0
    %5032 = vmatpush1.bf16.msra.mxu0 %v4967
    %5033 = vmatprep.subr.bf16.mxu0 0
    %5034 = vmatpush1.bf16.msra.mxu0 %v4968
    %5035 = vmatprep.subr.bf16.mxu0 0
    %5036 = vmatpush1.bf16.msra.mxu0 %v4969
    %5037 = vmatprep.subr.bf16.mxu0 0
    %5038 = vmatpush1.bf16.msra.mxu0 %v4970
    %5039 = vmatprep.subr.bf16.mxu0 0
    %5040 = vmatpush1.bf16.msra.mxu0 %v4971
    %5041 = vmatprep.subr.bf16.mxu0 0
    %5042 = vmatpush1.bf16.msra.mxu0 %v4972
    %5043 = vmatprep.subr.bf16.mxu0 0
    %5044 = vmatpush1.bf16.msra.mxu0 %v4973
    %5045 = vmatprep.subr.bf16.mxu0 0
    %5046 = vmatpush1.bf16.msra.mxu0 %v4974
    %5047 = vmatprep.subr.bf16.mxu0 0
    %5048 = vmatpush1.bf16.msra.mxu0 %v4975
    %5049 = vmatprep.subr.bf16.mxu0 0
    %5050 = vmatpush1.bf16.msra.mxu0 %v4976
    %5051 = vmatprep.subr.bf16.mxu0 0
    %5052 = vmatpush1.bf16.msra.mxu0 %v4977
    %5053 = vmatprep.subr.bf16.mxu0 0
    %5054 = vmatpush1.bf16.msra.mxu0 %v4978
    %5055 = vmatprep.subr.bf16.mxu0 0
    %5056 = vmatpush1.bf16.msra.mxu0 %v4979
    %5057 = vmatprep.subr.bf16.mxu0 0
    %5058 = vmatpush1.bf16.msra.mxu0 %v4980
    %5059 = vmatprep.subr.bf16.mxu0 0
    %5060 = vmatpush1.bf16.msra.mxu0 %v4981
    %5061 = vmatprep.subr.bf16.mxu0 0
    %5062 = vmatpush1.bf16.msra.mxu0 %v4982
    %5063 = vmatprep.mubr.bf16.mxu0 %v3376
    %5064 = vmatmul.mubr.bf16.gmra.mrb[0].mxu0 %v3375
    %v5065 = vpop.f32.mrb[0].mxu0
    %v5066 = vadd.f32 0.0, %v5065
    %v5067 = vpop.f32.mrb[0].mxu0
    %v5068 = vpop.f32.mrb[0].mxu0
    %v5069 = vadd.f32 0.0, %v5068
    %v5070 = vpop.f32.mrb[0].mxu0
    %5071 = vdwg.mxu0
    %5072 = vmatprep.subr.bf16.mxu0 0
    %5073 = vmatpush1.bf16.msra.mxu0 %v4983
    %5074 = vmatprep.subr.bf16.mxu0 0
    %5075 = vmatpush1.bf16.msra.mxu0 %v4984
    %5076 = vmatprep.subr.bf16.mxu0 0
    %5077 = vmatpush1.bf16.msra.mxu0 %v4985
    %5078 = vmatprep.subr.bf16.mxu0 0
    %5079 = vmatpush1.bf16.msra.mxu0 %v4986
    %5080 = vmatprep.subr.bf16.mxu0 0
    %5081 = vmatpush1.bf16.msra.mxu0 %v4987
    %5082 = vmatprep.subr.bf16.mxu0 0
    %5083 = vmatpush1.bf16.msra.mxu0 %v4988
    %5084 = vmatprep.subr.bf16.mxu0 0
    %5085 = vmatpush1.bf16.msra.mxu0 %v4989
    %5086 = vmatprep.subr.bf16.mxu0 0
    %5087 = vmatpush1.bf16.msra.mxu0 %v4990
    %5088 = vmatprep.subr.bf16.mxu0 0
    %5089 = vmatpush1.bf16.msra.mxu0 %v4991
    %5090 = vmatprep.subr.bf16.mxu0 0
    %5091 = vmatpush1.bf16.msra.mxu0 %v4992
    %5092 = vmatprep.subr.bf16.mxu0 0
    %5093 = vmatpush1.bf16.msra.mxu0 %v4993
    %5094 = vmatprep.subr.bf16.mxu0 0
    %5095 = vmatpush1.bf16.msra.mxu0 %v4994
    %5096 = vmatprep.subr.bf16.mxu0 0
    %5097 = vmatpush1.bf16.msra.mxu0 %v4995
    %5098 = vmatprep.subr.bf16.mxu0 0
    %5099 = vmatpush1.bf16.msra.mxu0 %v4996
    %5100 = vmatprep.subr.bf16.mxu0 0
    %5101 = vmatpush1.bf16.msra.mxu0 %v4997
    %5102 = vmatprep.subr.bf16.mxu0 0
    %5103 = vmatpush1.bf16.msra.mxu0 %v4998
    %5104 = vmatprep.mubr.bf16.mxu0 %v3378
    %5105 = vmatmul.mubr.bf16.gmra.mrb[0].mxu0 %v3377
    %v5106 = vpop.f32.mrb[0].mxu0
    %v5107 = vadd.f32 %v5066, %v5106
    %v5108 = vpop.f32.mrb[0].mxu0
    %v5109 = vpop.f32.mrb[0].mxu0
    %v5110 = vadd.f32 %v5069, %v5109
    %v5111 = vpop.f32.mrb[0].mxu0
    %5112 = vdwg.mxu0
    %v5113 = vadd.f32 %v4772, %v5107
    %v5114 = vadd.f32 %v4773, %v5110
    %s5115 = scalar_lea.vmem %s3, 1280
    %v5116 = vld [vmem:[%s5115] sm:$0xf]
    %v5117 = vld [vmem:[%s5115 + $0x4] sm:$0xf]
    %v5118 = vld [vmem:[%s5115 + $0x8] sm:$0xf]
    %v5119 = vld [vmem:[%s5115 + $0xc] sm:$0xf]
    %v5120 = vld [vmem:[%s5115 + $0x10] sm:$0xf]
    %v5121 = vld [vmem:[%s5115 + $0x14] sm:$0xf]
    %v5122 = vld [vmem:[%s5115 + $0x18] sm:$0xf]
    %v5123 = vld [vmem:[%s5115 + $0x1c] sm:$0xf]
    %v5124 = vld [vmem:[%s5115 + $0x20] sm:$0xf]
    %v5125 = vld [vmem:[%s5115 + $0x24] sm:$0xf]
    %v5126 = vld [vmem:[%s5115 + $0x28] sm:$0xf]
    %v5127 = vld [vmem:[%s5115 + $0x2c] sm:$0xf]
    %v5128 = vld [vmem:[%s5115 + $0x30] sm:$0xf]
    %v5129 = vld [vmem:[%s5115 + $0x34] sm:$0xf]
    %v5130 = vld [vmem:[%s5115 + $0x38] sm:$0xf]
    %v5131 = vld [vmem:[%s5115 + $0x3c] sm:$0xf]
    %v5132 = vld [vmem:[%s5115 + $0x40] sm:$0xf]
    %v5133 = vld [vmem:[%s5115 + $0x44] sm:$0xf]
    %v5134 = vld [vmem:[%s5115 + $0x48] sm:$0xf]
    %v5135 = vld [vmem:[%s5115 + $0x4c] sm:$0xf]
    %v5136 = vld [vmem:[%s5115 + $0x50] sm:$0xf]
    %v5137 = vld [vmem:[%s5115 + $0x54] sm:$0xf]
    %v5138 = vld [vmem:[%s5115 + $0x58] sm:$0xf]
    %v5139 = vld [vmem:[%s5115 + $0x5c] sm:$0xf]
    %v5140 = vld [vmem:[%s5115 + $0x60] sm:$0xf]
    %v5141 = vld [vmem:[%s5115 + $0x64] sm:$0xf]
    %v5142 = vld [vmem:[%s5115 + $0x68] sm:$0xf]
    %v5143 = vld [vmem:[%s5115 + $0x6c] sm:$0xf]
    %v5144 = vld [vmem:[%s5115 + $0x70] sm:$0xf]
    %v5145 = vld [vmem:[%s5115 + $0x74] sm:$0xf]
    %v5146 = vld [vmem:[%s5115 + $0x78] sm:$0xf]
    %v5147 = vld [vmem:[%s5115 + $0x7c] sm:$0xf]
    %v5148 = vld [vmem:[%s5115 + $0x80] sm:$0xf]
    %v5149 = vld [vmem:[%s5115 + $0x84] sm:$0xf]
    %v5150 = vld [vmem:[%s5115 + $0x88] sm:$0xf]
    %v5151 = vld [vmem:[%s5115 + $0x8c] sm:$0xf]
    %v5152 = vld [vmem:[%s5115 + $0x90] sm:$0xf]
    %v5153 = vld [vmem:[%s5115 + $0x94] sm:$0xf]
    %v5154 = vld [vmem:[%s5115 + $0x98] sm:$0xf]
    %v5155 = vld [vmem:[%s5115 + $0x9c] sm:$0xf]
    %v5156 = vld [vmem:[%s5115 + $0xa0] sm:$0xf]
    %v5157 = vld [vmem:[%s5115 + $0xa4] sm:$0xf]
    %v5158 = vld [vmem:[%s5115 + $0xa8] sm:$0xf]
    %v5159 = vld [vmem:[%s5115 + $0xac] sm:$0xf]
    %v5160 = vld [vmem:[%s5115 + $0xb0] sm:$0xf]
    %v5161 = vld [vmem:[%s5115 + $0xb4] sm:$0xf]
    %v5162 = vld [vmem:[%s5115 + $0xb8] sm:$0xf]
    %v5163 = vld [vmem:[%s5115 + $0xbc] sm:$0xf]
    %v5164 = vld [vmem:[%s5115 + $0xc0] sm:$0xf]
    %v5165 = vld [vmem:[%s5115 + $0xc4] sm:$0xf]
    %v5166 = vld [vmem:[%s5115 + $0xc8] sm:$0xf]
    %v5167 = vld [vmem:[%s5115 + $0xcc] sm:$0xf]
    %v5168 = vld [vmem:[%s5115 + $0xd0] sm:$0xf]
    %v5169 = vld [vmem:[%s5115 + $0xd4] sm:$0xf]
    %v5170 = vld [vmem:[%s5115 + $0xd8] sm:$0xf]
    %v5171 = vld [vmem:[%s5115 + $0xdc] sm:$0xf]
    %v5172 = vld [vmem:[%s5115 + $0xe0] sm:$0xf]
    %v5173 = vld [vmem:[%s5115 + $0xe4] sm:$0xf]
    %v5174 = vld [vmem:[%s5115 + $0xe8] sm:$0xf]
    %v5175 = vld [vmem:[%s5115 + $0xec] sm:$0xf]
    %v5176 = vld [vmem:[%s5115 + $0xf0] sm:$0xf]
    %v5177 = vld [vmem:[%s5115 + $0xf4] sm:$0xf]
    %v5178 = vld [vmem:[%s5115 + $0xf8] sm:$0xf]
    %v5179 = vld [vmem:[%s5115 + $0xfc] sm:$0xf]
    %v5244 = vunpack.c.l.b16 %v5116
    %v5245 = vunpack.c.l.b16 %v5117
    %v5246 = vunpack.c.l.b16 %v5118
    %v5247 = vunpack.c.l.b16 %v5119
    %v5248 = vunpack.c.l.b16 %v5120
    %v5249 = vunpack.c.l.b16 %v5121
    %v5250 = vunpack.c.l.b16 %v5122
    %v5251 = vunpack.c.l.b16 %v5123
    %v5252 = vunpack.c.l.b16 %v5124
    %v5253 = vunpack.c.l.b16 %v5125
    %v5254 = vunpack.c.l.b16 %v5126
    %v5255 = vunpack.c.l.b16 %v5127
    %v5256 = vunpack.c.l.b16 %v5128
    %v5257 = vunpack.c.l.b16 %v5129
    %v5258 = vunpack.c.l.b16 %v5130
    %v5259 = vunpack.c.l.b16 %v5131
    %v5260 = vunpack.c.l.b16 %v5132
    %v5261 = vunpack.c.l.b16 %v5133
    %v5262 = vunpack.c.l.b16 %v5134
    %v5263 = vunpack.c.l.b16 %v5135
    %v5264 = vunpack.c.l.b16 %v5136
    %v5265 = vunpack.c.l.b16 %v5137
    %v5266 = vunpack.c.l.b16 %v5138
    %v5267 = vunpack.c.l.b16 %v5139
    %v5268 = vunpack.c.l.b16 %v5140
    %v5269 = vunpack.c.l.b16 %v5141
    %v5270 = vunpack.c.l.b16 %v5142
    %v5271 = vunpack.c.l.b16 %v5143
    %v5272 = vunpack.c.l.b16 %v5144
    %v5273 = vunpack.c.l.b16 %v5145
    %v5274 = vunpack.c.l.b16 %v5146
    %v5275 = vunpack.c.l.b16 %v5147
    %v5276 = vunpack.c.l.b16 %v5148
    %v5277 = vunpack.c.l.b16 %v5149
    %v5278 = vunpack.c.l.b16 %v5150
    %v5279 = vunpack.c.l.b16 %v5151
    %v5280 = vunpack.c.l.b16 %v5152
    %v5281 = vunpack.c.l.b16 %v5153
    %v5282 = vunpack.c.l.b16 %v5154
    %v5283 = vunpack.c.l.b16 %v5155
    %v5284 = vunpack.c.l.b16 %v5156
    %v5285 = vunpack.c.l.b16 %v5157
    %v5286 = vunpack.c.l.b16 %v5158
    %v5287 = vunpack.c.l.b16 %v5159
    %v5288 = vunpack.c.l.b16 %v5160
    %v5289 = vunpack.c.l.b16 %v5161
    %v5290 = vunpack.c.l.b16 %v5162
    %v5291 = vunpack.c.l.b16 %v5163
    %v5292 = vunpack.c.l.b16 %v5164
    %v5293 = vunpack.c.l.b16 %v5165
    %v5294 = vunpack.c.l.b16 %v5166
    %v5295 = vunpack.c.l.b16 %v5167
    %v5296 = vunpack.c.l.b16 %v5168
    %v5297 = vunpack.c.l.b16 %v5169
    %v5298 = vunpack.c.l.b16 %v5170
    %v5299 = vunpack.c.l.b16 %v5171
    %v5300 = vunpack.c.l.b16 %v5172
    %v5301 = vunpack.c.l.b16 %v5173
    %v5302 = vunpack.c.l.b16 %v5174
    %v5303 = vunpack.c.l.b16 %v5175
    %v5304 = vunpack.c.l.b16 %v5176
    %v5305 = vunpack.c.l.b16 %v5177
    %v5306 = vunpack.c.l.b16 %v5178
    %v5307 = vunpack.c.l.b16 %v5179
    %v5308 = vpack.c.b16 %v5245, %v5244
    %v5309 = vpack.c.b16 %v5247, %v5246
    %v5310 = vpack.c.b16 %v5249, %v5248
    %v5311 = vpack.c.b16 %v5251, %v5250
    %v5312 = vpack.c.b16 %v5253, %v5252
    %v5313 = vpack.c.b16 %v5255, %v5254
    %v5314 = vpack.c.b16 %v5257, %v5256
    %v5315 = vpack.c.b16 %v5259, %v5258
    %v5316 = vpack.c.b16 %v5261, %v5260
    %v5317 = vpack.c.b16 %v5263, %v5262
    %v5318 = vpack.c.b16 %v5265, %v5264
    %v5319 = vpack.c.b16 %v5267, %v5266
    %v5320 = vpack.c.b16 %v5269, %v5268
    %v5321 = vpack.c.b16 %v5271, %v5270
    %v5322 = vpack.c.b16 %v5273, %v5272
    %v5323 = vpack.c.b16 %v5275, %v5274
    %v5324 = vpack.c.b16 %v5277, %v5276
    %v5325 = vpack.c.b16 %v5279, %v5278
    %v5326 = vpack.c.b16 %v5281, %v5280
    %v5327 = vpack.c.b16 %v5283, %v5282
    %v5328 = vpack.c.b16 %v5285, %v5284
    %v5329 = vpack.c.b16 %v5287, %v5286
    %v5330 = vpack.c.b16 %v5289, %v5288
    %v5331 = vpack.c.b16 %v5291, %v5290
    %v5332 = vpack.c.b16 %v5293, %v5292
    %v5333 = vpack.c.b16 %v5295, %v5294
    %v5334 = vpack.c.b16 %v5297, %v5296
    %v5335 = vpack.c.b16 %v5299, %v5298
    %v5336 = vpack.c.b16 %v5301, %v5300
    %v5337 = vpack.c.b16 %v5303, %v5302
    %v5338 = vpack.c.b16 %v5305, %v5304
    %v5339 = vpack.c.b16 %v5307, %v5306
    %5372 = vmatprep.subr.bf16.mxu0 0
    %5373 = vmatpush1.bf16.msra.mxu0 %v5308
    %5374 = vmatprep.subr.bf16.mxu0 0
    %5375 = vmatpush1.bf16.msra.mxu0 %v5309
    %5376 = vmatprep.subr.bf16.mxu0 0
    %5377 = vmatpush1.bf16.msra.mxu0 %v5310
    %5378 = vmatprep.subr.bf16.mxu0 0
    %5379 = vmatpush1.bf16.msra.mxu0 %v5311
    %5380 = vmatprep.subr.bf16.mxu0 0
    %5381 = vmatpush1.bf16.msra.mxu0 %v5312
    %5382 = vmatprep.subr.bf16.mxu0 0
    %5383 = vmatpush1.bf16.msra.mxu0 %v5313
    %5384 = vmatprep.subr.bf16.mxu0 0
    %5385 = vmatpush1.bf16.msra.mxu0 %v5314
    %5386 = vmatprep.subr.bf16.mxu0 0
    %5387 = vmatpush1.bf16.msra.mxu0 %v5315
    %5388 = vmatprep.subr.bf16.mxu0 0
    %5389 = vmatpush1.bf16.msra.mxu0 %v5316
    %5390 = vmatprep.subr.bf16.mxu0 0
    %5391 = vmatpush1.bf16.msra.mxu0 %v5317
    %5392 = vmatprep.subr.bf16.mxu0 0
    %5393 = vmatpush1.bf16.msra.mxu0 %v5318
    %5394 = vmatprep.subr.bf16.mxu0 0
    %5395 = vmatpush1.bf16.msra.mxu0 %v5319
    %5396 = vmatprep.subr.bf16.mxu0 0
    %5397 = vmatpush1.bf16.msra.mxu0 %v5320
    %5398 = vmatprep.subr.bf16.mxu0 0
    %5399 = vmatpush1.bf16.msra.mxu0 %v5321
    %5400 = vmatprep.subr.bf16.mxu0 0
    %5401 = vmatpush1.bf16.msra.mxu0 %v5322
    %5402 = vmatprep.subr.bf16.mxu0 0
    %5403 = vmatpush1.bf16.msra.mxu0 %v5323
    %5404 = vmatprep.mubr.bf16.mxu0 %v3380
    %5405 = vmatmul.mubr.bf16.gmra.mrb[0].mxu0 %v3379
    %v5406 = vpop.f32.mrb[0].mxu0
    %v5407 = vadd.f32 0.0, %v5406
    %v5408 = vpop.f32.mrb[0].mxu0
    %v5409 = vpop.f32.mrb[0].mxu0
    %v5410 = vadd.f32 0.0, %v5409
    %v5411 = vpop.f32.mrb[0].mxu0
    %5412 = vdwg.mxu0
    %5413 = vmatprep.subr.bf16.mxu0 0
    %5414 = vmatpush1.bf16.msra.mxu0 %v5324
    %5415 = vmatprep.subr.bf16.mxu0 0
    %5416 = vmatpush1.bf16.msra.mxu0 %v5325
    %5417 = vmatprep.subr.bf16.mxu0 0
    %5418 = vmatpush1.bf16.msra.mxu0 %v5326
    %5419 = vmatprep.subr.bf16.mxu0 0
    %5420 = vmatpush1.bf16.msra.mxu0 %v5327
    %5421 = vmatprep.subr.bf16.mxu0 0
    %5422 = vmatpush1.bf16.msra.mxu0 %v5328
    %5423 = vmatprep.subr.bf16.mxu0 0
    %5424 = vmatpush1.bf16.msra.mxu0 %v5329
    %5425 = vmatprep.subr.bf16.mxu0 0
    %5426 = vmatpush1.bf16.msra.mxu0 %v5330
    %5427 = vmatprep.subr.bf16.mxu0 0
    %5428 = vmatpush1.bf16.msra.mxu0 %v5331
    %5429 = vmatprep.subr.bf16.mxu0 0
    %5430 = vmatpush1.bf16.msra.mxu0 %v5332
    %5431 = vmatprep.subr.bf16.mxu0 0
    %5432 = vmatpush1.bf16.msra.mxu0 %v5333
    %5433 = vmatprep.subr.bf16.mxu0 0
    %5434 = vmatpush1.bf16.msra.mxu0 %v5334
    %5435 = vmatprep.subr.bf16.mxu0 0
    %5436 = vmatpush1.bf16.msra.mxu0 %v5335
    %5437 = vmatprep.subr.bf16.mxu0 0
    %5438 = vmatpush1.bf16.msra.mxu0 %v5336
    %5439 = vmatprep.subr.bf16.mxu0 0
    %5440 = vmatpush1.bf16.msra.mxu0 %v5337
    %5441 = vmatprep.subr.bf16.mxu0 0
    %5442 = vmatpush1.bf16.msra.mxu0 %v5338
    %5443 = vmatprep.subr.bf16.mxu0 0
    %5444 = vmatpush1.bf16.msra.mxu0 %v5339
    %5445 = vmatprep.mubr.bf16.mxu0 %v3382
    %5446 = vmatmul.mubr.bf16.gmra.mrb[0].mxu0 %v3381
    %v5447 = vpop.f32.mrb[0].mxu0
    %v5448 = vadd.f32 %v5407, %v5447
    %v5449 = vpop.f32.mrb[0].mxu0
    %v5450 = vpop.f32.mrb[0].mxu0
    %v5451 = vadd.f32 %v5410, %v5450
    %v5452 = vpop.f32.mrb[0].mxu0
    %5453 = vdwg.mxu0
    %v5454 = vadd.f32 %v5113, %v5448
    %v5455 = vadd.f32 %v5114, %v5451
    %s5456 = scalar_lea.vmem %s3, 1536
    %v5457 = vld [vmem:[%s5456] sm:$0xf]
    %v5458 = vld [vmem:[%s5456 + $0x4] sm:$0xf]
    %v5459 = vld [vmem:[%s5456 + $0x8] sm:$0xf]
    %v5460 = vld [vmem:[%s5456 + $0xc] sm:$0xf]
    %v5461 = vld [vmem:[%s5456 + $0x10] sm:$0xf]
    %v5462 = vld [vmem:[%s5456 + $0x14] sm:$0xf]
    %v5463 = vld [vmem:[%s5456 + $0x18] sm:$0xf]
    %v5464 = vld [vmem:[%s5456 + $0x1c] sm:$0xf]
    %v5465 = vld [vmem:[%s5456 + $0x20] sm:$0xf]
    %v5466 = vld [vmem:[%s5456 + $0x24] sm:$0xf]
    %v5467 = vld [vmem:[%s5456 + $0x28] sm:$0xf]
    %v5468 = vld [vmem:[%s5456 + $0x2c] sm:$0xf]
    %v5469 = vld [vmem:[%s5456 + $0x30] sm:$0xf]
    %v5470 = vld [vmem:[%s5456 + $0x34] sm:$0xf]
    %v5471 = vld [vmem:[%s5456 + $0x38] sm:$0xf]
    %v5472 = vld [vmem:[%s5456 + $0x3c] sm:$0xf]
    %v5473 = vld [vmem:[%s5456 + $0x40] sm:$0xf]
    %v5474 = vld [vmem:[%s5456 + $0x44] sm:$0xf]
    %v5475 = vld [vmem:[%s5456 + $0x48] sm:$0xf]
    %v5476 = vld [vmem:[%s5456 + $0x4c] sm:$0xf]
    %v5477 = vld [vmem:[%s5456 + $0x50] sm:$0xf]
    %v5478 = vld [vmem:[%s5456 + $0x54] sm:$0xf]
    %v5479 = vld [vmem:[%s5456 + $0x58] sm:$0xf]
    %v5480 = vld [vmem:[%s5456 + $0x5c] sm:$0xf]
    %v5481 = vld [vmem:[%s5456 + $0x60] sm:$0xf]
    %v5482 = vld [vmem:[%s5456 + $0x64] sm:$0xf]
    %v5483 = vld [vmem:[%s5456 + $0x68] sm:$0xf]
    %v5484 = vld [vmem:[%s5456 + $0x6c] sm:$0xf]
    %v5485 = vld [vmem:[%s5456 + $0x70] sm:$0xf]
    %v5486 = vld [vmem:[%s5456 + $0x74] sm:$0xf]
    %v5487 = vld [vmem:[%s5456 + $0x78] sm:$0xf]
    %v5488 = vld [vmem:[%s5456 + $0x7c] sm:$0xf]
    %v5489 = vld [vmem:[%s5456 + $0x80] sm:$0xf]
    %v5490 = vld [vmem:[%s5456 + $0x84] sm:$0xf]
    %v5491 = vld [vmem:[%s5456 + $0x88] sm:$0xf]
    %v5492 = vld [vmem:[%s5456 + $0x8c] sm:$0xf]
    %v5493 = vld [vmem:[%s5456 + $0x90] sm:$0xf]
    %v5494 = vld [vmem:[%s5456 + $0x94] sm:$0xf]
    %v5495 = vld [vmem:[%s5456 + $0x98] sm:$0xf]
    %v5496 = vld [vmem:[%s5456 + $0x9c] sm:$0xf]
    %v5497 = vld [vmem:[%s5456 + $0xa0] sm:$0xf]
    %v5498 = vld [vmem:[%s5456 + $0xa4] sm:$0xf]
    %v5499 = vld [vmem:[%s5456 + $0xa8] sm:$0xf]
    %v5500 = vld [vmem:[%s5456 + $0xac] sm:$0xf]
    %v5501 = vld [vmem:[%s5456 + $0xb0] sm:$0xf]
    %v5502 = vld [vmem:[%s5456 + $0xb4] sm:$0xf]
    %v5503 = vld [vmem:[%s5456 + $0xb8] sm:$0xf]
    %v5504 = vld [vmem:[%s5456 + $0xbc] sm:$0xf]
    %v5505 = vld [vmem:[%s5456 + $0xc0] sm:$0xf]
    %v5506 = vld [vmem:[%s5456 + $0xc4] sm:$0xf]
    %v5507 = vld [vmem:[%s5456 + $0xc8] sm:$0xf]
    %v5508 = vld [vmem:[%s5456 + $0xcc] sm:$0xf]
    %v5509 = vld [vmem:[%s5456 + $0xd0] sm:$0xf]
    %v5510 = vld [vmem:[%s5456 + $0xd4] sm:$0xf]
    %v5511 = vld [vmem:[%s5456 + $0xd8] sm:$0xf]
    %v5512 = vld [vmem:[%s5456 + $0xdc] sm:$0xf]
    %v5513 = vld [vmem:[%s5456 + $0xe0] sm:$0xf]
    %v5514 = vld [vmem:[%s5456 + $0xe4] sm:$0xf]
    %v5515 = vld [vmem:[%s5456 + $0xe8] sm:$0xf]
    %v5516 = vld [vmem:[%s5456 + $0xec] sm:$0xf]
    %v5517 = vld [vmem:[%s5456 + $0xf0] sm:$0xf]
    %v5518 = vld [vmem:[%s5456 + $0xf4] sm:$0xf]
    %v5519 = vld [vmem:[%s5456 + $0xf8] sm:$0xf]
    %v5520 = vld [vmem:[%s5456 + $0xfc] sm:$0xf]
    %v5585 = vunpack.c.l.b16 %v5457
    %v5586 = vunpack.c.l.b16 %v5458
    %v5587 = vunpack.c.l.b16 %v5459
    %v5588 = vunpack.c.l.b16 %v5460
    %v5589 = vunpack.c.l.b16 %v5461
    %v5590 = vunpack.c.l.b16 %v5462
    %v5591 = vunpack.c.l.b16 %v5463
    %v5592 = vunpack.c.l.b16 %v5464
    %v5593 = vunpack.c.l.b16 %v5465
    %v5594 = vunpack.c.l.b16 %v5466
    %v5595 = vunpack.c.l.b16 %v5467
    %v5596 = vunpack.c.l.b16 %v5468
    %v5597 = vunpack.c.l.b16 %v5469
    %v5598 = vunpack.c.l.b16 %v5470
    %v5599 = vunpack.c.l.b16 %v5471
    %v5600 = vunpack.c.l.b16 %v5472
    %v5601 = vunpack.c.l.b16 %v5473
    %v5602 = vunpack.c.l.b16 %v5474
    %v5603 = vunpack.c.l.b16 %v5475
    %v5604 = vunpack.c.l.b16 %v5476
    %v5605 = vunpack.c.l.b16 %v5477
    %v5606 = vunpack.c.l.b16 %v5478
    %v5607 = vunpack.c.l.b16 %v5479
    %v5608 = vunpack.c.l.b16 %v5480
    %v5609 = vunpack.c.l.b16 %v5481
    %v5610 = vunpack.c.l.b16 %v5482
    %v5611 = vunpack.c.l.b16 %v5483
    %v5612 = vunpack.c.l.b16 %v5484
    %v5613 = vunpack.c.l.b16 %v5485
    %v5614 = vunpack.c.l.b16 %v5486
    %v5615 = vunpack.c.l.b16 %v5487
    %v5616 = vunpack.c.l.b16 %v5488
    %v5617 = vunpack.c.l.b16 %v5489
    %v5618 = vunpack.c.l.b16 %v5490
    %v5619 = vunpack.c.l.b16 %v5491
    %v5620 = vunpack.c.l.b16 %v5492
    %v5621 = vunpack.c.l.b16 %v5493
    %v5622 = vunpack.c.l.b16 %v5494
    %v5623 = vunpack.c.l.b16 %v5495
    %v5624 = vunpack.c.l.b16 %v5496
    %v5625 = vunpack.c.l.b16 %v5497
    %v5626 = vunpack.c.l.b16 %v5498
    %v5627 = vunpack.c.l.b16 %v5499
    %v5628 = vunpack.c.l.b16 %v5500
    %v5629 = vunpack.c.l.b16 %v5501
    %v5630 = vunpack.c.l.b16 %v5502
    %v5631 = vunpack.c.l.b16 %v5503
    %v5632 = vunpack.c.l.b16 %v5504
    %v5633 = vunpack.c.l.b16 %v5505
    %v5634 = vunpack.c.l.b16 %v5506
    %v5635 = vunpack.c.l.b16 %v5507
    %v5636 = vunpack.c.l.b16 %v5508
    %v5637 = vunpack.c.l.b16 %v5509
    %v5638 = vunpack.c.l.b16 %v5510
    %v5639 = vunpack.c.l.b16 %v5511
    %v5640 = vunpack.c.l.b16 %v5512
    %v5641 = vunpack.c.l.b16 %v5513
    %v5642 = vunpack.c.l.b16 %v5514
    %v5643 = vunpack.c.l.b16 %v5515
    %v5644 = vunpack.c.l.b16 %v5516
    %v5645 = vunpack.c.l.b16 %v5517
    %v5646 = vunpack.c.l.b16 %v5518
    %v5647 = vunpack.c.l.b16 %v5519
    %v5648 = vunpack.c.l.b16 %v5520
    %v5649 = vpack.c.b16 %v5586, %v5585
    %v5650 = vpack.c.b16 %v5588, %v5587
    %v5651 = vpack.c.b16 %v5590, %v5589
    %v5652 = vpack.c.b16 %v5592, %v5591
    %v5653 = vpack.c.b16 %v5594, %v5593
    %v5654 = vpack.c.b16 %v5596, %v5595
    %v5655 = vpack.c.b16 %v5598, %v5597
    %v5656 = vpack.c.b16 %v5600, %v5599
    %v5657 = vpack.c.b16 %v5602, %v5601
    %v5658 = vpack.c.b16 %v5604, %v5603
    %v5659 = vpack.c.b16 %v5606, %v5605
    %v5660 = vpack.c.b16 %v5608, %v5607
    %v5661 = vpack.c.b16 %v5610, %v5609
    %v5662 = vpack.c.b16 %v5612, %v5611
    %v5663 = vpack.c.b16 %v5614, %v5613
    %v5664 = vpack.c.b16 %v5616, %v5615
    %v5665 = vpack.c.b16 %v5618, %v5617
    %v5666 = vpack.c.b16 %v5620, %v5619
    %v5667 = vpack.c.b16 %v5622, %v5621
    %v5668 = vpack.c.b16 %v5624, %v5623
    %v5669 = vpack.c.b16 %v5626, %v5625
    %v5670 = vpack.c.b16 %v5628, %v5627
    %v5671 = vpack.c.b16 %v5630, %v5629
    %v5672 = vpack.c.b16 %v5632, %v5631
    %v5673 = vpack.c.b16 %v5634, %v5633
    %v5674 = vpack.c.b16 %v5636, %v5635
    %v5675 = vpack.c.b16 %v5638, %v5637
    %v5676 = vpack.c.b16 %v5640, %v5639
    %v5677 = vpack.c.b16 %v5642, %v5641
    %v5678 = vpack.c.b16 %v5644, %v5643
    %v5679 = vpack.c.b16 %v5646, %v5645
    %v5680 = vpack.c.b16 %v5648, %v5647
    %5713 = vmatprep.subr.bf16.mxu0 0
    %5714 = vmatpush1.bf16.msra.mxu0 %v5649
    %5715 = vmatprep.subr.bf16.mxu0 0
    %5716 = vmatpush1.bf16.msra.mxu0 %v5650
    %5717 = vmatprep.subr.bf16.mxu0 0
    %5718 = vmatpush1.bf16.msra.mxu0 %v5651
    %5719 = vmatprep.subr.bf16.mxu0 0
    %5720 = vmatpush1.bf16.msra.mxu0 %v5652
    %5721 = vmatprep.subr.bf16.mxu0 0
    %5722 = vmatpush1.bf16.msra.mxu0 %v5653
    %5723 = vmatprep.subr.bf16.mxu0 0
    %5724 = vmatpush1.bf16.msra.mxu0 %v5654
    %5725 = vmatprep.subr.bf16.mxu0 0
    %5726 = vmatpush1.bf16.msra.mxu0 %v5655
    %5727 = vmatprep.subr.bf16.mxu0 0
    %5728 = vmatpush1.bf16.msra.mxu0 %v5656
    %5729 = vmatprep.subr.bf16.mxu0 0
    %5730 = vmatpush1.bf16.msra.mxu0 %v5657
    %5731 = vmatprep.subr.bf16.mxu0 0
    %5732 = vmatpush1.bf16.msra.mxu0 %v5658
    %5733 = vmatprep.subr.bf16.mxu0 0
    %5734 = vmatpush1.bf16.msra.mxu0 %v5659
    %5735 = vmatprep.subr.bf16.mxu0 0
    %5736 = vmatpush1.bf16.msra.mxu0 %v5660
    %5737 = vmatprep.subr.bf16.mxu0 0
    %5738 = vmatpush1.bf16.msra.mxu0 %v5661
    %5739 = vmatprep.subr.bf16.mxu0 0
    %5740 = vmatpush1.bf16.msra.mxu0 %v5662
    %5741 = vmatprep.subr.bf16.mxu0 0
    %5742 = vmatpush1.bf16.msra.mxu0 %v5663
    %5743 = vmatprep.subr.bf16.mxu0 0
    %5744 = vmatpush1.bf16.msra.mxu0 %v5664
    %5745 = vmatprep.mubr.bf16.mxu0 %v3384
    %5746 = vmatmul.mubr.bf16.gmra.mrb[0].mxu0 %v3383
    %v5747 = vpop.f32.mrb[0].mxu0
    %v5748 = vadd.f32 0.0, %v5747
    %v5749 = vpop.f32.mrb[0].mxu0
    %v5750 = vpop.f32.mrb[0].mxu0
    %v5751 = vadd.f32 0.0, %v5750
    %v5752 = vpop.f32.mrb[0].mxu0
    %5753 = vdwg.mxu0
    %5754 = vmatprep.subr.bf16.mxu0 0
    %5755 = vmatpush1.bf16.msra.mxu0 %v5665
    %5756 = vmatprep.subr.bf16.mxu0 0
    %5757 = vmatpush1.bf16.msra.mxu0 %v5666
    %5758 = vmatprep.subr.bf16.mxu0 0
    %5759 = vmatpush1.bf16.msra.mxu0 %v5667
    %5760 = vmatprep.subr.bf16.mxu0 0
    %5761 = vmatpush1.bf16.msra.mxu0 %v5668
    %5762 = vmatprep.subr.bf16.mxu0 0
    %5763 = vmatpush1.bf16.msra.mxu0 %v5669
    %5764 = vmatprep.subr.bf16.mxu0 0
    %5765 = vmatpush1.bf16.msra.mxu0 %v5670
    %5766 = vmatprep.subr.bf16.mxu0 0
    %5767 = vmatpush1.bf16.msra.mxu0 %v5671
    %5768 = vmatprep.subr.bf16.mxu0 0
    %5769 = vmatpush1.bf16.msra.mxu0 %v5672
    %5770 = vmatprep.subr.bf16.mxu0 0
    %5771 = vmatpush1.bf16.msra.mxu0 %v5673
    %5772 = vmatprep.subr.bf16.mxu0 0
    %5773 = vmatpush1.bf16.msra.mxu0 %v5674
    %5774 = vmatprep.subr.bf16.mxu0 0
    %5775 = vmatpush1.bf16.msra.mxu0 %v5675
    %5776 = vmatprep.subr.bf16.mxu0 0
    %5777 = vmatpush1.bf16.msra.mxu0 %v5676
    %5778 = vmatprep.subr.bf16.mxu0 0
    %5779 = vmatpush1.bf16.msra.mxu0 %v5677
    %5780 = vmatprep.subr.bf16.mxu0 0
    %5781 = vmatpush1.bf16.msra.mxu0 %v5678
    %5782 = vmatprep.subr.bf16.mxu0 0
    %5783 = vmatpush1.bf16.msra.mxu0 %v5679
    %5784 = vmatprep.subr.bf16.mxu0 0
    %5785 = vmatpush1.bf16.msra.mxu0 %v5680
    %5786 = vmatprep.mubr.bf16.mxu0 %v3386
    %5787 = vmatmul.mubr.bf16.gmra.mrb[0].mxu0 %v3385
    %v5788 = vpop.f32.mrb[0].mxu0
    %v5789 = vadd.f32 %v5748, %v5788
    %v5790 = vpop.f32.mrb[0].mxu0
    %v5791 = vpop.f32.mrb[0].mxu0
    %v5792 = vadd.f32 %v5751, %v5791
    %v5793 = vpop.f32.mrb[0].mxu0
    %5794 = vdwg.mxu0
    %v5795 = vadd.f32 %v5454, %v5789
    %v5796 = vadd.f32 %v5455, %v5792
    %s5797 = scalar_lea.vmem %s3, 1792
    %v5798 = vld [vmem:[%s5797] sm:$0xf]
    %v5799 = vld [vmem:[%s5797 + $0x4] sm:$0xf]
    %v5800 = vld [vmem:[%s5797 + $0x8] sm:$0xf]
    %v5801 = vld [vmem:[%s5797 + $0xc] sm:$0xf]
    %v5802 = vld [vmem:[%s5797 + $0x10] sm:$0xf]
    %v5803 = vld [vmem:[%s5797 + $0x14] sm:$0xf]
    %v5804 = vld [vmem:[%s5797 + $0x18] sm:$0xf]
    %v5805 = vld [vmem:[%s5797 + $0x1c] sm:$0xf]
    %v5806 = vld [vmem:[%s5797 + $0x20] sm:$0xf]
    %v5807 = vld [vmem:[%s5797 + $0x24] sm:$0xf]
    %v5808 = vld [vmem:[%s5797 + $0x28] sm:$0xf]
    %v5809 = vld [vmem:[%s5797 + $0x2c] sm:$0xf]
    %v5810 = vld [vmem:[%s5797 + $0x30] sm:$0xf]
    %v5811 = vld [vmem:[%s5797 + $0x34] sm:$0xf]
    %v5812 = vld [vmem:[%s5797 + $0x38] sm:$0xf]
    %v5813 = vld [vmem:[%s5797 + $0x3c] sm:$0xf]
    %v5814 = vld [vmem:[%s5797 + $0x40] sm:$0xf]
    %v5815 = vld [vmem:[%s5797 + $0x44] sm:$0xf]
    %v5816 = vld [vmem:[%s5797 + $0x48] sm:$0xf]
    %v5817 = vld [vmem:[%s5797 + $0x4c] sm:$0xf]
    %v5818 = vld [vmem:[%s5797 + $0x50] sm:$0xf]
    %v5819 = vld [vmem:[%s5797 + $0x54] sm:$0xf]
    %v5820 = vld [vmem:[%s5797 + $0x58] sm:$0xf]
    %v5821 = vld [vmem:[%s5797 + $0x5c] sm:$0xf]
    %v5822 = vld [vmem:[%s5797 + $0x60] sm:$0xf]
    %v5823 = vld [vmem:[%s5797 + $0x64] sm:$0xf]
    %v5824 = vld [vmem:[%s5797 + $0x68] sm:$0xf]
    %v5825 = vld [vmem:[%s5797 + $0x6c] sm:$0xf]
    %v5826 = vld [vmem:[%s5797 + $0x70] sm:$0xf]
    %v5827 = vld [vmem:[%s5797 + $0x74] sm:$0xf]
    %v5828 = vld [vmem:[%s5797 + $0x78] sm:$0xf]
    %v5829 = vld [vmem:[%s5797 + $0x7c] sm:$0xf]
    %v5830 = vld [vmem:[%s5797 + $0x80] sm:$0xf]
    %v5831 = vld [vmem:[%s5797 + $0x84] sm:$0xf]
    %v5832 = vld [vmem:[%s5797 + $0x88] sm:$0xf]
    %v5833 = vld [vmem:[%s5797 + $0x8c] sm:$0xf]
    %v5834 = vld [vmem:[%s5797 + $0x90] sm:$0xf]
    %v5835 = vld [vmem:[%s5797 + $0x94] sm:$0xf]
    %v5836 = vld [vmem:[%s5797 + $0x98] sm:$0xf]
    %v5837 = vld [vmem:[%s5797 + $0x9c] sm:$0xf]
    %v5838 = vld [vmem:[%s5797 + $0xa0] sm:$0xf]
    %v5839 = vld [vmem:[%s5797 + $0xa4] sm:$0xf]
    %v5840 = vld [vmem:[%s5797 + $0xa8] sm:$0xf]
    %v5841 = vld [vmem:[%s5797 + $0xac] sm:$0xf]
    %v5842 = vld [vmem:[%s5797 + $0xb0] sm:$0xf]
    %v5843 = vld [vmem:[%s5797 + $0xb4] sm:$0xf]
    %v5844 = vld [vmem:[%s5797 + $0xb8] sm:$0xf]
    %v5845 = vld [vmem:[%s5797 + $0xbc] sm:$0xf]
    %v5846 = vld [vmem:[%s5797 + $0xc0] sm:$0xf]
    %v5847 = vld [vmem:[%s5797 + $0xc4] sm:$0xf]
    %v5848 = vld [vmem:[%s5797 + $0xc8] sm:$0xf]
    %v5849 = vld [vmem:[%s5797 + $0xcc] sm:$0xf]
    %v5850 = vld [vmem:[%s5797 + $0xd0] sm:$0xf]
    %v5851 = vld [vmem:[%s5797 + $0xd4] sm:$0xf]
    %v5852 = vld [vmem:[%s5797 + $0xd8] sm:$0xf]
    %v5853 = vld [vmem:[%s5797 + $0xdc] sm:$0xf]
    %v5854 = vld [vmem:[%s5797 + $0xe0] sm:$0xf]
    %v5855 = vld [vmem:[%s5797 + $0xe4] sm:$0xf]
    %v5856 = vld [vmem:[%s5797 + $0xe8] sm:$0xf]
    %v5857 = vld [vmem:[%s5797 + $0xec] sm:$0xf]
    %v5858 = vld [vmem:[%s5797 + $0xf0] sm:$0xf]
    %v5859 = vld [vmem:[%s5797 + $0xf4] sm:$0xf]
    %v5860 = vld [vmem:[%s5797 + $0xf8] sm:$0xf]
    %v5861 = vld [vmem:[%s5797 + $0xfc] sm:$0xf]
    %v5926 = vunpack.c.l.b16 %v5798
    %v5927 = vunpack.c.l.b16 %v5799
    %v5928 = vunpack.c.l.b16 %v5800
    %v5929 = vunpack.c.l.b16 %v5801
    %v5930 = vunpack.c.l.b16 %v5802
    %v5931 = vunpack.c.l.b16 %v5803
    %v5932 = vunpack.c.l.b16 %v5804
    %v5933 = vunpack.c.l.b16 %v5805
    %v5934 = vunpack.c.l.b16 %v5806
    %v5935 = vunpack.c.l.b16 %v5807
    %v5936 = vunpack.c.l.b16 %v5808
    %v5937 = vunpack.c.l.b16 %v5809
    %v5938 = vunpack.c.l.b16 %v5810
    %v5939 = vunpack.c.l.b16 %v5811
    %v5940 = vunpack.c.l.b16 %v5812
    %v5941 = vunpack.c.l.b16 %v5813
    %v5942 = vunpack.c.l.b16 %v5814
    %v5943 = vunpack.c.l.b16 %v5815
    %v5944 = vunpack.c.l.b16 %v5816
    %v5945 = vunpack.c.l.b16 %v5817
    %v5946 = vunpack.c.l.b16 %v5818
    %v5947 = vunpack.c.l.b16 %v5819
    %v5948 = vunpack.c.l.b16 %v5820
    %v5949 = vunpack.c.l.b16 %v5821
    %v5950 = vunpack.c.l.b16 %v5822
    %v5951 = vunpack.c.l.b16 %v5823
    %v5952 = vunpack.c.l.b16 %v5824
    %v5953 = vunpack.c.l.b16 %v5825
    %v5954 = vunpack.c.l.b16 %v5826
    %v5955 = vunpack.c.l.b16 %v5827
    %v5956 = vunpack.c.l.b16 %v5828
    %v5957 = vunpack.c.l.b16 %v5829
    %v5958 = vunpack.c.l.b16 %v5830
    %v5959 = vunpack.c.l.b16 %v5831
    %v5960 = vunpack.c.l.b16 %v5832
    %v5961 = vunpack.c.l.b16 %v5833
    %v5962 = vunpack.c.l.b16 %v5834
    %v5963 = vunpack.c.l.b16 %v5835
    %v5964 = vunpack.c.l.b16 %v5836
    %v5965 = vunpack.c.l.b16 %v5837
    %v5966 = vunpack.c.l.b16 %v5838
    %v5967 = vunpack.c.l.b16 %v5839
    %v5968 = vunpack.c.l.b16 %v5840
    %v5969 = vunpack.c.l.b16 %v5841
    %v5970 = vunpack.c.l.b16 %v5842
    %v5971 = vunpack.c.l.b16 %v5843
    %v5972 = vunpack.c.l.b16 %v5844
    %v5973 = vunpack.c.l.b16 %v5845
    %v5974 = vunpack.c.l.b16 %v5846
    %v5975 = vunpack.c.l.b16 %v5847
    %v5976 = vunpack.c.l.b16 %v5848
    %v5977 = vunpack.c.l.b16 %v5849
    %v5978 = vunpack.c.l.b16 %v5850
    %v5979 = vunpack.c.l.b16 %v5851
    %v5980 = vunpack.c.l.b16 %v5852
    %v5981 = vunpack.c.l.b16 %v5853
    %v5982 = vunpack.c.l.b16 %v5854
    %v5983 = vunpack.c.l.b16 %v5855
    %v5984 = vunpack.c.l.b16 %v5856
    %v5985 = vunpack.c.l.b16 %v5857
    %v5986 = vunpack.c.l.b16 %v5858
    %v5987 = vunpack.c.l.b16 %v5859
    %v5988 = vunpack.c.l.b16 %v5860
    %v5989 = vunpack.c.l.b16 %v5861
    %v5990 = vpack.c.b16 %v5927, %v5926
    %v5991 = vpack.c.b16 %v5929, %v5928
    %v5992 = vpack.c.b16 %v5931, %v5930
    %v5993 = vpack.c.b16 %v5933, %v5932
    %v5994 = vpack.c.b16 %v5935, %v5934
    %v5995 = vpack.c.b16 %v5937, %v5936
    %v5996 = vpack.c.b16 %v5939, %v5938
    %v5997 = vpack.c.b16 %v5941, %v5940
    %v5998 = vpack.c.b16 %v5943, %v5942
    %v5999 = vpack.c.b16 %v5945, %v5944
    %v6000 = vpack.c.b16 %v5947, %v5946
    %v6001 = vpack.c.b16 %v5949, %v5948
    %v6002 = vpack.c.b16 %v5951, %v5950
    %v6003 = vpack.c.b16 %v5953, %v5952
    %v6004 = vpack.c.b16 %v5955, %v5954
    %v6005 = vpack.c.b16 %v5957, %v5956
    %v6006 = vpack.c.b16 %v5959, %v5958
    %v6007 = vpack.c.b16 %v5961, %v5960
    %v6008 = vpack.c.b16 %v5963, %v5962
    %v6009 = vpack.c.b16 %v5965, %v5964
    %v6010 = vpack.c.b16 %v5967, %v5966
    %v6011 = vpack.c.b16 %v5969, %v5968
    %v6012 = vpack.c.b16 %v5971, %v5970
    %v6013 = vpack.c.b16 %v5973, %v5972
    %v6014 = vpack.c.b16 %v5975, %v5974
    %v6015 = vpack.c.b16 %v5977, %v5976
    %v6016 = vpack.c.b16 %v5979, %v5978
    %v6017 = vpack.c.b16 %v5981, %v5980
    %v6018 = vpack.c.b16 %v5983, %v5982
    %v6019 = vpack.c.b16 %v5985, %v5984
    %v6020 = vpack.c.b16 %v5987, %v5986
    %v6021 = vpack.c.b16 %v5989, %v5988
    %6054 = vmatprep.subr.bf16.mxu0 0
    %6055 = vmatpush1.bf16.msra.mxu0 %v5990
    %6056 = vmatprep.subr.bf16.mxu0 0
    %6057 = vmatpush1.bf16.msra.mxu0 %v5991
    %6058 = vmatprep.subr.bf16.mxu0 0
    %6059 = vmatpush1.bf16.msra.mxu0 %v5992
    %6060 = vmatprep.subr.bf16.mxu0 0
    %6061 = vmatpush1.bf16.msra.mxu0 %v5993
    %6062 = vmatprep.subr.bf16.mxu0 0
    %6063 = vmatpush1.bf16.msra.mxu0 %v5994
    %6064 = vmatprep.subr.bf16.mxu0 0
    %6065 = vmatpush1.bf16.msra.mxu0 %v5995
    %6066 = vmatprep.subr.bf16.mxu0 0
    %6067 = vmatpush1.bf16.msra.mxu0 %v5996
    %6068 = vmatprep.subr.bf16.mxu0 0
    %6069 = vmatpush1.bf16.msra.mxu0 %v5997
    %6070 = vmatprep.subr.bf16.mxu0 0
    %6071 = vmatpush1.bf16.msra.mxu0 %v5998
    %6072 = vmatprep.subr.bf16.mxu0 0
    %6073 = vmatpush1.bf16.msra.mxu0 %v5999
    %6074 = vmatprep.subr.bf16.mxu0 0
    %6075 = vmatpush1.bf16.msra.mxu0 %v6000
    %6076 = vmatprep.subr.bf16.mxu0 0
    %6077 = vmatpush1.bf16.msra.mxu0 %v6001
    %6078 = vmatprep.subr.bf16.mxu0 0
    %6079 = vmatpush1.bf16.msra.mxu0 %v6002
    %6080 = vmatprep.subr.bf16.mxu0 0
    %6081 = vmatpush1.bf16.msra.mxu0 %v6003
    %6082 = vmatprep.subr.bf16.mxu0 0
    %6083 = vmatpush1.bf16.msra.mxu0 %v6004
    %6084 = vmatprep.subr.bf16.mxu0 0
    %6085 = vmatpush1.bf16.msra.mxu0 %v6005
    %6086 = vmatprep.mubr.bf16.mxu0 %v3388
    %6087 = vmatmul.mubr.bf16.gmra.mrb[0].mxu0 %v3387
    %v6088 = vpop.f32.mrb[0].mxu0
    %v6089 = vadd.f32 0.0, %v6088
    %v6090 = vpop.f32.mrb[0].mxu0
    %v6091 = vpop.f32.mrb[0].mxu0
    %v6092 = vadd.f32 0.0, %v6091
    %v6093 = vpop.f32.mrb[0].mxu0
    %6094 = vdwg.mxu0
    %6095 = vmatprep.subr.bf16.mxu0 0
    %6096 = vmatpush1.bf16.msra.mxu0 %v6006
    %6097 = vmatprep.subr.bf16.mxu0 0
    %6098 = vmatpush1.bf16.msra.mxu0 %v6007
    %6099 = vmatprep.subr.bf16.mxu0 0
    %6100 = vmatpush1.bf16.msra.mxu0 %v6008
    %6101 = vmatprep.subr.bf16.mxu0 0
    %6102 = vmatpush1.bf16.msra.mxu0 %v6009
    %6103 = vmatprep.subr.bf16.mxu0 0
    %6104 = vmatpush1.bf16.msra.mxu0 %v6010
    %6105 = vmatprep.subr.bf16.mxu0 0
    %6106 = vmatpush1.bf16.msra.mxu0 %v6011
    %6107 = vmatprep.subr.bf16.mxu0 0
    %6108 = vmatpush1.bf16.msra.mxu0 %v6012
    %6109 = vmatprep.subr.bf16.mxu0 0
    %6110 = vmatpush1.bf16.msra.mxu0 %v6013
    %6111 = vmatprep.subr.bf16.mxu0 0
    %6112 = vmatpush1.bf16.msra.mxu0 %v6014
    %6113 = vmatprep.subr.bf16.mxu0 0
    %6114 = vmatpush1.bf16.msra.mxu0 %v6015
    %6115 = vmatprep.subr.bf16.mxu0 0
    %6116 = vmatpush1.bf16.msra.mxu0 %v6016
    %6117 = vmatprep.subr.bf16.mxu0 0
    %6118 = vmatpush1.bf16.msra.mxu0 %v6017
    %6119 = vmatprep.subr.bf16.mxu0 0
    %6120 = vmatpush1.bf16.msra.mxu0 %v6018
    %6121 = vmatprep.subr.bf16.mxu0 0
    %6122 = vmatpush1.bf16.msra.mxu0 %v6019
    %6123 = vmatprep.subr.bf16.mxu0 0
    %6124 = vmatpush1.bf16.msra.mxu0 %v6020
    %6125 = vmatprep.subr.bf16.mxu0 0
    %6126 = vmatpush1.bf16.msra.mxu0 %v6021
    %6127 = vmatprep.mubr.bf16.mxu0 %v3390
    %6128 = vmatmul.mubr.bf16.gmra.mrb[0].mxu0 %v3389
    %v6129 = vpop.f32.mrb[0].mxu0
    %v6130 = vadd.f32 %v6089, %v6129
    %v6131 = vpop.f32.mrb[0].mxu0
    %v6132 = vpop.f32.mrb[0].mxu0
    %v6133 = vadd.f32 %v6092, %v6132
    %v6134 = vpop.f32.mrb[0].mxu0
    %6135 = vdwg.mxu0
    %v6136 = vadd.f32 %v5795, %v6130
    %v6137 = vadd.f32 %v5796, %v6133
    %s6138 = scalar_lea.vmem %s3, 2048
    %v6139 = vld [vmem:[%s6138] sm:$0xf]
    %v6140 = vld [vmem:[%s6138 + $0x4] sm:$0xf]
    %v6141 = vld [vmem:[%s6138 + $0x8] sm:$0xf]
    %v6142 = vld [vmem:[%s6138 + $0xc] sm:$0xf]
    %v6143 = vld [vmem:[%s6138 + $0x10] sm:$0xf]
    %v6144 = vld [vmem:[%s6138 + $0x14] sm:$0xf]
    %v6145 = vld [vmem:[%s6138 + $0x18] sm:$0xf]
    %v6146 = vld [vmem:[%s6138 + $0x1c] sm:$0xf]
    %v6147 = vld [vmem:[%s6138 + $0x20] sm:$0xf]
    %v6148 = vld [vmem:[%s6138 + $0x24] sm:$0xf]
    %v6149 = vld [vmem:[%s6138 + $0x28] sm:$0xf]
    %v6150 = vld [vmem:[%s6138 + $0x2c] sm:$0xf]
    %v6151 = vld [vmem:[%s6138 + $0x30] sm:$0xf]
    %v6152 = vld [vmem:[%s6138 + $0x34] sm:$0xf]
    %v6153 = vld [vmem:[%s6138 + $0x38] sm:$0xf]
    %v6154 = vld [vmem:[%s6138 + $0x3c] sm:$0xf]
    %v6155 = vld [vmem:[%s6138 + $0x40] sm:$0xf]
    %v6156 = vld [vmem:[%s6138 + $0x44] sm:$0xf]
    %v6157 = vld [vmem:[%s6138 + $0x48] sm:$0xf]
    %v6158 = vld [vmem:[%s6138 + $0x4c] sm:$0xf]
    %v6159 = vld [vmem:[%s6138 + $0x50] sm:$0xf]
    %v6160 = vld [vmem:[%s6138 + $0x54] sm:$0xf]
    %v6161 = vld [vmem:[%s6138 + $0x58] sm:$0xf]
    %v6162 = vld [vmem:[%s6138 + $0x5c] sm:$0xf]
    %v6163 = vld [vmem:[%s6138 + $0x60] sm:$0xf]
    %v6164 = vld [vmem:[%s6138 + $0x64] sm:$0xf]
    %v6165 = vld [vmem:[%s6138 + $0x68] sm:$0xf]
    %v6166 = vld [vmem:[%s6138 + $0x6c] sm:$0xf]
    %v6167 = vld [vmem:[%s6138 + $0x70] sm:$0xf]
    %v6168 = vld [vmem:[%s6138 + $0x74] sm:$0xf]
    %v6169 = vld [vmem:[%s6138 + $0x78] sm:$0xf]
    %v6170 = vld [vmem:[%s6138 + $0x7c] sm:$0xf]
    %v6171 = vld [vmem:[%s6138 + $0x80] sm:$0xf]
    %v6172 = vld [vmem:[%s6138 + $0x84] sm:$0xf]
    %v6173 = vld [vmem:[%s6138 + $0x88] sm:$0xf]
    %v6174 = vld [vmem:[%s6138 + $0x8c] sm:$0xf]
    %v6175 = vld [vmem:[%s6138 + $0x90] sm:$0xf]
    %v6176 = vld [vmem:[%s6138 + $0x94] sm:$0xf]
    %v6177 = vld [vmem:[%s6138 + $0x98] sm:$0xf]
    %v6178 = vld [vmem:[%s6138 + $0x9c] sm:$0xf]
    %v6179 = vld [vmem:[%s6138 + $0xa0] sm:$0xf]
    %v6180 = vld [vmem:[%s6138 + $0xa4] sm:$0xf]
    %v6181 = vld [vmem:[%s6138 + $0xa8] sm:$0xf]
    %v6182 = vld [vmem:[%s6138 + $0xac] sm:$0xf]
    %v6183 = vld [vmem:[%s6138 + $0xb0] sm:$0xf]
    %v6184 = vld [vmem:[%s6138 + $0xb4] sm:$0xf]
    %v6185 = vld [vmem:[%s6138 + $0xb8] sm:$0xf]
    %v6186 = vld [vmem:[%s6138 + $0xbc] sm:$0xf]
    %v6187 = vld [vmem:[%s6138 + $0xc0] sm:$0xf]
    %v6188 = vld [vmem:[%s6138 + $0xc4] sm:$0xf]
    %v6189 = vld [vmem:[%s6138 + $0xc8] sm:$0xf]
    %v6190 = vld [vmem:[%s6138 + $0xcc] sm:$0xf]
    %v6191 = vld [vmem:[%s6138 + $0xd0] sm:$0xf]
    %v6192 = vld [vmem:[%s6138 + $0xd4] sm:$0xf]
    %v6193 = vld [vmem:[%s6138 + $0xd8] sm:$0xf]
    %v6194 = vld [vmem:[%s6138 + $0xdc] sm:$0xf]
    %v6195 = vld [vmem:[%s6138 + $0xe0] sm:$0xf]
    %v6196 = vld [vmem:[%s6138 + $0xe4] sm:$0xf]
    %v6197 = vld [vmem:[%s6138 + $0xe8] sm:$0xf]
    %v6198 = vld [vmem:[%s6138 + $0xec] sm:$0xf]
    %v6199 = vld [vmem:[%s6138 + $0xf0] sm:$0xf]
    %v6200 = vld [vmem:[%s6138 + $0xf4] sm:$0xf]
    %v6201 = vld [vmem:[%s6138 + $0xf8] sm:$0xf]
    %v6202 = vld [vmem:[%s6138 + $0xfc] sm:$0xf]
    %v6267 = vunpack.c.l.b16 %v6139
    %v6268 = vunpack.c.l.b16 %v6140
    %v6269 = vunpack.c.l.b16 %v6141
    %v6270 = vunpack.c.l.b16 %v6142
    %v6271 = vunpack.c.l.b16 %v6143
    %v6272 = vunpack.c.l.b16 %v6144
    %v6273 = vunpack.c.l.b16 %v6145
    %v6274 = vunpack.c.l.b16 %v6146
    %v6275 = vunpack.c.l.b16 %v6147
    %v6276 = vunpack.c.l.b16 %v6148
    %v6277 = vunpack.c.l.b16 %v6149
    %v6278 = vunpack.c.l.b16 %v6150
    %v6279 = vunpack.c.l.b16 %v6151
    %v6280 = vunpack.c.l.b16 %v6152
    %v6281 = vunpack.c.l.b16 %v6153
    %v6282 = vunpack.c.l.b16 %v6154
    %v6283 = vunpack.c.l.b16 %v6155
    %v6284 = vunpack.c.l.b16 %v6156
    %v6285 = vunpack.c.l.b16 %v6157
    %v6286 = vunpack.c.l.b16 %v6158
    %v6287 = vunpack.c.l.b16 %v6159
    %v6288 = vunpack.c.l.b16 %v6160
    %v6289 = vunpack.c.l.b16 %v6161
    %v6290 = vunpack.c.l.b16 %v6162
    %v6291 = vunpack.c.l.b16 %v6163
    %v6292 = vunpack.c.l.b16 %v6164
    %v6293 = vunpack.c.l.b16 %v6165
    %v6294 = vunpack.c.l.b16 %v6166
    %v6295 = vunpack.c.l.b16 %v6167
    %v6296 = vunpack.c.l.b16 %v6168
    %v6297 = vunpack.c.l.b16 %v6169
    %v6298 = vunpack.c.l.b16 %v6170
    %v6299 = vunpack.c.l.b16 %v6171
    %v6300 = vunpack.c.l.b16 %v6172
    %v6301 = vunpack.c.l.b16 %v6173
    %v6302 = vunpack.c.l.b16 %v6174
    %v6303 = vunpack.c.l.b16 %v6175
    %v6304 = vunpack.c.l.b16 %v6176
    %v6305 = vunpack.c.l.b16 %v6177
    %v6306 = vunpack.c.l.b16 %v6178
    %v6307 = vunpack.c.l.b16 %v6179
    %v6308 = vunpack.c.l.b16 %v6180
    %v6309 = vunpack.c.l.b16 %v6181
    %v6310 = vunpack.c.l.b16 %v6182
    %v6311 = vunpack.c.l.b16 %v6183
    %v6312 = vunpack.c.l.b16 %v6184
    %v6313 = vunpack.c.l.b16 %v6185
    %v6314 = vunpack.c.l.b16 %v6186
    %v6315 = vunpack.c.l.b16 %v6187
    %v6316 = vunpack.c.l.b16 %v6188
    %v6317 = vunpack.c.l.b16 %v6189
    %v6318 = vunpack.c.l.b16 %v6190
    %v6319 = vunpack.c.l.b16 %v6191
    %v6320 = vunpack.c.l.b16 %v6192
    %v6321 = vunpack.c.l.b16 %v6193
    %v6322 = vunpack.c.l.b16 %v6194
    %v6323 = vunpack.c.l.b16 %v6195
    %v6324 = vunpack.c.l.b16 %v6196
    %v6325 = vunpack.c.l.b16 %v6197
    %v6326 = vunpack.c.l.b16 %v6198
    %v6327 = vunpack.c.l.b16 %v6199
    %v6328 = vunpack.c.l.b16 %v6200
    %v6329 = vunpack.c.l.b16 %v6201
    %v6330 = vunpack.c.l.b16 %v6202
    %v6331 = vpack.c.b16 %v6268, %v6267
    %v6332 = vpack.c.b16 %v6270, %v6269
    %v6333 = vpack.c.b16 %v6272, %v6271
    %v6334 = vpack.c.b16 %v6274, %v6273
    %v6335 = vpack.c.b16 %v6276, %v6275
    %v6336 = vpack.c.b16 %v6278, %v6277
    %v6337 = vpack.c.b16 %v6280, %v6279
    %v6338 = vpack.c.b16 %v6282, %v6281
    %v6339 = vpack.c.b16 %v6284, %v6283
    %v6340 = vpack.c.b16 %v6286, %v6285
    %v6341 = vpack.c.b16 %v6288, %v6287
    %v6342 = vpack.c.b16 %v6290, %v6289
    %v6343 = vpack.c.b16 %v6292, %v6291
    %v6344 = vpack.c.b16 %v6294, %v6293
    %v6345 = vpack.c.b16 %v6296, %v6295
    %v6346 = vpack.c.b16 %v6298, %v6297
    %v6347 = vpack.c.b16 %v6300, %v6299
    %v6348 = vpack.c.b16 %v6302, %v6301
    %v6349 = vpack.c.b16 %v6304, %v6303
    %v6350 = vpack.c.b16 %v6306, %v6305
    %v6351 = vpack.c.b16 %v6308, %v6307
    %v6352 = vpack.c.b16 %v6310, %v6309
    %v6353 = vpack.c.b16 %v6312, %v6311
    %v6354 = vpack.c.b16 %v6314, %v6313
    %v6355 = vpack.c.b16 %v6316, %v6315
    %v6356 = vpack.c.b16 %v6318, %v6317
    %v6357 = vpack.c.b16 %v6320, %v6319
    %v6358 = vpack.c.b16 %v6322, %v6321
    %v6359 = vpack.c.b16 %v6324, %v6323
    %v6360 = vpack.c.b16 %v6326, %v6325
    %v6361 = vpack.c.b16 %v6328, %v6327
    %v6362 = vpack.c.b16 %v6330, %v6329
    %6395 = vmatprep.subr.bf16.mxu0 0
    %6396 = vmatpush1.bf16.msra.mxu0 %v6331
    %6397 = vmatprep.subr.bf16.mxu0 0
    %6398 = vmatpush1.bf16.msra.mxu0 %v6332
    %6399 = vmatprep.subr.bf16.mxu0 0
    %6400 = vmatpush1.bf16.msra.mxu0 %v6333
    %6401 = vmatprep.subr.bf16.mxu0 0
    %6402 = vmatpush1.bf16.msra.mxu0 %v6334
    %6403 = vmatprep.subr.bf16.mxu0 0
    %6404 = vmatpush1.bf16.msra.mxu0 %v6335
    %6405 = vmatprep.subr.bf16.mxu0 0
    %6406 = vmatpush1.bf16.msra.mxu0 %v6336
    %6407 = vmatprep.subr.bf16.mxu0 0
    %6408 = vmatpush1.bf16.msra.mxu0 %v6337
    %6409 = vmatprep.subr.bf16.mxu0 0
    %6410 = vmatpush1.bf16.msra.mxu0 %v6338
    %6411 = vmatprep.subr.bf16.mxu0 0
    %6412 = vmatpush1.bf16.msra.mxu0 %v6339
    %6413 = vmatprep.subr.bf16.mxu0 0
    %6414 = vmatpush1.bf16.msra.mxu0 %v6340
    %6415 = vmatprep.subr.bf16.mxu0 0
    %6416 = vmatpush1.bf16.msra.mxu0 %v6341
    %6417 = vmatprep.subr.bf16.mxu0 0
    %6418 = vmatpush1.bf16.msra.mxu0 %v6342
    %6419 = vmatprep.subr.bf16.mxu0 0
    %6420 = vmatpush1.bf16.msra.mxu0 %v6343
    %6421 = vmatprep.subr.bf16.mxu0 0
    %6422 = vmatpush1.bf16.msra.mxu0 %v6344
    %6423 = vmatprep.subr.bf16.mxu0 0
    %6424 = vmatpush1.bf16.msra.mxu0 %v6345
    %6425 = vmatprep.subr.bf16.mxu0 0
    %6426 = vmatpush1.bf16.msra.mxu0 %v6346
    %6427 = vmatprep.mubr.bf16.mxu0 %v3392
    %6428 = vmatmul.mubr.bf16.gmra.mrb[0].mxu0 %v3391
    %v6429 = vpop.f32.mrb[0].mxu0
    %v6430 = vadd.f32 0.0, %v6429
    %v6431 = vpop.f32.mrb[0].mxu0
    %v6432 = vpop.f32.mrb[0].mxu0
    %v6433 = vadd.f32 0.0, %v6432
    %v6434 = vpop.f32.mrb[0].mxu0
    %6435 = vdwg.mxu0
    %6436 = vmatprep.subr.bf16.mxu0 0
    %6437 = vmatpush1.bf16.msra.mxu0 %v6347
    %6438 = vmatprep.subr.bf16.mxu0 0
    %6439 = vmatpush1.bf16.msra.mxu0 %v6348
    %6440 = vmatprep.subr.bf16.mxu0 0
    %6441 = vmatpush1.bf16.msra.mxu0 %v6349
    %6442 = vmatprep.subr.bf16.mxu0 0
    %6443 = vmatpush1.bf16.msra.mxu0 %v6350
    %6444 = vmatprep.subr.bf16.mxu0 0
    %6445 = vmatpush1.bf16.msra.mxu0 %v6351
    %6446 = vmatprep.subr.bf16.mxu0 0
    %6447 = vmatpush1.bf16.msra.mxu0 %v6352
    %6448 = vmatprep.subr.bf16.mxu0 0
    %6449 = vmatpush1.bf16.msra.mxu0 %v6353
    %6450 = vmatprep.subr.bf16.mxu0 0
    %6451 = vmatpush1.bf16.msra.mxu0 %v6354
    %6452 = vmatprep.subr.bf16.mxu0 0
    %6453 = vmatpush1.bf16.msra.mxu0 %v6355
    %6454 = vmatprep.subr.bf16.mxu0 0
    %6455 = vmatpush1.bf16.msra.mxu0 %v6356
    %6456 = vmatprep.subr.bf16.mxu0 0
    %6457 = vmatpush1.bf16.msra.mxu0 %v6357
    %6458 = vmatprep.subr.bf16.mxu0 0
    %6459 = vmatpush1.bf16.msra.mxu0 %v6358
    %6460 = vmatprep.subr.bf16.mxu0 0
    %6461 = vmatpush1.bf16.msra.mxu0 %v6359
    %6462 = vmatprep.subr.bf16.mxu0 0
    %6463 = vmatpush1.bf16.msra.mxu0 %v6360
    %6464 = vmatprep.subr.bf16.mxu0 0
    %6465 = vmatpush1.bf16.msra.mxu0 %v6361
    %6466 = vmatprep.subr.bf16.mxu0 0
    %6467 = vmatpush1.bf16.msra.mxu0 %v6362
    %6468 = vmatprep.mubr.bf16.mxu0 %v3394
    %6469 = vmatmul.mubr.bf16.gmra.mrb[0].mxu0 %v3393
    %v6470 = vpop.f32.mrb[0].mxu0
    %v6471 = vadd.f32 %v6430, %v6470
    %v6472 = vpop.f32.mrb[0].mxu0
    %v6473 = vpop.f32.mrb[0].mxu0
    %v6474 = vadd.f32 %v6433, %v6473
    %v6475 = vpop.f32.mrb[0].mxu0
    %6476 = vdwg.mxu0
    %v6477 = vadd.f32 %v6136, %v6471
    %v6478 = vadd.f32 %v6137, %v6474
    %s6479 = scalar_lea.vmem %s3, 2304
    %v6480 = vld [vmem:[%s6479] sm:$0xf]
    %v6481 = vld [vmem:[%s6479 + $0x4] sm:$0xf]
    %v6482 = vld [vmem:[%s6479 + $0x8] sm:$0xf]
    %v6483 = vld [vmem:[%s6479 + $0xc] sm:$0xf]
    %v6484 = vld [vmem:[%s6479 + $0x10] sm:$0xf]
    %v6485 = vld [vmem:[%s6479 + $0x14] sm:$0xf]
    %v6486 = vld [vmem:[%s6479 + $0x18] sm:$0xf]
    %v6487 = vld [vmem:[%s6479 + $0x1c] sm:$0xf]
    %v6488 = vld [vmem:[%s6479 + $0x20] sm:$0xf]
    %v6489 = vld [vmem:[%s6479 + $0x24] sm:$0xf]
    %v6490 = vld [vmem:[%s6479 + $0x28] sm:$0xf]
    %v6491 = vld [vmem:[%s6479 + $0x2c] sm:$0xf]
    %v6492 = vld [vmem:[%s6479 + $0x30] sm:$0xf]
    %v6493 = vld [vmem:[%s6479 + $0x34] sm:$0xf]
    %v6494 = vld [vmem:[%s6479 + $0x38] sm:$0xf]
    %v6495 = vld [vmem:[%s6479 + $0x3c] sm:$0xf]
    %v6496 = vld [vmem:[%s6479 + $0x40] sm:$0xf]
    %v6497 = vld [vmem:[%s6479 + $0x44] sm:$0xf]
    %v6498 = vld [vmem:[%s6479 + $0x48] sm:$0xf]
    %v6499 = vld [vmem:[%s6479 + $0x4c] sm:$0xf]
    %v6500 = vld [vmem:[%s6479 + $0x50] sm:$0xf]
    %v6501 = vld [vmem:[%s6479 + $0x54] sm:$0xf]
    %v6502 = vld [vmem:[%s6479 + $0x58] sm:$0xf]
    %v6503 = vld [vmem:[%s6479 + $0x5c] sm:$0xf]
    %v6504 = vld [vmem:[%s6479 + $0x60] sm:$0xf]
    %v6505 = vld [vmem:[%s6479 + $0x64] sm:$0xf]
    %v6506 = vld [vmem:[%s6479 + $0x68] sm:$0xf]
    %v6507 = vld [vmem:[%s6479 + $0x6c] sm:$0xf]
    %v6508 = vld [vmem:[%s6479 + $0x70] sm:$0xf]
    %v6509 = vld [vmem:[%s6479 + $0x74] sm:$0xf]
    %v6510 = vld [vmem:[%s6479 + $0x78] sm:$0xf]
    %v6511 = vld [vmem:[%s6479 + $0x7c] sm:$0xf]
    %v6512 = vld [vmem:[%s6479 + $0x80] sm:$0xf]
    %v6513 = vld [vmem:[%s6479 + $0x84] sm:$0xf]
    %v6514 = vld [vmem:[%s6479 + $0x88] sm:$0xf]
    %v6515 = vld [vmem:[%s6479 + $0x8c] sm:$0xf]
    %v6516 = vld [vmem:[%s6479 + $0x90] sm:$0xf]
    %v6517 = vld [vmem:[%s6479 + $0x94] sm:$0xf]
    %v6518 = vld [vmem:[%s6479 + $0x98] sm:$0xf]
    %v6519 = vld [vmem:[%s6479 + $0x9c] sm:$0xf]
    %v6520 = vld [vmem:[%s6479 + $0xa0] sm:$0xf]
    %v6521 = vld [vmem:[%s6479 + $0xa4] sm:$0xf]
    %v6522 = vld [vmem:[%s6479 + $0xa8] sm:$0xf]
    %v6523 = vld [vmem:[%s6479 + $0xac] sm:$0xf]
    %v6524 = vld [vmem:[%s6479 + $0xb0] sm:$0xf]
    %v6525 = vld [vmem:[%s6479 + $0xb4] sm:$0xf]
    %v6526 = vld [vmem:[%s6479 + $0xb8] sm:$0xf]
    %v6527 = vld [vmem:[%s6479 + $0xbc] sm:$0xf]
    %v6528 = vld [vmem:[%s6479 + $0xc0] sm:$0xf]
    %v6529 = vld [vmem:[%s6479 + $0xc4] sm:$0xf]
    %v6530 = vld [vmem:[%s6479 + $0xc8] sm:$0xf]
    %v6531 = vld [vmem:[%s6479 + $0xcc] sm:$0xf]
    %v6532 = vld [vmem:[%s6479 + $0xd0] sm:$0xf]
    %v6533 = vld [vmem:[%s6479 + $0xd4] sm:$0xf]
    %v6534 = vld [vmem:[%s6479 + $0xd8] sm:$0xf]
    %v6535 = vld [vmem:[%s6479 + $0xdc] sm:$0xf]
    %v6536 = vld [vmem:[%s6479 + $0xe0] sm:$0xf]
    %v6537 = vld [vmem:[%s6479 + $0xe4] sm:$0xf]
    %v6538 = vld [vmem:[%s6479 + $0xe8] sm:$0xf]
    %v6539 = vld [vmem:[%s6479 + $0xec] sm:$0xf]
    %v6540 = vld [vmem:[%s6479 + $0xf0] sm:$0xf]
    %v6541 = vld [vmem:[%s6479 + $0xf4] sm:$0xf]
    %v6542 = vld [vmem:[%s6479 + $0xf8] sm:$0xf]
    %v6543 = vld [vmem:[%s6479 + $0xfc] sm:$0xf]
    %v6608 = vunpack.c.l.b16 %v6480
    %v6609 = vunpack.c.l.b16 %v6481
    %v6610 = vunpack.c.l.b16 %v6482
    %v6611 = vunpack.c.l.b16 %v6483
    %v6612 = vunpack.c.l.b16 %v6484
    %v6613 = vunpack.c.l.b16 %v6485
    %v6614 = vunpack.c.l.b16 %v6486
    %v6615 = vunpack.c.l.b16 %v6487
    %v6616 = vunpack.c.l.b16 %v6488
    %v6617 = vunpack.c.l.b16 %v6489
    %v6618 = vunpack.c.l.b16 %v6490
    %v6619 = vunpack.c.l.b16 %v6491
    %v6620 = vunpack.c.l.b16 %v6492
    %v6621 = vunpack.c.l.b16 %v6493
    %v6622 = vunpack.c.l.b16 %v6494
    %v6623 = vunpack.c.l.b16 %v6495
    %v6624 = vunpack.c.l.b16 %v6496
    %v6625 = vunpack.c.l.b16 %v6497
    %v6626 = vunpack.c.l.b16 %v6498
    %v6627 = vunpack.c.l.b16 %v6499
    %v6628 = vunpack.c.l.b16 %v6500
    %v6629 = vunpack.c.l.b16 %v6501
    %v6630 = vunpack.c.l.b16 %v6502
    %v6631 = vunpack.c.l.b16 %v6503
    %v6632 = vunpack.c.l.b16 %v6504
    %v6633 = vunpack.c.l.b16 %v6505
    %v6634 = vunpack.c.l.b16 %v6506
    %v6635 = vunpack.c.l.b16 %v6507
    %v6636 = vunpack.c.l.b16 %v6508
    %v6637 = vunpack.c.l.b16 %v6509
    %v6638 = vunpack.c.l.b16 %v6510
    %v6639 = vunpack.c.l.b16 %v6511
    %v6640 = vunpack.c.l.b16 %v6512
    %v6641 = vunpack.c.l.b16 %v6513
    %v6642 = vunpack.c.l.b16 %v6514
    %v6643 = vunpack.c.l.b16 %v6515
    %v6644 = vunpack.c.l.b16 %v6516
    %v6645 = vunpack.c.l.b16 %v6517
    %v6646 = vunpack.c.l.b16 %v6518
    %v6647 = vunpack.c.l.b16 %v6519
    %v6648 = vunpack.c.l.b16 %v6520
    %v6649 = vunpack.c.l.b16 %v6521
    %v6650 = vunpack.c.l.b16 %v6522
    %v6651 = vunpack.c.l.b16 %v6523
    %v6652 = vunpack.c.l.b16 %v6524
    %v6653 = vunpack.c.l.b16 %v6525
    %v6654 = vunpack.c.l.b16 %v6526
    %v6655 = vunpack.c.l.b16 %v6527
    %v6656 = vunpack.c.l.b16 %v6528
    %v6657 = vunpack.c.l.b16 %v6529
    %v6658 = vunpack.c.l.b16 %v6530
    %v6659 = vunpack.c.l.b16 %v6531
    %v6660 = vunpack.c.l.b16 %v6532
    %v6661 = vunpack.c.l.b16 %v6533
    %v6662 = vunpack.c.l.b16 %v6534
    %v6663 = vunpack.c.l.b16 %v6535
    %v6664 = vunpack.c.l.b16 %v6536
    %v6665 = vunpack.c.l.b16 %v6537
    %v6666 = vunpack.c.l.b16 %v6538
    %v6667 = vunpack.c.l.b16 %v6539
    %v6668 = vunpack.c.l.b16 %v6540
    %v6669 = vunpack.c.l.b16 %v6541
    %v6670 = vunpack.c.l.b16 %v6542
    %v6671 = vunpack.c.l.b16 %v6543
    %v6672 = vpack.c.b16 %v6609, %v6608
    %v6673 = vpack.c.b16 %v6611, %v6610
    %v6674 = vpack.c.b16 %v6613, %v6612
    %v6675 = vpack.c.b16 %v6615, %v6614
    %v6676 = vpack.c.b16 %v6617, %v6616
    %v6677 = vpack.c.b16 %v6619, %v6618
    %v6678 = vpack.c.b16 %v6621, %v6620
    %v6679 = vpack.c.b16 %v6623, %v6622
    %v6680 = vpack.c.b16 %v6625, %v6624
    %v6681 = vpack.c.b16 %v6627, %v6626
    %v6682 = vpack.c.b16 %v6629, %v6628
    %v6683 = vpack.c.b16 %v6631, %v6630
    %v6684 = vpack.c.b16 %v6633, %v6632
    %v6685 = vpack.c.b16 %v6635, %v6634
    %v6686 = vpack.c.b16 %v6637, %v6636
    %v6687 = vpack.c.b16 %v6639, %v6638
    %v6688 = vpack.c.b16 %v6641, %v6640
    %v6689 = vpack.c.b16 %v6643, %v6642
    %v6690 = vpack.c.b16 %v6645, %v6644
    %v6691 = vpack.c.b16 %v6647, %v6646
    %v6692 = vpack.c.b16 %v6649, %v6648
    %v6693 = vpack.c.b16 %v6651, %v6650
    %v6694 = vpack.c.b16 %v6653, %v6652
    %v6695 = vpack.c.b16 %v6655, %v6654
    %v6696 = vpack.c.b16 %v6657, %v6656
    %v6697 = vpack.c.b16 %v6659, %v6658
    %v6698 = vpack.c.b16 %v6661, %v6660
    %v6699 = vpack.c.b16 %v6663, %v6662
    %v6700 = vpack.c.b16 %v6665, %v6664
    %v6701 = vpack.c.b16 %v6667, %v6666
    %v6702 = vpack.c.b16 %v6669, %v6668
    %v6703 = vpack.c.b16 %v6671, %v6670
    %6736 = vmatprep.subr.bf16.mxu0 0
    %6737 = vmatpush1.bf16.msra.mxu0 %v6672
    %6738 = vmatprep.subr.bf16.mxu0 0
    %6739 = vmatpush1.bf16.msra.mxu0 %v6673
    %6740 = vmatprep.subr.bf16.mxu0 0
    %6741 = vmatpush1.bf16.msra.mxu0 %v6674
    %6742 = vmatprep.subr.bf16.mxu0 0
    %6743 = vmatpush1.bf16.msra.mxu0 %v6675
    %6744 = vmatprep.subr.bf16.mxu0 0
    %6745 = vmatpush1.bf16.msra.mxu0 %v6676
    %6746 = vmatprep.subr.bf16.mxu0 0
    %6747 = vmatpush1.bf16.msra.mxu0 %v6677
    %6748 = vmatprep.subr.bf16.mxu0 0
    %6749 = vmatpush1.bf16.msra.mxu0 %v6678
    %6750 = vmatprep.subr.bf16.mxu0 0
    %6751 = vmatpush1.bf16.msra.mxu0 %v6679
    %6752 = vmatprep.subr.bf16.mxu0 0
    %6753 = vmatpush1.bf16.msra.mxu0 %v6680
    %6754 = vmatprep.subr.bf16.mxu0 0
    %6755 = vmatpush1.bf16.msra.mxu0 %v6681
    %6756 = vmatprep.subr.bf16.mxu0 0
    %6757 = vmatpush1.bf16.msra.mxu0 %v6682
    %6758 = vmatprep.subr.bf16.mxu0 0
    %6759 = vmatpush1.bf16.msra.mxu0 %v6683
    %6760 = vmatprep.subr.bf16.mxu0 0
    %6761 = vmatpush1.bf16.msra.mxu0 %v6684
    %6762 = vmatprep.subr.bf16.mxu0 0
    %6763 = vmatpush1.bf16.msra.mxu0 %v6685
    %6764 = vmatprep.subr.bf16.mxu0 0
    %6765 = vmatpush1.bf16.msra.mxu0 %v6686
    %6766 = vmatprep.subr.bf16.mxu0 0
    %6767 = vmatpush1.bf16.msra.mxu0 %v6687
    %6768 = vmatprep.mubr.bf16.mxu0 %v3396
    %6769 = vmatmul.mubr.bf16.gmra.mrb[0].mxu0 %v3395
    %v6770 = vpop.f32.mrb[0].mxu0
    %v6771 = vadd.f32 0.0, %v6770
    %v6772 = vpop.f32.mrb[0].mxu0
    %v6773 = vpop.f32.mrb[0].mxu0
    %v6774 = vadd.f32 0.0, %v6773
    %v6775 = vpop.f32.mrb[0].mxu0
    %6776 = vdwg.mxu0
    %6777 = vmatprep.subr.bf16.mxu0 0
    %6778 = vmatpush1.bf16.msra.mxu0 %v6688
    %6779 = vmatprep.subr.bf16.mxu0 0
    %6780 = vmatpush1.bf16.msra.mxu0 %v6689
    %6781 = vmatprep.subr.bf16.mxu0 0
    %6782 = vmatpush1.bf16.msra.mxu0 %v6690
    %6783 = vmatprep.subr.bf16.mxu0 0
    %6784 = vmatpush1.bf16.msra.mxu0 %v6691
    %6785 = vmatprep.subr.bf16.mxu0 0
    %6786 = vmatpush1.bf16.msra.mxu0 %v6692
    %6787 = vmatprep.subr.bf16.mxu0 0
    %6788 = vmatpush1.bf16.msra.mxu0 %v6693
    %6789 = vmatprep.subr.bf16.mxu0 0
    %6790 = vmatpush1.bf16.msra.mxu0 %v6694
    %6791 = vmatprep.subr.bf16.mxu0 0
    %6792 = vmatpush1.bf16.msra.mxu0 %v6695
    %6793 = vmatprep.subr.bf16.mxu0 0
    %6794 = vmatpush1.bf16.msra.mxu0 %v6696
    %6795 = vmatprep.subr.bf16.mxu0 0
    %6796 = vmatpush1.bf16.msra.mxu0 %v6697
    %6797 = vmatprep.subr.bf16.mxu0 0
    %6798 = vmatpush1.bf16.msra.mxu0 %v6698
    %6799 = vmatprep.subr.bf16.mxu0 0
    %6800 = vmatpush1.bf16.msra.mxu0 %v6699
    %6801 = vmatprep.subr.bf16.mxu0 0
    %6802 = vmatpush1.bf16.msra.mxu0 %v6700
    %6803 = vmatprep.subr.bf16.mxu0 0
    %6804 = vmatpush1.bf16.msra.mxu0 %v6701
    %6805 = vmatprep.subr.bf16.mxu0 0
    %6806 = vmatpush1.bf16.msra.mxu0 %v6702
    %6807 = vmatprep.subr.bf16.mxu0 0
    %6808 = vmatpush1.bf16.msra.mxu0 %v6703
    %6809 = vmatprep.mubr.bf16.mxu0 %v3398
    %6810 = vmatmul.mubr.bf16.gmra.mrb[0].mxu0 %v3397
    %v6811 = vpop.f32.mrb[0].mxu0
    %v6812 = vadd.f32 %v6771, %v6811
    %v6813 = vpop.f32.mrb[0].mxu0
    %v6814 = vpop.f32.mrb[0].mxu0
    %v6815 = vadd.f32 %v6774, %v6814
    %v6816 = vpop.f32.mrb[0].mxu0
    %6817 = vdwg.mxu0
    %v6818 = vadd.f32 %v6477, %v6812
    %v6819 = vadd.f32 %v6478, %v6815
    %s6820 = scalar_lea.vmem %s3, 2560
    %v6821 = vld [vmem:[%s6820] sm:$0xf]
    %v6822 = vld [vmem:[%s6820 + $0x4] sm:$0xf]
    %v6823 = vld [vmem:[%s6820 + $0x8] sm:$0xf]
    %v6824 = vld [vmem:[%s6820 + $0xc] sm:$0xf]
    %v6825 = vld [vmem:[%s6820 + $0x10] sm:$0xf]
    %v6826 = vld [vmem:[%s6820 + $0x14] sm:$0xf]
    %v6827 = vld [vmem:[%s6820 + $0x18] sm:$0xf]
    %v6828 = vld [vmem:[%s6820 + $0x1c] sm:$0xf]
    %v6829 = vld [vmem:[%s6820 + $0x20] sm:$0xf]
    %v6830 = vld [vmem:[%s6820 + $0x24] sm:$0xf]
    %v6831 = vld [vmem:[%s6820 + $0x28] sm:$0xf]
    %v6832 = vld [vmem:[%s6820 + $0x2c] sm:$0xf]
    %v6833 = vld [vmem:[%s6820 + $0x30] sm:$0xf]
    %v6834 = vld [vmem:[%s6820 + $0x34] sm:$0xf]
    %v6835 = vld [vmem:[%s6820 + $0x38] sm:$0xf]
    %v6836 = vld [vmem:[%s6820 + $0x3c] sm:$0xf]
    %v6837 = vld [vmem:[%s6820 + $0x40] sm:$0xf]
    %v6838 = vld [vmem:[%s6820 + $0x44] sm:$0xf]
    %v6839 = vld [vmem:[%s6820 + $0x48] sm:$0xf]
    %v6840 = vld [vmem:[%s6820 + $0x4c] sm:$0xf]
    %v6841 = vld [vmem:[%s6820 + $0x50] sm:$0xf]
    %v6842 = vld [vmem:[%s6820 + $0x54] sm:$0xf]
    %v6843 = vld [vmem:[%s6820 + $0x58] sm:$0xf]
    %v6844 = vld [vmem:[%s6820 + $0x5c] sm:$0xf]
    %v6845 = vld [vmem:[%s6820 + $0x60] sm:$0xf]
    %v6846 = vld [vmem:[%s6820 + $0x64] sm:$0xf]
    %v6847 = vld [vmem:[%s6820 + $0x68] sm:$0xf]
    %v6848 = vld [vmem:[%s6820 + $0x6c] sm:$0xf]
    %v6849 = vld [vmem:[%s6820 + $0x70] sm:$0xf]
    %v6850 = vld [vmem:[%s6820 + $0x74] sm:$0xf]
    %v6851 = vld [vmem:[%s6820 + $0x78] sm:$0xf]
    %v6852 = vld [vmem:[%s6820 + $0x7c] sm:$0xf]
    %v6853 = vld [vmem:[%s6820 + $0x80] sm:$0xf]
    %v6854 = vld [vmem:[%s6820 + $0x84] sm:$0xf]
    %v6855 = vld [vmem:[%s6820 + $0x88] sm:$0xf]
    %v6856 = vld [vmem:[%s6820 + $0x8c] sm:$0xf]
    %v6857 = vld [vmem:[%s6820 + $0x90] sm:$0xf]
    %v6858 = vld [vmem:[%s6820 + $0x94] sm:$0xf]
    %v6859 = vld [vmem:[%s6820 + $0x98] sm:$0xf]
    %v6860 = vld [vmem:[%s6820 + $0x9c] sm:$0xf]
    %v6861 = vld [vmem:[%s6820 + $0xa0] sm:$0xf]
    %v6862 = vld [vmem:[%s6820 + $0xa4] sm:$0xf]
    %v6863 = vld [vmem:[%s6820 + $0xa8] sm:$0xf]
    %v6864 = vld [vmem:[%s6820 + $0xac] sm:$0xf]
    %v6865 = vld [vmem:[%s6820 + $0xb0] sm:$0xf]
    %v6866 = vld [vmem:[%s6820 + $0xb4] sm:$0xf]
    %v6867 = vld [vmem:[%s6820 + $0xb8] sm:$0xf]
    %v6868 = vld [vmem:[%s6820 + $0xbc] sm:$0xf]
    %v6869 = vld [vmem:[%s6820 + $0xc0] sm:$0xf]
    %v6870 = vld [vmem:[%s6820 + $0xc4] sm:$0xf]
    %v6871 = vld [vmem:[%s6820 + $0xc8] sm:$0xf]
    %v6872 = vld [vmem:[%s6820 + $0xcc] sm:$0xf]
    %v6873 = vld [vmem:[%s6820 + $0xd0] sm:$0xf]
    %v6874 = vld [vmem:[%s6820 + $0xd4] sm:$0xf]
    %v6875 = vld [vmem:[%s6820 + $0xd8] sm:$0xf]
    %v6876 = vld [vmem:[%s6820 + $0xdc] sm:$0xf]
    %v6877 = vld [vmem:[%s6820 + $0xe0] sm:$0xf]
    %v6878 = vld [vmem:[%s6820 + $0xe4] sm:$0xf]
    %v6879 = vld [vmem:[%s6820 + $0xe8] sm:$0xf]
    %v6880 = vld [vmem:[%s6820 + $0xec] sm:$0xf]
    %v6881 = vld [vmem:[%s6820 + $0xf0] sm:$0xf]
    %v6882 = vld [vmem:[%s6820 + $0xf4] sm:$0xf]
    %v6883 = vld [vmem:[%s6820 + $0xf8] sm:$0xf]
    %v6884 = vld [vmem:[%s6820 + $0xfc] sm:$0xf]
    %v6949 = vunpack.c.l.b16 %v6821
    %v6950 = vunpack.c.l.b16 %v6822
    %v6951 = vunpack.c.l.b16 %v6823
    %v6952 = vunpack.c.l.b16 %v6824
    %v6953 = vunpack.c.l.b16 %v6825
    %v6954 = vunpack.c.l.b16 %v6826
    %v6955 = vunpack.c.l.b16 %v6827
    %v6956 = vunpack.c.l.b16 %v6828
    %v6957 = vunpack.c.l.b16 %v6829
    %v6958 = vunpack.c.l.b16 %v6830
    %v6959 = vunpack.c.l.b16 %v6831
    %v6960 = vunpack.c.l.b16 %v6832
    %v6961 = vunpack.c.l.b16 %v6833
    %v6962 = vunpack.c.l.b16 %v6834
    %v6963 = vunpack.c.l.b16 %v6835
    %v6964 = vunpack.c.l.b16 %v6836
    %v6965 = vunpack.c.l.b16 %v6837
    %v6966 = vunpack.c.l.b16 %v6838
    %v6967 = vunpack.c.l.b16 %v6839
    %v6968 = vunpack.c.l.b16 %v6840
    %v6969 = vunpack.c.l.b16 %v6841
    %v6970 = vunpack.c.l.b16 %v6842
    %v6971 = vunpack.c.l.b16 %v6843
    %v6972 = vunpack.c.l.b16 %v6844
    %v6973 = vunpack.c.l.b16 %v6845
    %v6974 = vunpack.c.l.b16 %v6846
    %v6975 = vunpack.c.l.b16 %v6847
    %v6976 = vunpack.c.l.b16 %v6848
    %v6977 = vunpack.c.l.b16 %v6849
    %v6978 = vunpack.c.l.b16 %v6850
    %v6979 = vunpack.c.l.b16 %v6851
    %v6980 = vunpack.c.l.b16 %v6852
    %v6981 = vunpack.c.l.b16 %v6853
    %v6982 = vunpack.c.l.b16 %v6854
    %v6983 = vunpack.c.l.b16 %v6855
    %v6984 = vunpack.c.l.b16 %v6856
    %v6985 = vunpack.c.l.b16 %v6857
    %v6986 = vunpack.c.l.b16 %v6858
    %v6987 = vunpack.c.l.b16 %v6859
    %v6988 = vunpack.c.l.b16 %v6860
    %v6989 = vunpack.c.l.b16 %v6861
    %v6990 = vunpack.c.l.b16 %v6862
    %v6991 = vunpack.c.l.b16 %v6863
    %v6992 = vunpack.c.l.b16 %v6864
    %v6993 = vunpack.c.l.b16 %v6865
    %v6994 = vunpack.c.l.b16 %v6866
    %v6995 = vunpack.c.l.b16 %v6867
    %v6996 = vunpack.c.l.b16 %v6868
    %v6997 = vunpack.c.l.b16 %v6869
    %v6998 = vunpack.c.l.b16 %v6870
    %v6999 = vunpack.c.l.b16 %v6871
    %v7000 = vunpack.c.l.b16 %v6872
    %v7001 = vunpack.c.l.b16 %v6873
    %v7002 = vunpack.c.l.b16 %v6874
    %v7003 = vunpack.c.l.b16 %v6875
    %v7004 = vunpack.c.l.b16 %v6876
    %v7005 = vunpack.c.l.b16 %v6877
    %v7006 = vunpack.c.l.b16 %v6878
    %v7007 = vunpack.c.l.b16 %v6879
    %v7008 = vunpack.c.l.b16 %v6880
    %v7009 = vunpack.c.l.b16 %v6881
    %v7010 = vunpack.c.l.b16 %v6882
    %v7011 = vunpack.c.l.b16 %v6883
    %v7012 = vunpack.c.l.b16 %v6884
    %v7013 = vpack.c.b16 %v6950, %v6949
    %v7014 = vpack.c.b16 %v6952, %v6951
    %v7015 = vpack.c.b16 %v6954, %v6953
    %v7016 = vpack.c.b16 %v6956, %v6955
    %v7017 = vpack.c.b16 %v6958, %v6957
    %v7018 = vpack.c.b16 %v6960, %v6959
    %v7019 = vpack.c.b16 %v6962, %v6961
    %v7020 = vpack.c.b16 %v6964, %v6963
    %v7021 = vpack.c.b16 %v6966, %v6965
    %v7022 = vpack.c.b16 %v6968, %v6967
    %v7023 = vpack.c.b16 %v6970, %v6969
    %v7024 = vpack.c.b16 %v6972, %v6971
    %v7025 = vpack.c.b16 %v6974, %v6973
    %v7026 = vpack.c.b16 %v6976, %v6975
    %v7027 = vpack.c.b16 %v6978, %v6977
    %v7028 = vpack.c.b16 %v6980, %v6979
    %v7029 = vpack.c.b16 %v6982, %v6981
    %v7030 = vpack.c.b16 %v6984, %v6983
    %v7031 = vpack.c.b16 %v6986, %v6985
    %v7032 = vpack.c.b16 %v6988, %v6987
    %v7033 = vpack.c.b16 %v6990, %v6989
    %v7034 = vpack.c.b16 %v6992, %v6991
    %v7035 = vpack.c.b16 %v6994, %v6993
    %v7036 = vpack.c.b16 %v6996, %v6995
    %v7037 = vpack.c.b16 %v6998, %v6997
    %v7038 = vpack.c.b16 %v7000, %v6999
    %v7039 = vpack.c.b16 %v7002, %v7001
    %v7040 = vpack.c.b16 %v7004, %v7003
    %v7041 = vpack.c.b16 %v7006, %v7005
    %v7042 = vpack.c.b16 %v7008, %v7007
    %v7043 = vpack.c.b16 %v7010, %v7009
    %v7044 = vpack.c.b16 %v7012, %v7011
    %7077 = vmatprep.subr.bf16.mxu0 0
    %7078 = vmatpush1.bf16.msra.mxu0 %v7013
    %7079 = vmatprep.subr.bf16.mxu0 0
    %7080 = vmatpush1.bf16.msra.mxu0 %v7014
    %7081 = vmatprep.subr.bf16.mxu0 0
    %7082 = vmatpush1.bf16.msra.mxu0 %v7015
    %7083 = vmatprep.subr.bf16.mxu0 0
    %7084 = vmatpush1.bf16.msra.mxu0 %v7016
    %7085 = vmatprep.subr.bf16.mxu0 0
    %7086 = vmatpush1.bf16.msra.mxu0 %v7017
    %7087 = vmatprep.subr.bf16.mxu0 0
    %7088 = vmatpush1.bf16.msra.mxu0 %v7018
    %7089 = vmatprep.subr.bf16.mxu0 0
    %7090 = vmatpush1.bf16.msra.mxu0 %v7019
    %7091 = vmatprep.subr.bf16.mxu0 0
    %7092 = vmatpush1.bf16.msra.mxu0 %v7020
    %7093 = vmatprep.subr.bf16.mxu0 0
    %7094 = vmatpush1.bf16.msra.mxu0 %v7021
    %7095 = vmatprep.subr.bf16.mxu0 0
    %7096 = vmatpush1.bf16.msra.mxu0 %v7022
    %7097 = vmatprep.subr.bf16.mxu0 0
    %7098 = vmatpush1.bf16.msra.mxu0 %v7023
    %7099 = vmatprep.subr.bf16.mxu0 0
    %7100 = vmatpush1.bf16.msra.mxu0 %v7024
    %7101 = vmatprep.subr.bf16.mxu0 0
    %7102 = vmatpush1.bf16.msra.mxu0 %v7025
    %7103 = vmatprep.subr.bf16.mxu0 0
    %7104 = vmatpush1.bf16.msra.mxu0 %v7026
    %7105 = vmatprep.subr.bf16.mxu0 0
    %7106 = vmatpush1.bf16.msra.mxu0 %v7027
    %7107 = vmatprep.subr.bf16.mxu0 0
    %7108 = vmatpush1.bf16.msra.mxu0 %v7028
    %7109 = vmatprep.mubr.bf16.mxu0 %v3400
    %7110 = vmatmul.mubr.bf16.gmra.mrb[0].mxu0 %v3399
    %v7111 = vpop.f32.mrb[0].mxu0
    %v7112 = vadd.f32 0.0, %v7111
    %v7113 = vpop.f32.mrb[0].mxu0
    %v7114 = vpop.f32.mrb[0].mxu0
    %v7115 = vadd.f32 0.0, %v7114
    %v7116 = vpop.f32.mrb[0].mxu0
    %7117 = vdwg.mxu0
    %7118 = vmatprep.subr.bf16.mxu0 0
    %7119 = vmatpush1.bf16.msra.mxu0 %v7029
    %7120 = vmatprep.subr.bf16.mxu0 0
    %7121 = vmatpush1.bf16.msra.mxu0 %v7030
    %7122 = vmatprep.subr.bf16.mxu0 0
    %7123 = vmatpush1.bf16.msra.mxu0 %v7031
    %7124 = vmatprep.subr.bf16.mxu0 0
    %7125 = vmatpush1.bf16.msra.mxu0 %v7032
    %7126 = vmatprep.subr.bf16.mxu0 0
    %7127 = vmatpush1.bf16.msra.mxu0 %v7033
    %7128 = vmatprep.subr.bf16.mxu0 0
    %7129 = vmatpush1.bf16.msra.mxu0 %v7034
    %7130 = vmatprep.subr.bf16.mxu0 0
    %7131 = vmatpush1.bf16.msra.mxu0 %v7035
    %7132 = vmatprep.subr.bf16.mxu0 0
    %7133 = vmatpush1.bf16.msra.mxu0 %v7036
    %7134 = vmatprep.subr.bf16.mxu0 0
    %7135 = vmatpush1.bf16.msra.mxu0 %v7037
    %7136 = vmatprep.subr.bf16.mxu0 0
    %7137 = vmatpush1.bf16.msra.mxu0 %v7038
    %7138 = vmatprep.subr.bf16.mxu0 0
    %7139 = vmatpush1.bf16.msra.mxu0 %v7039
    %7140 = vmatprep.subr.bf16.mxu0 0
    %7141 = vmatpush1.bf16.msra.mxu0 %v7040
    %7142 = vmatprep.subr.bf16.mxu0 0
    %7143 = vmatpush1.bf16.msra.mxu0 %v7041
    %7144 = vmatprep.subr.bf16.mxu0 0
    %7145 = vmatpush1.bf16.msra.mxu0 %v7042
    %7146 = vmatprep.subr.bf16.mxu0 0
    %7147 = vmatpush1.bf16.msra.mxu0 %v7043
    %7148 = vmatprep.subr.bf16.mxu0 0
    %7149 = vmatpush1.bf16.msra.mxu0 %v7044
    %7150 = vmatprep.mubr.bf16.mxu0 %v3402
    %7151 = vmatmul.mubr.bf16.gmra.mrb[0].mxu0 %v3401
    %v7152 = vpop.f32.mrb[0].mxu0
    %v7153 = vadd.f32 %v7112, %v7152
    %v7154 = vpop.f32.mrb[0].mxu0
    %v7155 = vpop.f32.mrb[0].mxu0
    %v7156 = vadd.f32 %v7115, %v7155
    %v7157 = vpop.f32.mrb[0].mxu0
    %7158 = vdwg.mxu0
    %v7159 = vadd.f32 %v6818, %v7153
    %v7160 = vadd.f32 %v6819, %v7156
    %s7161 = scalar_lea.vmem %s3, 2816
    %v7162 = vld [vmem:[%s7161] sm:$0xf]
    %v7163 = vld [vmem:[%s7161 + $0x4] sm:$0xf]
    %v7164 = vld [vmem:[%s7161 + $0x8] sm:$0xf]
    %v7165 = vld [vmem:[%s7161 + $0xc] sm:$0xf]
    %v7166 = vld [vmem:[%s7161 + $0x10] sm:$0xf]
    %v7167 = vld [vmem:[%s7161 + $0x14] sm:$0xf]
    %v7168 = vld [vmem:[%s7161 + $0x18] sm:$0xf]
    %v7169 = vld [vmem:[%s7161 + $0x1c] sm:$0xf]
    %v7170 = vld [vmem:[%s7161 + $0x20] sm:$0xf]
    %v7171 = vld [vmem:[%s7161 + $0x24] sm:$0xf]
    %v7172 = vld [vmem:[%s7161 + $0x28] sm:$0xf]
    %v7173 = vld [vmem:[%s7161 + $0x2c] sm:$0xf]
    %v7174 = vld [vmem:[%s7161 + $0x30] sm:$0xf]
    %v7175 = vld [vmem:[%s7161 + $0x34] sm:$0xf]
    %v7176 = vld [vmem:[%s7161 + $0x38] sm:$0xf]
    %v7177 = vld [vmem:[%s7161 + $0x3c] sm:$0xf]
    %v7178 = vld [vmem:[%s7161 + $0x40] sm:$0xf]
    %v7179 = vld [vmem:[%s7161 + $0x44] sm:$0xf]
    %v7180 = vld [vmem:[%s7161 + $0x48] sm:$0xf]
    %v7181 = vld [vmem:[%s7161 + $0x4c] sm:$0xf]
    %v7182 = vld [vmem:[%s7161 + $0x50] sm:$0xf]
    %v7183 = vld [vmem:[%s7161 + $0x54] sm:$0xf]
    %v7184 = vld [vmem:[%s7161 + $0x58] sm:$0xf]
    %v7185 = vld [vmem:[%s7161 + $0x5c] sm:$0xf]
    %v7186 = vld [vmem:[%s7161 + $0x60] sm:$0xf]
    %v7187 = vld [vmem:[%s7161 + $0x64] sm:$0xf]
    %v7188 = vld [vmem:[%s7161 + $0x68] sm:$0xf]
    %v7189 = vld [vmem:[%s7161 + $0x6c] sm:$0xf]
    %v7190 = vld [vmem:[%s7161 + $0x70] sm:$0xf]
    %v7191 = vld [vmem:[%s7161 + $0x74] sm:$0xf]
    %v7192 = vld [vmem:[%s7161 + $0x78] sm:$0xf]
    %v7193 = vld [vmem:[%s7161 + $0x7c] sm:$0xf]
    %v7194 = vld [vmem:[%s7161 + $0x80] sm:$0xf]
    %v7195 = vld [vmem:[%s7161 + $0x84] sm:$0xf]
    %v7196 = vld [vmem:[%s7161 + $0x88] sm:$0xf]
    %v7197 = vld [vmem:[%s7161 + $0x8c] sm:$0xf]
    %v7198 = vld [vmem:[%s7161 + $0x90] sm:$0xf]
    %v7199 = vld [vmem:[%s7161 + $0x94] sm:$0xf]
    %v7200 = vld [vmem:[%s7161 + $0x98] sm:$0xf]
    %v7201 = vld [vmem:[%s7161 + $0x9c] sm:$0xf]
    %v7202 = vld [vmem:[%s7161 + $0xa0] sm:$0xf]
    %v7203 = vld [vmem:[%s7161 + $0xa4] sm:$0xf]
    %v7204 = vld [vmem:[%s7161 + $0xa8] sm:$0xf]
    %v7205 = vld [vmem:[%s7161 + $0xac] sm:$0xf]
    %v7206 = vld [vmem:[%s7161 + $0xb0] sm:$0xf]
    %v7207 = vld [vmem:[%s7161 + $0xb4] sm:$0xf]
    %v7208 = vld [vmem:[%s7161 + $0xb8] sm:$0xf]
    %v7209 = vld [vmem:[%s7161 + $0xbc] sm:$0xf]
    %v7210 = vld [vmem:[%s7161 + $0xc0] sm:$0xf]
    %v7211 = vld [vmem:[%s7161 + $0xc4] sm:$0xf]
    %v7212 = vld [vmem:[%s7161 + $0xc8] sm:$0xf]
    %v7213 = vld [vmem:[%s7161 + $0xcc] sm:$0xf]
    %v7214 = vld [vmem:[%s7161 + $0xd0] sm:$0xf]
    %v7215 = vld [vmem:[%s7161 + $0xd4] sm:$0xf]
    %v7216 = vld [vmem:[%s7161 + $0xd8] sm:$0xf]
    %v7217 = vld [vmem:[%s7161 + $0xdc] sm:$0xf]
    %v7218 = vld [vmem:[%s7161 + $0xe0] sm:$0xf]
    %v7219 = vld [vmem:[%s7161 + $0xe4] sm:$0xf]
    %v7220 = vld [vmem:[%s7161 + $0xe8] sm:$0xf]
    %v7221 = vld [vmem:[%s7161 + $0xec] sm:$0xf]
    %v7222 = vld [vmem:[%s7161 + $0xf0] sm:$0xf]
    %v7223 = vld [vmem:[%s7161 + $0xf4] sm:$0xf]
    %v7224 = vld [vmem:[%s7161 + $0xf8] sm:$0xf]
    %v7225 = vld [vmem:[%s7161 + $0xfc] sm:$0xf]
    %v7290 = vunpack.c.l.b16 %v7162
    %v7291 = vunpack.c.l.b16 %v7163
    %v7292 = vunpack.c.l.b16 %v7164
    %v7293 = vunpack.c.l.b16 %v7165
    %v7294 = vunpack.c.l.b16 %v7166
    %v7295 = vunpack.c.l.b16 %v7167
    %v7296 = vunpack.c.l.b16 %v7168
    %v7297 = vunpack.c.l.b16 %v7169
    %v7298 = vunpack.c.l.b16 %v7170
    %v7299 = vunpack.c.l.b16 %v7171
    %v7300 = vunpack.c.l.b16 %v7172
    %v7301 = vunpack.c.l.b16 %v7173
    %v7302 = vunpack.c.l.b16 %v7174
    %v7303 = vunpack.c.l.b16 %v7175
    %v7304 = vunpack.c.l.b16 %v7176
    %v7305 = vunpack.c.l.b16 %v7177
    %v7306 = vunpack.c.l.b16 %v7178
    %v7307 = vunpack.c.l.b16 %v7179
    %v7308 = vunpack.c.l.b16 %v7180
    %v7309 = vunpack.c.l.b16 %v7181
    %v7310 = vunpack.c.l.b16 %v7182
    %v7311 = vunpack.c.l.b16 %v7183
    %v7312 = vunpack.c.l.b16 %v7184
    %v7313 = vunpack.c.l.b16 %v7185
    %v7314 = vunpack.c.l.b16 %v7186
    %v7315 = vunpack.c.l.b16 %v7187
    %v7316 = vunpack.c.l.b16 %v7188
    %v7317 = vunpack.c.l.b16 %v7189
    %v7318 = vunpack.c.l.b16 %v7190
    %v7319 = vunpack.c.l.b16 %v7191
    %v7320 = vunpack.c.l.b16 %v7192
    %v7321 = vunpack.c.l.b16 %v7193
    %v7322 = vunpack.c.l.b16 %v7194
    %v7323 = vunpack.c.l.b16 %v7195
    %v7324 = vunpack.c.l.b16 %v7196
    %v7325 = vunpack.c.l.b16 %v7197
    %v7326 = vunpack.c.l.b16 %v7198
    %v7327 = vunpack.c.l.b16 %v7199
    %v7328 = vunpack.c.l.b16 %v7200
    %v7329 = vunpack.c.l.b16 %v7201
    %v7330 = vunpack.c.l.b16 %v7202
    %v7331 = vunpack.c.l.b16 %v7203
    %v7332 = vunpack.c.l.b16 %v7204
    %v7333 = vunpack.c.l.b16 %v7205
    %v7334 = vunpack.c.l.b16 %v7206
    %v7335 = vunpack.c.l.b16 %v7207
    %v7336 = vunpack.c.l.b16 %v7208
    %v7337 = vunpack.c.l.b16 %v7209
    %v7338 = vunpack.c.l.b16 %v7210
    %v7339 = vunpack.c.l.b16 %v7211
    %v7340 = vunpack.c.l.b16 %v7212
    %v7341 = vunpack.c.l.b16 %v7213
    %v7342 = vunpack.c.l.b16 %v7214
    %v7343 = vunpack.c.l.b16 %v7215
    %v7344 = vunpack.c.l.b16 %v7216
    %v7345 = vunpack.c.l.b16 %v7217
    %v7346 = vunpack.c.l.b16 %v7218
    %v7347 = vunpack.c.l.b16 %v7219
    %v7348 = vunpack.c.l.b16 %v7220
    %v7349 = vunpack.c.l.b16 %v7221
    %v7350 = vunpack.c.l.b16 %v7222
    %v7351 = vunpack.c.l.b16 %v7223
    %v7352 = vunpack.c.l.b16 %v7224
    %v7353 = vunpack.c.l.b16 %v7225
    %v7354 = vpack.c.b16 %v7291, %v7290
    %v7355 = vpack.c.b16 %v7293, %v7292
    %v7356 = vpack.c.b16 %v7295, %v7294
    %v7357 = vpack.c.b16 %v7297, %v7296
    %v7358 = vpack.c.b16 %v7299, %v7298
    %v7359 = vpack.c.b16 %v7301, %v7300
    %v7360 = vpack.c.b16 %v7303, %v7302
    %v7361 = vpack.c.b16 %v7305, %v7304
    %v7362 = vpack.c.b16 %v7307, %v7306
    %v7363 = vpack.c.b16 %v7309, %v7308
    %v7364 = vpack.c.b16 %v7311, %v7310
    %v7365 = vpack.c.b16 %v7313, %v7312
    %v7366 = vpack.c.b16 %v7315, %v7314
    %v7367 = vpack.c.b16 %v7317, %v7316
    %v7368 = vpack.c.b16 %v7319, %v7318
    %v7369 = vpack.c.b16 %v7321, %v7320
    %v7370 = vpack.c.b16 %v7323, %v7322
    %v7371 = vpack.c.b16 %v7325, %v7324
    %v7372 = vpack.c.b16 %v7327, %v7326
    %v7373 = vpack.c.b16 %v7329, %v7328
    %v7374 = vpack.c.b16 %v7331, %v7330
    %v7375 = vpack.c.b16 %v7333, %v7332
    %v7376 = vpack.c.b16 %v7335, %v7334
    %v7377 = vpack.c.b16 %v7337, %v7336
    %v7378 = vpack.c.b16 %v7339, %v7338
    %v7379 = vpack.c.b16 %v7341, %v7340
    %v7380 = vpack.c.b16 %v7343, %v7342
    %v7381 = vpack.c.b16 %v7345, %v7344
    %v7382 = vpack.c.b16 %v7347, %v7346
    %v7383 = vpack.c.b16 %v7349, %v7348
    %v7384 = vpack.c.b16 %v7351, %v7350
    %v7385 = vpack.c.b16 %v7353, %v7352
    %7418 = vmatprep.subr.bf16.mxu0 0
    %7419 = vmatpush1.bf16.msra.mxu0 %v7354
    %7420 = vmatprep.subr.bf16.mxu0 0
    %7421 = vmatpush1.bf16.msra.mxu0 %v7355
    %7422 = vmatprep.subr.bf16.mxu0 0
    %7423 = vmatpush1.bf16.msra.mxu0 %v7356
    %7424 = vmatprep.subr.bf16.mxu0 0
    %7425 = vmatpush1.bf16.msra.mxu0 %v7357
    %7426 = vmatprep.subr.bf16.mxu0 0
    %7427 = vmatpush1.bf16.msra.mxu0 %v7358
    %7428 = vmatprep.subr.bf16.mxu0 0
    %7429 = vmatpush1.bf16.msra.mxu0 %v7359
    %7430 = vmatprep.subr.bf16.mxu0 0
    %7431 = vmatpush1.bf16.msra.mxu0 %v7360
    %7432 = vmatprep.subr.bf16.mxu0 0
    %7433 = vmatpush1.bf16.msra.mxu0 %v7361
    %7434 = vmatprep.subr.bf16.mxu0 0
    %7435 = vmatpush1.bf16.msra.mxu0 %v7362
    %7436 = vmatprep.subr.bf16.mxu0 0
    %7437 = vmatpush1.bf16.msra.mxu0 %v7363
    %7438 = vmatprep.subr.bf16.mxu0 0
    %7439 = vmatpush1.bf16.msra.mxu0 %v7364
    %7440 = vmatprep.subr.bf16.mxu0 0
    %7441 = vmatpush1.bf16.msra.mxu0 %v7365
    %7442 = vmatprep.subr.bf16.mxu0 0
    %7443 = vmatpush1.bf16.msra.mxu0 %v7366
    %7444 = vmatprep.subr.bf16.mxu0 0
    %7445 = vmatpush1.bf16.msra.mxu0 %v7367
    %7446 = vmatprep.subr.bf16.mxu0 0
    %7447 = vmatpush1.bf16.msra.mxu0 %v7368
    %7448 = vmatprep.subr.bf16.mxu0 0
    %7449 = vmatpush1.bf16.msra.mxu0 %v7369
    %7450 = vmatprep.mubr.bf16.mxu0 %v3404
    %7451 = vmatmul.mubr.bf16.gmra.mrb[0].mxu0 %v3403
    %v7452 = vpop.f32.mrb[0].mxu0
    %v7453 = vadd.f32 0.0, %v7452
    %v7454 = vpop.f32.mrb[0].mxu0
    %v7455 = vpop.f32.mrb[0].mxu0
    %v7456 = vadd.f32 0.0, %v7455
    %v7457 = vpop.f32.mrb[0].mxu0
    %7458 = vdwg.mxu0
    %7459 = vmatprep.subr.bf16.mxu0 0
    %7460 = vmatpush1.bf16.msra.mxu0 %v7370
    %7461 = vmatprep.subr.bf16.mxu0 0
    %7462 = vmatpush1.bf16.msra.mxu0 %v7371
    %7463 = vmatprep.subr.bf16.mxu0 0
    %7464 = vmatpush1.bf16.msra.mxu0 %v7372
    %7465 = vmatprep.subr.bf16.mxu0 0
    %7466 = vmatpush1.bf16.msra.mxu0 %v7373
    %7467 = vmatprep.subr.bf16.mxu0 0
    %7468 = vmatpush1.bf16.msra.mxu0 %v7374
    %7469 = vmatprep.subr.bf16.mxu0 0
    %7470 = vmatpush1.bf16.msra.mxu0 %v7375
    %7471 = vmatprep.subr.bf16.mxu0 0
    %7472 = vmatpush1.bf16.msra.mxu0 %v7376
    %7473 = vmatprep.subr.bf16.mxu0 0
    %7474 = vmatpush1.bf16.msra.mxu0 %v7377
    %7475 = vmatprep.subr.bf16.mxu0 0
    %7476 = vmatpush1.bf16.msra.mxu0 %v7378
    %7477 = vmatprep.subr.bf16.mxu0 0
    %7478 = vmatpush1.bf16.msra.mxu0 %v7379
    %7479 = vmatprep.subr.bf16.mxu0 0
    %7480 = vmatpush1.bf16.msra.mxu0 %v7380
    %7481 = vmatprep.subr.bf16.mxu0 0
    %7482 = vmatpush1.bf16.msra.mxu0 %v7381
    %7483 = vmatprep.subr.bf16.mxu0 0
    %7484 = vmatpush1.bf16.msra.mxu0 %v7382
    %7485 = vmatprep.subr.bf16.mxu0 0
    %7486 = vmatpush1.bf16.msra.mxu0 %v7383
    %7487 = vmatprep.subr.bf16.mxu0 0
    %7488 = vmatpush1.bf16.msra.mxu0 %v7384
    %7489 = vmatprep.subr.bf16.mxu0 0
    %7490 = vmatpush1.bf16.msra.mxu0 %v7385
    %7491 = vmatprep.mubr.bf16.mxu0 %v3406
    %7492 = vmatmul.mubr.bf16.gmra.mrb[0].mxu0 %v3405
    %v7493 = vpop.f32.mrb[0].mxu0
    %v7494 = vadd.f32 %v7453, %v7493
    %v7495 = vpop.f32.mrb[0].mxu0
    %v7496 = vpop.f32.mrb[0].mxu0
    %v7497 = vadd.f32 %v7456, %v7496
    %v7498 = vpop.f32.mrb[0].mxu0
    %7499 = vdwg.mxu0
    %v7500 = vadd.f32 %v7159, %v7494
    %v7501 = vadd.f32 %v7160, %v7497
    %s7502 = scalar_lea.vmem %s3, 3072
    %v7503 = vld [vmem:[%s7502] sm:$0xf]
    %v7504 = vld [vmem:[%s7502 + $0x4] sm:$0xf]
    %v7505 = vld [vmem:[%s7502 + $0x8] sm:$0xf]
    %v7506 = vld [vmem:[%s7502 + $0xc] sm:$0xf]
    %v7507 = vld [vmem:[%s7502 + $0x10] sm:$0xf]
    %v7508 = vld [vmem:[%s7502 + $0x14] sm:$0xf]
    %v7509 = vld [vmem:[%s7502 + $0x18] sm:$0xf]
    %v7510 = vld [vmem:[%s7502 + $0x1c] sm:$0xf]
    %v7511 = vld [vmem:[%s7502 + $0x20] sm:$0xf]
    %v7512 = vld [vmem:[%s7502 + $0x24] sm:$0xf]
    %v7513 = vld [vmem:[%s7502 + $0x28] sm:$0xf]
    %v7514 = vld [vmem:[%s7502 + $0x2c] sm:$0xf]
    %v7515 = vld [vmem:[%s7502 + $0x30] sm:$0xf]
    %v7516 = vld [vmem:[%s7502 + $0x34] sm:$0xf]
    %v7517 = vld [vmem:[%s7502 + $0x38] sm:$0xf]
    %v7518 = vld [vmem:[%s7502 + $0x3c] sm:$0xf]
    %v7519 = vld [vmem:[%s7502 + $0x40] sm:$0xf]
    %v7520 = vld [vmem:[%s7502 + $0x44] sm:$0xf]
    %v7521 = vld [vmem:[%s7502 + $0x48] sm:$0xf]
    %v7522 = vld [vmem:[%s7502 + $0x4c] sm:$0xf]
    %v7523 = vld [vmem:[%s7502 + $0x50] sm:$0xf]
    %v7524 = vld [vmem:[%s7502 + $0x54] sm:$0xf]
    %v7525 = vld [vmem:[%s7502 + $0x58] sm:$0xf]
    %v7526 = vld [vmem:[%s7502 + $0x5c] sm:$0xf]
    %v7527 = vld [vmem:[%s7502 + $0x60] sm:$0xf]
    %v7528 = vld [vmem:[%s7502 + $0x64] sm:$0xf]
    %v7529 = vld [vmem:[%s7502 + $0x68] sm:$0xf]
    %v7530 = vld [vmem:[%s7502 + $0x6c] sm:$0xf]
    %v7531 = vld [vmem:[%s7502 + $0x70] sm:$0xf]
    %v7532 = vld [vmem:[%s7502 + $0x74] sm:$0xf]
    %v7533 = vld [vmem:[%s7502 + $0x78] sm:$0xf]
    %v7534 = vld [vmem:[%s7502 + $0x7c] sm:$0xf]
    %v7535 = vld [vmem:[%s7502 + $0x80] sm:$0xf]
    %v7536 = vld [vmem:[%s7502 + $0x84] sm:$0xf]
    %v7537 = vld [vmem:[%s7502 + $0x88] sm:$0xf]
    %v7538 = vld [vmem:[%s7502 + $0x8c] sm:$0xf]
    %v7539 = vld [vmem:[%s7502 + $0x90] sm:$0xf]
    %v7540 = vld [vmem:[%s7502 + $0x94] sm:$0xf]
    %v7541 = vld [vmem:[%s7502 + $0x98] sm:$0xf]
    %v7542 = vld [vmem:[%s7502 + $0x9c] sm:$0xf]
    %v7543 = vld [vmem:[%s7502 + $0xa0] sm:$0xf]
    %v7544 = vld [vmem:[%s7502 + $0xa4] sm:$0xf]
    %v7545 = vld [vmem:[%s7502 + $0xa8] sm:$0xf]
    %v7546 = vld [vmem:[%s7502 + $0xac] sm:$0xf]
    %v7547 = vld [vmem:[%s7502 + $0xb0] sm:$0xf]
    %v7548 = vld [vmem:[%s7502 + $0xb4] sm:$0xf]
    %v7549 = vld [vmem:[%s7502 + $0xb8] sm:$0xf]
    %v7550 = vld [vmem:[%s7502 + $0xbc] sm:$0xf]
    %v7551 = vld [vmem:[%s7502 + $0xc0] sm:$0xf]
    %v7552 = vld [vmem:[%s7502 + $0xc4] sm:$0xf]
    %v7553 = vld [vmem:[%s7502 + $0xc8] sm:$0xf]
    %v7554 = vld [vmem:[%s7502 + $0xcc] sm:$0xf]
    %v7555 = vld [vmem:[%s7502 + $0xd0] sm:$0xf]
    %v7556 = vld [vmem:[%s7502 + $0xd4] sm:$0xf]
    %v7557 = vld [vmem:[%s7502 + $0xd8] sm:$0xf]
    %v7558 = vld [vmem:[%s7502 + $0xdc] sm:$0xf]
    %v7559 = vld [vmem:[%s7502 + $0xe0] sm:$0xf]
    %v7560 = vld [vmem:[%s7502 + $0xe4] sm:$0xf]
    %v7561 = vld [vmem:[%s7502 + $0xe8] sm:$0xf]
    %v7562 = vld [vmem:[%s7502 + $0xec] sm:$0xf]
    %v7563 = vld [vmem:[%s7502 + $0xf0] sm:$0xf]
    %v7564 = vld [vmem:[%s7502 + $0xf4] sm:$0xf]
    %v7565 = vld [vmem:[%s7502 + $0xf8] sm:$0xf]
    %v7566 = vld [vmem:[%s7502 + $0xfc] sm:$0xf]
    %v7631 = vunpack.c.l.b16 %v7503
    %v7632 = vunpack.c.l.b16 %v7504
    %v7633 = vunpack.c.l.b16 %v7505
    %v7634 = vunpack.c.l.b16 %v7506
    %v7635 = vunpack.c.l.b16 %v7507
    %v7636 = vunpack.c.l.b16 %v7508
    %v7637 = vunpack.c.l.b16 %v7509
    %v7638 = vunpack.c.l.b16 %v7510
    %v7639 = vunpack.c.l.b16 %v7511
    %v7640 = vunpack.c.l.b16 %v7512
    %v7641 = vunpack.c.l.b16 %v7513
    %v7642 = vunpack.c.l.b16 %v7514
    %v7643 = vunpack.c.l.b16 %v7515
    %v7644 = vunpack.c.l.b16 %v7516
    %v7645 = vunpack.c.l.b16 %v7517
    %v7646 = vunpack.c.l.b16 %v7518
    %v7647 = vunpack.c.l.b16 %v7519
    %v7648 = vunpack.c.l.b16 %v7520
    %v7649 = vunpack.c.l.b16 %v7521
    %v7650 = vunpack.c.l.b16 %v7522
    %v7651 = vunpack.c.l.b16 %v7523
    %v7652 = vunpack.c.l.b16 %v7524
    %v7653 = vunpack.c.l.b16 %v7525
    %v7654 = vunpack.c.l.b16 %v7526
    %v7655 = vunpack.c.l.b16 %v7527
    %v7656 = vunpack.c.l.b16 %v7528
    %v7657 = vunpack.c.l.b16 %v7529
    %v7658 = vunpack.c.l.b16 %v7530
    %v7659 = vunpack.c.l.b16 %v7531
    %v7660 = vunpack.c.l.b16 %v7532
    %v7661 = vunpack.c.l.b16 %v7533
    %v7662 = vunpack.c.l.b16 %v7534
    %v7663 = vunpack.c.l.b16 %v7535
    %v7664 = vunpack.c.l.b16 %v7536
    %v7665 = vunpack.c.l.b16 %v7537
    %v7666 = vunpack.c.l.b16 %v7538
    %v7667 = vunpack.c.l.b16 %v7539
    %v7668 = vunpack.c.l.b16 %v7540
    %v7669 = vunpack.c.l.b16 %v7541
    %v7670 = vunpack.c.l.b16 %v7542
    %v7671 = vunpack.c.l.b16 %v7543
    %v7672 = vunpack.c.l.b16 %v7544
    %v7673 = vunpack.c.l.b16 %v7545
    %v7674 = vunpack.c.l.b16 %v7546
    %v7675 = vunpack.c.l.b16 %v7547
    %v7676 = vunpack.c.l.b16 %v7548
    %v7677 = vunpack.c.l.b16 %v7549
    %v7678 = vunpack.c.l.b16 %v7550
    %v7679 = vunpack.c.l.b16 %v7551
    %v7680 = vunpack.c.l.b16 %v7552
    %v7681 = vunpack.c.l.b16 %v7553
    %v7682 = vunpack.c.l.b16 %v7554
    %v7683 = vunpack.c.l.b16 %v7555
    %v7684 = vunpack.c.l.b16 %v7556
    %v7685 = vunpack.c.l.b16 %v7557
    %v7686 = vunpack.c.l.b16 %v7558
    %v7687 = vunpack.c.l.b16 %v7559
    %v7688 = vunpack.c.l.b16 %v7560
    %v7689 = vunpack.c.l.b16 %v7561
    %v7690 = vunpack.c.l.b16 %v7562
    %v7691 = vunpack.c.l.b16 %v7563
    %v7692 = vunpack.c.l.b16 %v7564
    %v7693 = vunpack.c.l.b16 %v7565
    %v7694 = vunpack.c.l.b16 %v7566
    %v7695 = vpack.c.b16 %v7632, %v7631
    %v7696 = vpack.c.b16 %v7634, %v7633
    %v7697 = vpack.c.b16 %v7636, %v7635
    %v7698 = vpack.c.b16 %v7638, %v7637
    %v7699 = vpack.c.b16 %v7640, %v7639
    %v7700 = vpack.c.b16 %v7642, %v7641
    %v7701 = vpack.c.b16 %v7644, %v7643
    %v7702 = vpack.c.b16 %v7646, %v7645
    %v7703 = vpack.c.b16 %v7648, %v7647
    %v7704 = vpack.c.b16 %v7650, %v7649
    %v7705 = vpack.c.b16 %v7652, %v7651
    %v7706 = vpack.c.b16 %v7654, %v7653
    %v7707 = vpack.c.b16 %v7656, %v7655
    %v7708 = vpack.c.b16 %v7658, %v7657
    %v7709 = vpack.c.b16 %v7660, %v7659
    %v7710 = vpack.c.b16 %v7662, %v7661
    %v7711 = vpack.c.b16 %v7664, %v7663
    %v7712 = vpack.c.b16 %v7666, %v7665
    %v7713 = vpack.c.b16 %v7668, %v7667
    %v7714 = vpack.c.b16 %v7670, %v7669
    %v7715 = vpack.c.b16 %v7672, %v7671
    %v7716 = vpack.c.b16 %v7674, %v7673
    %v7717 = vpack.c.b16 %v7676, %v7675
    %v7718 = vpack.c.b16 %v7678, %v7677
    %v7719 = vpack.c.b16 %v7680, %v7679
    %v7720 = vpack.c.b16 %v7682, %v7681
    %v7721 = vpack.c.b16 %v7684, %v7683
    %v7722 = vpack.c.b16 %v7686, %v7685
    %v7723 = vpack.c.b16 %v7688, %v7687
    %v7724 = vpack.c.b16 %v7690, %v7689
    %v7725 = vpack.c.b16 %v7692, %v7691
    %v7726 = vpack.c.b16 %v7694, %v7693
    %7759 = vmatprep.subr.bf16.mxu0 0
    %7760 = vmatpush1.bf16.msra.mxu0 %v7695
    %7761 = vmatprep.subr.bf16.mxu0 0
    %7762 = vmatpush1.bf16.msra.mxu0 %v7696
    %7763 = vmatprep.subr.bf16.mxu0 0
    %7764 = vmatpush1.bf16.msra.mxu0 %v7697
    %7765 = vmatprep.subr.bf16.mxu0 0
    %7766 = vmatpush1.bf16.msra.mxu0 %v7698
    %7767 = vmatprep.subr.bf16.mxu0 0
    %7768 = vmatpush1.bf16.msra.mxu0 %v7699
    %7769 = vmatprep.subr.bf16.mxu0 0
    %7770 = vmatpush1.bf16.msra.mxu0 %v7700
    %7771 = vmatprep.subr.bf16.mxu0 0
    %7772 = vmatpush1.bf16.msra.mxu0 %v7701
    %7773 = vmatprep.subr.bf16.mxu0 0
    %7774 = vmatpush1.bf16.msra.mxu0 %v7702
    %7775 = vmatprep.subr.bf16.mxu0 0
    %7776 = vmatpush1.bf16.msra.mxu0 %v7703
    %7777 = vmatprep.subr.bf16.mxu0 0
    %7778 = vmatpush1.bf16.msra.mxu0 %v7704
    %7779 = vmatprep.subr.bf16.mxu0 0
    %7780 = vmatpush1.bf16.msra.mxu0 %v7705
    %7781 = vmatprep.subr.bf16.mxu0 0
    %7782 = vmatpush1.bf16.msra.mxu0 %v7706
    %7783 = vmatprep.subr.bf16.mxu0 0
    %7784 = vmatpush1.bf16.msra.mxu0 %v7707
    %7785 = vmatprep.subr.bf16.mxu0 0
    %7786 = vmatpush1.bf16.msra.mxu0 %v7708
    %7787 = vmatprep.subr.bf16.mxu0 0
    %7788 = vmatpush1.bf16.msra.mxu0 %v7709
    %7789 = vmatprep.subr.bf16.mxu0 0
    %7790 = vmatpush1.bf16.msra.mxu0 %v7710
    %7791 = vmatprep.mubr.bf16.mxu0 %v3408
    %7792 = vmatmul.mubr.bf16.gmra.mrb[0].mxu0 %v3407
    %v7793 = vpop.f32.mrb[0].mxu0
    %v7794 = vadd.f32 0.0, %v7793
    %v7795 = vpop.f32.mrb[0].mxu0
    %v7796 = vpop.f32.mrb[0].mxu0
    %v7797 = vadd.f32 0.0, %v7796
    %v7798 = vpop.f32.mrb[0].mxu0
    %7799 = vdwg.mxu0
    %7800 = vmatprep.subr.bf16.mxu0 0
    %7801 = vmatpush1.bf16.msra.mxu0 %v7711
    %7802 = vmatprep.subr.bf16.mxu0 0
    %7803 = vmatpush1.bf16.msra.mxu0 %v7712
    %7804 = vmatprep.subr.bf16.mxu0 0
    %7805 = vmatpush1.bf16.msra.mxu0 %v7713
    %7806 = vmatprep.subr.bf16.mxu0 0
    %7807 = vmatpush1.bf16.msra.mxu0 %v7714
    %7808 = vmatprep.subr.bf16.mxu0 0
    %7809 = vmatpush1.bf16.msra.mxu0 %v7715
    %7810 = vmatprep.subr.bf16.mxu0 0
    %7811 = vmatpush1.bf16.msra.mxu0 %v7716
    %7812 = vmatprep.subr.bf16.mxu0 0
    %7813 = vmatpush1.bf16.msra.mxu0 %v7717
    %7814 = vmatprep.subr.bf16.mxu0 0
    %7815 = vmatpush1.bf16.msra.mxu0 %v7718
    %7816 = vmatprep.subr.bf16.mxu0 0
    %7817 = vmatpush1.bf16.msra.mxu0 %v7719
    %7818 = vmatprep.subr.bf16.mxu0 0
    %7819 = vmatpush1.bf16.msra.mxu0 %v7720
    %7820 = vmatprep.subr.bf16.mxu0 0
    %7821 = vmatpush1.bf16.msra.mxu0 %v7721
    %7822 = vmatprep.subr.bf16.mxu0 0
    %7823 = vmatpush1.bf16.msra.mxu0 %v7722
    %7824 = vmatprep.subr.bf16.mxu0 0
    %7825 = vmatpush1.bf16.msra.mxu0 %v7723
    %7826 = vmatprep.subr.bf16.mxu0 0
    %7827 = vmatpush1.bf16.msra.mxu0 %v7724
    %7828 = vmatprep.subr.bf16.mxu0 0
    %7829 = vmatpush1.bf16.msra.mxu0 %v7725
    %7830 = vmatprep.subr.bf16.mxu0 0
    %7831 = vmatpush1.bf16.msra.mxu0 %v7726
    %7832 = vmatprep.mubr.bf16.mxu0 %v3410
    %7833 = vmatmul.mubr.bf16.gmra.mrb[0].mxu0 %v3409
    %v7834 = vpop.f32.mrb[0].mxu0
    %v7835 = vadd.f32 %v7794, %v7834
    %v7836 = vpop.f32.mrb[0].mxu0
    %v7837 = vpop.f32.mrb[0].mxu0
    %v7838 = vadd.f32 %v7797, %v7837
    %v7839 = vpop.f32.mrb[0].mxu0
    %7840 = vdwg.mxu0
    %v7841 = vadd.f32 %v7500, %v7835
    %v7842 = vadd.f32 %v7501, %v7838
    %s7843 = scalar_lea.vmem %s3, 3328
    %v7844 = vld [vmem:[%s7843] sm:$0xf]
    %v7845 = vld [vmem:[%s7843 + $0x4] sm:$0xf]
    %v7846 = vld [vmem:[%s7843 + $0x8] sm:$0xf]
    %v7847 = vld [vmem:[%s7843 + $0xc] sm:$0xf]
    %v7848 = vld [vmem:[%s7843 + $0x10] sm:$0xf]
    %v7849 = vld [vmem:[%s7843 + $0x14] sm:$0xf]
    %v7850 = vld [vmem:[%s7843 + $0x18] sm:$0xf]
    %v7851 = vld [vmem:[%s7843 + $0x1c] sm:$0xf]
    %v7852 = vld [vmem:[%s7843 + $0x20] sm:$0xf]
    %v7853 = vld [vmem:[%s7843 + $0x24] sm:$0xf]
    %v7854 = vld [vmem:[%s7843 + $0x28] sm:$0xf]
    %v7855 = vld [vmem:[%s7843 + $0x2c] sm:$0xf]
    %v7856 = vld [vmem:[%s7843 + $0x30] sm:$0xf]
    %v7857 = vld [vmem:[%s7843 + $0x34] sm:$0xf]
    %v7858 = vld [vmem:[%s7843 + $0x38] sm:$0xf]
    %v7859 = vld [vmem:[%s7843 + $0x3c] sm:$0xf]
    %v7860 = vld [vmem:[%s7843 + $0x40] sm:$0xf]
    %v7861 = vld [vmem:[%s7843 + $0x44] sm:$0xf]
    %v7862 = vld [vmem:[%s7843 + $0x48] sm:$0xf]
    %v7863 = vld [vmem:[%s7843 + $0x4c] sm:$0xf]
    %v7864 = vld [vmem:[%s7843 + $0x50] sm:$0xf]
    %v7865 = vld [vmem:[%s7843 + $0x54] sm:$0xf]
    %v7866 = vld [vmem:[%s7843 + $0x58] sm:$0xf]
    %v7867 = vld [vmem:[%s7843 + $0x5c] sm:$0xf]
    %v7868 = vld [vmem:[%s7843 + $0x60] sm:$0xf]
    %v7869 = vld [vmem:[%s7843 + $0x64] sm:$0xf]
    %v7870 = vld [vmem:[%s7843 + $0x68] sm:$0xf]
    %v7871 = vld [vmem:[%s7843 + $0x6c] sm:$0xf]
    %v7872 = vld [vmem:[%s7843 + $0x70] sm:$0xf]
    %v7873 = vld [vmem:[%s7843 + $0x74] sm:$0xf]
    %v7874 = vld [vmem:[%s7843 + $0x78] sm:$0xf]
    %v7875 = vld [vmem:[%s7843 + $0x7c] sm:$0xf]
    %v7876 = vld [vmem:[%s7843 + $0x80] sm:$0xf]
    %v7877 = vld [vmem:[%s7843 + $0x84] sm:$0xf]
    %v7878 = vld [vmem:[%s7843 + $0x88] sm:$0xf]
    %v7879 = vld [vmem:[%s7843 + $0x8c] sm:$0xf]
    %v7880 = vld [vmem:[%s7843 + $0x90] sm:$0xf]
    %v7881 = vld [vmem:[%s7843 + $0x94] sm:$0xf]
    %v7882 = vld [vmem:[%s7843 + $0x98] sm:$0xf]
    %v7883 = vld [vmem:[%s7843 + $0x9c] sm:$0xf]
    %v7884 = vld [vmem:[%s7843 + $0xa0] sm:$0xf]
    %v7885 = vld [vmem:[%s7843 + $0xa4] sm:$0xf]
    %v7886 = vld [vmem:[%s7843 + $0xa8] sm:$0xf]
    %v7887 = vld [vmem:[%s7843 + $0xac] sm:$0xf]
    %v7888 = vld [vmem:[%s7843 + $0xb0] sm:$0xf]
    %v7889 = vld [vmem:[%s7843 + $0xb4] sm:$0xf]
    %v7890 = vld [vmem:[%s7843 + $0xb8] sm:$0xf]
    %v7891 = vld [vmem:[%s7843 + $0xbc] sm:$0xf]
    %v7892 = vld [vmem:[%s7843 + $0xc0] sm:$0xf]
    %v7893 = vld [vmem:[%s7843 + $0xc4] sm:$0xf]
    %v7894 = vld [vmem:[%s7843 + $0xc8] sm:$0xf]
    %v7895 = vld [vmem:[%s7843 + $0xcc] sm:$0xf]
    %v7896 = vld [vmem:[%s7843 + $0xd0] sm:$0xf]
    %v7897 = vld [vmem:[%s7843 + $0xd4] sm:$0xf]
    %v7898 = vld [vmem:[%s7843 + $0xd8] sm:$0xf]
    %v7899 = vld [vmem:[%s7843 + $0xdc] sm:$0xf]
    %v7900 = vld [vmem:[%s7843 + $0xe0] sm:$0xf]
    %v7901 = vld [vmem:[%s7843 + $0xe4] sm:$0xf]
    %v7902 = vld [vmem:[%s7843 + $0xe8] sm:$0xf]
    %v7903 = vld [vmem:[%s7843 + $0xec] sm:$0xf]
    %v7904 = vld [vmem:[%s7843 + $0xf0] sm:$0xf]
    %v7905 = vld [vmem:[%s7843 + $0xf4] sm:$0xf]
    %v7906 = vld [vmem:[%s7843 + $0xf8] sm:$0xf]
    %v7907 = vld [vmem:[%s7843 + $0xfc] sm:$0xf]
    %v7972 = vunpack.c.l.b16 %v7844
    %v7973 = vunpack.c.l.b16 %v7845
    %v7974 = vunpack.c.l.b16 %v7846
    %v7975 = vunpack.c.l.b16 %v7847
    %v7976 = vunpack.c.l.b16 %v7848
    %v7977 = vunpack.c.l.b16 %v7849
    %v7978 = vunpack.c.l.b16 %v7850
    %v7979 = vunpack.c.l.b16 %v7851
    %v7980 = vunpack.c.l.b16 %v7852
    %v7981 = vunpack.c.l.b16 %v7853
    %v7982 = vunpack.c.l.b16 %v7854
    %v7983 = vunpack.c.l.b16 %v7855
    %v7984 = vunpack.c.l.b16 %v7856
    %v7985 = vunpack.c.l.b16 %v7857
    %v7986 = vunpack.c.l.b16 %v7858
    %v7987 = vunpack.c.l.b16 %v7859
    %v7988 = vunpack.c.l.b16 %v7860
    %v7989 = vunpack.c.l.b16 %v7861
    %v7990 = vunpack.c.l.b16 %v7862
    %v7991 = vunpack.c.l.b16 %v7863
    %v7992 = vunpack.c.l.b16 %v7864
    %v7993 = vunpack.c.l.b16 %v7865
    %v7994 = vunpack.c.l.b16 %v7866
    %v7995 = vunpack.c.l.b16 %v7867
    %v7996 = vunpack.c.l.b16 %v7868
    %v7997 = vunpack.c.l.b16 %v7869
    %v7998 = vunpack.c.l.b16 %v7870
    %v7999 = vunpack.c.l.b16 %v7871
    %v8000 = vunpack.c.l.b16 %v7872
    %v8001 = vunpack.c.l.b16 %v7873
    %v8002 = vunpack.c.l.b16 %v7874
    %v8003 = vunpack.c.l.b16 %v7875
    %v8004 = vunpack.c.l.b16 %v7876
    %v8005 = vunpack.c.l.b16 %v7877
    %v8006 = vunpack.c.l.b16 %v7878
    %v8007 = vunpack.c.l.b16 %v7879
    %v8008 = vunpack.c.l.b16 %v7880
    %v8009 = vunpack.c.l.b16 %v7881
    %v8010 = vunpack.c.l.b16 %v7882
    %v8011 = vunpack.c.l.b16 %v7883
    %v8012 = vunpack.c.l.b16 %v7884
    %v8013 = vunpack.c.l.b16 %v7885
    %v8014 = vunpack.c.l.b16 %v7886
    %v8015 = vunpack.c.l.b16 %v7887
    %v8016 = vunpack.c.l.b16 %v7888
    %v8017 = vunpack.c.l.b16 %v7889
    %v8018 = vunpack.c.l.b16 %v7890
    %v8019 = vunpack.c.l.b16 %v7891
    %v8020 = vunpack.c.l.b16 %v7892
    %v8021 = vunpack.c.l.b16 %v7893
    %v8022 = vunpack.c.l.b16 %v7894
    %v8023 = vunpack.c.l.b16 %v7895
    %v8024 = vunpack.c.l.b16 %v7896
    %v8025 = vunpack.c.l.b16 %v7897
    %v8026 = vunpack.c.l.b16 %v7898
    %v8027 = vunpack.c.l.b16 %v7899
    %v8028 = vunpack.c.l.b16 %v7900
    %v8029 = vunpack.c.l.b16 %v7901
    %v8030 = vunpack.c.l.b16 %v7902
    %v8031 = vunpack.c.l.b16 %v7903
    %v8032 = vunpack.c.l.b16 %v7904
    %v8033 = vunpack.c.l.b16 %v7905
    %v8034 = vunpack.c.l.b16 %v7906
    %v8035 = vunpack.c.l.b16 %v7907
    %v8036 = vpack.c.b16 %v7973, %v7972
    %v8037 = vpack.c.b16 %v7975, %v7974
    %v8038 = vpack.c.b16 %v7977, %v7976
    %v8039 = vpack.c.b16 %v7979, %v7978
    %v8040 = vpack.c.b16 %v7981, %v7980
    %v8041 = vpack.c.b16 %v7983, %v7982
    %v8042 = vpack.c.b16 %v7985, %v7984
    %v8043 = vpack.c.b16 %v7987, %v7986
    %v8044 = vpack.c.b16 %v7989, %v7988
    %v8045 = vpack.c.b16 %v7991, %v7990
    %v8046 = vpack.c.b16 %v7993, %v7992
    %v8047 = vpack.c.b16 %v7995, %v7994
    %v8048 = vpack.c.b16 %v7997, %v7996
    %v8049 = vpack.c.b16 %v7999, %v7998
    %v8050 = vpack.c.b16 %v8001, %v8000
    %v8051 = vpack.c.b16 %v8003, %v8002
    %v8052 = vpack.c.b16 %v8005, %v8004
    %v8053 = vpack.c.b16 %v8007, %v8006
    %v8054 = vpack.c.b16 %v8009, %v8008
    %v8055 = vpack.c.b16 %v8011, %v8010
    %v8056 = vpack.c.b16 %v8013, %v8012
    %v8057 = vpack.c.b16 %v8015, %v8014
    %v8058 = vpack.c.b16 %v8017, %v8016
    %v8059 = vpack.c.b16 %v8019, %v8018
    %v8060 = vpack.c.b16 %v8021, %v8020
    %v8061 = vpack.c.b16 %v8023, %v8022
    %v8062 = vpack.c.b16 %v8025, %v8024
    %v8063 = vpack.c.b16 %v8027, %v8026
    %v8064 = vpack.c.b16 %v8029, %v8028
    %v8065 = vpack.c.b16 %v8031, %v8030
    %v8066 = vpack.c.b16 %v8033, %v8032
    %v8067 = vpack.c.b16 %v8035, %v8034
    %8100 = vmatprep.subr.bf16.mxu0 0
    %8101 = vmatpush1.bf16.msra.mxu0 %v8036
    %8102 = vmatprep.subr.bf16.mxu0 0
    %8103 = vmatpush1.bf16.msra.mxu0 %v8037
    %8104 = vmatprep.subr.bf16.mxu0 0
    %8105 = vmatpush1.bf16.msra.mxu0 %v8038
    %8106 = vmatprep.subr.bf16.mxu0 0
    %8107 = vmatpush1.bf16.msra.mxu0 %v8039
    %8108 = vmatprep.subr.bf16.mxu0 0
    %8109 = vmatpush1.bf16.msra.mxu0 %v8040
    %8110 = vmatprep.subr.bf16.mxu0 0
    %8111 = vmatpush1.bf16.msra.mxu0 %v8041
    %8112 = vmatprep.subr.bf16.mxu0 0
    %8113 = vmatpush1.bf16.msra.mxu0 %v8042
    %8114 = vmatprep.subr.bf16.mxu0 0
    %8115 = vmatpush1.bf16.msra.mxu0 %v8043
    %8116 = vmatprep.subr.bf16.mxu0 0
    %8117 = vmatpush1.bf16.msra.mxu0 %v8044
    %8118 = vmatprep.subr.bf16.mxu0 0
    %8119 = vmatpush1.bf16.msra.mxu0 %v8045
    %8120 = vmatprep.subr.bf16.mxu0 0
    %8121 = vmatpush1.bf16.msra.mxu0 %v8046
    %8122 = vmatprep.subr.bf16.mxu0 0
    %8123 = vmatpush1.bf16.msra.mxu0 %v8047
    %8124 = vmatprep.subr.bf16.mxu0 0
    %8125 = vmatpush1.bf16.msra.mxu0 %v8048
    %8126 = vmatprep.subr.bf16.mxu0 0
    %8127 = vmatpush1.bf16.msra.mxu0 %v8049
    %8128 = vmatprep.subr.bf16.mxu0 0
    %8129 = vmatpush1.bf16.msra.mxu0 %v8050
    %8130 = vmatprep.subr.bf16.mxu0 0
    %8131 = vmatpush1.bf16.msra.mxu0 %v8051
    %8132 = vmatprep.mubr.bf16.mxu0 %v3412
    %8133 = vmatmul.mubr.bf16.gmra.mrb[0].mxu0 %v3411
    %v8134 = vpop.f32.mrb[0].mxu0
    %v8135 = vadd.f32 0.0, %v8134
    %v8136 = vpop.f32.mrb[0].mxu0
    %v8137 = vpop.f32.mrb[0].mxu0
    %v8138 = vadd.f32 0.0, %v8137
    %v8139 = vpop.f32.mrb[0].mxu0
    %8140 = vdwg.mxu0
    %8141 = vmatprep.subr.bf16.mxu0 0
    %8142 = vmatpush1.bf16.msra.mxu0 %v8052
    %8143 = vmatprep.subr.bf16.mxu0 0
    %8144 = vmatpush1.bf16.msra.mxu0 %v8053
    %8145 = vmatprep.subr.bf16.mxu0 0
    %8146 = vmatpush1.bf16.msra.mxu0 %v8054
    %8147 = vmatprep.subr.bf16.mxu0 0
    %8148 = vmatpush1.bf16.msra.mxu0 %v8055
    %8149 = vmatprep.subr.bf16.mxu0 0
    %8150 = vmatpush1.bf16.msra.mxu0 %v8056
    %8151 = vmatprep.subr.bf16.mxu0 0
    %8152 = vmatpush1.bf16.msra.mxu0 %v8057
    %8153 = vmatprep.subr.bf16.mxu0 0
    %8154 = vmatpush1.bf16.msra.mxu0 %v8058
    %8155 = vmatprep.subr.bf16.mxu0 0
    %8156 = vmatpush1.bf16.msra.mxu0 %v8059
    %8157 = vmatprep.subr.bf16.mxu0 0
    %8158 = vmatpush1.bf16.msra.mxu0 %v8060
    %8159 = vmatprep.subr.bf16.mxu0 0
    %8160 = vmatpush1.bf16.msra.mxu0 %v8061
    %8161 = vmatprep.subr.bf16.mxu0 0
    %8162 = vmatpush1.bf16.msra.mxu0 %v8062
    %8163 = vmatprep.subr.bf16.mxu0 0
    %8164 = vmatpush1.bf16.msra.mxu0 %v8063
    %8165 = vmatprep.subr.bf16.mxu0 0
    %8166 = vmatpush1.bf16.msra.mxu0 %v8064
    %8167 = vmatprep.subr.bf16.mxu0 0
    %8168 = vmatpush1.bf16.msra.mxu0 %v8065
    %8169 = vmatprep.subr.bf16.mxu0 0
    %8170 = vmatpush1.bf16.msra.mxu0 %v8066
    %8171 = vmatprep.subr.bf16.mxu0 0
    %8172 = vmatpush1.bf16.msra.mxu0 %v8067
    %8173 = vmatprep.mubr.bf16.mxu0 %v3414
    %8174 = vmatmul.mubr.bf16.gmra.mrb[0].mxu0 %v3413
    %v8175 = vpop.f32.mrb[0].mxu0
    %v8176 = vadd.f32 %v8135, %v8175
    %v8177 = vpop.f32.mrb[0].mxu0
    %v8178 = vpop.f32.mrb[0].mxu0
    %v8179 = vadd.f32 %v8138, %v8178
    %v8180 = vpop.f32.mrb[0].mxu0
    %8181 = vdwg.mxu0
    %v8182 = vadd.f32 %v7841, %v8176
    %v8183 = vadd.f32 %v7842, %v8179
    %v8184 = vld [vmem:[%s4] sm:$0x1]
    %v8186 = vlaneseq
    %v8187 = vshrl.u32 %v8186, 7
    %v8188 = vsub.s32 0, %v8187
    %v8189 = vrot.slane %v8184, %v8188
    %v8191 = vadd.f32 %v8182, %v8189
    %v8192 = vadd.f32 %v8183, %v8189
    %v8193 = vmax.f32 %v8191, -60.0
    %v8194 = vmax.f32 %v8192, -60.0
    %v8195 = vmin.f32 %v8193, 60.0
    %v8196 = vmin.f32 %v8194, 60.0
    %v8197 = vsub.f32 0.0, %v8195
    %v8198 = vsub.f32 0.0, %v8196
    %v8199 = vmul.f32 %v8197, 1.442695
    %v8200 = vpow.pop %v8199
    %v8201 = vmul.f32 %v8198, 1.442695
    %v8202 = vpow.pop %v8201
    %v8203 = vadd.f32 %v8200, 1.0
    %v8204 = vadd.f32 %v8202, 1.0
    %v8205 = vrcp.pop %v8203
    %v8206 = vrcp.pop %v8204
    %v8207 = vpack.c.bf16 %v8206, %v8205
    %v8208 = vld [vmem:[%s5] sm:$0xf]
    %v8209 = vld [vmem:[%s5 + $0x4] sm:$0xf]
    %v8210 = vld [vmem:[%s5 + $0x8] sm:$0xf]
    %v8211 = vld [vmem:[%s5 + $0xc] sm:$0xf]
    %v8212 = vld [vmem:[%s5 + $0x10] sm:$0xf]
    %v8213 = vld [vmem:[%s5 + $0x14] sm:$0xf]
    %v8214 = vld [vmem:[%s5 + $0x18] sm:$0xf]
    %v8215 = vld [vmem:[%s5 + $0x1c] sm:$0xf]
    %v8216 = vld [vmem:[%s5 + $0x20] sm:$0xf]
    %v8217 = vld [vmem:[%s5 + $0x24] sm:$0xf]
    %v8218 = vld [vmem:[%s5 + $0x28] sm:$0xf]
    %v8219 = vld [vmem:[%s5 + $0x2c] sm:$0xf]
    %v8220 = vld [vmem:[%s5 + $0x30] sm:$0xf]
    %v8221 = vld [vmem:[%s5 + $0x34] sm:$0xf]
    %v8222 = vld [vmem:[%s5 + $0x38] sm:$0xf]
    %v8223 = vld [vmem:[%s5 + $0x3c] sm:$0xf]
    %v8224 = vld [vmem:[%s6] sm:$0x1]
    %v8226 = vlaneseq
    %v8227 = vshrl.u32 %v8226, 7
    %v8228 = vsub.s32 0, %v8227
    %v8229 = vrot.slane %v8224, %v8228
    %v8247 = vunpack.c.l.b16 %v8208
    %v8248 = vunpack.c.l.b16 %v8209
    %v8249 = vunpack.c.l.b16 %v8210
    %v8250 = vunpack.c.l.b16 %v8211
    %v8251 = vunpack.c.l.b16 %v8212
    %v8252 = vunpack.c.l.b16 %v8213
    %v8253 = vunpack.c.l.b16 %v8214
    %v8254 = vunpack.c.l.b16 %v8215
    %v8255 = vunpack.c.l.b16 %v8216
    %v8256 = vunpack.c.l.b16 %v8217
    %v8257 = vunpack.c.l.b16 %v8218
    %v8258 = vunpack.c.l.b16 %v8219
    %v8259 = vunpack.c.l.b16 %v8220
    %v8260 = vunpack.c.l.b16 %v8221
    %v8261 = vunpack.c.l.b16 %v8222
    %v8262 = vunpack.c.l.b16 %v8223
    %v8263 = vpack.c.b16 %v8248, %v8247
    %v8264 = vpack.c.b16 %v8250, %v8249
    %v8265 = vpack.c.b16 %v8252, %v8251
    %v8266 = vpack.c.b16 %v8254, %v8253
    %v8267 = vpack.c.b16 %v8256, %v8255
    %v8268 = vpack.c.b16 %v8258, %v8257
    %v8269 = vpack.c.b16 %v8260, %v8259
    %v8270 = vpack.c.b16 %v8262, %v8261
    %8279 = vmatprep.subr.bf16.mxu0 0
    %8280 = vmatpush1.bf16.msra.mxu0 %v8263
    %8281 = vmatprep.subr.bf16.mxu0 0
    %8282 = vmatpush1.bf16.msra.mxu0 %v8264
    %8283 = vmatprep.subr.bf16.mxu0 0
    %8284 = vmatpush1.bf16.msra.mxu0 %v8265
    %8285 = vmatprep.subr.bf16.mxu0 0
    %8286 = vmatpush1.bf16.msra.mxu0 %v8266
    %8287 = vmatprep.subr.bf16.mxu0 0
    %8288 = vmatpush1.bf16.msra.mxu0 %v8267
    %8289 = vmatprep.subr.bf16.mxu0 0
    %8290 = vmatpush1.bf16.msra.mxu0 %v8268
    %8291 = vmatprep.subr.bf16.mxu0 0
    %8292 = vmatpush1.bf16.msra.mxu0 %v8269
    %8293 = vmatprep.subr.bf16.mxu0 0
    %8294 = vmatpush1.bf16.msra.mxu0 %v8270
    %8295 = vmatprep.subr.bf16.mxu0 0
    %8296 = vmatpush1.bf16.msra.mxu0 0
    %8297 = vmatprep.subr.bf16.mxu0 0
    %8298 = vmatpush1.bf16.msra.mxu0 0
    %8299 = vmatprep.subr.bf16.mxu0 0
    %8300 = vmatpush1.bf16.msra.mxu0 0
    %8301 = vmatprep.subr.bf16.mxu0 0
    %8302 = vmatpush1.bf16.msra.mxu0 0
    %8303 = vmatprep.subr.bf16.mxu0 0
    %8304 = vmatpush1.bf16.msra.mxu0 0
    %8305 = vmatprep.subr.bf16.mxu0 0
    %8306 = vmatpush1.bf16.msra.mxu0 0
    %8307 = vmatprep.subr.bf16.mxu0 0
    %8308 = vmatpush1.bf16.msra.mxu0 0
    %8309 = vmatprep.subr.bf16.mxu0 0
    %8310 = vmatpush1.bf16.msra.mxu0 0
    %8311 = vmatprep.mubr.bf16.mxu0 0
    %8312 = vmatmul.mubr.bf16.gmra.mrb[0].mxu0 %v8207
    %v8313 = vpop.f32.mrb[0].mxu0
    %v8314 = vadd.f32 %v8229, %v8313
    %v8315 = vpop.f32.mrb[0].mxu0
    %v8316 = vpop.f32.mrb[0].mxu0
    %v8317 = vadd.f32 %v8229, %v8316
    %v8318 = vpop.f32.mrb[0].mxu0
    %8319 = vdwg.mxu0
    %8320 = vmax.xlane.f32.xlu0 %v8314
    %v8321 = vpop.xlane.xlu0 %8320
    %8322 = vmax.xlane.f32.xlu0 %v8317
    %v8323 = vpop.xlane.xlu0 %8322
    %v8324 = vsub.f32 %v8314, %v8321
    %v8325 = vsub.f32 %v8317, %v8323
    %v8326 = vmul.f32 %v8324, 1.442695
    %v8327 = vpow.pop %v8326
    %v8328 = vmul.f32 %v8325, 1.442695
    %v8329 = vpow.pop %v8328
    %8330 = vadd.xlane.f32.xlu0 %v8327
    %v8331 = vpop.xlane.xlu0 %8330
    %8332 = vadd.xlane.f32.xlu0 %v8329
    %v8333 = vpop.xlane.xlu0 %8332
    %v8334 = vlog2.pop %v8331
    %v8335 = vmul.f32 %v8334, 0.6931472
    %v8336 = vlog2.pop %v8333
    %v8337 = vmul.f32 %v8336, 0.6931472
    %v8338 = vadd.f32 %v8321, %v8335
    %v8339 = vadd.f32 %v8323, %v8337
    %v8340 = vsub.f32 %v8314, %v8338
    %v8341 = vsub.f32 %v8317, %v8339
    %8342 = vst [vmem:[%s7] sm:$0xff] %v8340
    %8343 = vst [vmem:[%s7 + $0x8] sm:$0xff] %v8341
    // Predicated region
    $region34: #{convnn_forward.1} parent=1 // pred_check
      _
    $region35: #{convnn_forward.1} parent=1 // pred_check_branch
      %8345 = sbr.rel (0) target = $region37
    $region36: #{convnn_forward.1} parent=1 // pred_region
      _
    $region37: #{convnn_forward.1} parent=1 // pred_fallthru
      _
    // Predicated region
    $region38: #{convnn_forward.1} parent=1 // pred_check
      _
    $region39: #{convnn_forward.1} parent=1 // pred_check_branch
      %8347 = sbr.rel (0) target = $region41
    $region40: #{convnn_forward.1} parent=1 // pred_region
      _
    $region41: #{convnn_forward.1} parent=1 // pred_fallthru
      _
    %8348 = vsyncpa [#allocation3], 1

</llo_original>
